<compile_context>
chip_gen: v7x
topology: tpu7x:2x2x1
jax: 0.10.0
libtpu: 0.0.40
codegen_flags: <defaults>
</compile_context>

<pallas_src>
import functools

import jax
import jax.numpy as jnp
from jax import lax
from jax.experimental import pallas as pl
from jax.experimental.pallas import tpu as pltpu

# ---------------- config (small, consistent with the module) ----------------
CI_ENC_DIM = 8
EXT_INPUT_DIM = 4
CO_DIM = 4
GEN_DIM = 32
CON_DIM = 16
LATENT_DIM = 8
CELL_CLIP = 5.0

STATE_DIMS = [GEN_DIM, CON_DIM, CO_DIM, CO_DIM, CO_DIM + EXT_INPUT_DIM, LATENT_DIM]
H_TOT = sum(STATE_DIMS)                      # 72
IN_DIM = 2 * CI_ENC_DIM + EXT_INPUT_DIM      # 20
CI2 = 2 * CI_ENC_DIM                         # 16
X_PAD = CI2 + 2 * EXT_INPUT_DIM              # 24: [ci(16) | zero pad(4) | ext(4)]


# ------------------------------ kernel ------------------------------
def _gru_step(x_a, x_b, h, w_a_ref, w_b_ref, u_ref, b_i, b_hn, H):
    """Fused-gate ClippedGRUCell step, batch-on-lanes layout.

    x_a/x_b: the two input sections, (In_a, Bt)/(In_b, Bt).  h: (H, Bt).
    w_a_ref/w_b_ref: torch weight_ih column splits (3H, In_*); u_ref: torch
    weight_hh (3H, H); gate rows are stacked [r; z; n].  b_i: (3H, Bt) with
    b_ih+b_hh folded for the r/z rows and b_ih_n for the n rows; b_hn: (H, Bt)
    = b_hh_n (stays inside the r* term to preserve torch numerics).
    3 MXU pushes per cell instead of 9; gate slices are 8-aligned sublane
    slices of one 3H-row result.
    """
    def mm(w, x):
        return jnp.dot(w, x, preferred_element_type=jnp.float32)

    gi = mm(w_a_ref[...], x_a) + mm(w_b_ref[...], x_b) + b_i        # (3H, Bt)
    gh = mm(u_ref[...], h)                                          # (3H, Bt)
    r = jax.nn.sigmoid(gi[:H] + gh[:H])
    z = jax.nn.sigmoid(gi[H:2 * H] + gh[H:2 * H])
    n = jnp.tanh(gi[2 * H:] + r * (gh[2 * H:] + b_hn))
    h_new = (1.0 - z) * n + z * h
    return jnp.clip(h_new, -CELL_CLIP, CELL_CLIP)


def decoder_kernel(x_ref, gen0_ref, con0_ref, fac0_ref,
                   c_wc_ref, c_wf_ref, c_u_ref, c_bi_ref, c_bhn_ref,
                   co_w_ref, co_b_ref,
                   g_wc_ref, g_we_ref, g_u_ref, g_bi_ref, g_bhn_ref,
                   fac_w_ref,
                   out_ref, *, unroll):
    T = x_ref.shape[0]
    Bt = gen0_ref.shape[1]

    # Hoist loop-invariant bias loads, lane-broadcasts and the row mask out of
    # the recurrence (JAX does not CSE broadcast_in_dim).  Weight matrices are
    # read from VMEM refs at their point of use to keep vreg pressure down.
    c_bi = jnp.broadcast_to(c_bi_ref[...], (3 * CON_DIM, Bt))
    c_bhn = jnp.broadcast_to(c_bhn_ref[...], (CON_DIM, Bt))
    co_b = jnp.broadcast_to(co_b_ref[...], (2 * CO_DIM, Bt))
    g_bi = jnp.broadcast_to(g_bi_ref[...], (3 * GEN_DIM, Bt))
    g_bhn = jnp.broadcast_to(g_bhn_ref[...], (GEN_DIM, Bt))
    row_lt4 = lax.broadcasted_iota(jnp.int32, (2 * CO_DIM, Bt), 0) < CO_DIM

    def step(t, carry):
        gen_h, con_h, fac = carry
        xt = x_ref[t]                      # (X_PAD, Bt), cheap leading index
        ci = xt[:CI2]                      # (16, Bt)
        x8 = xt[CI2:]                      # (8, Bt): rows 4:8 are ext, rows 0:4 are zero pad

        # controller GRU; con_input = [ci | factor]; eval-mode dropout == id
        con_h = _gru_step(ci, fac, con_h, c_wc_ref, c_wf_ref, c_u_ref,
                          c_bi, c_bhn, CON_DIM)

        # fused co_linear head: rows [co_mean(4); co_logvar(4)]
        co = jnp.dot(co_w_ref[...], con_h,
                     preferred_element_type=jnp.float32) + co_b

        # generator GRU; gen_input = [co_mean | ext].  g_wc has zero columns on
        # the logvar rows and g_we has zero columns on the pad rows, so passing
        # the full 8-row co / x8 operands is exactly g_wc@co_mean + g_we@ext.
        gen_h = _gru_step(co, x8, gen_h, g_wc_ref, g_we_ref, g_u_ref,
                          g_bi, g_bhn, GEN_DIM)

        # factor readout; fac_w rows were L2-normalized host-side (hoisted)
        fac = jnp.dot(fac_w_ref[...], gen_h, preferred_element_type=jnp.float32)

        # packed hidden = [gen | con | co_mean | co_std | gen_input | factor];
        # assemble the two 8-row mixed blocks with selects so every concat
        # piece is 8-sublane aligned, then do a single lane-dense store.
        mean_std = jnp.where(row_lt4, co, jnp.exp(0.5 * co))   # [mean; sqrt(exp(logvar))]
        gen_in = jnp.where(row_lt4, co, x8)                    # [co_mean; ext]
        out_ref[t] = jnp.concatenate([gen_h, con_h, mean_std, gen_in, fac],
                                     axis=0)
        return gen_h, con_h, fac

    lax.fori_loop(0, T, step, (gen0_ref[...], con0_ref[...], fac0_ref[...]),
                  unroll=unroll)


# ------------------------------ wrapper ------------------------------
_W_ORDER = ("c_wc", "c_wf", "c_u", "c_bi", "c_bhn", "co_w", "co_b",
            "g_wc", "g_we", "g_u", "g_bi", "g_bhn", "fac_w")


def decoder_rnn_forward(x, h0, kparams, *, b_tile=None, unroll=None):
    """x: (B, T, IN_DIM), h0: (B, H_TOT) -> (output (B, T, H_TOT), hidden (B, H_TOT))."""
    B, T, D = x.shape
    assert D == IN_DIM and h0.shape == (B, H_TOT)
    if b_tile is None:
        # >=2 lane tiles of 128 lets v7x split the "parallel" batch axis over
        # its 2 TensorCores; harmless (sequential) on 1-TC v5e/v6e.
        b_tile = 128 if (B % 256 == 0) else B
    assert B % b_tile == 0 and (b_tile == B or b_tile % 128 == 0), (
        "batch lane-tiles must be multiples of 128 (or the full batch)")
    nb = B // b_tile
    if unroll is None:
        unroll = True if T <= 32 else 4       # full unroll for short sequences

    x = x.astype(jnp.float32)
    h0 = h0.astype(jnp.float32)

    # Batch-on-lanes layout: (time, features, batch).  x is padded to 24 rows
    # ([ci | 4 zero rows | ext]) so the ext section lives in an aligned 8-row
    # block.  These two transposes are the only remaining extra HBM passes;
    # callers that can produce / consume (T, feat, B) directly can drop them.
    x_l = jnp.transpose(x, (1, 2, 0))                         # (T, IN_DIM, B)
    x_l = jnp.concatenate(
        [x_l[:, :CI2], jnp.zeros((T, EXT_INPUT_DIM, B), jnp.float32),
         x_l[:, CI2:]], axis=1)                               # (T, X_PAD, B)
    # The recurrence only consumes the gen / con / factor slices of h_0.
    gen0 = h0[:, :GEN_DIM].T                                  # (GEN_DIM, B)
    con0 = h0[:, GEN_DIM:GEN_DIM + CON_DIM].T                 # (CON_DIM, B)
    fac0 = h0[:, H_TOT - LATENT_DIM:].T                       # (LATENT_DIM, B)

    weights = [kparams[k] for k in _W_ORDER]

    def full_spec(a):
        nd = a.ndim
        # Constant block index: Mosaic keeps the (tiny) block resident.
        return pl.BlockSpec(a.shape, lambda b, nd=nd: (0,) * nd)

    in_specs = [
        pl.BlockSpec((T, X_PAD, b_tile), lambda b: (0, 0, b)),
        pl.BlockSpec((GEN_DIM, b_tile), lambda b: (0, b)),
        pl.BlockSpec((CON_DIM, b_tile), lambda b: (0, b)),
        pl.BlockSpec((LATENT_DIM, b_tile), lambda b: (0, b)),
    ] + [full_spec(w) for w in weights]

    out_l = pl.pallas_call(
        functools.partial(decoder_kernel, unroll=unroll),
        grid=(nb,),
        in_specs=in_specs,
        out_specs=pl.BlockSpec((T, H_TOT, b_tile), lambda b: (0, 0, b)),
        out_shape=jax.ShapeDtypeStruct((T, H_TOT, B), jnp.float32),
        compiler_params=pltpu.CompilerParams(
            dimension_semantics=("parallel",),
            vmem_limit_bytes=32 * 1024 * 1024),
    )(x_l, gen0, con0, fac0, *weights)

    output = jnp.transpose(out_l, (2, 0, 1))                  # (B, T, H_TOT)
    hidden = output[:, -1, :]                                 # final hidden
    return output, hidden


# ------------------- parameters (PyTorch layout + repack) -------------------
def init_raw_params(key):
    """Parameters in the PyTorch layout (GRUCell weight_ih/weight_hh/bias_*)."""
    ks = jax.random.split(key, 11)
    scale = 0.1
    rnd = lambda k, s: scale * jax.random.normal(k, s, dtype=jnp.float32)
    GEN_IN = CO_DIM + EXT_INPUT_DIM
    CON_IN = 2 * CI_ENC_DIM + LATENT_DIM
    return {
        "gen_w_ih": rnd(ks[0], (3 * GEN_DIM, GEN_IN)),
        "gen_w_hh": rnd(ks[1], (3 * GEN_DIM, GEN_DIM)),
        "gen_b_ih": rnd(ks[2], (3 * GEN_DIM,)),
        "gen_b_hh": rnd(ks[3], (3 * GEN_DIM,)),
        "con_w_ih": rnd(ks[4], (3 * CON_DIM, CON_IN)),
        "con_w_hh": rnd(ks[5], (3 * CON_DIM, CON_DIM)),
        "con_b_ih": rnd(ks[6], (3 * CON_DIM,)),
        "con_b_hh": rnd(ks[7], (3 * CON_DIM,)),
        "fac_w": rnd(ks[8], (LATENT_DIM, GEN_DIM)),           # KernelNormalizedLinear
        "co_w": rnd(ks[9], (2 * CO_DIM, CON_DIM)),            # co_linear
        "co_b": rnd(ks[10], (2 * CO_DIM,)),
    }


def prepare_params(raw):
    """One-time host-side repack for the batch-on-lanes fused-gate kernel."""
    def gru_pack(w_ih, w_hh, b_ih, b_hh, H, split):
        # torch GRUCell rows are the stacked [r; z; n] gates.
        w_a = w_ih[:, :split]                    # (3H, split): first input section
        w_b = w_ih[:, split:]                    # (3H, In-split): second section
        u = w_hh                                 # (3H, H)
        b_i = jnp.concatenate(
            [b_ih[:2 * H] + b_hh[:2 * H],        # fold b_ih+b_hh for r, z
             b_ih[2 * H:]]).reshape(3 * H, 1)    # n gate: b_ih_n (outside r*)
        b_hn = b_hh[2 * H:].reshape(H, 1)        # n gate: b_hh_n (inside r*)
        return w_a, w_b, u, b_i, b_hn

    # controller: input = [ci (16) | factor (8)]
    c_wc, c_wf, c_u, c_bi, c_bhn = gru_pack(raw["con_w_ih"], raw["con_w_hh"],
                                            raw["con_b_ih"], raw["con_b_hh"],
                                            CON_DIM, 2 * CI_ENC_DIM)
    # generator: input = [controller output (4) | ext (4)].  Pad the two input
    # sections to 8 columns with zeros so the kernel can feed the full 8-row
    # co (mean|logvar) / x8 (pad|ext) operands without unaligned slicing.
    g_wc4, g_we4, g_u, g_bi, g_bhn = gru_pack(raw["gen_w_ih"], raw["gen_w_hh"],
                                              raw["gen_b_ih"], raw["gen_b_hh"],
                                              GEN_DIM, CO_DIM)
    zpad = jnp.zeros((3 * GEN_DIM, EXT_INPUT_DIM), jnp.float32)
    g_wc = jnp.concatenate([g_wc4, zpad], axis=1)             # (96, 8): zero on logvar rows
    g_we = jnp.concatenate([zpad, g_we4], axis=1)             # (96, 8): zero on pad rows

    co_w = raw["co_w"]                           # (8, CON_DIM): rows [mean; logvar]
    co_b = raw["co_b"].reshape(2 * CO_DIM, 1)

    # KernelNormalizedLinear: F.normalize(W, p=2, dim=1), hoisted out of the loop
    fw = raw["fac_w"]
    norm = jnp.sqrt(jnp.sum(fw * fw, axis=1, keepdims=True))
    fac_w = fw / jnp.maximum(norm, 1e-12)        # (LATENT_DIM, GEN_DIM)

    return {"c_wc": c_wc, "c_wf": c_wf, "c_u": c_u, "c_bi": c_bi, "c_bhn": c_bhn,
            "co_w": co_w, "co_b": co_b,
            "g_wc": g_wc, "g_we": g_we, "g_u": g_u, "g_bi": g_bi, "g_bhn": g_bhn,
            "fac_w": fac_w}


# ----------------------- pure-JAX reference (torch math) -----------------------
def decoder_rnn_reference(x, h0, raw):
    P = jax.lax.Precision.HIGHEST
    mm = lambda a, b: jnp.dot(a, b, precision=P)

    def gru(x_in, h, w_ih, w_hh, b_ih, b_hh, H):
        gi = mm(x_in, w_ih.T) + b_ih
        gh = mm(h, w_hh.T) + b_hh
        r = jax.nn.sigmoid(gi[:, :H] + gh[:, :H])
        z = jax.nn.sigmoid(gi[:, H:2 * H] + gh[:, H:2 * H])
        n = jnp.tanh(gi[:, 2 * H:] + r * gh[:, 2 * H:])
        return jnp.clip((1.0 - z) * n + z * h, -CELL_CLIP, CELL_CLIP)

    fw = raw["fac_w"]
    fwn = fw / jnp.maximum(jnp.sqrt(jnp.sum(fw * fw, axis=1, keepdims=True)), 1e-12)

    hidden = h0
    outs = []
    for t in range(x.shape[1]):
        gen_s = hidden[:, :GEN_DIM]
        con_s = hidden[:, GEN_DIM:GEN_DIM + CON_DIM]
        factor = hidden[:, H_TOT - LATENT_DIM:]
        ci, ext = x[:, t, :CI2], x[:, t, CI2:]
        con_in = jnp.concatenate([ci, factor], axis=1)
        con_s = gru(con_in, con_s, raw["con_w_ih"], raw["con_w_hh"],
                    raw["con_b_ih"], raw["con_b_hh"], CON_DIM)
        co_params = mm(con_s, raw["co_w"].T) + raw["co_b"]
        co_mean, co_logvar = co_params[:, :CO_DIM], co_params[:, CO_DIM:]
        co_std = jnp.sqrt(jnp.exp(co_logvar))
        gen_in = jnp.concatenate([co_mean, ext], axis=1)
        gen_s = gru(gen_in, gen_s, raw["gen_w_ih"], raw["gen_w_hh"],
                    raw["gen_b_ih"], raw["gen_b_hh"], GEN_DIM)
        factor = mm(gen_s, fwn.T)
        hidden = jnp.concatenate([gen_s, con_s, co_mean, co_std, gen_in, factor],
                                 axis=1)
        outs.append(hidden)
    return jnp.stack(outs, axis=1), hidden


if __name__ == "__main__":
    key = jax.random.PRNGKey(0)
    k_param, k_x, k_h = jax.random.split(key, 3)

    B, T = 4, 6
    raw = init_raw_params(k_param)
    kparams = prepare_params(raw)
    x = jax.random.normal(k_x, (B, T, IN_DIM), dtype=jnp.float32)
    h0 = jax.random.normal(k_h, (B, H_TOT), dtype=jnp.float32)

    output, hidden = decoder_rnn_forward(x, h0, kparams)
    output = jax.block_until_ready(output)
    hidden = jax.block_until_ready(hidden)

    assert output.shape == (B, T, H_TOT)
    assert hidden.shape == (B, H_TOT)
    assert jnp.all(jnp.isfinite(output)) and jnp.all(jnp.isfinite(hidden))

    ref_out, ref_hid = decoder_rnn_reference(x, h0, raw)
    max_err = float(jnp.max(jnp.abs(output - ref_out)))
    assert bool(jnp.allclose(output, ref_out, rtol=1e-5, atol=1e-5)), (
        f"output mismatch, max|err|={max_err}")
    assert bool(jnp.allclose(hidden, ref_hid, rtol=1e-5, atol=1e-5))

    print("KERNEL_OK")
</pallas_src>

<mosaic_0001>
module attributes {stable_mosaic.version = 11 : i64} {
  func.func @decoder_kernel(%arg0: i32, %arg1: memref<6x24x4xf32, #tpu.memory_space<vmem>>, %arg2: memref<32x4xf32, #tpu.memory_space<vmem>>, %arg3: memref<16x4xf32, #tpu.memory_space<vmem>>, %arg4: memref<8x4xf32, #tpu.memory_space<vmem>>, %arg5: memref<48x16xf32, #tpu.memory_space<vmem>>, %arg6: memref<48x8xf32, #tpu.memory_space<vmem>>, %arg7: memref<48x16xf32, #tpu.memory_space<vmem>>, %arg8: memref<48x1xf32, #tpu.memory_space<vmem>>, %arg9: memref<16x1xf32, #tpu.memory_space<vmem>>, %arg10: memref<8x16xf32, #tpu.memory_space<vmem>>, %arg11: memref<8x1xf32, #tpu.memory_space<vmem>>, %arg12: memref<96x8xf32, #tpu.memory_space<vmem>>, %arg13: memref<96x8xf32, #tpu.memory_space<vmem>>, %arg14: memref<96x32xf32, #tpu.memory_space<vmem>>, %arg15: memref<96x1xf32, #tpu.memory_space<vmem>>, %arg16: memref<32x1xf32, #tpu.memory_space<vmem>>, %arg17: memref<8x32xf32, #tpu.memory_space<vmem>>, %arg18: memref<6x72x4xf32, #tpu.memory_space<vmem>>) attributes {dimension_semantics = [#tpu.dimension_semantics<parallel>], iteration_bounds = array<i64: 1>, scalar_prefetch = 0 : i64, scratch_operands = 0 : i64, tpu.core_type = #tpu.core_type<tc>, window_params = [{transform_indices = @transform_0, window_bounds = array<i64: 6, 24, 4>}, {transform_indices = @transform_1, window_bounds = array<i64: 32, 4>}, {transform_indices = @transform_2, window_bounds = array<i64: 16, 4>}, {transform_indices = @transform_3, window_bounds = array<i64: 8, 4>}, {pipeline_mode = #tpu.pipeline_mode<synchronous>, transform_indices = @transform_4, window_bounds = array<i64: 48, 16>}, {pipeline_mode = #tpu.pipeline_mode<synchronous>, transform_indices = @transform_5, window_bounds = array<i64: 48, 8>}, {pipeline_mode = #tpu.pipeline_mode<synchronous>, transform_indices = @transform_6, window_bounds = array<i64: 48, 16>}, {pipeline_mode = #tpu.pipeline_mode<synchronous>, transform_indices = @transform_7, window_bounds = array<i64: 48, 1>}, {pipeline_mode = #tpu.pipeline_mode<synchronous>, transform_indices = @transform_8, window_bounds = array<i64: 16, 1>}, {pipeline_mode = #tpu.pipeline_mode<synchronous>, transform_indices = @transform_9, window_bounds = array<i64: 8, 16>}, {pipeline_mode = #tpu.pipeline_mode<synchronous>, transform_indices = @transform_10, window_bounds = array<i64: 8, 1>}, {pipeline_mode = #tpu.pipeline_mode<synchronous>, transform_indices = @transform_11, window_bounds = array<i64: 96, 8>}, {pipeline_mode = #tpu.pipeline_mode<synchronous>, transform_indices = @transform_12, window_bounds = array<i64: 96, 8>}, {pipeline_mode = #tpu.pipeline_mode<synchronous>, transform_indices = @transform_13, window_bounds = array<i64: 96, 32>}, {pipeline_mode = #tpu.pipeline_mode<synchronous>, transform_indices = @transform_14, window_bounds = array<i64: 96, 1>}, {pipeline_mode = #tpu.pipeline_mode<synchronous>, transform_indices = @transform_15, window_bounds = array<i64: 32, 1>}, {pipeline_mode = #tpu.pipeline_mode<synchronous>, transform_indices = @transform_16, window_bounds = array<i64: 8, 32>}, {transform_indices = @transform_17, window_bounds = array<i64: 6, 72, 4>}]} {
    %c0 = arith.constant 0 : index
    %c0_0 = arith.constant 0 : index
    %0 = vector.load %arg8[%c0, %c0_0] : memref<48x1xf32, #tpu.memory_space<vmem>>, vector<48x1xf32>
    %1 = vector.shape_cast %0 : vector<48x1xf32> to vector<48x1xf32>
    %2 = vector.broadcast %1 : vector<48x1xf32> to vector<48x4xf32>
    %c0_1 = arith.constant 0 : index
    %c0_2 = arith.constant 0 : index
    %3 = vector.load %arg9[%c0_1, %c0_2] : memref<16x1xf32, #tpu.memory_space<vmem>>, vector<16x1xf32>
    %4 = vector.shape_cast %3 : vector<16x1xf32> to vector<16x1xf32>
    %5 = vector.broadcast %4 : vector<16x1xf32> to vector<16x4xf32>
    %c0_3 = arith.constant 0 : index
    %c0_4 = arith.constant 0 : index
    %6 = vector.load %arg11[%c0_3, %c0_4] : memref<8x1xf32, #tpu.memory_space<vmem>>, vector<8x1xf32>
    %7 = vector.shape_cast %6 : vector<8x1xf32> to vector<8x1xf32>
    %8 = vector.broadcast %7 : vector<8x1xf32> to vector<8x4xf32>
    %c0_5 = arith.constant 0 : index
    %c0_6 = arith.constant 0 : index
    %9 = vector.load %arg15[%c0_5, %c0_6] : memref<96x1xf32, #tpu.memory_space<vmem>>, vector<96x1xf32>
    %10 = vector.shape_cast %9 : vector<96x1xf32> to vector<96x1xf32>
    %11 = vector.broadcast %10 : vector<96x1xf32> to vector<96x4xf32>
    %c0_7 = arith.constant 0 : index
    %c0_8 = arith.constant 0 : index
    %12 = vector.load %arg16[%c0_7, %c0_8] : memref<32x1xf32, #tpu.memory_space<vmem>>, vector<32x1xf32>
    %13 = vector.shape_cast %12 : vector<32x1xf32> to vector<32x1xf32>
    %14 = vector.broadcast %13 : vector<32x1xf32> to vector<32x4xf32>
    %15 = tpu.iota {dimensions = array<i32: 0>} : vector<8x4xi32>
    %c4_i32 = arith.constant 4 : i32
    %16 = vector.broadcast %c4_i32 : i32 to vector<8x4xi32>
    %17 = arith.cmpi slt, %15, %16 : vector<8x4xi32>
    %c0_9 = arith.constant 0 : index
    %c0_10 = arith.constant 0 : index
    %18 = vector.load %arg2[%c0_9, %c0_10] : memref<32x4xf32, #tpu.memory_space<vmem>>, vector<32x4xf32>
    %c0_11 = arith.constant 0 : index
    %c0_12 = arith.constant 0 : index
    %19 = vector.load %arg3[%c0_11, %c0_12] : memref<16x4xf32, #tpu.memory_space<vmem>>, vector<16x4xf32>
    %c0_13 = arith.constant 0 : index
    %c0_14 = arith.constant 0 : index
    %20 = vector.load %arg4[%c0_13, %c0_14] : memref<8x4xf32, #tpu.memory_space<vmem>>, vector<8x4xf32>
    %c0_i32 = arith.constant 0 : i32
    %21 = arith.index_cast %c0_i32 : i32 to index
    %c0_15 = arith.constant 0 : index
    %c0_16 = arith.constant 0 : index
    %22 = vector.load %arg1[%21, %c0_15, %c0_16] : memref<6x24x4xf32, #tpu.memory_space<vmem>>, vector<1x24x4xf32>
    %23 = vector.shape_cast %22 : vector<1x24x4xf32> to vector<24x4xf32>
    %24 = vector.extract_strided_slice %23 {offsets = [0, 0], sizes = [16, 4], strides = [1, 1]} : vector<24x4xf32> to vector<16x4xf32>
    %25 = vector.extract_strided_slice %23 {offsets = [16, 0], sizes = [8, 4], strides = [1, 1]} : vector<24x4xf32> to vector<8x4xf32>
    %c0_17 = arith.constant 0 : index
    %c0_18 = arith.constant 0 : index
    %26 = vector.load %arg5[%c0_17, %c0_18] : memref<48x16xf32, #tpu.memory_space<vmem>>, vector<48x16xf32>
    %cst = arith.constant dense<0.000000e+00> : vector<48x4xf32>
    %27 = tpu.matmul %26, %24, %cst {dimension_numbers = #tpu.dot_dimension_numbers<[1], [0], [0], [1], [0, 0, 1, 1], [], []>} : vector<48x16xf32>, vector<16x4xf32>, vector<48x4xf32> -> vector<48x4xf32>
    %c0_19 = arith.constant 0 : index
    %c0_20 = arith.constant 0 : index
    %28 = vector.load %arg6[%c0_19, %c0_20] : memref<48x8xf32, #tpu.memory_space<vmem>>, vector<48x8xf32>
    %cst_21 = arith.constant dense<0.000000e+00> : vector<48x4xf32>
    %29 = tpu.matmul %28, %20, %cst_21 {dimension_numbers = #tpu.dot_dimension_numbers<[1], [0], [0], [1], [0, 0, 1, 1], [], []>} : vector<48x8xf32>, vector<8x4xf32>, vector<48x4xf32> -> vector<48x4xf32>
    %30 = arith.addf %27, %29 : vector<48x4xf32>
    %31 = arith.addf %30, %2 : vector<48x4xf32>
    %c0_22 = arith.constant 0 : index
    %c0_23 = arith.constant 0 : index
    %32 = vector.load %arg7[%c0_22, %c0_23] : memref<48x16xf32, #tpu.memory_space<vmem>>, vector<48x16xf32>
    %cst_24 = arith.constant dense<0.000000e+00> : vector<48x4xf32>
    %33 = tpu.matmul %32, %19, %cst_24 {dimension_numbers = #tpu.dot_dimension_numbers<[1], [0], [0], [1], [0, 0, 1, 1], [], []>} : vector<48x16xf32>, vector<16x4xf32>, vector<48x4xf32> -> vector<48x4xf32>
    %34 = vector.extract_strided_slice %31 {offsets = [0, 0], sizes = [16, 4], strides = [1, 1]} : vector<48x4xf32> to vector<16x4xf32>
    %35 = vector.extract_strided_slice %33 {offsets = [0, 0], sizes = [16, 4], strides = [1, 1]} : vector<48x4xf32> to vector<16x4xf32>
    %36 = arith.addf %34, %35 : vector<16x4xf32>
    %37 = arith.negf %36 : vector<16x4xf32>
    %38 = math.exp %37 : vector<16x4xf32>
    %cst_25 = arith.constant 1.000000e+00 : f32
    %39 = vector.broadcast %cst_25 : f32 to vector<16x4xf32>
    %40 = arith.addf %39, %38 : vector<16x4xf32>
    %41 = arith.divf %39, %40 : vector<16x4xf32>
    %42 = vector.extract_strided_slice %31 {offsets = [16, 0], sizes = [16, 4], strides = [1, 1]} : vector<48x4xf32> to vector<16x4xf32>
    %43 = vector.extract_strided_slice %33 {offsets = [16, 0], sizes = [16, 4], strides = [1, 1]} : vector<48x4xf32> to vector<16x4xf32>
    %44 = arith.addf %42, %43 : vector<16x4xf32>
    %45 = arith.negf %44 : vector<16x4xf32>
    %46 = math.exp %45 : vector<16x4xf32>
    %cst_26 = arith.constant 1.000000e+00 : f32
    %47 = vector.broadcast %cst_26 : f32 to vector<16x4xf32>
    %48 = arith.addf %47, %46 : vector<16x4xf32>
    %49 = arith.divf %47, %48 : vector<16x4xf32>
    %50 = vector.extract_strided_slice %31 {offsets = [32, 0], sizes = [16, 4], strides = [1, 1]} : vector<48x4xf32> to vector<16x4xf32>
    %51 = vector.extract_strided_slice %33 {offsets = [32, 0], sizes = [16, 4], strides = [1, 1]} : vector<48x4xf32> to vector<16x4xf32>
    %52 = arith.addf %51, %5 : vector<16x4xf32>
    %53 = arith.mulf %41, %52 : vector<16x4xf32>
    %54 = arith.addf %50, %53 : vector<16x4xf32>
    %55 = math.tanh %54 : vector<16x4xf32>
    %cst_27 = arith.constant 1.000000e+00 : f32
    %56 = vector.broadcast %cst_27 : f32 to vector<16x4xf32>
    %57 = arith.subf %56, %49 : vector<16x4xf32>
    %58 = arith.mulf %57, %55 : vector<16x4xf32>
    %59 = arith.mulf %49, %19 : vector<16x4xf32>
    %60 = arith.addf %58, %59 : vector<16x4xf32>
    %cst_28 = arith.constant -5.000000e+00 : f32
    %cst_29 = arith.constant 5.000000e+00 : f32
    %61 = vector.broadcast %cst_28 : f32 to vector<16x4xf32>
    %62 = arith.maximumf %61, %60 : vector<16x4xf32>
    %63 = vector.broadcast %cst_29 : f32 to vector<16x4xf32>
    %64 = arith.minimumf %63, %62 : vector<16x4xf32>
    %c0_30 = arith.constant 0 : index
    %c0_31 = arith.constant 0 : index
    %65 = vector.load %arg10[%c0_30, %c0_31] : memref<8x16xf32, #tpu.memory_space<vmem>>, vector<8x16xf32>
    %cst_32 = arith.constant dense<0.000000e+00> : vector<8x4xf32>
    %66 = tpu.matmul %65, %64, %cst_32 {dimension_numbers = #tpu.dot_dimension_numbers<[1], [0], [0], [1], [0, 0, 1, 1], [], []>} : vector<8x16xf32>, vector<16x4xf32>, vector<8x4xf32> -> vector<8x4xf32>
    %67 = arith.addf %66, %8 : vector<8x4xf32>
    %c0_33 = arith.constant 0 : index
    %c0_34 = arith.constant 0 : index
    %68 = vector.load %arg12[%c0_33, %c0_34] : memref<96x8xf32, #tpu.memory_space<vmem>>, vector<96x8xf32>
    %cst_35 = arith.constant dense<0.000000e+00> : vector<96x4xf32>
    %69 = tpu.matmul %68, %67, %cst_35 {dimension_numbers = #tpu.dot_dimension_numbers<[1], [0], [0], [1], [0, 0, 1, 1], [], []>} : vector<96x8xf32>, vector<8x4xf32>, vector<96x4xf32> -> vector<96x4xf32>
    %c0_36 = arith.constant 0 : index
    %c0_37 = arith.constant 0 : index
    %70 = vector.load %arg13[%c0_36, %c0_37] : memref<96x8xf32, #tpu.memory_space<vmem>>, vector<96x8xf32>
    %cst_38 = arith.constant dense<0.000000e+00> : vector<96x4xf32>
    %71 = tpu.matmul %70, %25, %cst_38 {dimension_numbers = #tpu.dot_dimension_numbers<[1], [0], [0], [1], [0, 0, 1, 1], [], []>} : vector<96x8xf32>, vector<8x4xf32>, vector<96x4xf32> -> vector<96x4xf32>
    %72 = arith.addf %69, %71 : vector<96x4xf32>
    %73 = arith.addf %72, %11 : vector<96x4xf32>
    %c0_39 = arith.constant 0 : index
    %c0_40 = arith.constant 0 : index
    %74 = vector.load %arg14[%c0_39, %c0_40] : memref<96x32xf32, #tpu.memory_space<vmem>>, vector<96x32xf32>
    %cst_41 = arith.constant dense<0.000000e+00> : vector<96x4xf32>
    %75 = tpu.matmul %74, %18, %cst_41 {dimension_numbers = #tpu.dot_dimension_numbers<[1], [0], [0], [1], [0, 0, 1, 1], [], []>} : vector<96x32xf32>, vector<32x4xf32>, vector<96x4xf32> -> vector<96x4xf32>
    %76 = vector.extract_strided_slice %73 {offsets = [0, 0], sizes = [32, 4], strides = [1, 1]} : vector<96x4xf32> to vector<32x4xf32>
    %77 = vector.extract_strided_slice %75 {offsets = [0, 0], sizes = [32, 4], strides = [1, 1]} : vector<96x4xf32> to vector<32x4xf32>
    %78 = arith.addf %76, %77 : vector<32x4xf32>
    %79 = arith.negf %78 : vector<32x4xf32>
    %80 = math.exp %79 : vector<32x4xf32>
    %cst_42 = arith.constant 1.000000e+00 : f32
    %81 = vector.broadcast %cst_42 : f32 to vector<32x4xf32>
    %82 = arith.addf %81, %80 : vector<32x4xf32>
    %83 = arith.divf %81, %82 : vector<32x4xf32>
    %84 = vector.extract_strided_slice %73 {offsets = [32, 0], sizes = [32, 4], strides = [1, 1]} : vector<96x4xf32> to vector<32x4xf32>
    %85 = vector.extract_strided_slice %75 {offsets = [32, 0], sizes = [32, 4], strides = [1, 1]} : vector<96x4xf32> to vector<32x4xf32>
    %86 = arith.addf %84, %85 : vector<32x4xf32>
    %87 = arith.negf %86 : vector<32x4xf32>
    %88 = math.exp %87 : vector<32x4xf32>
    %cst_43 = arith.constant 1.000000e+00 : f32
    %89 = vector.broadcast %cst_43 : f32 to vector<32x4xf32>
    %90 = arith.addf %89, %88 : vector<32x4xf32>
    %91 = arith.divf %89, %90 : vector<32x4xf32>
    %92 = vector.extract_strided_slice %73 {offsets = [64, 0], sizes = [32, 4], strides = [1, 1]} : vector<96x4xf32> to vector<32x4xf32>
    %93 = vector.extract_strided_slice %75 {offsets = [64, 0], sizes = [32, 4], strides = [1, 1]} : vector<96x4xf32> to vector<32x4xf32>
    %94 = arith.addf %93, %14 : vector<32x4xf32>
    %95 = arith.mulf %83, %94 : vector<32x4xf32>
    %96 = arith.addf %92, %95 : vector<32x4xf32>
    %97 = math.tanh %96 : vector<32x4xf32>
    %cst_44 = arith.constant 1.000000e+00 : f32
    %98 = vector.broadcast %cst_44 : f32 to vector<32x4xf32>
    %99 = arith.subf %98, %91 : vector<32x4xf32>
    %100 = arith.mulf %99, %97 : vector<32x4xf32>
    %101 = arith.mulf %91, %18 : vector<32x4xf32>
    %102 = arith.addf %100, %101 : vector<32x4xf32>
    %cst_45 = arith.constant -5.000000e+00 : f32
    %cst_46 = arith.constant 5.000000e+00 : f32
    %103 = vector.broadcast %cst_45 : f32 to vector<32x4xf32>
    %104 = arith.maximumf %103, %102 : vector<32x4xf32>
    %105 = vector.broadcast %cst_46 : f32 to vector<32x4xf32>
    %106 = arith.minimumf %105, %104 : vector<32x4xf32>
    %c0_47 = arith.constant 0 : index
    %c0_48 = arith.constant 0 : index
    %107 = vector.load %arg17[%c0_47, %c0_48] : memref<8x32xf32, #tpu.memory_space<vmem>>, vector<8x32xf32>
    %cst_49 = arith.constant dense<0.000000e+00> : vector<8x4xf32>
    %108 = tpu.matmul %107, %106, %cst_49 {dimension_numbers = #tpu.dot_dimension_numbers<[1], [0], [0], [1], [0, 0, 1, 1], [], []>} : vector<8x32xf32>, vector<32x4xf32>, vector<8x4xf32> -> vector<8x4xf32>
    %cst_50 = arith.constant 5.000000e-01 : f32
    %109 = vector.broadcast %cst_50 : f32 to vector<8x4xf32>
    %110 = arith.mulf %109, %67 : vector<8x4xf32>
    %111 = math.exp %110 : vector<8x4xf32>
    %112 = arith.select %17, %67, %111 : vector<8x4xi1>, vector<8x4xf32>
    %113 = arith.select %17, %67, %25 : vector<8x4xi1>, vector<8x4xf32>
    %114 = tpu.concatenate %106, %64, %112, %113, %108 in 0 : vector<32x4xf32>, vector<16x4xf32>, vector<8x4xf32>, vector<8x4xf32>, vector<8x4xf32> -> vector<72x4xf32>
    %115 = arith.index_cast %c0_i32 : i32 to index
    %c0_51 = arith.constant 0 : index
    %c0_52 = arith.constant 0 : index
    %116 = vector.load %arg18[%115, %c0_51, %c0_52] : memref<6x72x4xf32, #tpu.memory_space<vmem>>, vector<1x72x4xf32>
    %117 = vector.shape_cast %116 : vector<1x72x4xf32> to vector<72x4xf32>
    %118 = vector.shape_cast %114 : vector<72x4xf32> to vector<1x72x4xf32>
    tpu.vector_store %arg18[%115, %c0_51, %c0_52], %118 {strides = array<i32>} : memref<6x72x4xf32, #tpu.memory_space<vmem>>, vector<1x72x4xf32>,
    %c1_i32 = arith.constant 1 : i32
    %119 = arith.index_cast %c1_i32 : i32 to index
    %c0_53 = arith.constant 0 : index
    %c0_54 = arith.constant 0 : index
    %120 = vector.load %arg1[%119, %c0_53, %c0_54] : memref<6x24x4xf32, #tpu.memory_space<vmem>>, vector<1x24x4xf32>
    %121 = vector.shape_cast %120 : vector<1x24x4xf32> to vector<24x4xf32>
    %122 = vector.extract_strided_slice %121 {offsets = [0, 0], sizes = [16, 4], strides = [1, 1]} : vector<24x4xf32> to vector<16x4xf32>
    %123 = vector.extract_strided_slice %121 {offsets = [16, 0], sizes = [8, 4], strides = [1, 1]} : vector<24x4xf32> to vector<8x4xf32>
    %c0_55 = arith.constant 0 : index
    %c0_56 = arith.constant 0 : index
    %124 = vector.load %arg5[%c0_55, %c0_56] : memref<48x16xf32, #tpu.memory_space<vmem>>, vector<48x16xf32>
    %cst_57 = arith.constant dense<0.000000e+00> : vector<48x4xf32>
    %125 = tpu.matmul %124, %122, %cst_57 {dimension_numbers = #tpu.dot_dimension_numbers<[1], [0], [0], [1], [0, 0, 1, 1], [], []>} : vector<48x16xf32>, vector<16x4xf32>, vector<48x4xf32> -> vector<48x4xf32>
    %c0_58 = arith.constant 0 : index
    %c0_59 = arith.constant 0 : index
    %126 = vector.load %arg6[%c0_58, %c0_59] : memref<48x8xf32, #tpu.memory_space<vmem>>, vector<48x8xf32>
    %cst_60 = arith.constant dense<0.000000e+00> : vector<48x4xf32>
    %127 = tpu.matmul %126, %108, %cst_60 {dimension_numbers = #tpu.dot_dimension_numbers<[1], [0], [0], [1], [0, 0, 1, 1], [], []>} : vector<48x8xf32>, vector<8x4xf32>, vector<48x4xf32> -> vector<48x4xf32>
    %128 = arith.addf %125, %127 : vector<48x4xf32>
    %129 = arith.addf %128, %2 : vector<48x4xf32>
    %c0_61 = arith.constant 0 : index
    %c0_62 = arith.constant 0 : index
    %130 = vector.load %arg7[%c0_61, %c0_62] : memref<48x16xf32, #tpu.memory_space<vmem>>, vector<48x16xf32>
    %cst_63 = arith.constant dense<0.000000e+00> : vector<48x4xf32>
    %131 = tpu.matmul %130, %64, %cst_63 {dimension_numbers = #tpu.dot_dimension_numbers<[1], [0], [0], [1], [0, 0, 1, 1], [], []>} : vector<48x16xf32>, vector<16x4xf32>, vector<48x4xf32> -> vector<48x4xf32>
    %132 = vector.extract_strided_slice %129 {offsets = [0, 0], sizes = [16, 4], strides = [1, 1]} : vector<48x4xf32> to vector<16x4xf32>
    %133 = vector.extract_strided_slice %131 {offsets = [0, 0], sizes = [16, 4], strides = [1, 1]} : vector<48x4xf32> to vector<16x4xf32>
    %134 = arith.addf %132, %133 : vector<16x4xf32>
    %135 = arith.negf %134 : vector<16x4xf32>
    %136 = math.exp %135 : vector<16x4xf32>
    %cst_64 = arith.constant 1.000000e+00 : f32
    %137 = vector.broadcast %cst_64 : f32 to vector<16x4xf32>
    %138 = arith.addf %137, %136 : vector<16x4xf32>
    %139 = arith.divf %137, %138 : vector<16x4xf32>
    %140 = vector.extract_strided_slice %129 {offsets = [16, 0], sizes = [16, 4], strides = [1, 1]} : vector<48x4xf32> to vector<16x4xf32>
    %141 = vector.extract_strided_slice %131 {offsets = [16, 0], sizes = [16, 4], strides = [1, 1]} : vector<48x4xf32> to vector<16x4xf32>
    %142 = arith.addf %140, %141 : vector<16x4xf32>
    %143 = arith.negf %142 : vector<16x4xf32>
    %144 = math.exp %143 : vector<16x4xf32>
    %cst_65 = arith.constant 1.000000e+00 : f32
    %145 = vector.broadcast %cst_65 : f32 to vector<16x4xf32>
    %146 = arith.addf %145, %144 : vector<16x4xf32>
    %147 = arith.divf %145, %146 : vector<16x4xf32>
    %148 = vector.extract_strided_slice %129 {offsets = [32, 0], sizes = [16, 4], strides = [1, 1]} : vector<48x4xf32> to vector<16x4xf32>
    %149 = vector.extract_strided_slice %131 {offsets = [32, 0], sizes = [16, 4], strides = [1, 1]} : vector<48x4xf32> to vector<16x4xf32>
    %150 = arith.addf %149, %5 : vector<16x4xf32>
    %151 = arith.mulf %139, %150 : vector<16x4xf32>
    %152 = arith.addf %148, %151 : vector<16x4xf32>
    %153 = math.tanh %152 : vector<16x4xf32>
    %cst_66 = arith.constant 1.000000e+00 : f32
    %154 = vector.broadcast %cst_66 : f32 to vector<16x4xf32>
    %155 = arith.subf %154, %147 : vector<16x4xf32>
    %156 = arith.mulf %155, %153 : vector<16x4xf32>
    %157 = arith.mulf %147, %64 : vector<16x4xf32>
    %158 = arith.addf %156, %157 : vector<16x4xf32>
    %cst_67 = arith.constant -5.000000e+00 : f32
    %cst_68 = arith.constant 5.000000e+00 : f32
    %159 = vector.broadcast %cst_67 : f32 to vector<16x4xf32>
    %160 = arith.maximumf %159, %158 : vector<16x4xf32>
    %161 = vector.broadcast %cst_68 : f32 to vector<16x4xf32>
    %162 = arith.minimumf %161, %160 : vector<16x4xf32>
    %c0_69 = arith.constant 0 : index
    %c0_70 = arith.constant 0 : index
    %163 = vector.load %arg10[%c0_69, %c0_70] : memref<8x16xf32, #tpu.memory_space<vmem>>, vector<8x16xf32>
    %cst_71 = arith.constant dense<0.000000e+00> : vector<8x4xf32>
    %164 = tpu.matmul %163, %162, %cst_71 {dimension_numbers = #tpu.dot_dimension_numbers<[1], [0], [0], [1], [0, 0, 1, 1], [], []>} : vector<8x16xf32>, vector<16x4xf32>, vector<8x4xf32> -> vector<8x4xf32>
    %165 = arith.addf %164, %8 : vector<8x4xf32>
    %c0_72 = arith.constant 0 : index
    %c0_73 = arith.constant 0 : index
    %166 = vector.load %arg12[%c0_72, %c0_73] : memref<96x8xf32, #tpu.memory_space<vmem>>, vector<96x8xf32>
    %cst_74 = arith.constant dense<0.000000e+00> : vector<96x4xf32>
    %167 = tpu.matmul %166, %165, %cst_74 {dimension_numbers = #tpu.dot_dimension_numbers<[1], [0], [0], [1], [0, 0, 1, 1], [], []>} : vector<96x8xf32>, vector<8x4xf32>, vector<96x4xf32> -> vector<96x4xf32>
    %c0_75 = arith.constant 0 : index
    %c0_76 = arith.constant 0 : index
    %168 = vector.load %arg13[%c0_75, %c0_76] : memref<96x8xf32, #tpu.memory_space<vmem>>, vector<96x8xf32>
    %cst_77 = arith.constant dense<0.000000e+00> : vector<96x4xf32>
    %169 = tpu.matmul %168, %123, %cst_77 {dimension_numbers = #tpu.dot_dimension_numbers<[1], [0], [0], [1], [0, 0, 1, 1], [], []>} : vector<96x8xf32>, vector<8x4xf32>, vector<96x4xf32> -> vector<96x4xf32>
    %170 = arith.addf %167, %169 : vector<96x4xf32>
    %171 = arith.addf %170, %11 : vector<96x4xf32>
    %c0_78 = arith.constant 0 : index
    %c0_79 = arith.constant 0 : index
    %172 = vector.load %arg14[%c0_78, %c0_79] : memref<96x32xf32, #tpu.memory_space<vmem>>, vector<96x32xf32>
    %cst_80 = arith.constant dense<0.000000e+00> : vector<96x4xf32>
    %173 = tpu.matmul %172, %106, %cst_80 {dimension_numbers = #tpu.dot_dimension_numbers<[1], [0], [0], [1], [0, 0, 1, 1], [], []>} : vector<96x32xf32>, vector<32x4xf32>, vector<96x4xf32> -> vector<96x4xf32>
    %174 = vector.extract_strided_slice %171 {offsets = [0, 0], sizes = [32, 4], strides = [1, 1]} : vector<96x4xf32> to vector<32x4xf32>
    %175 = vector.extract_strided_slice %173 {offsets = [0, 0], sizes = [32, 4], strides = [1, 1]} : vector<96x4xf32> to vector<32x4xf32>
    %176 = arith.addf %174, %175 : vector<32x4xf32>
    %177 = arith.negf %176 : vector<32x4xf32>
    %178 = math.exp %177 : vector<32x4xf32>
    %cst_81 = arith.constant 1.000000e+00 : f32
    %179 = vector.broadcast %cst_81 : f32 to vector<32x4xf32>
    %180 = arith.addf %179, %178 : vector<32x4xf32>
    %181 = arith.divf %179, %180 : vector<32x4xf32>
    %182 = vector.extract_strided_slice %171 {offsets = [32, 0], sizes = [32, 4], strides = [1, 1]} : vector<96x4xf32> to vector<32x4xf32>
    %183 = vector.extract_strided_slice %173 {offsets = [32, 0], sizes = [32, 4], strides = [1, 1]} : vector<96x4xf32> to vector<32x4xf32>
    %184 = arith.addf %182, %183 : vector<32x4xf32>
    %185 = arith.negf %184 : vector<32x4xf32>
    %186 = math.exp %185 : vector<32x4xf32>
    %cst_82 = arith.constant 1.000000e+00 : f32
    %187 = vector.broadcast %cst_82 : f32 to vector<32x4xf32>
    %188 = arith.addf %187, %186 : vector<32x4xf32>
    %189 = arith.divf %187, %188 : vector<32x4xf32>
    %190 = vector.extract_strided_slice %171 {offsets = [64, 0], sizes = [32, 4], strides = [1, 1]} : vector<96x4xf32> to vector<32x4xf32>
    %191 = vector.extract_strided_slice %173 {offsets = [64, 0], sizes = [32, 4], strides = [1, 1]} : vector<96x4xf32> to vector<32x4xf32>
    %192 = arith.addf %191, %14 : vector<32x4xf32>
    %193 = arith.mulf %181, %192 : vector<32x4xf32>
    %194 = arith.addf %190, %193 : vector<32x4xf32>
    %195 = math.tanh %194 : vector<32x4xf32>
    %cst_83 = arith.constant 1.000000e+00 : f32
    %196 = vector.broadcast %cst_83 : f32 to vector<32x4xf32>
    %197 = arith.subf %196, %189 : vector<32x4xf32>
    %198 = arith.mulf %197, %195 : vector<32x4xf32>
    %199 = arith.mulf %189, %106 : vector<32x4xf32>
    %200 = arith.addf %198, %199 : vector<32x4xf32>
    %cst_84 = arith.constant -5.000000e+00 : f32
    %cst_85 = arith.constant 5.000000e+00 : f32
    %201 = vector.broadcast %cst_84 : f32 to vector<32x4xf32>
    %202 = arith.maximumf %201, %200 : vector<32x4xf32>
    %203 = vector.broadcast %cst_85 : f32 to vector<32x4xf32>
    %204 = arith.minimumf %203, %202 : vector<32x4xf32>
    %c0_86 = arith.constant 0 : index
    %c0_87 = arith.constant 0 : index
    %205 = vector.load %arg17[%c0_86, %c0_87] : memref<8x32xf32, #tpu.memory_space<vmem>>, vector<8x32xf32>
    %cst_88 = arith.constant dense<0.000000e+00> : vector<8x4xf32>
    %206 = tpu.matmul %205, %204, %cst_88 {dimension_numbers = #tpu.dot_dimension_numbers<[1], [0], [0], [1], [0, 0, 1, 1], [], []>} : vector<8x32xf32>, vector<32x4xf32>, vector<8x4xf32> -> vector<8x4xf32>
    %cst_89 = arith.constant 5.000000e-01 : f32
    %207 = vector.broadcast %cst_89 : f32 to vector<8x4xf32>
    %208 = arith.mulf %207, %165 : vector<8x4xf32>
    %209 = math.exp %208 : vector<8x4xf32>
    %210 = arith.select %17, %165, %209 : vector<8x4xi1>, vector<8x4xf32>
    %211 = arith.select %17, %165, %123 : vector<8x4xi1>, vector<8x4xf32>
    %212 = tpu.concatenate %204, %162, %210, %211, %206 in 0 : vector<32x4xf32>, vector<16x4xf32>, vector<8x4xf32>, vector<8x4xf32>, vector<8x4xf32> -> vector<72x4xf32>
    %213 = arith.index_cast %c1_i32 : i32 to index
    %c0_90 = arith.constant 0 : index
    %c0_91 = arith.constant 0 : index
    %214 = vector.load %arg18[%213, %c0_90, %c0_91] : memref<6x72x4xf32, #tpu.memory_space<vmem>>, vector<1x72x4xf32>
    %215 = vector.shape_cast %214 : vector<1x72x4xf32> to vector<72x4xf32>
    %216 = vector.shape_cast %212 : vector<72x4xf32> to vector<1x72x4xf32>
    tpu.vector_store %arg18[%213, %c0_90, %c0_91], %216 {strides = array<i32>} : memref<6x72x4xf32, #tpu.memory_space<vmem>>, vector<1x72x4xf32>,
    %c2_i32 = arith.constant 2 : i32
    %217 = arith.index_cast %c2_i32 : i32 to index
    %c0_92 = arith.constant 0 : index
    %c0_93 = arith.constant 0 : index
    %218 = vector.load %arg1[%217, %c0_92, %c0_93] : memref<6x24x4xf32, #tpu.memory_space<vmem>>, vector<1x24x4xf32>
    %219 = vector.shape_cast %218 : vector<1x24x4xf32> to vector<24x4xf32>
    %220 = vector.extract_strided_slice %219 {offsets = [0, 0], sizes = [16, 4], strides = [1, 1]} : vector<24x4xf32> to vector<16x4xf32>
    %221 = vector.extract_strided_slice %219 {offsets = [16, 0], sizes = [8, 4], strides = [1, 1]} : vector<24x4xf32> to vector<8x4xf32>
    %c0_94 = arith.constant 0 : index
    %c0_95 = arith.constant 0 : index
    %222 = vector.load %arg5[%c0_94, %c0_95] : memref<48x16xf32, #tpu.memory_space<vmem>>, vector<48x16xf32>
    %cst_96 = arith.constant dense<0.000000e+00> : vector<48x4xf32>
    %223 = tpu.matmul %222, %220, %cst_96 {dimension_numbers = #tpu.dot_dimension_numbers<[1], [0], [0], [1], [0, 0, 1, 1], [], []>} : vector<48x16xf32>, vector<16x4xf32>, vector<48x4xf32> -> vector<48x4xf32>
    %c0_97 = arith.constant 0 : index
    %c0_98 = arith.constant 0 : index
    %224 = vector.load %arg6[%c0_97, %c0_98] : memref<48x8xf32, #tpu.memory_space<vmem>>, vector<48x8xf32>
    %cst_99 = arith.constant dense<0.000000e+00> : vector<48x4xf32>
    %225 = tpu.matmul %224, %206, %cst_99 {dimension_numbers = #tpu.dot_dimension_numbers<[1], [0], [0], [1], [0, 0, 1, 1], [], []>} : vector<48x8xf32>, vector<8x4xf32>, vector<48x4xf32> -> vector<48x4xf32>
    %226 = arith.addf %223, %225 : vector<48x4xf32>
    %227 = arith.addf %226, %2 : vector<48x4xf32>
    %c0_100 = arith.constant 0 : index
    %c0_101 = arith.constant 0 : index
    %228 = vector.load %arg7[%c0_100, %c0_101] : memref<48x16xf32, #tpu.memory_space<vmem>>, vector<48x16xf32>
    %cst_102 = arith.constant dense<0.000000e+00> : vector<48x4xf32>
    %229 = tpu.matmul %228, %162, %cst_102 {dimension_numbers = #tpu.dot_dimension_numbers<[1], [0], [0], [1], [0, 0, 1, 1], [], []>} : vector<48x16xf32>, vector<16x4xf32>, vector<48x4xf32> -> vector<48x4xf32>
    %230 = vector.extract_strided_slice %227 {offsets = [0, 0], sizes = [16, 4], strides = [1, 1]} : vector<48x4xf32> to vector<16x4xf32>
    %231 = vector.extract_strided_slice %229 {offsets = [0, 0], sizes = [16, 4], strides = [1, 1]} : vector<48x4xf32> to vector<16x4xf32>
    %232 = arith.addf %230, %231 : vector<16x4xf32>
    %233 = arith.negf %232 : vector<16x4xf32>
    %234 = math.exp %233 : vector<16x4xf32>
    %cst_103 = arith.constant 1.000000e+00 : f32
    %235 = vector.broadcast %cst_103 : f32 to vector<16x4xf32>
    %236 = arith.addf %235, %234 : vector<16x4xf32>
    %237 = arith.divf %235, %236 : vector<16x4xf32>
    %238 = vector.extract_strided_slice %227 {offsets = [16, 0], sizes = [16, 4], strides = [1, 1]} : vector<48x4xf32> to vector<16x4xf32>
    %239 = vector.extract_strided_slice %229 {offsets = [16, 0], sizes = [16, 4], strides = [1, 1]} : vector<48x4xf32> to vector<16x4xf32>
    %240 = arith.addf %238, %239 : vector<16x4xf32>
    %241 = arith.negf %240 : vector<16x4xf32>
    %242 = math.exp %241 : vector<16x4xf32>
    %cst_104 = arith.constant 1.000000e+00 : f32
    %243 = vector.broadcast %cst_104 : f32 to vector<16x4xf32>
    %244 = arith.addf %243, %242 : vector<16x4xf32>
    %245 = arith.divf %243, %244 : vector<16x4xf32>
    %246 = vector.extract_strided_slice %227 {offsets = [32, 0], sizes = [16, 4], strides = [1, 1]} : vector<48x4xf32> to vector<16x4xf32>
    %247 = vector.extract_strided_slice %229 {offsets = [32, 0], sizes = [16, 4], strides = [1, 1]} : vector<48x4xf32> to vector<16x4xf32>
    %248 = arith.addf %247, %5 : vector<16x4xf32>
    %249 = arith.mulf %237, %248 : vector<16x4xf32>
    %250 = arith.addf %246, %249 : vector<16x4xf32>
    %251 = math.tanh %250 : vector<16x4xf32>
    %cst_105 = arith.constant 1.000000e+00 : f32
    %252 = vector.broadcast %cst_105 : f32 to vector<16x4xf32>
    %253 = arith.subf %252, %245 : vector<16x4xf32>
    %254 = arith.mulf %253, %251 : vector<16x4xf32>
    %255 = arith.mulf %245, %162 : vector<16x4xf32>
    %256 = arith.addf %254, %255 : vector<16x4xf32>
    %cst_106 = arith.constant -5.000000e+00 : f32
    %cst_107 = arith.constant 5.000000e+00 : f32
    %257 = vector.broadcast %cst_106 : f32 to vector<16x4xf32>
    %258 = arith.maximumf %257, %256 : vector<16x4xf32>
    %259 = vector.broadcast %cst_107 : f32 to vector<16x4xf32>
    %260 = arith.minimumf %259, %258 : vector<16x4xf32>
    %c0_108 = arith.constant 0 : index
    %c0_109 = arith.constant 0 : index
    %261 = vector.load %arg10[%c0_108, %c0_109] : memref<8x16xf32, #tpu.memory_space<vmem>>, vector<8x16xf32>
    %cst_110 = arith.constant dense<0.000000e+00> : vector<8x4xf32>
    %262 = tpu.matmul %261, %260, %cst_110 {dimension_numbers = #tpu.dot_dimension_numbers<[1], [0], [0], [1], [0, 0, 1, 1], [], []>} : vector<8x16xf32>, vector<16x4xf32>, vector<8x4xf32> -> vector<8x4xf32>
    %263 = arith.addf %262, %8 : vector<8x4xf32>
    %c0_111 = arith.constant 0 : index
    %c0_112 = arith.constant 0 : index
    %264 = vector.load %arg12[%c0_111, %c0_112] : memref<96x8xf32, #tpu.memory_space<vmem>>, vector<96x8xf32>
    %cst_113 = arith.constant dense<0.000000e+00> : vector<96x4xf32>
    %265 = tpu.matmul %264, %263, %cst_113 {dimension_numbers = #tpu.dot_dimension_numbers<[1], [0], [0], [1], [0, 0, 1, 1], [], []>} : vector<96x8xf32>, vector<8x4xf32>, vector<96x4xf32> -> vector<96x4xf32>
    %c0_114 = arith.constant 0 : index
    %c0_115 = arith.constant 0 : index
    %266 = vector.load %arg13[%c0_114, %c0_115] : memref<96x8xf32, #tpu.memory_space<vmem>>, vector<96x8xf32>
    %cst_116 = arith.constant dense<0.000000e+00> : vector<96x4xf32>
    %267 = tpu.matmul %266, %221, %cst_116 {dimension_numbers = #tpu.dot_dimension_numbers<[1], [0], [0], [1], [0, 0, 1, 1], [], []>} : vector<96x8xf32>, vector<8x4xf32>, vector<96x4xf32> -> vector<96x4xf32>
    %268 = arith.addf %265, %267 : vector<96x4xf32>
    %269 = arith.addf %268, %11 : vector<96x4xf32>
    %c0_117 = arith.constant 0 : index
    %c0_118 = arith.constant 0 : index
    %270 = vector.load %arg14[%c0_117, %c0_118] : memref<96x32xf32, #tpu.memory_space<vmem>>, vector<96x32xf32>
    %cst_119 = arith.constant dense<0.000000e+00> : vector<96x4xf32>
    %271 = tpu.matmul %270, %204, %cst_119 {dimension_numbers = #tpu.dot_dimension_numbers<[1], [0], [0], [1], [0, 0, 1, 1], [], []>} : vector<96x32xf32>, vector<32x4xf32>, vector<96x4xf32> -> vector<96x4xf32>
    %272 = vector.extract_strided_slice %269 {offsets = [0, 0], sizes = [32, 4], strides = [1, 1]} : vector<96x4xf32> to vector<32x4xf32>
    %273 = vector.extract_strided_slice %271 {offsets = [0, 0], sizes = [32, 4], strides = [1, 1]} : vector<96x4xf32> to vector<32x4xf32>
    %274 = arith.addf %272, %273 : vector<32x4xf32>
    %275 = arith.negf %274 : vector<32x4xf32>
    %276 = math.exp %275 : vector<32x4xf32>
    %cst_120 = arith.constant 1.000000e+00 : f32
    %277 = vector.broadcast %cst_120 : f32 to vector<32x4xf32>
    %278 = arith.addf %277, %276 : vector<32x4xf32>
    %279 = arith.divf %277, %278 : vector<32x4xf32>
    %280 = vector.extract_strided_slice %269 {offsets = [32, 0], sizes = [32, 4], strides = [1, 1]} : vector<96x4xf32> to vector<32x4xf32>
    %281 = vector.extract_strided_slice %271 {offsets = [32, 0], sizes = [32, 4], strides = [1, 1]} : vector<96x4xf32> to vector<32x4xf32>
    %282 = arith.addf %280, %281 : vector<32x4xf32>
    %283 = arith.negf %282 : vector<32x4xf32>
    %284 = math.exp %283 : vector<32x4xf32>
    %cst_121 = arith.constant 1.000000e+00 : f32
    %285 = vector.broadcast %cst_121 : f32 to vector<32x4xf32>
    %286 = arith.addf %285, %284 : vector<32x4xf32>
    %287 = arith.divf %285, %286 : vector<32x4xf32>
    %288 = vector.extract_strided_slice %269 {offsets = [64, 0], sizes = [32, 4], strides = [1, 1]} : vector<96x4xf32> to vector<32x4xf32>
    %289 = vector.extract_strided_slice %271 {offsets = [64, 0], sizes = [32, 4], strides = [1, 1]} : vector<96x4xf32> to vector<32x4xf32>
    %290 = arith.addf %289, %14 : vector<32x4xf32>
    %291 = arith.mulf %279, %290 : vector<32x4xf32>
    %292 = arith.addf %288, %291 : vector<32x4xf32>
    %293 = math.tanh %292 : vector<32x4xf32>
    %cst_122 = arith.constant 1.000000e+00 : f32
    %294 = vector.broadcast %cst_122 : f32 to vector<32x4xf32>
    %295 = arith.subf %294, %287 : vector<32x4xf32>
    %296 = arith.mulf %295, %293 : vector<32x4xf32>
    %297 = arith.mulf %287, %204 : vector<32x4xf32>
    %298 = arith.addf %296, %297 : vector<32x4xf32>
    %cst_123 = arith.constant -5.000000e+00 : f32
    %cst_124 = arith.constant 5.000000e+00 : f32
    %299 = vector.broadcast %cst_123 : f32 to vector<32x4xf32>
    %300 = arith.maximumf %299, %298 : vector<32x4xf32>
    %301 = vector.broadcast %cst_124 : f32 to vector<32x4xf32>
    %302 = arith.minimumf %301, %300 : vector<32x4xf32>
    %c0_125 = arith.constant 0 : index
    %c0_126 = arith.constant 0 : index
    %303 = vector.load %arg17[%c0_125, %c0_126] : memref<8x32xf32, #tpu.memory_space<vmem>>, vector<8x32xf32>
    %cst_127 = arith.constant dense<0.000000e+00> : vector<8x4xf32>
    %304 = tpu.matmul %303, %302, %cst_127 {dimension_numbers = #tpu.dot_dimension_numbers<[1], [0], [0], [1], [0, 0, 1, 1], [], []>} : vector<8x32xf32>, vector<32x4xf32>, vector<8x4xf32> -> vector<8x4xf32>
    %cst_128 = arith.constant 5.000000e-01 : f32
    %305 = vector.broadcast %cst_128 : f32 to vector<8x4xf32>
    %306 = arith.mulf %305, %263 : vector<8x4xf32>
    %307 = math.exp %306 : vector<8x4xf32>
    %308 = arith.select %17, %263, %307 : vector<8x4xi1>, vector<8x4xf32>
    %309 = arith.select %17, %263, %221 : vector<8x4xi1>, vector<8x4xf32>
    %310 = tpu.concatenate %302, %260, %308, %309, %304 in 0 : vector<32x4xf32>, vector<16x4xf32>, vector<8x4xf32>, vector<8x4xf32>, vector<8x4xf32> -> vector<72x4xf32>
    %311 = arith.index_cast %c2_i32 : i32 to index
    %c0_129 = arith.constant 0 : index
    %c0_130 = arith.constant 0 : index
    %312 = vector.load %arg18[%311, %c0_129, %c0_130] : memref<6x72x4xf32, #tpu.memory_space<vmem>>, vector<1x72x4xf32>
    %313 = vector.shape_cast %312 : vector<1x72x4xf32> to vector<72x4xf32>
    %314 = vector.shape_cast %310 : vector<72x4xf32> to vector<1x72x4xf32>
    tpu.vector_store %arg18[%311, %c0_129, %c0_130], %314 {strides = array<i32>} : memref<6x72x4xf32, #tpu.memory_space<vmem>>, vector<1x72x4xf32>,
    %c3_i32 = arith.constant 3 : i32
    %315 = arith.index_cast %c3_i32 : i32 to index
    %c0_131 = arith.constant 0 : index
    %c0_132 = arith.constant 0 : index
    %316 = vector.load %arg1[%315, %c0_131, %c0_132] : memref<6x24x4xf32, #tpu.memory_space<vmem>>, vector<1x24x4xf32>
    %317 = vector.shape_cast %316 : vector<1x24x4xf32> to vector<24x4xf32>
    %318 = vector.extract_strided_slice %317 {offsets = [0, 0], sizes = [16, 4], strides = [1, 1]} : vector<24x4xf32> to vector<16x4xf32>
    %319 = vector.extract_strided_slice %317 {offsets = [16, 0], sizes = [8, 4], strides = [1, 1]} : vector<24x4xf32> to vector<8x4xf32>
    %c0_133 = arith.constant 0 : index
    %c0_134 = arith.constant 0 : index
    %320 = vector.load %arg5[%c0_133, %c0_134] : memref<48x16xf32, #tpu.memory_space<vmem>>, vector<48x16xf32>
    %cst_135 = arith.constant dense<0.000000e+00> : vector<48x4xf32>
    %321 = tpu.matmul %320, %318, %cst_135 {dimension_numbers = #tpu.dot_dimension_numbers<[1], [0], [0], [1], [0, 0, 1, 1], [], []>} : vector<48x16xf32>, vector<16x4xf32>, vector<48x4xf32> -> vector<48x4xf32>
    %c0_136 = arith.constant 0 : index
    %c0_137 = arith.constant 0 : index
    %322 = vector.load %arg6[%c0_136, %c0_137] : memref<48x8xf32, #tpu.memory_space<vmem>>, vector<48x8xf32>
    %cst_138 = arith.constant dense<0.000000e+00> : vector<48x4xf32>
    %323 = tpu.matmul %322, %304, %cst_138 {dimension_numbers = #tpu.dot_dimension_numbers<[1], [0], [0], [1], [0, 0, 1, 1], [], []>} : vector<48x8xf32>, vector<8x4xf32>, vector<48x4xf32> -> vector<48x4xf32>
    %324 = arith.addf %321, %323 : vector<48x4xf32>
    %325 = arith.addf %324, %2 : vector<48x4xf32>
    %c0_139 = arith.constant 0 : index
    %c0_140 = arith.constant 0 : index
    %326 = vector.load %arg7[%c0_139, %c0_140] : memref<48x16xf32, #tpu.memory_space<vmem>>, vector<48x16xf32>
    %cst_141 = arith.constant dense<0.000000e+00> : vector<48x4xf32>
    %327 = tpu.matmul %326, %260, %cst_141 {dimension_numbers = #tpu.dot_dimension_numbers<[1], [0], [0], [1], [0, 0, 1, 1], [], []>} : vector<48x16xf32>, vector<16x4xf32>, vector<48x4xf32> -> vector<48x4xf32>
    %328 = vector.extract_strided_slice %325 {offsets = [0, 0], sizes = [16, 4], strides = [1, 1]} : vector<48x4xf32> to vector<16x4xf32>
    %329 = vector.extract_strided_slice %327 {offsets = [0, 0], sizes = [16, 4], strides = [1, 1]} : vector<48x4xf32> to vector<16x4xf32>
    %330 = arith.addf %328, %329 : vector<16x4xf32>
    %331 = arith.negf %330 : vector<16x4xf32>
    %332 = math.exp %331 : vector<16x4xf32>
    %cst_142 = arith.constant 1.000000e+00 : f32
    %333 = vector.broadcast %cst_142 : f32 to vector<16x4xf32>
    %334 = arith.addf %333, %332 : vector<16x4xf32>
    %335 = arith.divf %333, %334 : vector<16x4xf32>
    %336 = vector.extract_strided_slice %325 {offsets = [16, 0], sizes = [16, 4], strides = [1, 1]} : vector<48x4xf32> to vector<16x4xf32>
    %337 = vector.extract_strided_slice %327 {offsets = [16, 0], sizes = [16, 4], strides = [1, 1]} : vector<48x4xf32> to vector<16x4xf32>
    %338 = arith.addf %336, %337 : vector<16x4xf32>
    %339 = arith.negf %338 : vector<16x4xf32>
    %340 = math.exp %339 : vector<16x4xf32>
    %cst_143 = arith.constant 1.000000e+00 : f32
    %341 = vector.broadcast %cst_143 : f32 to vector<16x4xf32>
    %342 = arith.addf %341, %340 : vector<16x4xf32>
    %343 = arith.divf %341, %342 : vector<16x4xf32>
    %344 = vector.extract_strided_slice %325 {offsets = [32, 0], sizes = [16, 4], strides = [1, 1]} : vector<48x4xf32> to vector<16x4xf32>
    %345 = vector.extract_strided_slice %327 {offsets = [32, 0], sizes = [16, 4], strides = [1, 1]} : vector<48x4xf32> to vector<16x4xf32>
    %346 = arith.addf %345, %5 : vector<16x4xf32>
    %347 = arith.mulf %335, %346 : vector<16x4xf32>
    %348 = arith.addf %344, %347 : vector<16x4xf32>
    %349 = math.tanh %348 : vector<16x4xf32>
    %cst_144 = arith.constant 1.000000e+00 : f32
    %350 = vector.broadcast %cst_144 : f32 to vector<16x4xf32>
    %351 = arith.subf %350, %343 : vector<16x4xf32>
    %352 = arith.mulf %351, %349 : vector<16x4xf32>
    %353 = arith.mulf %343, %260 : vector<16x4xf32>
    %354 = arith.addf %352, %353 : vector<16x4xf32>
    %cst_145 = arith.constant -5.000000e+00 : f32
    %cst_146 = arith.constant 5.000000e+00 : f32
    %355 = vector.broadcast %cst_145 : f32 to vector<16x4xf32>
    %356 = arith.maximumf %355, %354 : vector<16x4xf32>
    %357 = vector.broadcast %cst_146 : f32 to vector<16x4xf32>
    %358 = arith.minimumf %357, %356 : vector<16x4xf32>
    %c0_147 = arith.constant 0 : index
    %c0_148 = arith.constant 0 : index
    %359 = vector.load %arg10[%c0_147, %c0_148] : memref<8x16xf32, #tpu.memory_space<vmem>>, vector<8x16xf32>
    %cst_149 = arith.constant dense<0.000000e+00> : vector<8x4xf32>
    %360 = tpu.matmul %359, %358, %cst_149 {dimension_numbers = #tpu.dot_dimension_numbers<[1], [0], [0], [1], [0, 0, 1, 1], [], []>} : vector<8x16xf32>, vector<16x4xf32>, vector<8x4xf32> -> vector<8x4xf32>
    %361 = arith.addf %360, %8 : vector<8x4xf32>
    %c0_150 = arith.constant 0 : index
    %c0_151 = arith.constant 0 : index
    %362 = vector.load %arg12[%c0_150, %c0_151] : memref<96x8xf32, #tpu.memory_space<vmem>>, vector<96x8xf32>
    %cst_152 = arith.constant dense<0.000000e+00> : vector<96x4xf32>
    %363 = tpu.matmul %362, %361, %cst_152 {dimension_numbers = #tpu.dot_dimension_numbers<[1], [0], [0], [1], [0, 0, 1, 1], [], []>} : vector<96x8xf32>, vector<8x4xf32>, vector<96x4xf32> -> vector<96x4xf32>
    %c0_153 = arith.constant 0 : index
    %c0_154 = arith.constant 0 : index
    %364 = vector.load %arg13[%c0_153, %c0_154] : memref<96x8xf32, #tpu.memory_space<vmem>>, vector<96x8xf32>
    %cst_155 = arith.constant dense<0.000000e+00> : vector<96x4xf32>
    %365 = tpu.matmul %364, %319, %cst_155 {dimension_numbers = #tpu.dot_dimension_numbers<[1], [0], [0], [1], [0, 0, 1, 1], [], []>} : vector<96x8xf32>, vector<8x4xf32>, vector<96x4xf32> -> vector<96x4xf32>
    %366 = arith.addf %363, %365 : vector<96x4xf32>
    %367 = arith.addf %366, %11 : vector<96x4xf32>
    %c0_156 = arith.constant 0 : index
    %c0_157 = arith.constant 0 : index
    %368 = vector.load %arg14[%c0_156, %c0_157] : memref<96x32xf32, #tpu.memory_space<vmem>>, vector<96x32xf32>
    %cst_158 = arith.constant dense<0.000000e+00> : vector<96x4xf32>
    %369 = tpu.matmul %368, %302, %cst_158 {dimension_numbers = #tpu.dot_dimension_numbers<[1], [0], [0], [1], [0, 0, 1, 1], [], []>} : vector<96x32xf32>, vector<32x4xf32>, vector<96x4xf32> -> vector<96x4xf32>
    %370 = vector.extract_strided_slice %367 {offsets = [0, 0], sizes = [32, 4], strides = [1, 1]} : vector<96x4xf32> to vector<32x4xf32>
    %371 = vector.extract_strided_slice %369 {offsets = [0, 0], sizes = [32, 4], strides = [1, 1]} : vector<96x4xf32> to vector<32x4xf32>
    %372 = arith.addf %370, %371 : vector<32x4xf32>
    %373 = arith.negf %372 : vector<32x4xf32>
    %374 = math.exp %373 : vector<32x4xf32>
    %cst_159 = arith.constant 1.000000e+00 : f32
    %375 = vector.broadcast %cst_159 : f32 to vector<32x4xf32>
    %376 = arith.addf %375, %374 : vector<32x4xf32>
    %377 = arith.divf %375, %376 : vector<32x4xf32>
    %378 = vector.extract_strided_slice %367 {offsets = [32, 0], sizes = [32, 4], strides = [1, 1]} : vector<96x4xf32> to vector<32x4xf32>
    %379 = vector.extract_strided_slice %369 {offsets = [32, 0], sizes = [32, 4], strides = [1, 1]} : vector<96x4xf32> to vector<32x4xf32>
    %380 = arith.addf %378, %379 : vector<32x4xf32>
    %381 = arith.negf %380 : vector<32x4xf32>
    %382 = math.exp %381 : vector<32x4xf32>
    %cst_160 = arith.constant 1.000000e+00 : f32
    %383 = vector.broadcast %cst_160 : f32 to vector<32x4xf32>
    %384 = arith.addf %383, %382 : vector<32x4xf32>
    %385 = arith.divf %383, %384 : vector<32x4xf32>
    %386 = vector.extract_strided_slice %367 {offsets = [64, 0], sizes = [32, 4], strides = [1, 1]} : vector<96x4xf32> to vector<32x4xf32>
    %387 = vector.extract_strided_slice %369 {offsets = [64, 0], sizes = [32, 4], strides = [1, 1]} : vector<96x4xf32> to vector<32x4xf32>
    %388 = arith.addf %387, %14 : vector<32x4xf32>
    %389 = arith.mulf %377, %388 : vector<32x4xf32>
    %390 = arith.addf %386, %389 : vector<32x4xf32>
    %391 = math.tanh %390 : vector<32x4xf32>
    %cst_161 = arith.constant 1.000000e+00 : f32
    %392 = vector.broadcast %cst_161 : f32 to vector<32x4xf32>
    %393 = arith.subf %392, %385 : vector<32x4xf32>
    %394 = arith.mulf %393, %391 : vector<32x4xf32>
    %395 = arith.mulf %385, %302 : vector<32x4xf32>
    %396 = arith.addf %394, %395 : vector<32x4xf32>
    %cst_162 = arith.constant -5.000000e+00 : f32
    %cst_163 = arith.constant 5.000000e+00 : f32
    %397 = vector.broadcast %cst_162 : f32 to vector<32x4xf32>
    %398 = arith.maximumf %397, %396 : vector<32x4xf32>
    %399 = vector.broadcast %cst_163 : f32 to vector<32x4xf32>
    %400 = arith.minimumf %399, %398 : vector<32x4xf32>
    %c0_164 = arith.constant 0 : index
    %c0_165 = arith.constant 0 : index
    %401 = vector.load %arg17[%c0_164, %c0_165] : memref<8x32xf32, #tpu.memory_space<vmem>>, vector<8x32xf32>
    %cst_166 = arith.constant dense<0.000000e+00> : vector<8x4xf32>
    %402 = tpu.matmul %401, %400, %cst_166 {dimension_numbers = #tpu.dot_dimension_numbers<[1], [0], [0], [1], [0, 0, 1, 1], [], []>} : vector<8x32xf32>, vector<32x4xf32>, vector<8x4xf32> -> vector<8x4xf32>
    %cst_167 = arith.constant 5.000000e-01 : f32
    %403 = vector.broadcast %cst_167 : f32 to vector<8x4xf32>
    %404 = arith.mulf %403, %361 : vector<8x4xf32>
    %405 = math.exp %404 : vector<8x4xf32>
    %406 = arith.select %17, %361, %405 : vector<8x4xi1>, vector<8x4xf32>
    %407 = arith.select %17, %361, %319 : vector<8x4xi1>, vector<8x4xf32>
    %408 = tpu.concatenate %400, %358, %406, %407, %402 in 0 : vector<32x4xf32>, vector<16x4xf32>, vector<8x4xf32>, vector<8x4xf32>, vector<8x4xf32> -> vector<72x4xf32>
    %409 = arith.index_cast %c3_i32 : i32 to index
    %c0_168 = arith.constant 0 : index
    %c0_169 = arith.constant 0 : index
    %410 = vector.load %arg18[%409, %c0_168, %c0_169] : memref<6x72x4xf32, #tpu.memory_space<vmem>>, vector<1x72x4xf32>
    %411 = vector.shape_cast %410 : vector<1x72x4xf32> to vector<72x4xf32>
    %412 = vector.shape_cast %408 : vector<72x4xf32> to vector<1x72x4xf32>
    tpu.vector_store %arg18[%409, %c0_168, %c0_169], %412 {strides = array<i32>} : memref<6x72x4xf32, #tpu.memory_space<vmem>>, vector<1x72x4xf32>,
    %c4_i32_170 = arith.constant 4 : i32
    %413 = arith.index_cast %c4_i32_170 : i32 to index
    %c0_171 = arith.constant 0 : index
    %c0_172 = arith.constant 0 : index
    %414 = vector.load %arg1[%413, %c0_171, %c0_172] : memref<6x24x4xf32, #tpu.memory_space<vmem>>, vector<1x24x4xf32>
    %415 = vector.shape_cast %414 : vector<1x24x4xf32> to vector<24x4xf32>
    %416 = vector.extract_strided_slice %415 {offsets = [0, 0], sizes = [16, 4], strides = [1, 1]} : vector<24x4xf32> to vector<16x4xf32>
    %417 = vector.extract_strided_slice %415 {offsets = [16, 0], sizes = [8, 4], strides = [1, 1]} : vector<24x4xf32> to vector<8x4xf32>
    %c0_173 = arith.constant 0 : index
    %c0_174 = arith.constant 0 : index
    %418 = vector.load %arg5[%c0_173, %c0_174] : memref<48x16xf32, #tpu.memory_space<vmem>>, vector<48x16xf32>
    %cst_175 = arith.constant dense<0.000000e+00> : vector<48x4xf32>
    %419 = tpu.matmul %418, %416, %cst_175 {dimension_numbers = #tpu.dot_dimension_numbers<[1], [0], [0], [1], [0, 0, 1, 1], [], []>} : vector<48x16xf32>, vector<16x4xf32>, vector<48x4xf32> -> vector<48x4xf32>
    %c0_176 = arith.constant 0 : index
    %c0_177 = arith.constant 0 : index
    %420 = vector.load %arg6[%c0_176, %c0_177] : memref<48x8xf32, #tpu.memory_space<vmem>>, vector<48x8xf32>
    %cst_178 = arith.constant dense<0.000000e+00> : vector<48x4xf32>
    %421 = tpu.matmul %420, %402, %cst_178 {dimension_numbers = #tpu.dot_dimension_numbers<[1], [0], [0], [1], [0, 0, 1, 1], [], []>} : vector<48x8xf32>, vector<8x4xf32>, vector<48x4xf32> -> vector<48x4xf32>
    %422 = arith.addf %419, %421 : vector<48x4xf32>
    %423 = arith.addf %422, %2 : vector<48x4xf32>
    %c0_179 = arith.constant 0 : index
    %c0_180 = arith.constant 0 : index
    %424 = vector.load %arg7[%c0_179, %c0_180] : memref<48x16xf32, #tpu.memory_space<vmem>>, vector<48x16xf32>
    %cst_181 = arith.constant dense<0.000000e+00> : vector<48x4xf32>
    %425 = tpu.matmul %424, %358, %cst_181 {dimension_numbers = #tpu.dot_dimension_numbers<[1], [0], [0], [1], [0, 0, 1, 1], [], []>} : vector<48x16xf32>, vector<16x4xf32>, vector<48x4xf32> -> vector<48x4xf32>
    %426 = vector.extract_strided_slice %423 {offsets = [0, 0], sizes = [16, 4], strides = [1, 1]} : vector<48x4xf32> to vector<16x4xf32>
    %427 = vector.extract_strided_slice %425 {offsets = [0, 0], sizes = [16, 4], strides = [1, 1]} : vector<48x4xf32> to vector<16x4xf32>
    %428 = arith.addf %426, %427 : vector<16x4xf32>
    %429 = arith.negf %428 : vector<16x4xf32>
    %430 = math.exp %429 : vector<16x4xf32>
    %cst_182 = arith.constant 1.000000e+00 : f32
    %431 = vector.broadcast %cst_182 : f32 to vector<16x4xf32>
    %432 = arith.addf %431, %430 : vector<16x4xf32>
    %433 = arith.divf %431, %432 : vector<16x4xf32>
    %434 = vector.extract_strided_slice %423 {offsets = [16, 0], sizes = [16, 4], strides = [1, 1]} : vector<48x4xf32> to vector<16x4xf32>
    %435 = vector.extract_strided_slice %425 {offsets = [16, 0], sizes = [16, 4], strides = [1, 1]} : vector<48x4xf32> to vector<16x4xf32>
    %436 = arith.addf %434, %435 : vector<16x4xf32>
    %437 = arith.negf %436 : vector<16x4xf32>
    %438 = math.exp %437 : vector<16x4xf32>
    %cst_183 = arith.constant 1.000000e+00 : f32
    %439 = vector.broadcast %cst_183 : f32 to vector<16x4xf32>
    %440 = arith.addf %439, %438 : vector<16x4xf32>
    %441 = arith.divf %439, %440 : vector<16x4xf32>
    %442 = vector.extract_strided_slice %423 {offsets = [32, 0], sizes = [16, 4], strides = [1, 1]} : vector<48x4xf32> to vector<16x4xf32>
    %443 = vector.extract_strided_slice %425 {offsets = [32, 0], sizes = [16, 4], strides = [1, 1]} : vector<48x4xf32> to vector<16x4xf32>
    %444 = arith.addf %443, %5 : vector<16x4xf32>
    %445 = arith.mulf %433, %444 : vector<16x4xf32>
    %446 = arith.addf %442, %445 : vector<16x4xf32>
    %447 = math.tanh %446 : vector<16x4xf32>
    %cst_184 = arith.constant 1.000000e+00 : f32
    %448 = vector.broadcast %cst_184 : f32 to vector<16x4xf32>
    %449 = arith.subf %448, %441 : vector<16x4xf32>
    %450 = arith.mulf %449, %447 : vector<16x4xf32>
    %451 = arith.mulf %441, %358 : vector<16x4xf32>
    %452 = arith.addf %450, %451 : vector<16x4xf32>
    %cst_185 = arith.constant -5.000000e+00 : f32
    %cst_186 = arith.constant 5.000000e+00 : f32
    %453 = vector.broadcast %cst_185 : f32 to vector<16x4xf32>
    %454 = arith.maximumf %453, %452 : vector<16x4xf32>
    %455 = vector.broadcast %cst_186 : f32 to vector<16x4xf32>
    %456 = arith.minimumf %455, %454 : vector<16x4xf32>
    %c0_187 = arith.constant 0 : index
    %c0_188 = arith.constant 0 : index
    %457 = vector.load %arg10[%c0_187, %c0_188] : memref<8x16xf32, #tpu.memory_space<vmem>>, vector<8x16xf32>
    %cst_189 = arith.constant dense<0.000000e+00> : vector<8x4xf32>
    %458 = tpu.matmul %457, %456, %cst_189 {dimension_numbers = #tpu.dot_dimension_numbers<[1], [0], [0], [1], [0, 0, 1, 1], [], []>} : vector<8x16xf32>, vector<16x4xf32>, vector<8x4xf32> -> vector<8x4xf32>
    %459 = arith.addf %458, %8 : vector<8x4xf32>
    %c0_190 = arith.constant 0 : index
    %c0_191 = arith.constant 0 : index
    %460 = vector.load %arg12[%c0_190, %c0_191] : memref<96x8xf32, #tpu.memory_space<vmem>>, vector<96x8xf32>
    %cst_192 = arith.constant dense<0.000000e+00> : vector<96x4xf32>
    %461 = tpu.matmul %460, %459, %cst_192 {dimension_numbers = #tpu.dot_dimension_numbers<[1], [0], [0], [1], [0, 0, 1, 1], [], []>} : vector<96x8xf32>, vector<8x4xf32>, vector<96x4xf32> -> vector<96x4xf32>
    %c0_193 = arith.constant 0 : index
    %c0_194 = arith.constant 0 : index
    %462 = vector.load %arg13[%c0_193, %c0_194] : memref<96x8xf32, #tpu.memory_space<vmem>>, vector<96x8xf32>
    %cst_195 = arith.constant dense<0.000000e+00> : vector<96x4xf32>
    %463 = tpu.matmul %462, %417, %cst_195 {dimension_numbers = #tpu.dot_dimension_numbers<[1], [0], [0], [1], [0, 0, 1, 1], [], []>} : vector<96x8xf32>, vector<8x4xf32>, vector<96x4xf32> -> vector<96x4xf32>
    %464 = arith.addf %461, %463 : vector<96x4xf32>
    %465 = arith.addf %464, %11 : vector<96x4xf32>
    %c0_196 = arith.constant 0 : index
    %c0_197 = arith.constant 0 : index
    %466 = vector.load %arg14[%c0_196, %c0_197] : memref<96x32xf32, #tpu.memory_space<vmem>>, vector<96x32xf32>
    %cst_198 = arith.constant dense<0.000000e+00> : vector<96x4xf32>
    %467 = tpu.matmul %466, %400, %cst_198 {dimension_numbers = #tpu.dot_dimension_numbers<[1], [0], [0], [1], [0, 0, 1, 1], [], []>} : vector<96x32xf32>, vector<32x4xf32>, vector<96x4xf32> -> vector<96x4xf32>
    %468 = vector.extract_strided_slice %465 {offsets = [0, 0], sizes = [32, 4], strides = [1, 1]} : vector<96x4xf32> to vector<32x4xf32>
    %469 = vector.extract_strided_slice %467 {offsets = [0, 0], sizes = [32, 4], strides = [1, 1]} : vector<96x4xf32> to vector<32x4xf32>
    %470 = arith.addf %468, %469 : vector<32x4xf32>
    %471 = arith.negf %470 : vector<32x4xf32>
    %472 = math.exp %471 : vector<32x4xf32>
    %cst_199 = arith.constant 1.000000e+00 : f32
    %473 = vector.broadcast %cst_199 : f32 to vector<32x4xf32>
    %474 = arith.addf %473, %472 : vector<32x4xf32>
    %475 = arith.divf %473, %474 : vector<32x4xf32>
    %476 = vector.extract_strided_slice %465 {offsets = [32, 0], sizes = [32, 4], strides = [1, 1]} : vector<96x4xf32> to vector<32x4xf32>
    %477 = vector.extract_strided_slice %467 {offsets = [32, 0], sizes = [32, 4], strides = [1, 1]} : vector<96x4xf32> to vector<32x4xf32>
    %478 = arith.addf %476, %477 : vector<32x4xf32>
    %479 = arith.negf %478 : vector<32x4xf32>
    %480 = math.exp %479 : vector<32x4xf32>
    %cst_200 = arith.constant 1.000000e+00 : f32
    %481 = vector.broadcast %cst_200 : f32 to vector<32x4xf32>
    %482 = arith.addf %481, %480 : vector<32x4xf32>
    %483 = arith.divf %481, %482 : vector<32x4xf32>
    %484 = vector.extract_strided_slice %465 {offsets = [64, 0], sizes = [32, 4], strides = [1, 1]} : vector<96x4xf32> to vector<32x4xf32>
    %485 = vector.extract_strided_slice %467 {offsets = [64, 0], sizes = [32, 4], strides = [1, 1]} : vector<96x4xf32> to vector<32x4xf32>
    %486 = arith.addf %485, %14 : vector<32x4xf32>
    %487 = arith.mulf %475, %486 : vector<32x4xf32>
    %488 = arith.addf %484, %487 : vector<32x4xf32>
    %489 = math.tanh %488 : vector<32x4xf32>
    %cst_201 = arith.constant 1.000000e+00 : f32
    %490 = vector.broadcast %cst_201 : f32 to vector<32x4xf32>
    %491 = arith.subf %490, %483 : vector<32x4xf32>
    %492 = arith.mulf %491, %489 : vector<32x4xf32>
    %493 = arith.mulf %483, %400 : vector<32x4xf32>
    %494 = arith.addf %492, %493 : vector<32x4xf32>
    %cst_202 = arith.constant -5.000000e+00 : f32
    %cst_203 = arith.constant 5.000000e+00 : f32
    %495 = vector.broadcast %cst_202 : f32 to vector<32x4xf32>
    %496 = arith.maximumf %495, %494 : vector<32x4xf32>
    %497 = vector.broadcast %cst_203 : f32 to vector<32x4xf32>
    %498 = arith.minimumf %497, %496 : vector<32x4xf32>
    %c0_204 = arith.constant 0 : index
    %c0_205 = arith.constant 0 : index
    %499 = vector.load %arg17[%c0_204, %c0_205] : memref<8x32xf32, #tpu.memory_space<vmem>>, vector<8x32xf32>
    %cst_206 = arith.constant dense<0.000000e+00> : vector<8x4xf32>
    %500 = tpu.matmul %499, %498, %cst_206 {dimension_numbers = #tpu.dot_dimension_numbers<[1], [0], [0], [1], [0, 0, 1, 1], [], []>} : vector<8x32xf32>, vector<32x4xf32>, vector<8x4xf32> -> vector<8x4xf32>
    %cst_207 = arith.constant 5.000000e-01 : f32
    %501 = vector.broadcast %cst_207 : f32 to vector<8x4xf32>
    %502 = arith.mulf %501, %459 : vector<8x4xf32>
    %503 = math.exp %502 : vector<8x4xf32>
    %504 = arith.select %17, %459, %503 : vector<8x4xi1>, vector<8x4xf32>
    %505 = arith.select %17, %459, %417 : vector<8x4xi1>, vector<8x4xf32>
    %506 = tpu.concatenate %498, %456, %504, %505, %500 in 0 : vector<32x4xf32>, vector<16x4xf32>, vector<8x4xf32>, vector<8x4xf32>, vector<8x4xf32> -> vector<72x4xf32>
    %507 = arith.index_cast %c4_i32_170 : i32 to index
    %c0_208 = arith.constant 0 : index
    %c0_209 = arith.constant 0 : index
    %508 = vector.load %arg18[%507, %c0_208, %c0_209] : memref<6x72x4xf32, #tpu.memory_space<vmem>>, vector<1x72x4xf32>
    %509 = vector.shape_cast %508 : vector<1x72x4xf32> to vector<72x4xf32>
    %510 = vector.shape_cast %506 : vector<72x4xf32> to vector<1x72x4xf32>
    tpu.vector_store %arg18[%507, %c0_208, %c0_209], %510 {strides = array<i32>} : memref<6x72x4xf32, #tpu.memory_space<vmem>>, vector<1x72x4xf32>,
    %c5_i32 = arith.constant 5 : i32
    %511 = arith.index_cast %c5_i32 : i32 to index
    %c0_210 = arith.constant 0 : index
    %c0_211 = arith.constant 0 : index
    %512 = vector.load %arg1[%511, %c0_210, %c0_211] : memref<6x24x4xf32, #tpu.memory_space<vmem>>, vector<1x24x4xf32>
    %513 = vector.shape_cast %512 : vector<1x24x4xf32> to vector<24x4xf32>
    %514 = vector.extract_strided_slice %513 {offsets = [0, 0], sizes = [16, 4], strides = [1, 1]} : vector<24x4xf32> to vector<16x4xf32>
    %515 = vector.extract_strided_slice %513 {offsets = [16, 0], sizes = [8, 4], strides = [1, 1]} : vector<24x4xf32> to vector<8x4xf32>
    %c0_212 = arith.constant 0 : index
    %c0_213 = arith.constant 0 : index
    %516 = vector.load %arg5[%c0_212, %c0_213] : memref<48x16xf32, #tpu.memory_space<vmem>>, vector<48x16xf32>
    %cst_214 = arith.constant dense<0.000000e+00> : vector<48x4xf32>
    %517 = tpu.matmul %516, %514, %cst_214 {dimension_numbers = #tpu.dot_dimension_numbers<[1], [0], [0], [1], [0, 0, 1, 1], [], []>} : vector<48x16xf32>, vector<16x4xf32>, vector<48x4xf32> -> vector<48x4xf32>
    %c0_215 = arith.constant 0 : index
    %c0_216 = arith.constant 0 : index
    %518 = vector.load %arg6[%c0_215, %c0_216] : memref<48x8xf32, #tpu.memory_space<vmem>>, vector<48x8xf32>
    %cst_217 = arith.constant dense<0.000000e+00> : vector<48x4xf32>
    %519 = tpu.matmul %518, %500, %cst_217 {dimension_numbers = #tpu.dot_dimension_numbers<[1], [0], [0], [1], [0, 0, 1, 1], [], []>} : vector<48x8xf32>, vector<8x4xf32>, vector<48x4xf32> -> vector<48x4xf32>
    %520 = arith.addf %517, %519 : vector<48x4xf32>
    %521 = arith.addf %520, %2 : vector<48x4xf32>
    %c0_218 = arith.constant 0 : index
    %c0_219 = arith.constant 0 : index
    %522 = vector.load %arg7[%c0_218, %c0_219] : memref<48x16xf32, #tpu.memory_space<vmem>>, vector<48x16xf32>
    %cst_220 = arith.constant dense<0.000000e+00> : vector<48x4xf32>
    %523 = tpu.matmul %522, %456, %cst_220 {dimension_numbers = #tpu.dot_dimension_numbers<[1], [0], [0], [1], [0, 0, 1, 1], [], []>} : vector<48x16xf32>, vector<16x4xf32>, vector<48x4xf32> -> vector<48x4xf32>
    %524 = vector.extract_strided_slice %521 {offsets = [0, 0], sizes = [16, 4], strides = [1, 1]} : vector<48x4xf32> to vector<16x4xf32>
    %525 = vector.extract_strided_slice %523 {offsets = [0, 0], sizes = [16, 4], strides = [1, 1]} : vector<48x4xf32> to vector<16x4xf32>
    %526 = arith.addf %524, %525 : vector<16x4xf32>
    %527 = arith.negf %526 : vector<16x4xf32>
    %528 = math.exp %527 : vector<16x4xf32>
    %cst_221 = arith.constant 1.000000e+00 : f32
    %529 = vector.broadcast %cst_221 : f32 to vector<16x4xf32>
    %530 = arith.addf %529, %528 : vector<16x4xf32>
    %531 = arith.divf %529, %530 : vector<16x4xf32>
    %532 = vector.extract_strided_slice %521 {offsets = [16, 0], sizes = [16, 4], strides = [1, 1]} : vector<48x4xf32> to vector<16x4xf32>
    %533 = vector.extract_strided_slice %523 {offsets = [16, 0], sizes = [16, 4], strides = [1, 1]} : vector<48x4xf32> to vector<16x4xf32>
    %534 = arith.addf %532, %533 : vector<16x4xf32>
    %535 = arith.negf %534 : vector<16x4xf32>
    %536 = math.exp %535 : vector<16x4xf32>
    %cst_222 = arith.constant 1.000000e+00 : f32
    %537 = vector.broadcast %cst_222 : f32 to vector<16x4xf32>
    %538 = arith.addf %537, %536 : vector<16x4xf32>
    %539 = arith.divf %537, %538 : vector<16x4xf32>
    %540 = vector.extract_strided_slice %521 {offsets = [32, 0], sizes = [16, 4], strides = [1, 1]} : vector<48x4xf32> to vector<16x4xf32>
    %541 = vector.extract_strided_slice %523 {offsets = [32, 0], sizes = [16, 4], strides = [1, 1]} : vector<48x4xf32> to vector<16x4xf32>
    %542 = arith.addf %541, %5 : vector<16x4xf32>
    %543 = arith.mulf %531, %542 : vector<16x4xf32>
    %544 = arith.addf %540, %543 : vector<16x4xf32>
    %545 = math.tanh %544 : vector<16x4xf32>
    %cst_223 = arith.constant 1.000000e+00 : f32
    %546 = vector.broadcast %cst_223 : f32 to vector<16x4xf32>
    %547 = arith.subf %546, %539 : vector<16x4xf32>
    %548 = arith.mulf %547, %545 : vector<16x4xf32>
    %549 = arith.mulf %539, %456 : vector<16x4xf32>
    %550 = arith.addf %548, %549 : vector<16x4xf32>
    %cst_224 = arith.constant -5.000000e+00 : f32
    %cst_225 = arith.constant 5.000000e+00 : f32
    %551 = vector.broadcast %cst_224 : f32 to vector<16x4xf32>
    %552 = arith.maximumf %551, %550 : vector<16x4xf32>
    %553 = vector.broadcast %cst_225 : f32 to vector<16x4xf32>
    %554 = arith.minimumf %553, %552 : vector<16x4xf32>
    %c0_226 = arith.constant 0 : index
    %c0_227 = arith.constant 0 : index
    %555 = vector.load %arg10[%c0_226, %c0_227] : memref<8x16xf32, #tpu.memory_space<vmem>>, vector<8x16xf32>
    %cst_228 = arith.constant dense<0.000000e+00> : vector<8x4xf32>
    %556 = tpu.matmul %555, %554, %cst_228 {dimension_numbers = #tpu.dot_dimension_numbers<[1], [0], [0], [1], [0, 0, 1, 1], [], []>} : vector<8x16xf32>, vector<16x4xf32>, vector<8x4xf32> -> vector<8x4xf32>
    %557 = arith.addf %556, %8 : vector<8x4xf32>
    %c0_229 = arith.constant 0 : index
    %c0_230 = arith.constant 0 : index
    %558 = vector.load %arg12[%c0_229, %c0_230] : memref<96x8xf32, #tpu.memory_space<vmem>>, vector<96x8xf32>
    %cst_231 = arith.constant dense<0.000000e+00> : vector<96x4xf32>
    %559 = tpu.matmul %558, %557, %cst_231 {dimension_numbers = #tpu.dot_dimension_numbers<[1], [0], [0], [1], [0, 0, 1, 1], [], []>} : vector<96x8xf32>, vector<8x4xf32>, vector<96x4xf32> -> vector<96x4xf32>
    %c0_232 = arith.constant 0 : index
    %c0_233 = arith.constant 0 : index
    %560 = vector.load %arg13[%c0_232, %c0_233] : memref<96x8xf32, #tpu.memory_space<vmem>>, vector<96x8xf32>
    %cst_234 = arith.constant dense<0.000000e+00> : vector<96x4xf32>
    %561 = tpu.matmul %560, %515, %cst_234 {dimension_numbers = #tpu.dot_dimension_numbers<[1], [0], [0], [1], [0, 0, 1, 1], [], []>} : vector<96x8xf32>, vector<8x4xf32>, vector<96x4xf32> -> vector<96x4xf32>
    %562 = arith.addf %559, %561 : vector<96x4xf32>
    %563 = arith.addf %562, %11 : vector<96x4xf32>
    %c0_235 = arith.constant 0 : index
    %c0_236 = arith.constant 0 : index
    %564 = vector.load %arg14[%c0_235, %c0_236] : memref<96x32xf32, #tpu.memory_space<vmem>>, vector<96x32xf32>
    %cst_237 = arith.constant dense<0.000000e+00> : vector<96x4xf32>
    %565 = tpu.matmul %564, %498, %cst_237 {dimension_numbers = #tpu.dot_dimension_numbers<[1], [0], [0], [1], [0, 0, 1, 1], [], []>} : vector<96x32xf32>, vector<32x4xf32>, vector<96x4xf32> -> vector<96x4xf32>
    %566 = vector.extract_strided_slice %563 {offsets = [0, 0], sizes = [32, 4], strides = [1, 1]} : vector<96x4xf32> to vector<32x4xf32>
    %567 = vector.extract_strided_slice %565 {offsets = [0, 0], sizes = [32, 4], strides = [1, 1]} : vector<96x4xf32> to vector<32x4xf32>
    %568 = arith.addf %566, %567 : vector<32x4xf32>
    %569 = arith.negf %568 : vector<32x4xf32>
    %570 = math.exp %569 : vector<32x4xf32>
    %cst_238 = arith.constant 1.000000e+00 : f32
    %571 = vector.broadcast %cst_238 : f32 to vector<32x4xf32>
    %572 = arith.addf %571, %570 : vector<32x4xf32>
    %573 = arith.divf %571, %572 : vector<32x4xf32>
    %574 = vector.extract_strided_slice %563 {offsets = [32, 0], sizes = [32, 4], strides = [1, 1]} : vector<96x4xf32> to vector<32x4xf32>
    %575 = vector.extract_strided_slice %565 {offsets = [32, 0], sizes = [32, 4], strides = [1, 1]} : vector<96x4xf32> to vector<32x4xf32>
    %576 = arith.addf %574, %575 : vector<32x4xf32>
    %577 = arith.negf %576 : vector<32x4xf32>
    %578 = math.exp %577 : vector<32x4xf32>
    %cst_239 = arith.constant 1.000000e+00 : f32
    %579 = vector.broadcast %cst_239 : f32 to vector<32x4xf32>
    %580 = arith.addf %579, %578 : vector<32x4xf32>
    %581 = arith.divf %579, %580 : vector<32x4xf32>
    %582 = vector.extract_strided_slice %563 {offsets = [64, 0], sizes = [32, 4], strides = [1, 1]} : vector<96x4xf32> to vector<32x4xf32>
    %583 = vector.extract_strided_slice %565 {offsets = [64, 0], sizes = [32, 4], strides = [1, 1]} : vector<96x4xf32> to vector<32x4xf32>
    %584 = arith.addf %583, %14 : vector<32x4xf32>
    %585 = arith.mulf %573, %584 : vector<32x4xf32>
    %586 = arith.addf %582, %585 : vector<32x4xf32>
    %587 = math.tanh %586 : vector<32x4xf32>
    %cst_240 = arith.constant 1.000000e+00 : f32
    %588 = vector.broadcast %cst_240 : f32 to vector<32x4xf32>
    %589 = arith.subf %588, %581 : vector<32x4xf32>
    %590 = arith.mulf %589, %587 : vector<32x4xf32>
    %591 = arith.mulf %581, %498 : vector<32x4xf32>
    %592 = arith.addf %590, %591 : vector<32x4xf32>
    %cst_241 = arith.constant -5.000000e+00 : f32
    %cst_242 = arith.constant 5.000000e+00 : f32
    %593 = vector.broadcast %cst_241 : f32 to vector<32x4xf32>
    %594 = arith.maximumf %593, %592 : vector<32x4xf32>
    %595 = vector.broadcast %cst_242 : f32 to vector<32x4xf32>
    %596 = arith.minimumf %595, %594 : vector<32x4xf32>
    %c0_243 = arith.constant 0 : index
    %c0_244 = arith.constant 0 : index
    %597 = vector.load %arg17[%c0_243, %c0_244] : memref<8x32xf32, #tpu.memory_space<vmem>>, vector<8x32xf32>
    %cst_245 = arith.constant dense<0.000000e+00> : vector<8x4xf32>
    %598 = tpu.matmul %597, %596, %cst_245 {dimension_numbers = #tpu.dot_dimension_numbers<[1], [0], [0], [1], [0, 0, 1, 1], [], []>} : vector<8x32xf32>, vector<32x4xf32>, vector<8x4xf32> -> vector<8x4xf32>
    %cst_246 = arith.constant 5.000000e-01 : f32
    %599 = vector.broadcast %cst_246 : f32 to vector<8x4xf32>
    %600 = arith.mulf %599, %557 : vector<8x4xf32>
    %601 = math.exp %600 : vector<8x4xf32>
    %602 = arith.select %17, %557, %601 : vector<8x4xi1>, vector<8x4xf32>
    %603 = arith.select %17, %557, %515 : vector<8x4xi1>, vector<8x4xf32>
    %604 = tpu.concatenate %596, %554, %602, %603, %598 in 0 : vector<32x4xf32>, vector<16x4xf32>, vector<8x4xf32>, vector<8x4xf32>, vector<8x4xf32> -> vector<72x4xf32>
    %605 = arith.index_cast %c5_i32 : i32 to index
    %c0_247 = arith.constant 0 : index
    %c0_248 = arith.constant 0 : index
    %606 = vector.load %arg18[%605, %c0_247, %c0_248] : memref<6x72x4xf32, #tpu.memory_space<vmem>>, vector<1x72x4xf32>
    %607 = vector.shape_cast %606 : vector<1x72x4xf32> to vector<72x4xf32>
    %608 = vector.shape_cast %604 : vector<72x4xf32> to vector<1x72x4xf32>
    tpu.vector_store %arg18[%605, %c0_247, %c0_248], %608 {strides = array<i32>} : memref<6x72x4xf32, #tpu.memory_space<vmem>>, vector<1x72x4xf32>,
    %c6_i32 = arith.constant 6 : i32
    return
  }
  func.func @transform_0(%arg0: i32) -> (i32, i32, i32) {
    %c0_i32 = arith.constant 0 : i32
    %c0_i32_0 = arith.constant 0 : i32
    %c0_i32_1 = arith.constant 0 : i32
    return %c0_i32, %c0_i32_0, %arg0 : i32, i32, i32
  }
  func.func @transform_1(%arg0: i32) -> (i32, i32) {
    %c0_i32 = arith.constant 0 : i32
    %c0_i32_0 = arith.constant 0 : i32
    return %c0_i32, %arg0 : i32, i32
  }
  func.func @transform_2(%arg0: i32) -> (i32, i32) {
    %c0_i32 = arith.constant 0 : i32
    %c0_i32_0 = arith.constant 0 : i32
    return %c0_i32, %arg0 : i32, i32
  }
  func.func @transform_3(%arg0: i32) -> (i32, i32) {
    %c0_i32 = arith.constant 0 : i32
    %c0_i32_0 = arith.constant 0 : i32
    return %c0_i32, %arg0 : i32, i32
  }
  func.func @transform_4(%arg0: i32) -> (i32, i32) {
    %c0_i32 = arith.constant 0 : i32
    %c0_i32_0 = arith.constant 0 : i32
    %c0_i32_1 = arith.constant 0 : i32
    return %c0_i32, %c0_i32_0 : i32, i32
  }
  func.func @transform_5(%arg0: i32) -> (i32, i32) {
    %c0_i32 = arith.constant 0 : i32
    %c0_i32_0 = arith.constant 0 : i32
    %c0_i32_1 = arith.constant 0 : i32
    return %c0_i32, %c0_i32_0 : i32, i32
  }
  func.func @transform_6(%arg0: i32) -> (i32, i32) {
    %c0_i32 = arith.constant 0 : i32
    %c0_i32_0 = arith.constant 0 : i32
    %c0_i32_1 = arith.constant 0 : i32
    return %c0_i32, %c0_i32_0 : i32, i32
  }
  func.func @transform_7(%arg0: i32) -> (i32, i32) {
    %c0_i32 = arith.constant 0 : i32
    %c0_i32_0 = arith.constant 0 : i32
    %c0_i32_1 = arith.constant 0 : i32
    return %c0_i32, %c0_i32_0 : i32, i32
  }
  func.func @transform_8(%arg0: i32) -> (i32, i32) {
    %c0_i32 = arith.constant 0 : i32
    %c0_i32_0 = arith.constant 0 : i32
    %c0_i32_1 = arith.constant 0 : i32
    return %c0_i32, %c0_i32_0 : i32, i32
  }
  func.func @transform_9(%arg0: i32) -> (i32, i32) {
    %c0_i32 = arith.constant 0 : i32
    %c0_i32_0 = arith.constant 0 : i32
    %c0_i32_1 = arith.constant 0 : i32
    return %c0_i32, %c0_i32_0 : i32, i32
  }
  func.func @transform_10(%arg0: i32) -> (i32, i32) {
    %c0_i32 = arith.constant 0 : i32
    %c0_i32_0 = arith.constant 0 : i32
    %c0_i32_1 = arith.constant 0 : i32
    return %c0_i32, %c0_i32_0 : i32, i32
  }
  func.func @transform_11(%arg0: i32) -> (i32, i32) {
    %c0_i32 = arith.constant 0 : i32
    %c0_i32_0 = arith.constant 0 : i32
    %c0_i32_1 = arith.constant 0 : i32
    return %c0_i32, %c0_i32_0 : i32, i32
  }
  func.func @transform_12(%arg0: i32) -> (i32, i32) {
    %c0_i32 = arith.constant 0 : i32
    %c0_i32_0 = arith.constant 0 : i32
    %c0_i32_1 = arith.constant 0 : i32
    return %c0_i32, %c0_i32_0 : i32, i32
  }
  func.func @transform_13(%arg0: i32) -> (i32, i32) {
    %c0_i32 = arith.constant 0 : i32
    %c0_i32_0 = arith.constant 0 : i32
    %c0_i32_1 = arith.constant 0 : i32
    return %c0_i32, %c0_i32_0 : i32, i32
  }
  func.func @transform_14(%arg0: i32) -> (i32, i32) {
    %c0_i32 = arith.constant 0 : i32
    %c0_i32_0 = arith.constant 0 : i32
    %c0_i32_1 = arith.constant 0 : i32
    return %c0_i32, %c0_i32_0 : i32, i32
  }
  func.func @transform_15(%arg0: i32) -> (i32, i32) {
    %c0_i32 = arith.constant 0 : i32
    %c0_i32_0 = arith.constant 0 : i32
    %c0_i32_1 = arith.constant 0 : i32
    return %c0_i32, %c0_i32_0 : i32, i32
  }
  func.func @transform_16(%arg0: i32) -> (i32, i32) {
    %c0_i32 = arith.constant 0 : i32
    %c0_i32_0 = arith.constant 0 : i32
    %c0_i32_1 = arith.constant 0 : i32
    return %c0_i32, %c0_i32_0 : i32, i32
  }
  func.func @transform_17(%arg0: i32) -> (i32, i32, i32) {
    %c0_i32 = arith.constant 0 : i32
    %c0_i32_0 = arith.constant 0 : i32
    %c0_i32_1 = arith.constant 0 : i32
    return %c0_i32, %c0_i32_0, %arg0 : i32, i32, i32
  }
}

</mosaic_0001>

<llo_original>
// kernel: tpu_custom_call.1
$region0: #{tpu_custom_call.1}
  #allocation0 [shape = 'u32[]', space=smem, size = 0x4, offset = 0x4, fixed_abs, tag = 'smem constant byte address 0x4 - core index']
  #allocation1 [shape = 'u32[144,128]{1,0:T(1,128)}', space=vmem, size = 0x12000, scoped, tag = 'internal scratch']
  %s0 = inlined_call_operand.vmem [shape: f32[6,24,4], index: 0, kind: input, shape index: {}]
  %s1 = inlined_call_operand.vmem [shape: f32[32,4], index: 1, kind: input, shape index: {}]
  %s2 = inlined_call_operand.vmem [shape: f32[16,4], index: 2, kind: input, shape index: {}]
  %s3 = inlined_call_operand.vmem [shape: f32[8,4], index: 3, kind: input, shape index: {}]
  %s4 = inlined_call_operand.vmem [shape: f32[48,16], index: 4, kind: input, shape index: {}]
  %s5 = inlined_call_operand.vmem [shape: f32[48,8], index: 5, kind: input, shape index: {}]
  %s6 = inlined_call_operand.vmem [shape: f32[48,16], index: 6, kind: input, shape index: {}]
  %s7 = inlined_call_operand.vmem [shape: f32[48,1], index: 7, kind: input, shape index: {}]
  %s8 = inlined_call_operand.vmem [shape: f32[16,1], index: 8, kind: input, shape index: {}]
  %s9 = inlined_call_operand.vmem [shape: f32[8,16], index: 9, kind: input, shape index: {}]
  %s10 = inlined_call_operand.vmem [shape: f32[8,1], index: 10, kind: input, shape index: {}]
  %s11 = inlined_call_operand.vmem [shape: f32[96,8], index: 11, kind: input, shape index: {}]
  %s12 = inlined_call_operand.vmem [shape: f32[96,8], index: 12, kind: input, shape index: {}]
  %s13 = inlined_call_operand.vmem [shape: f32[96,32], index: 13, kind: input, shape index: {}]
  %s14 = inlined_call_operand.vmem [shape: f32[96,1], index: 14, kind: input, shape index: {}]
  %s15 = inlined_call_operand.vmem [shape: f32[32,1], index: 15, kind: input, shape index: {}]
  %s16 = inlined_call_operand.vmem [shape: f32[8,32], index: 16, kind: input, shape index: {}]
  %s17 = inlined_call_operand.vmem [shape: f32[6,72,4], index: 17, kind: output, shape index: {}]
  %s18 = sld [smem:[#allocation0]]
  $region78: #{tpu_custom_call.1} parent=0
    _
  %s20 = ssub.s32 1, %s18
  %s21 = scalar_select 0, %s20, %s18
  // Predicated region
  $region2: #{tpu_custom_call.1} parent=0 // pred_check
    _
  $region3: #{tpu_custom_call.1} parent=0 // pred_check_branch
    %23 = sbr.rel (0) target = $region5
  $region4: #{tpu_custom_call.1} parent=0 // pred_region
    _
  $region5: #{tpu_custom_call.1} parent=0 // pred_fallthru
    _
  // Predicated region
  $region6: #{tpu_custom_call.1} parent=0 // pred_check
    _
  $region7: #{tpu_custom_call.1} parent=0 // pred_check_branch
    %25 = sbr.rel (0) target = $region9
  $region8: #{tpu_custom_call.1} parent=0 // pred_region
    _
  $region9: #{tpu_custom_call.1} parent=0 // pred_fallthru
    _
  // Predicated region
  $region10: #{tpu_custom_call.1} parent=0 // pred_check
    _
  $region11: #{tpu_custom_call.1} parent=0 // pred_check_branch
    %27 = sbr.rel (0) target = $region13
  $region12: #{tpu_custom_call.1} parent=0 // pred_region
    _
  $region13: #{tpu_custom_call.1} parent=0 // pred_fallthru
    _
  // Predicated region
  $region14: #{tpu_custom_call.1} parent=0 // pred_check
    _
  $region15: #{tpu_custom_call.1} parent=0 // pred_check_branch
    %29 = sbr.rel (0) target = $region17
  $region16: #{tpu_custom_call.1} parent=0 // pred_region
    _
  $region17: #{tpu_custom_call.1} parent=0 // pred_fallthru
    _
  // Predicated region
  $region18: #{tpu_custom_call.1} parent=0 // pred_check
    _
  $region19: #{tpu_custom_call.1} parent=0 // pred_check_branch
    %31 = sbr.rel (0) target = $region21
  $region20: #{tpu_custom_call.1} parent=0 // pred_region
    _
  $region21: #{tpu_custom_call.1} parent=0 // pred_fallthru
    _
  // Predicated region
  $region22: #{tpu_custom_call.1} parent=0 // pred_check
    _
  $region23: #{tpu_custom_call.1} parent=0 // pred_check_branch
    %33 = sbr.rel (0) target = $region25
  $region24: #{tpu_custom_call.1} parent=0 // pred_region
    _
  $region25: #{tpu_custom_call.1} parent=0 // pred_fallthru
    _
  // Predicated region
  $region26: #{tpu_custom_call.1} parent=0 // pred_check
    _
  $region27: #{tpu_custom_call.1} parent=0 // pred_check_branch
    %35 = sbr.rel (0) target = $region29
  $region28: #{tpu_custom_call.1} parent=0 // pred_region
    _
  $region29: #{tpu_custom_call.1} parent=0 // pred_fallthru
    _
  // Predicated region
  $region30: #{tpu_custom_call.1} parent=0 // pred_check
    _
  $region31: #{tpu_custom_call.1} parent=0 // pred_check_branch
    %37 = sbr.rel (0) target = $region33
  $region32: #{tpu_custom_call.1} parent=0 // pred_region
    _
  $region33: #{tpu_custom_call.1} parent=0 // pred_fallthru
    _
  // Predicated region
  $region34: #{tpu_custom_call.1} parent=0 // pred_check
    _
  $region35: #{tpu_custom_call.1} parent=0 // pred_check_branch
    %39 = sbr.rel (0) target = $region37
  $region36: #{tpu_custom_call.1} parent=0 // pred_region
    _
  $region37: #{tpu_custom_call.1} parent=0 // pred_fallthru
    _
  // Predicated region
  $region38: #{tpu_custom_call.1} parent=0 // pred_check
    _
  $region39: #{tpu_custom_call.1} parent=0 // pred_check_branch
    %41 = sbr.rel (0) target = $region41
  $region40: #{tpu_custom_call.1} parent=0 // pred_region
    _
  $region41: #{tpu_custom_call.1} parent=0 // pred_fallthru
    _
  // Predicated region
  $region42: #{tpu_custom_call.1} parent=0 // pred_check
    _
  $region43: #{tpu_custom_call.1} parent=0 // pred_check_branch
    %43 = sbr.rel (0) target = $region45
  $region44: #{tpu_custom_call.1} parent=0 // pred_region
    _
  $region45: #{tpu_custom_call.1} parent=0 // pred_fallthru
    _
  // Predicated region
  $region46: #{tpu_custom_call.1} parent=0 // pred_check
    _
  $region47: #{tpu_custom_call.1} parent=0 // pred_check_branch
    %45 = sbr.rel (0) target = $region49
  $region48: #{tpu_custom_call.1} parent=0 // pred_region
    _
  $region49: #{tpu_custom_call.1} parent=0 // pred_fallthru
    _
  // Predicated region
  $region50: #{tpu_custom_call.1} parent=0 // pred_check
    _
  $region51: #{tpu_custom_call.1} parent=0 // pred_check_branch
    %47 = sbr.rel (0) target = $region53
  $region52: #{tpu_custom_call.1} parent=0 // pred_region
    _
  $region53: #{tpu_custom_call.1} parent=0 // pred_fallthru
    _
  // Predicated region
  $region54: #{tpu_custom_call.1} parent=0 // pred_check
    _
  $region55: #{tpu_custom_call.1} parent=0 // pred_check_branch
    %49 = sbr.rel (0) target = $region57
  $region56: #{tpu_custom_call.1} parent=0 // pred_region
    _
  $region57: #{tpu_custom_call.1} parent=0 // pred_fallthru
    _
  // Predicated region
  $region58: #{tpu_custom_call.1} parent=0 // pred_check
    _
  $region59: #{tpu_custom_call.1} parent=0 // pred_check_branch
    %51 = sbr.rel (0) target = $region61
  $region60: #{tpu_custom_call.1} parent=0 // pred_region
    _
  $region61: #{tpu_custom_call.1} parent=0 // pred_fallthru
    _
  // Predicated region
  $region62: #{tpu_custom_call.1} parent=0 // pred_check
    _
  $region63: #{tpu_custom_call.1} parent=0 // pred_check_branch
    %53 = sbr.rel (0) target = $region65
  $region64: #{tpu_custom_call.1} parent=0 // pred_region
    _
  $region65: #{tpu_custom_call.1} parent=0 // pred_fallthru
    _
  // Predicated region
  $region66: #{tpu_custom_call.1} parent=0 // pred_check
    _
  $region67: #{tpu_custom_call.1} parent=0 // pred_check_branch
    %55 = sbr.rel (0) target = $region69
  $region68: #{tpu_custom_call.1} parent=0 // pred_region
    _
  $region69: #{tpu_custom_call.1} parent=0 // pred_fallthru
    _
  %v56 = vld [vmem:[%s7] sm:$0xff]
  %v57 = vld [vmem:[%s7 + $0x8] sm:$0xff]
  %v58 = vld [vmem:[%s7 + $0x10] sm:$0xff]
  %v59 = vld [vmem:[%s7 + $0x18] sm:$0xff]
  %v60 = vld [vmem:[%s7 + $0x20] sm:$0xff]
  %v61 = vld [vmem:[%s7 + $0x28] sm:$0xff]
  %63 = vset.pattern.permute.xlu0 0
  %64 = vperm.xlu0 %63, %v56
  %v65 = vpop.permute.xlu0 %64
  %68 = vset.pattern.permute.xlu0 0
  %69 = vperm.xlu0 %68, %v57
  %v70 = vpop.permute.xlu0 %69
  %73 = vset.pattern.permute.xlu0 0
  %74 = vperm.xlu0 %73, %v58
  %v75 = vpop.permute.xlu0 %74
  %78 = vset.pattern.permute.xlu0 0
  %79 = vperm.xlu0 %78, %v59
  %v80 = vpop.permute.xlu0 %79
  %83 = vset.pattern.permute.xlu0 0
  %84 = vperm.xlu0 %83, %v60
  %v85 = vpop.permute.xlu0 %84
  %88 = vset.pattern.permute.xlu0 0
  %89 = vperm.xlu0 %88, %v61
  %v90 = vpop.permute.xlu0 %89
  %v92 = vld [vmem:[%s8] sm:$0xff]
  %v93 = vld [vmem:[%s8 + $0x8] sm:$0xff]
  %95 = vset.pattern.permute.xlu0 0
  %96 = vperm.xlu0 %95, %v92
  %v97 = vpop.permute.xlu0 %96
  %100 = vset.pattern.permute.xlu0 0
  %101 = vperm.xlu0 %100, %v93
  %v102 = vpop.permute.xlu0 %101
  %v104 = vld [vmem:[%s10] sm:$0xff]
  %106 = vset.pattern.permute.xlu0 0
  %107 = vperm.xlu0 %106, %v104
  %v108 = vpop.permute.xlu0 %107
  %v110 = vld [vmem:[%s14] sm:$0xff]
  %v111 = vld [vmem:[%s14 + $0x8] sm:$0xff]
  %v112 = vld [vmem:[%s14 + $0x10] sm:$0xff]
  %v113 = vld [vmem:[%s14 + $0x18] sm:$0xff]
  %v114 = vld [vmem:[%s14 + $0x20] sm:$0xff]
  %v115 = vld [vmem:[%s14 + $0x28] sm:$0xff]
  %v116 = vld [vmem:[%s14 + $0x30] sm:$0xff]
  %v117 = vld [vmem:[%s14 + $0x38] sm:$0xff]
  %v118 = vld [vmem:[%s14 + $0x40] sm:$0xff]
  %v119 = vld [vmem:[%s14 + $0x48] sm:$0xff]
  %v120 = vld [vmem:[%s14 + $0x50] sm:$0xff]
  %v121 = vld [vmem:[%s14 + $0x58] sm:$0xff]
  %123 = vset.pattern.permute.xlu0 0
  %124 = vperm.xlu0 %123, %v110
  %v125 = vpop.permute.xlu0 %124
  %128 = vset.pattern.permute.xlu0 0
  %129 = vperm.xlu0 %128, %v111
  %v130 = vpop.permute.xlu0 %129
  %133 = vset.pattern.permute.xlu0 0
  %134 = vperm.xlu0 %133, %v112
  %v135 = vpop.permute.xlu0 %134
  %138 = vset.pattern.permute.xlu0 0
  %139 = vperm.xlu0 %138, %v113
  %v140 = vpop.permute.xlu0 %139
  %143 = vset.pattern.permute.xlu0 0
  %144 = vperm.xlu0 %143, %v114
  %v145 = vpop.permute.xlu0 %144
  %148 = vset.pattern.permute.xlu0 0
  %149 = vperm.xlu0 %148, %v115
  %v150 = vpop.permute.xlu0 %149
  %153 = vset.pattern.permute.xlu0 0
  %154 = vperm.xlu0 %153, %v116
  %v155 = vpop.permute.xlu0 %154
  %158 = vset.pattern.permute.xlu0 0
  %159 = vperm.xlu0 %158, %v117
  %v160 = vpop.permute.xlu0 %159
  %163 = vset.pattern.permute.xlu0 0
  %164 = vperm.xlu0 %163, %v118
  %v165 = vpop.permute.xlu0 %164
  %168 = vset.pattern.permute.xlu0 0
  %169 = vperm.xlu0 %168, %v119
  %v170 = vpop.permute.xlu0 %169
  %173 = vset.pattern.permute.xlu0 0
  %174 = vperm.xlu0 %173, %v120
  %v175 = vpop.permute.xlu0 %174
  %178 = vset.pattern.permute.xlu0 0
  %179 = vperm.xlu0 %178, %v121
  %v180 = vpop.permute.xlu0 %179
  %v182 = vld [vmem:[%s15] sm:$0xff]
  %v183 = vld [vmem:[%s15 + $0x8] sm:$0xff]
  %v184 = vld [vmem:[%s15 + $0x10] sm:$0xff]
  %v185 = vld [vmem:[%s15 + $0x18] sm:$0xff]
  %187 = vset.pattern.permute.xlu0 0
  %188 = vperm.xlu0 %187, %v182
  %v189 = vpop.permute.xlu0 %188
  %192 = vset.pattern.permute.xlu0 0
  %193 = vperm.xlu0 %192, %v183
  %v194 = vpop.permute.xlu0 %193
  %197 = vset.pattern.permute.xlu0 0
  %198 = vperm.xlu0 %197, %v184
  %v199 = vpop.permute.xlu0 %198
  %202 = vset.pattern.permute.xlu0 0
  %203 = vperm.xlu0 %202, %v185
  %v204 = vpop.permute.xlu0 %203
  %v206 = vlaneseq
  %v207 = vshrl.u32 %v206, 7
  %vm208 = vcmp.lt.s32.totalorder %v207, 4
  %v209 = vld [vmem:[%s1] sm:$0xff]
  %v210 = vld [vmem:[%s1 + $0x8] sm:$0xff]
  %v211 = vld [vmem:[%s1 + $0x10] sm:$0xff]
  %v212 = vld [vmem:[%s1 + $0x18] sm:$0xff]
  %v213 = vld [vmem:[%s2] sm:$0xff]
  %v214 = vld [vmem:[%s2 + $0x8] sm:$0xff]
  %v215 = vld [vmem:[%s3] sm:$0xff]
  %v216 = vld [vmem:[%s0] sm:$0xff]
  %v217 = vld [vmem:[%s0 + $0x8] sm:$0xff]
  %v218 = vld [vmem:[%s0 + $0x10] sm:$0xff]
  %v219 = vld [vmem:[%s4] sm:$0xff]
  %v220 = vld [vmem:[%s4 + $0x8] sm:$0xff]
  %v221 = vld [vmem:[%s4 + $0x10] sm:$0xff]
  %v222 = vld [vmem:[%s4 + $0x18] sm:$0xff]
  %v223 = vld [vmem:[%s4 + $0x20] sm:$0xff]
  %v224 = vld [vmem:[%s4 + $0x28] sm:$0xff]
  %v225 = vld [vmem:[%s5] sm:$0xff]
  %v226 = vld [vmem:[%s5 + $0x8] sm:$0xff]
  %v227 = vld [vmem:[%s5 + $0x10] sm:$0xff]
  %v228 = vld [vmem:[%s5 + $0x18] sm:$0xff]
  %v229 = vld [vmem:[%s5 + $0x20] sm:$0xff]
  %v230 = vld [vmem:[%s5 + $0x28] sm:$0xff]
  %vm231 = vcmask 64512
  %v233 = vsel %vm231, %v225, 0
  %v236 = vsel %vm231, %v226, 0
  %v239 = vsel %vm231, %v227, 0
  %v242 = vsel %vm231, %v228, 0
  %v245 = vsel %vm231, %v229, 0
  %v248 = vsel %vm231, %v230, 0
  %250 = vmatprep.subr.mxu0 0.0
  %251 = vmatpush1.msra.mxu0 %v215
  %252 = vmatprep.subr.mxu0 0.0
  %253 = vmatpush1.msra.mxu0 0.0
  %254 = vmatprep.subr.mxu0 0.0
  %255 = vmatpush1.msra.mxu0 0.0
  %256 = vmatprep.subr.mxu0 0.0
  %257 = vmatpush1.msra.mxu0 0.0
  %258 = vmatprep.subr.mxu0 0.0
  %259 = vmatpush1.msra.mxu0 0.0
  %260 = vmatprep.subr.mxu0 0.0
  %261 = vmatpush1.msra.mxu0 0.0
  %262 = vmatprep.subr.mxu0 0.0
  %263 = vmatpush1.msra.mxu0 0.0
  %264 = vmatprep.subr.mxu0 0.0
  %265 = vmatpush1.msra.mxu0 0.0
  %266 = vmatprep.subr.mxu0 0.0
  %267 = vmatpush1.msra.mxu0 0.0
  %268 = vmatprep.subr.mxu0 0.0
  %269 = vmatpush1.msra.mxu0 0.0
  %270 = vmatprep.subr.mxu0 0.0
  %271 = vmatpush1.msra.mxu0 0.0
  %272 = vmatprep.subr.mxu0 0.0
  %273 = vmatpush1.msra.mxu0 0.0
  %274 = vmatprep.subr.mxu0 0.0
  %275 = vmatpush1.msra.mxu0 0.0
  %276 = vmatprep.subr.mxu0 0.0
  %277 = vmatpush1.msra.mxu0 0.0
  %278 = vmatprep.subr.mxu0 0.0
  %279 = vmatpush1.msra.mxu0 0.0
  %280 = vmatprep.subr.mxu0 0.0
  %281 = vmatpush1.msra.mxu0 0.0
  %282 = vmatprep.subr.mxu0 0.0
  %283 = vmatpush1.msra.mxu0 0.0
  %284 = vmatprep.subr.mxu0 0.0
  %285 = vmatpush1.msra.mxu0 0.0
  %286 = vmatprep.subr.mxu0 0.0
  %287 = vmatpush1.msra.mxu0 0.0
  %288 = vmatprep.subr.mxu0 0.0
  %289 = vmatpush1.msra.mxu0 0.0
  %290 = vmatprep.subr.mxu0 0.0
  %291 = vmatpush1.msra.mxu0 0.0
  %292 = vmatprep.subr.mxu0 0.0
  %293 = vmatpush1.msra.mxu0 0.0
  %294 = vmatprep.subr.mxu0 0.0
  %295 = vmatpush1.msra.mxu0 0.0
  %296 = vmatprep.subr.mxu0 0.0
  %297 = vmatpush1.msra.mxu0 0.0
  %298 = vmatprep.subr.mxu0 0.0
  %299 = vmatpush1.msra.mxu0 0.0
  %300 = vmatprep.subr.mxu0 0.0
  %301 = vmatpush1.msra.mxu0 0.0
  %302 = vmatprep.subr.mxu0 0.0
  %303 = vmatpush1.msra.mxu0 0.0
  %304 = vmatprep.subr.mxu0 0.0
  %305 = vmatpush1.msra.mxu0 0.0
  %306 = vmatprep.subr.mxu0 0.0
  %307 = vmatpush1.msra.mxu0 0.0
  %308 = vmatprep.subr.mxu0 0.0
  %309 = vmatpush1.msra.mxu0 0.0
  %310 = vmatprep.subr.mxu0 0.0
  %311 = vmatpush1.msra.mxu0 0.0
  %312 = vmatprep.subr.mxu0 0.0
  %313 = vmatpush1.msra.mxu0 0.0
  %314 = vmatprep.mubr.f32.mxu0 0.0
  %315 = vmatmul.mubr.f32.gmra.mrb[0].mxu0 %v233
  %v316 = vpop.f32.mrb[0].mxu0
  %v317 = vadd.f32 0.0, %v316
  %v318 = vpop.f32.mrb[0].mxu0
  %319 = vmatprep.mubr.f32.mxu0 0.0
  %320 = vmatmul.mubr.f32.gmra.mrb[0].mxu0 %v236
  %v321 = vpop.f32.mrb[0].mxu0
  %v322 = vadd.f32 0.0, %v321
  %v323 = vpop.f32.mrb[0].mxu0
  %324 = vmatprep.mubr.f32.mxu0 0.0
  %325 = vmatmul.mubr.f32.gmra.mrb[0].mxu0 %v239
  %v326 = vpop.f32.mrb[0].mxu0
  %v327 = vadd.f32 0.0, %v326
  %v328 = vpop.f32.mrb[0].mxu0
  %329 = vmatprep.mubr.f32.mxu0 0.0
  %330 = vmatmul.mubr.f32.gmra.mrb[0].mxu0 %v242
  %v331 = vpop.f32.mrb[0].mxu0
  %v332 = vadd.f32 0.0, %v331
  %v333 = vpop.f32.mrb[0].mxu0
  %334 = vmatprep.mubr.f32.mxu0 0.0
  %335 = vmatmul.mubr.f32.gmra.mrb[0].mxu0 %v245
  %v336 = vpop.f32.mrb[0].mxu0
  %v337 = vadd.f32 0.0, %v336
  %v338 = vpop.f32.mrb[0].mxu0
  %339 = vmatprep.mubr.f32.mxu0 0.0
  %340 = vmatmul.mubr.f32.gmra.mrb[0].mxu0 %v248
  %v341 = vpop.f32.mrb[0].mxu0
  %v342 = vadd.f32 0.0, %v341
  %v343 = vpop.f32.mrb[0].mxu0
  %344 = vdwg.mxu0
  %vm345 = vcmask 130048
  %v347 = vsel %vm345, %v219, 0
  %v350 = vsel %vm345, %v220, 0
  %v353 = vsel %vm345, %v221, 0
  %v356 = vsel %vm345, %v222, 0
  %v359 = vsel %vm345, %v223, 0
  %v362 = vsel %vm345, %v224, 0
  %364 = vmatprep.subr.mxu0 0.0
  %365 = vmatpush1.msra.mxu0 %v216
  %366 = vmatprep.subr.mxu0 0.0
  %367 = vmatpush1.msra.mxu0 %v217
  %368 = vmatprep.subr.mxu0 0.0
  %369 = vmatpush1.msra.mxu0 0.0
  %370 = vmatprep.subr.mxu0 0.0
  %371 = vmatpush1.msra.mxu0 0.0
  %372 = vmatprep.subr.mxu0 0.0
  %373 = vmatpush1.msra.mxu0 0.0
  %374 = vmatprep.subr.mxu0 0.0
  %375 = vmatpush1.msra.mxu0 0.0
  %376 = vmatprep.subr.mxu0 0.0
  %377 = vmatpush1.msra.mxu0 0.0
  %378 = vmatprep.subr.mxu0 0.0
  %379 = vmatpush1.msra.mxu0 0.0
  %380 = vmatprep.subr.mxu0 0.0
  %381 = vmatpush1.msra.mxu0 0.0
  %382 = vmatprep.subr.mxu0 0.0
  %383 = vmatpush1.msra.mxu0 0.0
  %384 = vmatprep.subr.mxu0 0.0
  %385 = vmatpush1.msra.mxu0 0.0
  %386 = vmatprep.subr.mxu0 0.0
  %387 = vmatpush1.msra.mxu0 0.0
  %388 = vmatprep.subr.mxu0 0.0
  %389 = vmatpush1.msra.mxu0 0.0
  %390 = vmatprep.subr.mxu0 0.0
  %391 = vmatpush1.msra.mxu0 0.0
  %392 = vmatprep.subr.mxu0 0.0
  %393 = vmatpush1.msra.mxu0 0.0
  %394 = vmatprep.subr.mxu0 0.0
  %395 = vmatpush1.msra.mxu0 0.0
  %396 = vmatprep.subr.mxu0 0.0
  %397 = vmatpush1.msra.mxu0 0.0
  %398 = vmatprep.subr.mxu0 0.0
  %399 = vmatpush1.msra.mxu0 0.0
  %400 = vmatprep.subr.mxu0 0.0
  %401 = vmatpush1.msra.mxu0 0.0
  %402 = vmatprep.subr.mxu0 0.0
  %403 = vmatpush1.msra.mxu0 0.0
  %404 = vmatprep.subr.mxu0 0.0
  %405 = vmatpush1.msra.mxu0 0.0
  %406 = vmatprep.subr.mxu0 0.0
  %407 = vmatpush1.msra.mxu0 0.0
  %408 = vmatprep.subr.mxu0 0.0
  %409 = vmatpush1.msra.mxu0 0.0
  %410 = vmatprep.subr.mxu0 0.0
  %411 = vmatpush1.msra.mxu0 0.0
  %412 = vmatprep.subr.mxu0 0.0
  %413 = vmatpush1.msra.mxu0 0.0
  %414 = vmatprep.subr.mxu0 0.0
  %415 = vmatpush1.msra.mxu0 0.0
  %416 = vmatprep.subr.mxu0 0.0
  %417 = vmatpush1.msra.mxu0 0.0
  %418 = vmatprep.subr.mxu0 0.0
  %419 = vmatpush1.msra.mxu0 0.0
  %420 = vmatprep.subr.mxu0 0.0
  %421 = vmatpush1.msra.mxu0 0.0
  %422 = vmatprep.subr.mxu0 0.0
  %423 = vmatpush1.msra.mxu0 0.0
  %424 = vmatprep.subr.mxu0 0.0
  %425 = vmatpush1.msra.mxu0 0.0
  %426 = vmatprep.subr.mxu0 0.0
  %427 = vmatpush1.msra.mxu0 0.0
  %428 = vmatprep.mubr.f32.mxu0 0.0
  %429 = vmatmul.mubr.f32.gmra.mrb[0].mxu0 %v347
  %v430 = vpop.f32.mrb[0].mxu0
  %v431 = vadd.f32 %v317, %v430
  %v432 = vpop.f32.mrb[0].mxu0
  %433 = vmatprep.mubr.f32.mxu0 0.0
  %434 = vmatmul.mubr.f32.gmra.mrb[0].mxu0 %v350
  %v435 = vpop.f32.mrb[0].mxu0
  %v436 = vadd.f32 %v322, %v435
  %v437 = vpop.f32.mrb[0].mxu0
  %438 = vmatprep.mubr.f32.mxu0 0.0
  %439 = vmatmul.mubr.f32.gmra.mrb[0].mxu0 %v353
  %v440 = vpop.f32.mrb[0].mxu0
  %v441 = vadd.f32 %v327, %v440
  %v442 = vpop.f32.mrb[0].mxu0
  %443 = vmatprep.mubr.f32.mxu0 0.0
  %444 = vmatmul.mubr.f32.gmra.mrb[0].mxu0 %v356
  %v445 = vpop.f32.mrb[0].mxu0
  %v446 = vadd.f32 %v332, %v445
  %v447 = vpop.f32.mrb[0].mxu0
  %448 = vmatprep.mubr.f32.mxu0 0.0
  %449 = vmatmul.mubr.f32.gmra.mrb[0].mxu0 %v359
  %v450 = vpop.f32.mrb[0].mxu0
  %v451 = vadd.f32 %v337, %v450
  %v452 = vpop.f32.mrb[0].mxu0
  %453 = vmatprep.mubr.f32.mxu0 0.0
  %454 = vmatmul.mubr.f32.gmra.mrb[0].mxu0 %v362
  %v455 = vpop.f32.mrb[0].mxu0
  %v456 = vadd.f32 %v342, %v455
  %v457 = vpop.f32.mrb[0].mxu0
  %458 = vdwg.mxu0
  %v459 = vadd.f32 %v431, %v65
  %v460 = vadd.f32 %v436, %v70
  %v461 = vadd.f32 %v441, %v75
  %v462 = vadd.f32 %v446, %v80
  %v463 = vadd.f32 %v451, %v85
  %v464 = vadd.f32 %v456, %v90
  %v465 = vld [vmem:[%s6] sm:$0xff]
  %v466 = vld [vmem:[%s6 + $0x8] sm:$0xff]
  %v467 = vld [vmem:[%s6 + $0x10] sm:$0xff]
  %v468 = vld [vmem:[%s6 + $0x18] sm:$0xff]
  %v469 = vld [vmem:[%s6 + $0x20] sm:$0xff]
  %v470 = vld [vmem:[%s6 + $0x28] sm:$0xff]
  %v472 = vsel %vm345, %v465, 0
  %v475 = vsel %vm345, %v466, 0
  %v478 = vsel %vm345, %v467, 0
  %v481 = vsel %vm345, %v468, 0
  %v484 = vsel %vm345, %v469, 0
  %v487 = vsel %vm345, %v470, 0
  %489 = vmatprep.subr.mxu0 0.0
  %490 = vmatpush1.msra.mxu0 %v213
  %491 = vmatprep.subr.mxu0 0.0
  %492 = vmatpush1.msra.mxu0 %v214
  %493 = vmatprep.subr.mxu0 0.0
  %494 = vmatpush1.msra.mxu0 0.0
  %495 = vmatprep.subr.mxu0 0.0
  %496 = vmatpush1.msra.mxu0 0.0
  %497 = vmatprep.subr.mxu0 0.0
  %498 = vmatpush1.msra.mxu0 0.0
  %499 = vmatprep.subr.mxu0 0.0
  %500 = vmatpush1.msra.mxu0 0.0
  %501 = vmatprep.subr.mxu0 0.0
  %502 = vmatpush1.msra.mxu0 0.0
  %503 = vmatprep.subr.mxu0 0.0
  %504 = vmatpush1.msra.mxu0 0.0
  %505 = vmatprep.subr.mxu0 0.0
  %506 = vmatpush1.msra.mxu0 0.0
  %507 = vmatprep.subr.mxu0 0.0
  %508 = vmatpush1.msra.mxu0 0.0
  %509 = vmatprep.subr.mxu0 0.0
  %510 = vmatpush1.msra.mxu0 0.0
  %511 = vmatprep.subr.mxu0 0.0
  %512 = vmatpush1.msra.mxu0 0.0
  %513 = vmatprep.subr.mxu0 0.0
  %514 = vmatpush1.msra.mxu0 0.0
  %515 = vmatprep.subr.mxu0 0.0
  %516 = vmatpush1.msra.mxu0 0.0
  %517 = vmatprep.subr.mxu0 0.0
  %518 = vmatpush1.msra.mxu0 0.0
  %519 = vmatprep.subr.mxu0 0.0
  %520 = vmatpush1.msra.mxu0 0.0
  %521 = vmatprep.subr.mxu0 0.0
  %522 = vmatpush1.msra.mxu0 0.0
  %523 = vmatprep.subr.mxu0 0.0
  %524 = vmatpush1.msra.mxu0 0.0
  %525 = vmatprep.subr.mxu0 0.0
  %526 = vmatpush1.msra.mxu0 0.0
  %527 = vmatprep.subr.mxu0 0.0
  %528 = vmatpush1.msra.mxu0 0.0
  %529 = vmatprep.subr.mxu0 0.0
  %530 = vmatpush1.msra.mxu0 0.0
  %531 = vmatprep.subr.mxu0 0.0
  %532 = vmatpush1.msra.mxu0 0.0
  %533 = vmatprep.subr.mxu0 0.0
  %534 = vmatpush1.msra.mxu0 0.0
  %535 = vmatprep.subr.mxu0 0.0
  %536 = vmatpush1.msra.mxu0 0.0
  %537 = vmatprep.subr.mxu0 0.0
  %538 = vmatpush1.msra.mxu0 0.0
  %539 = vmatprep.subr.mxu0 0.0
  %540 = vmatpush1.msra.mxu0 0.0
  %541 = vmatprep.subr.mxu0 0.0
  %542 = vmatpush1.msra.mxu0 0.0
  %543 = vmatprep.subr.mxu0 0.0
  %544 = vmatpush1.msra.mxu0 0.0
  %545 = vmatprep.subr.mxu0 0.0
  %546 = vmatpush1.msra.mxu0 0.0
  %547 = vmatprep.subr.mxu0 0.0
  %548 = vmatpush1.msra.mxu0 0.0
  %549 = vmatprep.subr.mxu0 0.0
  %550 = vmatpush1.msra.mxu0 0.0
  %551 = vmatprep.subr.mxu0 0.0
  %552 = vmatpush1.msra.mxu0 0.0
  %553 = vmatprep.mubr.f32.mxu0 0.0
  %554 = vmatmul.mubr.f32.gmra.mrb[0].mxu0 %v472
  %v555 = vpop.f32.mrb[0].mxu0
  %v556 = vadd.f32 0.0, %v555
  %v557 = vpop.f32.mrb[0].mxu0
  %558 = vmatprep.mubr.f32.mxu0 0.0
  %559 = vmatmul.mubr.f32.gmra.mrb[0].mxu0 %v475
  %v560 = vpop.f32.mrb[0].mxu0
  %v561 = vadd.f32 0.0, %v560
  %v562 = vpop.f32.mrb[0].mxu0
  %563 = vmatprep.mubr.f32.mxu0 0.0
  %564 = vmatmul.mubr.f32.gmra.mrb[0].mxu0 %v478
  %v565 = vpop.f32.mrb[0].mxu0
  %v566 = vadd.f32 0.0, %v565
  %v567 = vpop.f32.mrb[0].mxu0
  %568 = vmatprep.mubr.f32.mxu0 0.0
  %569 = vmatmul.mubr.f32.gmra.mrb[0].mxu0 %v481
  %v570 = vpop.f32.mrb[0].mxu0
  %v571 = vadd.f32 0.0, %v570
  %v572 = vpop.f32.mrb[0].mxu0
  %573 = vmatprep.mubr.f32.mxu0 0.0
  %574 = vmatmul.mubr.f32.gmra.mrb[0].mxu0 %v484
  %v575 = vpop.f32.mrb[0].mxu0
  %v576 = vadd.f32 0.0, %v575
  %v577 = vpop.f32.mrb[0].mxu0
  %578 = vmatprep.mubr.f32.mxu0 0.0
  %579 = vmatmul.mubr.f32.gmra.mrb[0].mxu0 %v487
  %v580 = vpop.f32.mrb[0].mxu0
  %v581 = vadd.f32 0.0, %v580
  %v582 = vpop.f32.mrb[0].mxu0
  %583 = vdwg.mxu0
  %v584 = vadd.f32 %v459, %v556
  %v585 = vadd.f32 %v460, %v561
  %v586 = vxor.u32 %v584, 2147483648
  %v587 = vxor.u32 %v585, 2147483648
  %v588 = vmul.f32 %v586, 1.442695
  %v589 = vpow.pop %v588
  %v590 = vmul.f32 %v587, 1.442695
  %v591 = vpow.pop %v590
  %v592 = vadd.f32 %v589, 1.0
  %v593 = vadd.f32 %v591, 1.0
  %v594 = vrcp.pop %v592
  %v595 = vmul.f32 1.0, %v594
  %v596 = vrcp.pop %v593
  %v597 = vmul.f32 1.0, %v596
  %v598 = vadd.f32 %v461, %v566
  %v599 = vadd.f32 %v462, %v571
  %v600 = vxor.u32 %v598, 2147483648
  %v601 = vxor.u32 %v599, 2147483648
  %v602 = vmul.f32 %v600, 1.442695
  %v603 = vpow.pop %v602
  %v604 = vmul.f32 %v601, 1.442695
  %v605 = vpow.pop %v604
  %v606 = vadd.f32 %v603, 1.0
  %v607 = vadd.f32 %v605, 1.0
  %v608 = vrcp.pop %v606
  %v609 = vmul.f32 1.0, %v608
  %v610 = vrcp.pop %v607
  %v611 = vmul.f32 1.0, %v610
  %v612 = vadd.f32 %v576, %v97
  %v613 = vadd.f32 %v581, %v102
  %v614 = vmul.f32 %v595, %v612
  %v615 = vmul.f32 %v597, %v613
  %v616 = vadd.f32 %v463, %v614
  %v617 = vadd.f32 %v464, %v615
  %v618 = vtanh.pop %v616
  %v619 = vtanh.pop %v617
  %v620 = vsub.f32 1.0, %v609
  %v621 = vsub.f32 1.0, %v611
  %v622 = vmul.f32 %v620, %v618
  %v623 = vmul.f32 %v621, %v619
  %v624 = vmul.f32 %v609, %v213
  %v625 = vmul.f32 %v611, %v214
  %v626 = vadd.f32 %v622, %v624
  %v627 = vadd.f32 %v623, %v625
  %v628 = vmax.f32 %v626, -5.0
  %v629 = vmax.f32 %v627, -5.0
  %v630 = vmin.f32 %v628, 5.0
  %v631 = vmin.f32 %v629, 5.0
  %v632 = vld [vmem:[%s9] sm:$0xff]
  %v634 = vsel %vm345, %v632, 0
  %636 = vmatprep.subr.mxu0 0.0
  %637 = vmatpush1.msra.mxu0 %v630
  %638 = vmatprep.subr.mxu0 0.0
  %639 = vmatpush1.msra.mxu0 %v631
  %640 = vmatprep.subr.mxu0 0.0
  %641 = vmatpush1.msra.mxu0 0.0
  %642 = vmatprep.subr.mxu0 0.0
  %643 = vmatpush1.msra.mxu0 0.0
  %644 = vmatprep.subr.mxu0 0.0
  %645 = vmatpush1.msra.mxu0 0.0
  %646 = vmatprep.subr.mxu0 0.0
  %647 = vmatpush1.msra.mxu0 0.0
  %648 = vmatprep.subr.mxu0 0.0
  %649 = vmatpush1.msra.mxu0 0.0
  %650 = vmatprep.subr.mxu0 0.0
  %651 = vmatpush1.msra.mxu0 0.0
  %652 = vmatprep.subr.mxu0 0.0
  %653 = vmatpush1.msra.mxu0 0.0
  %654 = vmatprep.subr.mxu0 0.0
  %655 = vmatpush1.msra.mxu0 0.0
  %656 = vmatprep.subr.mxu0 0.0
  %657 = vmatpush1.msra.mxu0 0.0
  %658 = vmatprep.subr.mxu0 0.0
  %659 = vmatpush1.msra.mxu0 0.0
  %660 = vmatprep.subr.mxu0 0.0
  %661 = vmatpush1.msra.mxu0 0.0
  %662 = vmatprep.subr.mxu0 0.0
  %663 = vmatpush1.msra.mxu0 0.0
  %664 = vmatprep.subr.mxu0 0.0
  %665 = vmatpush1.msra.mxu0 0.0
  %666 = vmatprep.subr.mxu0 0.0
  %667 = vmatpush1.msra.mxu0 0.0
  %668 = vmatprep.subr.mxu0 0.0
  %669 = vmatpush1.msra.mxu0 0.0
  %670 = vmatprep.subr.mxu0 0.0
  %671 = vmatpush1.msra.mxu0 0.0
  %672 = vmatprep.subr.mxu0 0.0
  %673 = vmatpush1.msra.mxu0 0.0
  %674 = vmatprep.subr.mxu0 0.0
  %675 = vmatpush1.msra.mxu0 0.0
  %676 = vmatprep.subr.mxu0 0.0
  %677 = vmatpush1.msra.mxu0 0.0
  %678 = vmatprep.subr.mxu0 0.0
  %679 = vmatpush1.msra.mxu0 0.0
  %680 = vmatprep.subr.mxu0 0.0
  %681 = vmatpush1.msra.mxu0 0.0
  %682 = vmatprep.subr.mxu0 0.0
  %683 = vmatpush1.msra.mxu0 0.0
  %684 = vmatprep.subr.mxu0 0.0
  %685 = vmatpush1.msra.mxu0 0.0
  %686 = vmatprep.subr.mxu0 0.0
  %687 = vmatpush1.msra.mxu0 0.0
  %688 = vmatprep.subr.mxu0 0.0
  %689 = vmatpush1.msra.mxu0 0.0
  %690 = vmatprep.subr.mxu0 0.0
  %691 = vmatpush1.msra.mxu0 0.0
  %692 = vmatprep.subr.mxu0 0.0
  %693 = vmatpush1.msra.mxu0 0.0
  %694 = vmatprep.subr.mxu0 0.0
  %695 = vmatpush1.msra.mxu0 0.0
  %696 = vmatprep.subr.mxu0 0.0
  %697 = vmatpush1.msra.mxu0 0.0
  %698 = vmatprep.subr.mxu0 0.0
  %699 = vmatpush1.msra.mxu0 0.0
  %700 = vmatprep.mubr.f32.mxu0 0.0
  %701 = vmatmul.mubr.f32.gmra.mrb[0].mxu0 %v634
  %v702 = vpop.f32.mrb[0].mxu0
  %v703 = vadd.f32 %v108, %v702
  %v704 = vpop.f32.mrb[0].mxu0
  %705 = vdwg.mxu0
  %v706 = vld [vmem:[%s11] sm:$0xff]
  %v707 = vld [vmem:[%s11 + $0x8] sm:$0xff]
  %v708 = vld [vmem:[%s11 + $0x10] sm:$0xff]
  %v709 = vld [vmem:[%s11 + $0x18] sm:$0xff]
  %v710 = vld [vmem:[%s11 + $0x20] sm:$0xff]
  %v711 = vld [vmem:[%s11 + $0x28] sm:$0xff]
  %v712 = vld [vmem:[%s11 + $0x30] sm:$0xff]
  %v713 = vld [vmem:[%s11 + $0x38] sm:$0xff]
  %v714 = vld [vmem:[%s11 + $0x40] sm:$0xff]
  %v715 = vld [vmem:[%s11 + $0x48] sm:$0xff]
  %v716 = vld [vmem:[%s11 + $0x50] sm:$0xff]
  %v717 = vld [vmem:[%s11 + $0x58] sm:$0xff]
  %v718 = vld [vmem:[%s12] sm:$0xff]
  %v719 = vld [vmem:[%s12 + $0x8] sm:$0xff]
  %v720 = vld [vmem:[%s12 + $0x10] sm:$0xff]
  %v721 = vld [vmem:[%s12 + $0x18] sm:$0xff]
  %v722 = vld [vmem:[%s12 + $0x20] sm:$0xff]
  %v723 = vld [vmem:[%s12 + $0x28] sm:$0xff]
  %v724 = vld [vmem:[%s12 + $0x30] sm:$0xff]
  %v725 = vld [vmem:[%s12 + $0x38] sm:$0xff]
  %v726 = vld [vmem:[%s12 + $0x40] sm:$0xff]
  %v727 = vld [vmem:[%s12 + $0x48] sm:$0xff]
  %v728 = vld [vmem:[%s12 + $0x50] sm:$0xff]
  %v729 = vld [vmem:[%s12 + $0x58] sm:$0xff]
  %v731 = vsel %vm231, %v718, 0
  %v734 = vsel %vm231, %v719, 0
  %v737 = vsel %vm231, %v720, 0
  %v740 = vsel %vm231, %v721, 0
  %v743 = vsel %vm231, %v722, 0
  %v746 = vsel %vm231, %v723, 0
  %v749 = vsel %vm231, %v724, 0
  %v752 = vsel %vm231, %v725, 0
  %v755 = vsel %vm231, %v726, 0
  %v758 = vsel %vm231, %v727, 0
  %v761 = vsel %vm231, %v728, 0
  %v764 = vsel %vm231, %v729, 0
  %766 = vmatprep.subr.mxu0 0.0
  %767 = vmatpush1.msra.mxu0 %v218
  %768 = vmatprep.subr.mxu0 0.0
  %769 = vmatpush1.msra.mxu0 0.0
  %770 = vmatprep.subr.mxu0 0.0
  %771 = vmatpush1.msra.mxu0 0.0
  %772 = vmatprep.subr.mxu0 0.0
  %773 = vmatpush1.msra.mxu0 0.0
  %774 = vmatprep.subr.mxu0 0.0
  %775 = vmatpush1.msra.mxu0 0.0
  %776 = vmatprep.subr.mxu0 0.0
  %777 = vmatpush1.msra.mxu0 0.0
  %778 = vmatprep.subr.mxu0 0.0
  %779 = vmatpush1.msra.mxu0 0.0
  %780 = vmatprep.subr.mxu0 0.0
  %781 = vmatpush1.msra.mxu0 0.0
  %782 = vmatprep.subr.mxu0 0.0
  %783 = vmatpush1.msra.mxu0 0.0
  %784 = vmatprep.subr.mxu0 0.0
  %785 = vmatpush1.msra.mxu0 0.0
  %786 = vmatprep.subr.mxu0 0.0
  %787 = vmatpush1.msra.mxu0 0.0
  %788 = vmatprep.subr.mxu0 0.0
  %789 = vmatpush1.msra.mxu0 0.0
  %790 = vmatprep.subr.mxu0 0.0
  %791 = vmatpush1.msra.mxu0 0.0
  %792 = vmatprep.subr.mxu0 0.0
  %793 = vmatpush1.msra.mxu0 0.0
  %794 = vmatprep.subr.mxu0 0.0
  %795 = vmatpush1.msra.mxu0 0.0
  %796 = vmatprep.subr.mxu0 0.0
  %797 = vmatpush1.msra.mxu0 0.0
  %798 = vmatprep.subr.mxu0 0.0
  %799 = vmatpush1.msra.mxu0 0.0
  %800 = vmatprep.subr.mxu0 0.0
  %801 = vmatpush1.msra.mxu0 0.0
  %802 = vmatprep.subr.mxu0 0.0
  %803 = vmatpush1.msra.mxu0 0.0
  %804 = vmatprep.subr.mxu0 0.0
  %805 = vmatpush1.msra.mxu0 0.0
  %806 = vmatprep.subr.mxu0 0.0
  %807 = vmatpush1.msra.mxu0 0.0
  %808 = vmatprep.subr.mxu0 0.0
  %809 = vmatpush1.msra.mxu0 0.0
  %810 = vmatprep.subr.mxu0 0.0
  %811 = vmatpush1.msra.mxu0 0.0
  %812 = vmatprep.subr.mxu0 0.0
  %813 = vmatpush1.msra.mxu0 0.0
  %814 = vmatprep.subr.mxu0 0.0
  %815 = vmatpush1.msra.mxu0 0.0
  %816 = vmatprep.subr.mxu0 0.0
  %817 = vmatpush1.msra.mxu0 0.0
  %818 = vmatprep.subr.mxu0 0.0
  %819 = vmatpush1.msra.mxu0 0.0
  %820 = vmatprep.subr.mxu0 0.0
  %821 = vmatpush1.msra.mxu0 0.0
  %822 = vmatprep.subr.mxu0 0.0
  %823 = vmatpush1.msra.mxu0 0.0
  %824 = vmatprep.subr.mxu0 0.0
  %825 = vmatpush1.msra.mxu0 0.0
  %826 = vmatprep.subr.mxu0 0.0
  %827 = vmatpush1.msra.mxu0 0.0
  %828 = vmatprep.subr.mxu0 0.0
  %829 = vmatpush1.msra.mxu0 0.0
  %830 = vmatprep.mubr.f32.mxu0 0.0
  %831 = vmatmul.mubr.f32.gmra.mrb[0].mxu0 %v731
  %v832 = vpop.f32.mrb[0].mxu0
  %v833 = vadd.f32 0.0, %v832
  %v834 = vpop.f32.mrb[0].mxu0
  %835 = vmatprep.mubr.f32.mxu0 0.0
  %836 = vmatmul.mubr.f32.gmra.mrb[0].mxu0 %v734
  %v837 = vpop.f32.mrb[0].mxu0
  %v838 = vadd.f32 0.0, %v837
  %v839 = vpop.f32.mrb[0].mxu0
  %840 = vmatprep.mubr.f32.mxu0 0.0
  %841 = vmatmul.mubr.f32.gmra.mrb[0].mxu0 %v737
  %v842 = vpop.f32.mrb[0].mxu0
  %v843 = vadd.f32 0.0, %v842
  %v844 = vpop.f32.mrb[0].mxu0
  %845 = vmatprep.mubr.f32.mxu0 0.0
  %846 = vmatmul.mubr.f32.gmra.mrb[0].mxu0 %v740
  %v847 = vpop.f32.mrb[0].mxu0
  %v848 = vadd.f32 0.0, %v847
  %v849 = vpop.f32.mrb[0].mxu0
  %850 = vmatprep.mubr.f32.mxu0 0.0
  %851 = vmatmul.mubr.f32.gmra.mrb[0].mxu0 %v743
  %v852 = vpop.f32.mrb[0].mxu0
  %v853 = vadd.f32 0.0, %v852
  %v854 = vpop.f32.mrb[0].mxu0
  %855 = vmatprep.mubr.f32.mxu0 0.0
  %856 = vmatmul.mubr.f32.gmra.mrb[0].mxu0 %v746
  %v857 = vpop.f32.mrb[0].mxu0
  %v858 = vadd.f32 0.0, %v857
  %v859 = vpop.f32.mrb[0].mxu0
  %860 = vmatprep.mubr.f32.mxu0 0.0
  %861 = vmatmul.mubr.f32.gmra.mrb[0].mxu0 %v749
  %v862 = vpop.f32.mrb[0].mxu0
  %v863 = vadd.f32 0.0, %v862
  %v864 = vpop.f32.mrb[0].mxu0
  %865 = vmatprep.mubr.f32.mxu0 0.0
  %866 = vmatmul.mubr.f32.gmra.mrb[0].mxu0 %v752
  %v867 = vpop.f32.mrb[0].mxu0
  %v868 = vadd.f32 0.0, %v867
  %v869 = vpop.f32.mrb[0].mxu0
  %870 = vmatprep.mubr.f32.mxu0 0.0
  %871 = vmatmul.mubr.f32.gmra.mrb[0].mxu0 %v755
  %v872 = vpop.f32.mrb[0].mxu0
  %v873 = vadd.f32 0.0, %v872
  %v874 = vpop.f32.mrb[0].mxu0
  %875 = vmatprep.mubr.f32.mxu0 0.0
  %876 = vmatmul.mubr.f32.gmra.mrb[0].mxu0 %v758
  %v877 = vpop.f32.mrb[0].mxu0
  %v878 = vadd.f32 0.0, %v877
  %v879 = vpop.f32.mrb[0].mxu0
  %880 = vmatprep.mubr.f32.mxu0 0.0
  %881 = vmatmul.mubr.f32.gmra.mrb[0].mxu0 %v761
  %v882 = vpop.f32.mrb[0].mxu0
  %v883 = vadd.f32 0.0, %v882
  %v884 = vpop.f32.mrb[0].mxu0
  %885 = vmatprep.mubr.f32.mxu0 0.0
  %886 = vmatmul.mubr.f32.gmra.mrb[0].mxu0 %v764
  %v887 = vpop.f32.mrb[0].mxu0
  %v888 = vadd.f32 0.0, %v887
  %v889 = vpop.f32.mrb[0].mxu0
  %890 = vdwg.mxu0
  %v892 = vsel %vm231, %v706, 0
  %v895 = vsel %vm231, %v707, 0
  %v898 = vsel %vm231, %v708, 0
  %v901 = vsel %vm231, %v709, 0
  %v904 = vsel %vm231, %v710, 0
  %v907 = vsel %vm231, %v711, 0
  %v910 = vsel %vm231, %v712, 0
  %v913 = vsel %vm231, %v713, 0
  %v916 = vsel %vm231, %v714, 0
  %v919 = vsel %vm231, %v715, 0
  %v922 = vsel %vm231, %v716, 0
  %v925 = vsel %vm231, %v717, 0
  %927 = vmatprep.subr.mxu0 0.0
  %928 = vmatpush1.msra.mxu0 %v703
  %929 = vmatprep.subr.mxu0 0.0
  %930 = vmatpush1.msra.mxu0 0.0
  %931 = vmatprep.subr.mxu0 0.0
  %932 = vmatpush1.msra.mxu0 0.0
  %933 = vmatprep.subr.mxu0 0.0
  %934 = vmatpush1.msra.mxu0 0.0
  %935 = vmatprep.subr.mxu0 0.0
  %936 = vmatpush1.msra.mxu0 0.0
  %937 = vmatprep.subr.mxu0 0.0
  %938 = vmatpush1.msra.mxu0 0.0
  %939 = vmatprep.subr.mxu0 0.0
  %940 = vmatpush1.msra.mxu0 0.0
  %941 = vmatprep.subr.mxu0 0.0
  %942 = vmatpush1.msra.mxu0 0.0
  %943 = vmatprep.subr.mxu0 0.0
  %944 = vmatpush1.msra.mxu0 0.0
  %945 = vmatprep.subr.mxu0 0.0
  %946 = vmatpush1.msra.mxu0 0.0
  %947 = vmatprep.subr.mxu0 0.0
  %948 = vmatpush1.msra.mxu0 0.0
  %949 = vmatprep.subr.mxu0 0.0
  %950 = vmatpush1.msra.mxu0 0.0
  %951 = vmatprep.subr.mxu0 0.0
  %952 = vmatpush1.msra.mxu0 0.0
  %953 = vmatprep.subr.mxu0 0.0
  %954 = vmatpush1.msra.mxu0 0.0
  %955 = vmatprep.subr.mxu0 0.0
  %956 = vmatpush1.msra.mxu0 0.0
  %957 = vmatprep.subr.mxu0 0.0
  %958 = vmatpush1.msra.mxu0 0.0
  %959 = vmatprep.subr.mxu0 0.0
  %960 = vmatpush1.msra.mxu0 0.0
  %961 = vmatprep.subr.mxu0 0.0
  %962 = vmatpush1.msra.mxu0 0.0
  %963 = vmatprep.subr.mxu0 0.0
  %964 = vmatpush1.msra.mxu0 0.0
  %965 = vmatprep.subr.mxu0 0.0
  %966 = vmatpush1.msra.mxu0 0.0
  %967 = vmatprep.subr.mxu0 0.0
  %968 = vmatpush1.msra.mxu0 0.0
  %969 = vmatprep.subr.mxu0 0.0
  %970 = vmatpush1.msra.mxu0 0.0
  %971 = vmatprep.subr.mxu0 0.0
  %972 = vmatpush1.msra.mxu0 0.0
  %973 = vmatprep.subr.mxu0 0.0
  %974 = vmatpush1.msra.mxu0 0.0
  %975 = vmatprep.subr.mxu0 0.0
  %976 = vmatpush1.msra.mxu0 0.0
  %977 = vmatprep.subr.mxu0 0.0
  %978 = vmatpush1.msra.mxu0 0.0
  %979 = vmatprep.subr.mxu0 0.0
  %980 = vmatpush1.msra.mxu0 0.0
  %981 = vmatprep.subr.mxu0 0.0
  %982 = vmatpush1.msra.mxu0 0.0
  %983 = vmatprep.subr.mxu0 0.0
  %984 = vmatpush1.msra.mxu0 0.0
  %985 = vmatprep.subr.mxu0 0.0
  %986 = vmatpush1.msra.mxu0 0.0
  %987 = vmatprep.subr.mxu0 0.0
  %988 = vmatpush1.msra.mxu0 0.0
  %989 = vmatprep.subr.mxu0 0.0
  %990 = vmatpush1.msra.mxu0 0.0
  %991 = vmatprep.mubr.f32.mxu0 0.0
  %992 = vmatmul.mubr.f32.gmra.mrb[0].mxu0 %v892
  %v993 = vpop.f32.mrb[0].mxu0
  %v994 = vadd.f32 %v833, %v993
  %v995 = vpop.f32.mrb[0].mxu0
  %996 = vmatprep.mubr.f32.mxu0 0.0
  %997 = vmatmul.mubr.f32.gmra.mrb[0].mxu0 %v895
  %v998 = vpop.f32.mrb[0].mxu0
  %v999 = vadd.f32 %v838, %v998
  %v1000 = vpop.f32.mrb[0].mxu0
  %1001 = vmatprep.mubr.f32.mxu0 0.0
  %1002 = vmatmul.mubr.f32.gmra.mrb[0].mxu0 %v898
  %v1003 = vpop.f32.mrb[0].mxu0
  %v1004 = vadd.f32 %v843, %v1003
  %v1005 = vpop.f32.mrb[0].mxu0
  %1006 = vmatprep.mubr.f32.mxu0 0.0
  %1007 = vmatmul.mubr.f32.gmra.mrb[0].mxu0 %v901
  %v1008 = vpop.f32.mrb[0].mxu0
  %v1009 = vadd.f32 %v848, %v1008
  %v1010 = vpop.f32.mrb[0].mxu0
  %1011 = vmatprep.mubr.f32.mxu0 0.0
  %1012 = vmatmul.mubr.f32.gmra.mrb[0].mxu0 %v904
  %v1013 = vpop.f32.mrb[0].mxu0
  %v1014 = vadd.f32 %v853, %v1013
  %v1015 = vpop.f32.mrb[0].mxu0
  %1016 = vmatprep.mubr.f32.mxu0 0.0
  %1017 = vmatmul.mubr.f32.gmra.mrb[0].mxu0 %v907
  %v1018 = vpop.f32.mrb[0].mxu0
  %v1019 = vadd.f32 %v858, %v1018
  %v1020 = vpop.f32.mrb[0].mxu0
  %1021 = vmatprep.mubr.f32.mxu0 0.0
  %1022 = vmatmul.mubr.f32.gmra.mrb[0].mxu0 %v910
  %v1023 = vpop.f32.mrb[0].mxu0
  %v1024 = vadd.f32 %v863, %v1023
  %v1025 = vpop.f32.mrb[0].mxu0
  %1026 = vmatprep.mubr.f32.mxu0 0.0
  %1027 = vmatmul.mubr.f32.gmra.mrb[0].mxu0 %v913
  %v1028 = vpop.f32.mrb[0].mxu0
  %v1029 = vadd.f32 %v868, %v1028
  %v1030 = vpop.f32.mrb[0].mxu0
  %1031 = vmatprep.mubr.f32.mxu0 0.0
  %1032 = vmatmul.mubr.f32.gmra.mrb[0].mxu0 %v916
  %v1033 = vpop.f32.mrb[0].mxu0
  %v1034 = vadd.f32 %v873, %v1033
  %v1035 = vpop.f32.mrb[0].mxu0
  %1036 = vmatprep.mubr.f32.mxu0 0.0
  %1037 = vmatmul.mubr.f32.gmra.mrb[0].mxu0 %v919
  %v1038 = vpop.f32.mrb[0].mxu0
  %v1039 = vadd.f32 %v878, %v1038
  %v1040 = vpop.f32.mrb[0].mxu0
  %1041 = vmatprep.mubr.f32.mxu0 0.0
  %1042 = vmatmul.mubr.f32.gmra.mrb[0].mxu0 %v922
  %v1043 = vpop.f32.mrb[0].mxu0
  %v1044 = vadd.f32 %v883, %v1043
  %v1045 = vpop.f32.mrb[0].mxu0
  %1046 = vmatprep.mubr.f32.mxu0 0.0
  %1047 = vmatmul.mubr.f32.gmra.mrb[0].mxu0 %v925
  %v1048 = vpop.f32.mrb[0].mxu0
  %v1049 = vadd.f32 %v888, %v1048
  %v1050 = vpop.f32.mrb[0].mxu0
  %1051 = vdwg.mxu0
  %v1052 = vadd.f32 %v994, %v125
  %v1053 = vadd.f32 %v999, %v130
  %v1054 = vadd.f32 %v1004, %v135
  %v1055 = vadd.f32 %v1009, %v140
  %v1056 = vadd.f32 %v1014, %v145
  %v1057 = vadd.f32 %v1019, %v150
  %v1058 = vadd.f32 %v1024, %v155
  %v1059 = vadd.f32 %v1029, %v160
  %v1060 = vadd.f32 %v1034, %v165
  %v1061 = vadd.f32 %v1039, %v170
  %v1062 = vadd.f32 %v1044, %v175
  %v1063 = vadd.f32 %v1049, %v180
  %v1064 = vld [vmem:[%s13] sm:$0xff]
  %v1065 = vld [vmem:[%s13 + $0x8] sm:$0xff]
  %v1066 = vld [vmem:[%s13 + $0x10] sm:$0xff]
  %v1067 = vld [vmem:[%s13 + $0x18] sm:$0xff]
  %v1068 = vld [vmem:[%s13 + $0x20] sm:$0xff]
  %v1069 = vld [vmem:[%s13 + $0x28] sm:$0xff]
  %v1070 = vld [vmem:[%s13 + $0x30] sm:$0xff]
  %v1071 = vld [vmem:[%s13 + $0x38] sm:$0xff]
  %v1072 = vld [vmem:[%s13 + $0x40] sm:$0xff]
  %v1073 = vld [vmem:[%s13 + $0x48] sm:$0xff]
  %v1074 = vld [vmem:[%s13 + $0x50] sm:$0xff]
  %v1075 = vld [vmem:[%s13 + $0x58] sm:$0xff]
  %vm1076 = vcmask 261120
  %v1078 = vsel %vm1076, %v1064, 0
  %v1081 = vsel %vm1076, %v1065, 0
  %v1084 = vsel %vm1076, %v1066, 0
  %v1087 = vsel %vm1076, %v1067, 0
  %v1090 = vsel %vm1076, %v1068, 0
  %v1093 = vsel %vm1076, %v1069, 0
  %v1096 = vsel %vm1076, %v1070, 0
  %v1099 = vsel %vm1076, %v1071, 0
  %v1102 = vsel %vm1076, %v1072, 0
  %v1105 = vsel %vm1076, %v1073, 0
  %v1108 = vsel %vm1076, %v1074, 0
  %v1111 = vsel %vm1076, %v1075, 0
  %1113 = vmatprep.subr.mxu0 0.0
  %1114 = vmatpush1.msra.mxu0 %v209
  %1115 = vmatprep.subr.mxu0 0.0
  %1116 = vmatpush1.msra.mxu0 %v210
  %1117 = vmatprep.subr.mxu0 0.0
  %1118 = vmatpush1.msra.mxu0 %v211
  %1119 = vmatprep.subr.mxu0 0.0
  %1120 = vmatpush1.msra.mxu0 %v212
  %1121 = vmatprep.subr.mxu0 0.0
  %1122 = vmatpush1.msra.mxu0 0.0
  %1123 = vmatprep.subr.mxu0 0.0
  %1124 = vmatpush1.msra.mxu0 0.0
  %1125 = vmatprep.subr.mxu0 0.0
  %1126 = vmatpush1.msra.mxu0 0.0
  %1127 = vmatprep.subr.mxu0 0.0
  %1128 = vmatpush1.msra.mxu0 0.0
  %1129 = vmatprep.subr.mxu0 0.0
  %1130 = vmatpush1.msra.mxu0 0.0
  %1131 = vmatprep.subr.mxu0 0.0
  %1132 = vmatpush1.msra.mxu0 0.0
  %1133 = vmatprep.subr.mxu0 0.0
  %1134 = vmatpush1.msra.mxu0 0.0
  %1135 = vmatprep.subr.mxu0 0.0
  %1136 = vmatpush1.msra.mxu0 0.0
  %1137 = vmatprep.subr.mxu0 0.0
  %1138 = vmatpush1.msra.mxu0 0.0
  %1139 = vmatprep.subr.mxu0 0.0
  %1140 = vmatpush1.msra.mxu0 0.0
  %1141 = vmatprep.subr.mxu0 0.0
  %1142 = vmatpush1.msra.mxu0 0.0
  %1143 = vmatprep.subr.mxu0 0.0
  %1144 = vmatpush1.msra.mxu0 0.0
  %1145 = vmatprep.subr.mxu0 0.0
  %1146 = vmatpush1.msra.mxu0 0.0
  %1147 = vmatprep.subr.mxu0 0.0
  %1148 = vmatpush1.msra.mxu0 0.0
  %1149 = vmatprep.subr.mxu0 0.0
  %1150 = vmatpush1.msra.mxu0 0.0
  %1151 = vmatprep.subr.mxu0 0.0
  %1152 = vmatpush1.msra.mxu0 0.0
  %1153 = vmatprep.subr.mxu0 0.0
  %1154 = vmatpush1.msra.mxu0 0.0
  %1155 = vmatprep.subr.mxu0 0.0
  %1156 = vmatpush1.msra.mxu0 0.0
  %1157 = vmatprep.subr.mxu0 0.0
  %1158 = vmatpush1.msra.mxu0 0.0
  %1159 = vmatprep.subr.mxu0 0.0
  %1160 = vmatpush1.msra.mxu0 0.0
  %1161 = vmatprep.subr.mxu0 0.0
  %1162 = vmatpush1.msra.mxu0 0.0
  %1163 = vmatprep.subr.mxu0 0.0
  %1164 = vmatpush1.msra.mxu0 0.0
  %1165 = vmatprep.subr.mxu0 0.0
  %1166 = vmatpush1.msra.mxu0 0.0
  %1167 = vmatprep.subr.mxu0 0.0
  %1168 = vmatpush1.msra.mxu0 0.0
  %1169 = vmatprep.subr.mxu0 0.0
  %1170 = vmatpush1.msra.mxu0 0.0
  %1171 = vmatprep.subr.mxu0 0.0
  %1172 = vmatpush1.msra.mxu0 0.0
  %1173 = vmatprep.subr.mxu0 0.0
  %1174 = vmatpush1.msra.mxu0 0.0
  %1175 = vmatprep.subr.mxu0 0.0
  %1176 = vmatpush1.msra.mxu0 0.0
  %1177 = vmatprep.mubr.f32.mxu0 0.0
  %1178 = vmatmul.mubr.f32.gmra.mrb[0].mxu0 %v1078
  %v1179 = vpop.f32.mrb[0].mxu0
  %v1180 = vadd.f32 0.0, %v1179
  %v1181 = vpop.f32.mrb[0].mxu0
  %1182 = vmatprep.mubr.f32.mxu0 0.0
  %1183 = vmatmul.mubr.f32.gmra.mrb[0].mxu0 %v1081
  %v1184 = vpop.f32.mrb[0].mxu0
  %v1185 = vadd.f32 0.0, %v1184
  %v1186 = vpop.f32.mrb[0].mxu0
  %1187 = vmatprep.mubr.f32.mxu0 0.0
  %1188 = vmatmul.mubr.f32.gmra.mrb[0].mxu0 %v1084
  %v1189 = vpop.f32.mrb[0].mxu0
  %v1190 = vadd.f32 0.0, %v1189
  %v1191 = vpop.f32.mrb[0].mxu0
  %1192 = vmatprep.mubr.f32.mxu0 0.0
  %1193 = vmatmul.mubr.f32.gmra.mrb[0].mxu0 %v1087
  %v1194 = vpop.f32.mrb[0].mxu0
  %v1195 = vadd.f32 0.0, %v1194
  %v1196 = vpop.f32.mrb[0].mxu0
  %1197 = vmatprep.mubr.f32.mxu0 0.0
  %1198 = vmatmul.mubr.f32.gmra.mrb[0].mxu0 %v1090
  %v1199 = vpop.f32.mrb[0].mxu0
  %v1200 = vadd.f32 0.0, %v1199
  %v1201 = vpop.f32.mrb[0].mxu0
  %1202 = vmatprep.mubr.f32.mxu0 0.0
  %1203 = vmatmul.mubr.f32.gmra.mrb[0].mxu0 %v1093
  %v1204 = vpop.f32.mrb[0].mxu0
  %v1205 = vadd.f32 0.0, %v1204
  %v1206 = vpop.f32.mrb[0].mxu0
  %1207 = vmatprep.mubr.f32.mxu0 0.0
  %1208 = vmatmul.mubr.f32.gmra.mrb[0].mxu0 %v1096
  %v1209 = vpop.f32.mrb[0].mxu0
  %v1210 = vadd.f32 0.0, %v1209
  %v1211 = vpop.f32.mrb[0].mxu0
  %1212 = vmatprep.mubr.f32.mxu0 0.0
  %1213 = vmatmul.mubr.f32.gmra.mrb[0].mxu0 %v1099
  %v1214 = vpop.f32.mrb[0].mxu0
  %v1215 = vadd.f32 0.0, %v1214
  %v1216 = vpop.f32.mrb[0].mxu0
  %1217 = vmatprep.mubr.f32.mxu0 0.0
  %1218 = vmatmul.mubr.f32.gmra.mrb[0].mxu0 %v1102
  %v1219 = vpop.f32.mrb[0].mxu0
  %v1220 = vadd.f32 0.0, %v1219
  %v1221 = vpop.f32.mrb[0].mxu0
  %1222 = vmatprep.mubr.f32.mxu0 0.0
  %1223 = vmatmul.mubr.f32.gmra.mrb[0].mxu0 %v1105
  %v1224 = vpop.f32.mrb[0].mxu0
  %v1225 = vadd.f32 0.0, %v1224
  %v1226 = vpop.f32.mrb[0].mxu0
  %1227 = vmatprep.mubr.f32.mxu0 0.0
  %1228 = vmatmul.mubr.f32.gmra.mrb[0].mxu0 %v1108
  %v1229 = vpop.f32.mrb[0].mxu0
  %v1230 = vadd.f32 0.0, %v1229
  %v1231 = vpop.f32.mrb[0].mxu0
  %1232 = vmatprep.mubr.f32.mxu0 0.0
  %1233 = vmatmul.mubr.f32.gmra.mrb[0].mxu0 %v1111
  %v1234 = vpop.f32.mrb[0].mxu0
  %v1235 = vadd.f32 0.0, %v1234
  %v1236 = vpop.f32.mrb[0].mxu0
  %1237 = vdwg.mxu0
  %v1238 = vadd.f32 %v1052, %v1180
  %v1239 = vadd.f32 %v1053, %v1185
  %v1240 = vadd.f32 %v1054, %v1190
  %v1241 = vadd.f32 %v1055, %v1195
  %v1242 = vxor.u32 %v1238, 2147483648
  %v1243 = vxor.u32 %v1239, 2147483648
  %v1244 = vxor.u32 %v1240, 2147483648
  %v1245 = vxor.u32 %v1241, 2147483648
  %v1246 = vmul.f32 %v1242, 1.442695
  %v1247 = vpow.pop %v1246
  %v1248 = vmul.f32 %v1243, 1.442695
  %v1249 = vpow.pop %v1248
  %v1250 = vmul.f32 %v1244, 1.442695
  %v1251 = vpow.pop %v1250
  %v1252 = vmul.f32 %v1245, 1.442695
  %v1253 = vpow.pop %v1252
  %v1254 = vadd.f32 %v1247, 1.0
  %v1255 = vadd.f32 %v1249, 1.0
  %v1256 = vadd.f32 %v1251, 1.0
  %v1257 = vadd.f32 %v1253, 1.0
  %v1258 = vrcp.pop %v1254
  %v1259 = vmul.f32 1.0, %v1258
  %v1260 = vrcp.pop %v1255
  %v1261 = vmul.f32 1.0, %v1260
  %v1262 = vrcp.pop %v1256
  %v1263 = vmul.f32 1.0, %v1262
  %v1264 = vrcp.pop %v1257
  %v1265 = vmul.f32 1.0, %v1264
  %v1266 = vadd.f32 %v1056, %v1200
  %v1267 = vadd.f32 %v1057, %v1205
  %v1268 = vadd.f32 %v1058, %v1210
  %v1269 = vadd.f32 %v1059, %v1215
  %v1270 = vxor.u32 %v1266, 2147483648
  %v1271 = vxor.u32 %v1267, 2147483648
  %v1272 = vxor.u32 %v1268, 2147483648
  %v1273 = vxor.u32 %v1269, 2147483648
  %v1274 = vmul.f32 %v1270, 1.442695
  %v1275 = vpow.pop %v1274
  %v1276 = vmul.f32 %v1271, 1.442695
  %v1277 = vpow.pop %v1276
  %v1278 = vmul.f32 %v1272, 1.442695
  %v1279 = vpow.pop %v1278
  %v1280 = vmul.f32 %v1273, 1.442695
  %v1281 = vpow.pop %v1280
  %v1282 = vadd.f32 %v1275, 1.0
  %v1283 = vadd.f32 %v1277, 1.0
  %v1284 = vadd.f32 %v1279, 1.0
  %v1285 = vadd.f32 %v1281, 1.0
  %v1286 = vrcp.pop %v1282
  %v1287 = vmul.f32 1.0, %v1286
  %v1288 = vrcp.pop %v1283
  %v1289 = vmul.f32 1.0, %v1288
  %v1290 = vrcp.pop %v1284
  %v1291 = vmul.f32 1.0, %v1290
  %v1292 = vrcp.pop %v1285
  %v1293 = vmul.f32 1.0, %v1292
  %v1294 = vadd.f32 %v1220, %v189
  %v1295 = vadd.f32 %v1225, %v194
  %v1296 = vadd.f32 %v1230, %v199
  %v1297 = vadd.f32 %v1235, %v204
  %v1298 = vmul.f32 %v1259, %v1294
  %v1299 = vmul.f32 %v1261, %v1295
  %v1300 = vmul.f32 %v1263, %v1296
  %v1301 = vmul.f32 %v1265, %v1297
  %v1302 = vadd.f32 %v1060, %v1298
  %v1303 = vadd.f32 %v1061, %v1299
  %v1304 = vadd.f32 %v1062, %v1300
  %v1305 = vadd.f32 %v1063, %v1301
  %v1306 = vtanh.pop %v1302
  %v1307 = vtanh.pop %v1303
  %v1308 = vtanh.pop %v1304
  %v1309 = vtanh.pop %v1305
  %v1310 = vsub.f32 1.0, %v1287
  %v1311 = vsub.f32 1.0, %v1289
  %v1312 = vsub.f32 1.0, %v1291
  %v1313 = vsub.f32 1.0, %v1293
  %v1314 = vmul.f32 %v1310, %v1306
  %v1315 = vmul.f32 %v1311, %v1307
  %v1316 = vmul.f32 %v1312, %v1308
  %v1317 = vmul.f32 %v1313, %v1309
  %v1318 = vmul.f32 %v1287, %v209
  %v1319 = vmul.f32 %v1289, %v210
  %v1320 = vmul.f32 %v1291, %v211
  %v1321 = vmul.f32 %v1293, %v212
  %v1322 = vadd.f32 %v1314, %v1318
  %v1323 = vadd.f32 %v1315, %v1319
  %v1324 = vadd.f32 %v1316, %v1320
  %v1325 = vadd.f32 %v1317, %v1321
  %v1326 = vmax.f32 %v1322, -5.0
  %v1327 = vmax.f32 %v1323, -5.0
  %v1328 = vmax.f32 %v1324, -5.0
  %v1329 = vmax.f32 %v1325, -5.0
  %v1330 = vmin.f32 %v1326, 5.0
  %v1331 = vmin.f32 %v1327, 5.0
  %v1332 = vmin.f32 %v1328, 5.0
  %v1333 = vmin.f32 %v1329, 5.0
  %v1334 = vld [vmem:[%s16] sm:$0xff]
  %v1336 = vsel %vm1076, %v1334, 0
  %1338 = vmatprep.subr.mxu0 0.0
  %1339 = vmatpush1.msra.mxu0 %v1330
  %1340 = vmatprep.subr.mxu0 0.0
  %1341 = vmatpush1.msra.mxu0 %v1331
  %1342 = vmatprep.subr.mxu0 0.0
  %1343 = vmatpush1.msra.mxu0 %v1332
  %1344 = vmatprep.subr.mxu0 0.0
  %1345 = vmatpush1.msra.mxu0 %v1333
  %1346 = vmatprep.subr.mxu0 0.0
  %1347 = vmatpush1.msra.mxu0 0.0
  %1348 = vmatprep.subr.mxu0 0.0
  %1349 = vmatpush1.msra.mxu0 0.0
  %1350 = vmatprep.subr.mxu0 0.0
  %1351 = vmatpush1.msra.mxu0 0.0
  %1352 = vmatprep.subr.mxu0 0.0
  %1353 = vmatpush1.msra.mxu0 0.0
  %1354 = vmatprep.subr.mxu0 0.0
  %1355 = vmatpush1.msra.mxu0 0.0
  %1356 = vmatprep.subr.mxu0 0.0
  %1357 = vmatpush1.msra.mxu0 0.0
  %1358 = vmatprep.subr.mxu0 0.0
  %1359 = vmatpush1.msra.mxu0 0.0
  %1360 = vmatprep.subr.mxu0 0.0
  %1361 = vmatpush1.msra.mxu0 0.0
  %1362 = vmatprep.subr.mxu0 0.0
  %1363 = vmatpush1.msra.mxu0 0.0
  %1364 = vmatprep.subr.mxu0 0.0
  %1365 = vmatpush1.msra.mxu0 0.0
  %1366 = vmatprep.subr.mxu0 0.0
  %1367 = vmatpush1.msra.mxu0 0.0
  %1368 = vmatprep.subr.mxu0 0.0
  %1369 = vmatpush1.msra.mxu0 0.0
  %1370 = vmatprep.subr.mxu0 0.0
  %1371 = vmatpush1.msra.mxu0 0.0
  %1372 = vmatprep.subr.mxu0 0.0
  %1373 = vmatpush1.msra.mxu0 0.0
  %1374 = vmatprep.subr.mxu0 0.0
  %1375 = vmatpush1.msra.mxu0 0.0
  %1376 = vmatprep.subr.mxu0 0.0
  %1377 = vmatpush1.msra.mxu0 0.0
  %1378 = vmatprep.subr.mxu0 0.0
  %1379 = vmatpush1.msra.mxu0 0.0
  %1380 = vmatprep.subr.mxu0 0.0
  %1381 = vmatpush1.msra.mxu0 0.0
  %1382 = vmatprep.subr.mxu0 0.0
  %1383 = vmatpush1.msra.mxu0 0.0
  %1384 = vmatprep.subr.mxu0 0.0
  %1385 = vmatpush1.msra.mxu0 0.0
  %1386 = vmatprep.subr.mxu0 0.0
  %1387 = vmatpush1.msra.mxu0 0.0
  %1388 = vmatprep.subr.mxu0 0.0
  %1389 = vmatpush1.msra.mxu0 0.0
  %1390 = vmatprep.subr.mxu0 0.0
  %1391 = vmatpush1.msra.mxu0 0.0
  %1392 = vmatprep.subr.mxu0 0.0
  %1393 = vmatpush1.msra.mxu0 0.0
  %1394 = vmatprep.subr.mxu0 0.0
  %1395 = vmatpush1.msra.mxu0 0.0
  %1396 = vmatprep.subr.mxu0 0.0
  %1397 = vmatpush1.msra.mxu0 0.0
  %1398 = vmatprep.subr.mxu0 0.0
  %1399 = vmatpush1.msra.mxu0 0.0
  %1400 = vmatprep.subr.mxu0 0.0
  %1401 = vmatpush1.msra.mxu0 0.0
  %1402 = vmatprep.mubr.f32.mxu0 0.0
  %1403 = vmatmul.mubr.f32.gmra.mrb[0].mxu0 %v1336
  %v1404 = vpop.f32.mrb[0].mxu0
  %v1405 = vadd.f32 0.0, %v1404
  %v1406 = vpop.f32.mrb[0].mxu0
  %1407 = vdwg.mxu0
  %v1408 = vmul.f32 %v703, 0.5
  %v1409 = vmul.f32 %v1408, 1.442695
  %v1410 = vpow.pop %v1409
  %v1411 = vsel %vm208, %v703, %v1410
  %v1412 = vsel %vm208, %v703, %v218
  %vm1413 = vcmask 31744
  %1414 = vst.msk [vmem:[%s17] sm:$0xff] %vm1413, %v1330
  %1415 = vst.msk [vmem:[%s17 + $0x8] sm:$0xff] %vm1413, %v1331
  %1416 = vst.msk [vmem:[%s17 + $0x10] sm:$0xff] %vm1413, %v1332
  %1417 = vst.msk [vmem:[%s17 + $0x18] sm:$0xff] %vm1413, %v1333
  %1418 = vst.msk [vmem:[%s17 + $0x20] sm:$0xff] %vm1413, %v630
  %1419 = vst.msk [vmem:[%s17 + $0x28] sm:$0xff] %vm1413, %v631
  %1420 = vst.msk [vmem:[%s17 + $0x30] sm:$0xff] %vm1413, %v1411
  %1421 = vst.msk [vmem:[%s17 + $0x38] sm:$0xff] %vm1413, %v1412
  %1422 = vst.msk [vmem:[%s17 + $0x40] sm:$0xff] %vm1413, %v1405
  %s1423 = scalar_lea.vmem %s0, 24
  %v1424 = vld [vmem:[%s1423] sm:$0xff]
  %v1425 = vld [vmem:[%s1423 + $0x8] sm:$0xff]
  %v1426 = vld [vmem:[%s1423 + $0x10] sm:$0xff]
  %v1427 = vld [vmem:[%s4] sm:$0xff]
  %v1428 = vld [vmem:[%s4 + $0x8] sm:$0xff]
  %v1429 = vld [vmem:[%s4 + $0x10] sm:$0xff]
  %v1430 = vld [vmem:[%s4 + $0x18] sm:$0xff]
  %v1431 = vld [vmem:[%s4 + $0x20] sm:$0xff]
  %v1432 = vld [vmem:[%s4 + $0x28] sm:$0xff]
  %v1433 = vld [vmem:[%s5] sm:$0xff]
  %v1434 = vld [vmem:[%s5 + $0x8] sm:$0xff]
  %v1435 = vld [vmem:[%s5 + $0x10] sm:$0xff]
  %v1436 = vld [vmem:[%s5 + $0x18] sm:$0xff]
  %v1437 = vld [vmem:[%s5 + $0x20] sm:$0xff]
  %v1438 = vld [vmem:[%s5 + $0x28] sm:$0xff]
  %v1440 = vsel %vm231, %v1433, 0
  %v1443 = vsel %vm231, %v1434, 0
  %v1446 = vsel %vm231, %v1435, 0
  %v1449 = vsel %vm231, %v1436, 0
  %v1452 = vsel %vm231, %v1437, 0
  %v1455 = vsel %vm231, %v1438, 0
  %1457 = vmatprep.subr.mxu0 0.0
  %1458 = vmatpush1.msra.mxu0 %v1405
  %1459 = vmatprep.subr.mxu0 0.0
  %1460 = vmatpush1.msra.mxu0 0.0
  %1461 = vmatprep.subr.mxu0 0.0
  %1462 = vmatpush1.msra.mxu0 0.0
  %1463 = vmatprep.subr.mxu0 0.0
  %1464 = vmatpush1.msra.mxu0 0.0
  %1465 = vmatprep.subr.mxu0 0.0
  %1466 = vmatpush1.msra.mxu0 0.0
  %1467 = vmatprep.subr.mxu0 0.0
  %1468 = vmatpush1.msra.mxu0 0.0
  %1469 = vmatprep.subr.mxu0 0.0
  %1470 = vmatpush1.msra.mxu0 0.0
  %1471 = vmatprep.subr.mxu0 0.0
  %1472 = vmatpush1.msra.mxu0 0.0
  %1473 = vmatprep.subr.mxu0 0.0
  %1474 = vmatpush1.msra.mxu0 0.0
  %1475 = vmatprep.subr.mxu0 0.0
  %1476 = vmatpush1.msra.mxu0 0.0
  %1477 = vmatprep.subr.mxu0 0.0
  %1478 = vmatpush1.msra.mxu0 0.0
  %1479 = vmatprep.subr.mxu0 0.0
  %1480 = vmatpush1.msra.mxu0 0.0
  %1481 = vmatprep.subr.mxu0 0.0
  %1482 = vmatpush1.msra.mxu0 0.0
  %1483 = vmatprep.subr.mxu0 0.0
  %1484 = vmatpush1.msra.mxu0 0.0
  %1485 = vmatprep.subr.mxu0 0.0
  %1486 = vmatpush1.msra.mxu0 0.0
  %1487 = vmatprep.subr.mxu0 0.0
  %1488 = vmatpush1.msra.mxu0 0.0
  %1489 = vmatprep.subr.mxu0 0.0
  %1490 = vmatpush1.msra.mxu0 0.0
  %1491 = vmatprep.subr.mxu0 0.0
  %1492 = vmatpush1.msra.mxu0 0.0
  %1493 = vmatprep.subr.mxu0 0.0
  %1494 = vmatpush1.msra.mxu0 0.0
  %1495 = vmatprep.subr.mxu0 0.0
  %1496 = vmatpush1.msra.mxu0 0.0
  %1497 = vmatprep.subr.mxu0 0.0
  %1498 = vmatpush1.msra.mxu0 0.0
  %1499 = vmatprep.subr.mxu0 0.0
  %1500 = vmatpush1.msra.mxu0 0.0
  %1501 = vmatprep.subr.mxu0 0.0
  %1502 = vmatpush1.msra.mxu0 0.0
  %1503 = vmatprep.subr.mxu0 0.0
  %1504 = vmatpush1.msra.mxu0 0.0
  %1505 = vmatprep.subr.mxu0 0.0
  %1506 = vmatpush1.msra.mxu0 0.0
  %1507 = vmatprep.subr.mxu0 0.0
  %1508 = vmatpush1.msra.mxu0 0.0
  %1509 = vmatprep.subr.mxu0 0.0
  %1510 = vmatpush1.msra.mxu0 0.0
  %1511 = vmatprep.subr.mxu0 0.0
  %1512 = vmatpush1.msra.mxu0 0.0
  %1513 = vmatprep.subr.mxu0 0.0
  %1514 = vmatpush1.msra.mxu0 0.0
  %1515 = vmatprep.subr.mxu0 0.0
  %1516 = vmatpush1.msra.mxu0 0.0
  %1517 = vmatprep.subr.mxu0 0.0
  %1518 = vmatpush1.msra.mxu0 0.0
  %1519 = vmatprep.subr.mxu0 0.0
  %1520 = vmatpush1.msra.mxu0 0.0
  %1521 = vmatprep.mubr.f32.mxu0 0.0
  %1522 = vmatmul.mubr.f32.gmra.mrb[0].mxu0 %v1440
  %v1523 = vpop.f32.mrb[0].mxu0
  %v1524 = vadd.f32 0.0, %v1523
  %v1525 = vpop.f32.mrb[0].mxu0
  %1526 = vmatprep.mubr.f32.mxu0 0.0
  %1527 = vmatmul.mubr.f32.gmra.mrb[0].mxu0 %v1443
  %v1528 = vpop.f32.mrb[0].mxu0
  %v1529 = vadd.f32 0.0, %v1528
  %v1530 = vpop.f32.mrb[0].mxu0
  %1531 = vmatprep.mubr.f32.mxu0 0.0
  %1532 = vmatmul.mubr.f32.gmra.mrb[0].mxu0 %v1446
  %v1533 = vpop.f32.mrb[0].mxu0
  %v1534 = vadd.f32 0.0, %v1533
  %v1535 = vpop.f32.mrb[0].mxu0
  %1536 = vmatprep.mubr.f32.mxu0 0.0
  %1537 = vmatmul.mubr.f32.gmra.mrb[0].mxu0 %v1449
  %v1538 = vpop.f32.mrb[0].mxu0
  %v1539 = vadd.f32 0.0, %v1538
  %v1540 = vpop.f32.mrb[0].mxu0
  %1541 = vmatprep.mubr.f32.mxu0 0.0
  %1542 = vmatmul.mubr.f32.gmra.mrb[0].mxu0 %v1452
  %v1543 = vpop.f32.mrb[0].mxu0
  %v1544 = vadd.f32 0.0, %v1543
  %v1545 = vpop.f32.mrb[0].mxu0
  %1546 = vmatprep.mubr.f32.mxu0 0.0
  %1547 = vmatmul.mubr.f32.gmra.mrb[0].mxu0 %v1455
  %v1548 = vpop.f32.mrb[0].mxu0
  %v1549 = vadd.f32 0.0, %v1548
  %v1550 = vpop.f32.mrb[0].mxu0
  %1551 = vdwg.mxu0
  %v1553 = vsel %vm345, %v1427, 0
  %v1556 = vsel %vm345, %v1428, 0
  %v1559 = vsel %vm345, %v1429, 0
  %v1562 = vsel %vm345, %v1430, 0
  %v1565 = vsel %vm345, %v1431, 0
  %v1568 = vsel %vm345, %v1432, 0
  %1570 = vmatprep.subr.mxu0 0.0
  %1571 = vmatpush1.msra.mxu0 %v1424
  %1572 = vmatprep.subr.mxu0 0.0
  %1573 = vmatpush1.msra.mxu0 %v1425
  %1574 = vmatprep.subr.mxu0 0.0
  %1575 = vmatpush1.msra.mxu0 0.0
  %1576 = vmatprep.subr.mxu0 0.0
  %1577 = vmatpush1.msra.mxu0 0.0
  %1578 = vmatprep.subr.mxu0 0.0
  %1579 = vmatpush1.msra.mxu0 0.0
  %1580 = vmatprep.subr.mxu0 0.0
  %1581 = vmatpush1.msra.mxu0 0.0
  %1582 = vmatprep.subr.mxu0 0.0
  %1583 = vmatpush1.msra.mxu0 0.0
  %1584 = vmatprep.subr.mxu0 0.0
  %1585 = vmatpush1.msra.mxu0 0.0
  %1586 = vmatprep.subr.mxu0 0.0
  %1587 = vmatpush1.msra.mxu0 0.0
  %1588 = vmatprep.subr.mxu0 0.0
  %1589 = vmatpush1.msra.mxu0 0.0
  %1590 = vmatprep.subr.mxu0 0.0
  %1591 = vmatpush1.msra.mxu0 0.0
  %1592 = vmatprep.subr.mxu0 0.0
  %1593 = vmatpush1.msra.mxu0 0.0
  %1594 = vmatprep.subr.mxu0 0.0
  %1595 = vmatpush1.msra.mxu0 0.0
  %1596 = vmatprep.subr.mxu0 0.0
  %1597 = vmatpush1.msra.mxu0 0.0
  %1598 = vmatprep.subr.mxu0 0.0
  %1599 = vmatpush1.msra.mxu0 0.0
  %1600 = vmatprep.subr.mxu0 0.0
  %1601 = vmatpush1.msra.mxu0 0.0
  %1602 = vmatprep.subr.mxu0 0.0
  %1603 = vmatpush1.msra.mxu0 0.0
  %1604 = vmatprep.subr.mxu0 0.0
  %1605 = vmatpush1.msra.mxu0 0.0
  %1606 = vmatprep.subr.mxu0 0.0
  %1607 = vmatpush1.msra.mxu0 0.0
  %1608 = vmatprep.subr.mxu0 0.0
  %1609 = vmatpush1.msra.mxu0 0.0
  %1610 = vmatprep.subr.mxu0 0.0
  %1611 = vmatpush1.msra.mxu0 0.0
  %1612 = vmatprep.subr.mxu0 0.0
  %1613 = vmatpush1.msra.mxu0 0.0
  %1614 = vmatprep.subr.mxu0 0.0
  %1615 = vmatpush1.msra.mxu0 0.0
  %1616 = vmatprep.subr.mxu0 0.0
  %1617 = vmatpush1.msra.mxu0 0.0
  %1618 = vmatprep.subr.mxu0 0.0
  %1619 = vmatpush1.msra.mxu0 0.0
  %1620 = vmatprep.subr.mxu0 0.0
  %1621 = vmatpush1.msra.mxu0 0.0
  %1622 = vmatprep.subr.mxu0 0.0
  %1623 = vmatpush1.msra.mxu0 0.0
  %1624 = vmatprep.subr.mxu0 0.0
  %1625 = vmatpush1.msra.mxu0 0.0
  %1626 = vmatprep.subr.mxu0 0.0
  %1627 = vmatpush1.msra.mxu0 0.0
  %1628 = vmatprep.subr.mxu0 0.0
  %1629 = vmatpush1.msra.mxu0 0.0
  %1630 = vmatprep.subr.mxu0 0.0
  %1631 = vmatpush1.msra.mxu0 0.0
  %1632 = vmatprep.subr.mxu0 0.0
  %1633 = vmatpush1.msra.mxu0 0.0
  %1634 = vmatprep.mubr.f32.mxu0 0.0
  %1635 = vmatmul.mubr.f32.gmra.mrb[0].mxu0 %v1553
  %v1636 = vpop.f32.mrb[0].mxu0
  %v1637 = vadd.f32 %v1524, %v1636
  %v1638 = vpop.f32.mrb[0].mxu0
  %1639 = vmatprep.mubr.f32.mxu0 0.0
  %1640 = vmatmul.mubr.f32.gmra.mrb[0].mxu0 %v1556
  %v1641 = vpop.f32.mrb[0].mxu0
  %v1642 = vadd.f32 %v1529, %v1641
  %v1643 = vpop.f32.mrb[0].mxu0
  %1644 = vmatprep.mubr.f32.mxu0 0.0
  %1645 = vmatmul.mubr.f32.gmra.mrb[0].mxu0 %v1559
  %v1646 = vpop.f32.mrb[0].mxu0
  %v1647 = vadd.f32 %v1534, %v1646
  %v1648 = vpop.f32.mrb[0].mxu0
  %1649 = vmatprep.mubr.f32.mxu0 0.0
  %1650 = vmatmul.mubr.f32.gmra.mrb[0].mxu0 %v1562
  %v1651 = vpop.f32.mrb[0].mxu0
  %v1652 = vadd.f32 %v1539, %v1651
  %v1653 = vpop.f32.mrb[0].mxu0
  %1654 = vmatprep.mubr.f32.mxu0 0.0
  %1655 = vmatmul.mubr.f32.gmra.mrb[0].mxu0 %v1565
  %v1656 = vpop.f32.mrb[0].mxu0
  %v1657 = vadd.f32 %v1544, %v1656
  %v1658 = vpop.f32.mrb[0].mxu0
  %1659 = vmatprep.mubr.f32.mxu0 0.0
  %1660 = vmatmul.mubr.f32.gmra.mrb[0].mxu0 %v1568
  %v1661 = vpop.f32.mrb[0].mxu0
  %v1662 = vadd.f32 %v1549, %v1661
  %v1663 = vpop.f32.mrb[0].mxu0
  %1664 = vdwg.mxu0
  %v1665 = vadd.f32 %v1637, %v65
  %v1666 = vadd.f32 %v1642, %v70
  %v1667 = vadd.f32 %v1647, %v75
  %v1668 = vadd.f32 %v1652, %v80
  %v1669 = vadd.f32 %v1657, %v85
  %v1670 = vadd.f32 %v1662, %v90
  %v1671 = vld [vmem:[%s6] sm:$0xff]
  %v1672 = vld [vmem:[%s6 + $0x8] sm:$0xff]
  %v1673 = vld [vmem:[%s6 + $0x10] sm:$0xff]
  %v1674 = vld [vmem:[%s6 + $0x18] sm:$0xff]
  %v1675 = vld [vmem:[%s6 + $0x20] sm:$0xff]
  %v1676 = vld [vmem:[%s6 + $0x28] sm:$0xff]
  %v1678 = vsel %vm345, %v1671, 0
  %v1681 = vsel %vm345, %v1672, 0
  %v1684 = vsel %vm345, %v1673, 0
  %v1687 = vsel %vm345, %v1674, 0
  %v1690 = vsel %vm345, %v1675, 0
  %v1693 = vsel %vm345, %v1676, 0
  %1695 = vmatprep.subr.mxu0 0.0
  %1696 = vmatpush1.msra.mxu0 %v630
  %1697 = vmatprep.subr.mxu0 0.0
  %1698 = vmatpush1.msra.mxu0 %v631
  %1699 = vmatprep.subr.mxu0 0.0
  %1700 = vmatpush1.msra.mxu0 0.0
  %1701 = vmatprep.subr.mxu0 0.0
  %1702 = vmatpush1.msra.mxu0 0.0
  %1703 = vmatprep.subr.mxu0 0.0
  %1704 = vmatpush1.msra.mxu0 0.0
  %1705 = vmatprep.subr.mxu0 0.0
  %1706 = vmatpush1.msra.mxu0 0.0
  %1707 = vmatprep.subr.mxu0 0.0
  %1708 = vmatpush1.msra.mxu0 0.0
  %1709 = vmatprep.subr.mxu0 0.0
  %1710 = vmatpush1.msra.mxu0 0.0
  %1711 = vmatprep.subr.mxu0 0.0
  %1712 = vmatpush1.msra.mxu0 0.0
  %1713 = vmatprep.subr.mxu0 0.0
  %1714 = vmatpush1.msra.mxu0 0.0
  %1715 = vmatprep.subr.mxu0 0.0
  %1716 = vmatpush1.msra.mxu0 0.0
  %1717 = vmatprep.subr.mxu0 0.0
  %1718 = vmatpush1.msra.mxu0 0.0
  %1719 = vmatprep.subr.mxu0 0.0
  %1720 = vmatpush1.msra.mxu0 0.0
  %1721 = vmatprep.subr.mxu0 0.0
  %1722 = vmatpush1.msra.mxu0 0.0
  %1723 = vmatprep.subr.mxu0 0.0
  %1724 = vmatpush1.msra.mxu0 0.0
  %1725 = vmatprep.subr.mxu0 0.0
  %1726 = vmatpush1.msra.mxu0 0.0
  %1727 = vmatprep.subr.mxu0 0.0
  %1728 = vmatpush1.msra.mxu0 0.0
  %1729 = vmatprep.subr.mxu0 0.0
  %1730 = vmatpush1.msra.mxu0 0.0
  %1731 = vmatprep.subr.mxu0 0.0
  %1732 = vmatpush1.msra.mxu0 0.0
  %1733 = vmatprep.subr.mxu0 0.0
  %1734 = vmatpush1.msra.mxu0 0.0
  %1735 = vmatprep.subr.mxu0 0.0
  %1736 = vmatpush1.msra.mxu0 0.0
  %1737 = vmatprep.subr.mxu0 0.0
  %1738 = vmatpush1.msra.mxu0 0.0
  %1739 = vmatprep.subr.mxu0 0.0
  %1740 = vmatpush1.msra.mxu0 0.0
  %1741 = vmatprep.subr.mxu0 0.0
  %1742 = vmatpush1.msra.mxu0 0.0
  %1743 = vmatprep.subr.mxu0 0.0
  %1744 = vmatpush1.msra.mxu0 0.0
  %1745 = vmatprep.subr.mxu0 0.0
  %1746 = vmatpush1.msra.mxu0 0.0
  %1747 = vmatprep.subr.mxu0 0.0
  %1748 = vmatpush1.msra.mxu0 0.0
  %1749 = vmatprep.subr.mxu0 0.0
  %1750 = vmatpush1.msra.mxu0 0.0
  %1751 = vmatprep.subr.mxu0 0.0
  %1752 = vmatpush1.msra.mxu0 0.0
  %1753 = vmatprep.subr.mxu0 0.0
  %1754 = vmatpush1.msra.mxu0 0.0
  %1755 = vmatprep.subr.mxu0 0.0
  %1756 = vmatpush1.msra.mxu0 0.0
  %1757 = vmatprep.subr.mxu0 0.0
  %1758 = vmatpush1.msra.mxu0 0.0
  %1759 = vmatprep.mubr.f32.mxu0 0.0
  %1760 = vmatmul.mubr.f32.gmra.mrb[0].mxu0 %v1678
  %v1761 = vpop.f32.mrb[0].mxu0
  %v1762 = vadd.f32 0.0, %v1761
  %v1763 = vpop.f32.mrb[0].mxu0
  %1764 = vmatprep.mubr.f32.mxu0 0.0
  %1765 = vmatmul.mubr.f32.gmra.mrb[0].mxu0 %v1681
  %v1766 = vpop.f32.mrb[0].mxu0
  %v1767 = vadd.f32 0.0, %v1766
  %v1768 = vpop.f32.mrb[0].mxu0
  %1769 = vmatprep.mubr.f32.mxu0 0.0
  %1770 = vmatmul.mubr.f32.gmra.mrb[0].mxu0 %v1684
  %v1771 = vpop.f32.mrb[0].mxu0
  %v1772 = vadd.f32 0.0, %v1771
  %v1773 = vpop.f32.mrb[0].mxu0
  %1774 = vmatprep.mubr.f32.mxu0 0.0
  %1775 = vmatmul.mubr.f32.gmra.mrb[0].mxu0 %v1687
  %v1776 = vpop.f32.mrb[0].mxu0
  %v1777 = vadd.f32 0.0, %v1776
  %v1778 = vpop.f32.mrb[0].mxu0
  %1779 = vmatprep.mubr.f32.mxu0 0.0
  %1780 = vmatmul.mubr.f32.gmra.mrb[0].mxu0 %v1690
  %v1781 = vpop.f32.mrb[0].mxu0
  %v1782 = vadd.f32 0.0, %v1781
  %v1783 = vpop.f32.mrb[0].mxu0
  %1784 = vmatprep.mubr.f32.mxu0 0.0
  %1785 = vmatmul.mubr.f32.gmra.mrb[0].mxu0 %v1693
  %v1786 = vpop.f32.mrb[0].mxu0
  %v1787 = vadd.f32 0.0, %v1786
  %v1788 = vpop.f32.mrb[0].mxu0
  %1789 = vdwg.mxu0
  %v1790 = vadd.f32 %v1665, %v1762
  %v1791 = vadd.f32 %v1666, %v1767
  %v1792 = vxor.u32 %v1790, 2147483648
  %v1793 = vxor.u32 %v1791, 2147483648
  %v1794 = vmul.f32 %v1792, 1.442695
  %v1795 = vpow.pop %v1794
  %v1796 = vmul.f32 %v1793, 1.442695
  %v1797 = vpow.pop %v1796
  %v1798 = vadd.f32 %v1795, 1.0
  %v1799 = vadd.f32 %v1797, 1.0
  %v1800 = vrcp.pop %v1798
  %v1801 = vmul.f32 1.0, %v1800
  %v1802 = vrcp.pop %v1799
  %v1803 = vmul.f32 1.0, %v1802
  %v1804 = vadd.f32 %v1667, %v1772
  %v1805 = vadd.f32 %v1668, %v1777
  %v1806 = vxor.u32 %v1804, 2147483648
  %v1807 = vxor.u32 %v1805, 2147483648
  %v1808 = vmul.f32 %v1806, 1.442695
  %v1809 = vpow.pop %v1808
  %v1810 = vmul.f32 %v1807, 1.442695
  %v1811 = vpow.pop %v1810
  %v1812 = vadd.f32 %v1809, 1.0
  %v1813 = vadd.f32 %v1811, 1.0
  %v1814 = vrcp.pop %v1812
  %v1815 = vmul.f32 1.0, %v1814
  %v1816 = vrcp.pop %v1813
  %v1817 = vmul.f32 1.0, %v1816
  %v1818 = vadd.f32 %v1782, %v97
  %v1819 = vadd.f32 %v1787, %v102
  %v1820 = vmul.f32 %v1801, %v1818
  %v1821 = vmul.f32 %v1803, %v1819
  %v1822 = vadd.f32 %v1669, %v1820
  %v1823 = vadd.f32 %v1670, %v1821
  %v1824 = vtanh.pop %v1822
  %v1825 = vtanh.pop %v1823
  %v1826 = vsub.f32 1.0, %v1815
  %v1827 = vsub.f32 1.0, %v1817
  %v1828 = vmul.f32 %v1826, %v1824
  %v1829 = vmul.f32 %v1827, %v1825
  %v1830 = vmul.f32 %v1815, %v630
  %v1831 = vmul.f32 %v1817, %v631
  %v1832 = vadd.f32 %v1828, %v1830
  %v1833 = vadd.f32 %v1829, %v1831
  %v1834 = vmax.f32 %v1832, -5.0
  %v1835 = vmax.f32 %v1833, -5.0
  %v1836 = vmin.f32 %v1834, 5.0
  %v1837 = vmin.f32 %v1835, 5.0
  %v1838 = vld [vmem:[%s9] sm:$0xff]
  %v1840 = vsel %vm345, %v1838, 0
  %1842 = vmatprep.subr.mxu0 0.0
  %1843 = vmatpush1.msra.mxu0 %v1836
  %1844 = vmatprep.subr.mxu0 0.0
  %1845 = vmatpush1.msra.mxu0 %v1837
  %1846 = vmatprep.subr.mxu0 0.0
  %1847 = vmatpush1.msra.mxu0 0.0
  %1848 = vmatprep.subr.mxu0 0.0
  %1849 = vmatpush1.msra.mxu0 0.0
  %1850 = vmatprep.subr.mxu0 0.0
  %1851 = vmatpush1.msra.mxu0 0.0
  %1852 = vmatprep.subr.mxu0 0.0
  %1853 = vmatpush1.msra.mxu0 0.0
  %1854 = vmatprep.subr.mxu0 0.0
  %1855 = vmatpush1.msra.mxu0 0.0
  %1856 = vmatprep.subr.mxu0 0.0
  %1857 = vmatpush1.msra.mxu0 0.0
  %1858 = vmatprep.subr.mxu0 0.0
  %1859 = vmatpush1.msra.mxu0 0.0
  %1860 = vmatprep.subr.mxu0 0.0
  %1861 = vmatpush1.msra.mxu0 0.0
  %1862 = vmatprep.subr.mxu0 0.0
  %1863 = vmatpush1.msra.mxu0 0.0
  %1864 = vmatprep.subr.mxu0 0.0
  %1865 = vmatpush1.msra.mxu0 0.0
  %1866 = vmatprep.subr.mxu0 0.0
  %1867 = vmatpush1.msra.mxu0 0.0
  %1868 = vmatprep.subr.mxu0 0.0
  %1869 = vmatpush1.msra.mxu0 0.0
  %1870 = vmatprep.subr.mxu0 0.0
  %1871 = vmatpush1.msra.mxu0 0.0
  %1872 = vmatprep.subr.mxu0 0.0
  %1873 = vmatpush1.msra.mxu0 0.0
  %1874 = vmatprep.subr.mxu0 0.0
  %1875 = vmatpush1.msra.mxu0 0.0
  %1876 = vmatprep.subr.mxu0 0.0
  %1877 = vmatpush1.msra.mxu0 0.0
  %1878 = vmatprep.subr.mxu0 0.0
  %1879 = vmatpush1.msra.mxu0 0.0
  %1880 = vmatprep.subr.mxu0 0.0
  %1881 = vmatpush1.msra.mxu0 0.0
  %1882 = vmatprep.subr.mxu0 0.0
  %1883 = vmatpush1.msra.mxu0 0.0
  %1884 = vmatprep.subr.mxu0 0.0
  %1885 = vmatpush1.msra.mxu0 0.0
  %1886 = vmatprep.subr.mxu0 0.0
  %1887 = vmatpush1.msra.mxu0 0.0
  %1888 = vmatprep.subr.mxu0 0.0
  %1889 = vmatpush1.msra.mxu0 0.0
  %1890 = vmatprep.subr.mxu0 0.0
  %1891 = vmatpush1.msra.mxu0 0.0
  %1892 = vmatprep.subr.mxu0 0.0
  %1893 = vmatpush1.msra.mxu0 0.0
  %1894 = vmatprep.subr.mxu0 0.0
  %1895 = vmatpush1.msra.mxu0 0.0
  %1896 = vmatprep.subr.mxu0 0.0
  %1897 = vmatpush1.msra.mxu0 0.0
  %1898 = vmatprep.subr.mxu0 0.0
  %1899 = vmatpush1.msra.mxu0 0.0
  %1900 = vmatprep.subr.mxu0 0.0
  %1901 = vmatpush1.msra.mxu0 0.0
  %1902 = vmatprep.subr.mxu0 0.0
  %1903 = vmatpush1.msra.mxu0 0.0
  %1904 = vmatprep.subr.mxu0 0.0
  %1905 = vmatpush1.msra.mxu0 0.0
  %1906 = vmatprep.mubr.f32.mxu0 0.0
  %1907 = vmatmul.mubr.f32.gmra.mrb[0].mxu0 %v1840
  %v1908 = vpop.f32.mrb[0].mxu0
  %v1909 = vadd.f32 %v108, %v1908
  %v1910 = vpop.f32.mrb[0].mxu0
  %1911 = vdwg.mxu0
  %v1912 = vld [vmem:[%s11] sm:$0xff]
  %v1913 = vld [vmem:[%s11 + $0x8] sm:$0xff]
  %v1914 = vld [vmem:[%s11 + $0x10] sm:$0xff]
  %v1915 = vld [vmem:[%s11 + $0x18] sm:$0xff]
  %v1916 = vld [vmem:[%s11 + $0x20] sm:$0xff]
  %v1917 = vld [vmem:[%s11 + $0x28] sm:$0xff]
  %v1918 = vld [vmem:[%s11 + $0x30] sm:$0xff]
  %v1919 = vld [vmem:[%s11 + $0x38] sm:$0xff]
  %v1920 = vld [vmem:[%s11 + $0x40] sm:$0xff]
  %v1921 = vld [vmem:[%s11 + $0x48] sm:$0xff]
  %v1922 = vld [vmem:[%s11 + $0x50] sm:$0xff]
  %v1923 = vld [vmem:[%s11 + $0x58] sm:$0xff]
  %v1924 = vld [vmem:[%s12] sm:$0xff]
  %v1925 = vld [vmem:[%s12 + $0x8] sm:$0xff]
  %v1926 = vld [vmem:[%s12 + $0x10] sm:$0xff]
  %v1927 = vld [vmem:[%s12 + $0x18] sm:$0xff]
  %v1928 = vld [vmem:[%s12 + $0x20] sm:$0xff]
  %v1929 = vld [vmem:[%s12 + $0x28] sm:$0xff]
  %v1930 = vld [vmem:[%s12 + $0x30] sm:$0xff]
  %v1931 = vld [vmem:[%s12 + $0x38] sm:$0xff]
  %v1932 = vld [vmem:[%s12 + $0x40] sm:$0xff]
  %v1933 = vld [vmem:[%s12 + $0x48] sm:$0xff]
  %v1934 = vld [vmem:[%s12 + $0x50] sm:$0xff]
  %v1935 = vld [vmem:[%s12 + $0x58] sm:$0xff]
  %v1937 = vsel %vm231, %v1924, 0
  %v1940 = vsel %vm231, %v1925, 0
  %v1943 = vsel %vm231, %v1926, 0
  %v1946 = vsel %vm231, %v1927, 0
  %v1949 = vsel %vm231, %v1928, 0
  %v1952 = vsel %vm231, %v1929, 0
  %v1955 = vsel %vm231, %v1930, 0
  %v1958 = vsel %vm231, %v1931, 0
  %v1961 = vsel %vm231, %v1932, 0
  %v1964 = vsel %vm231, %v1933, 0
  %v1967 = vsel %vm231, %v1934, 0
  %v1970 = vsel %vm231, %v1935, 0
  %1972 = vmatprep.subr.mxu0 0.0
  %1973 = vmatpush1.msra.mxu0 %v1426
  %1974 = vmatprep.subr.mxu0 0.0
  %1975 = vmatpush1.msra.mxu0 0.0
  %1976 = vmatprep.subr.mxu0 0.0
  %1977 = vmatpush1.msra.mxu0 0.0
  %1978 = vmatprep.subr.mxu0 0.0
  %1979 = vmatpush1.msra.mxu0 0.0
  %1980 = vmatprep.subr.mxu0 0.0
  %1981 = vmatpush1.msra.mxu0 0.0
  %1982 = vmatprep.subr.mxu0 0.0
  %1983 = vmatpush1.msra.mxu0 0.0
  %1984 = vmatprep.subr.mxu0 0.0
  %1985 = vmatpush1.msra.mxu0 0.0
  %1986 = vmatprep.subr.mxu0 0.0
  %1987 = vmatpush1.msra.mxu0 0.0
  %1988 = vmatprep.subr.mxu0 0.0
  %1989 = vmatpush1.msra.mxu0 0.0
  %1990 = vmatprep.subr.mxu0 0.0
  %1991 = vmatpush1.msra.mxu0 0.0
  %1992 = vmatprep.subr.mxu0 0.0
  %1993 = vmatpush1.msra.mxu0 0.0
  %1994 = vmatprep.subr.mxu0 0.0
  %1995 = vmatpush1.msra.mxu0 0.0
  %1996 = vmatprep.subr.mxu0 0.0
  %1997 = vmatpush1.msra.mxu0 0.0
  %1998 = vmatprep.subr.mxu0 0.0
  %1999 = vmatpush1.msra.mxu0 0.0
  %2000 = vmatprep.subr.mxu0 0.0
  %2001 = vmatpush1.msra.mxu0 0.0
  %2002 = vmatprep.subr.mxu0 0.0
  %2003 = vmatpush1.msra.mxu0 0.0
  %2004 = vmatprep.subr.mxu0 0.0
  %2005 = vmatpush1.msra.mxu0 0.0
  %2006 = vmatprep.subr.mxu0 0.0
  %2007 = vmatpush1.msra.mxu0 0.0
  %2008 = vmatprep.subr.mxu0 0.0
  %2009 = vmatpush1.msra.mxu0 0.0
  %2010 = vmatprep.subr.mxu0 0.0
  %2011 = vmatpush1.msra.mxu0 0.0
  %2012 = vmatprep.subr.mxu0 0.0
  %2013 = vmatpush1.msra.mxu0 0.0
  %2014 = vmatprep.subr.mxu0 0.0
  %2015 = vmatpush1.msra.mxu0 0.0
  %2016 = vmatprep.subr.mxu0 0.0
  %2017 = vmatpush1.msra.mxu0 0.0
  %2018 = vmatprep.subr.mxu0 0.0
  %2019 = vmatpush1.msra.mxu0 0.0
  %2020 = vmatprep.subr.mxu0 0.0
  %2021 = vmatpush1.msra.mxu0 0.0
  %2022 = vmatprep.subr.mxu0 0.0
  %2023 = vmatpush1.msra.mxu0 0.0
  %2024 = vmatprep.subr.mxu0 0.0
  %2025 = vmatpush1.msra.mxu0 0.0
  %2026 = vmatprep.subr.mxu0 0.0
  %2027 = vmatpush1.msra.mxu0 0.0
  %2028 = vmatprep.subr.mxu0 0.0
  %2029 = vmatpush1.msra.mxu0 0.0
  %2030 = vmatprep.subr.mxu0 0.0
  %2031 = vmatpush1.msra.mxu0 0.0
  %2032 = vmatprep.subr.mxu0 0.0
  %2033 = vmatpush1.msra.mxu0 0.0
  %2034 = vmatprep.subr.mxu0 0.0
  %2035 = vmatpush1.msra.mxu0 0.0
  %2036 = vmatprep.mubr.f32.mxu0 0.0
  %2037 = vmatmul.mubr.f32.gmra.mrb[0].mxu0 %v1937
  %v2038 = vpop.f32.mrb[0].mxu0
  %v2039 = vadd.f32 0.0, %v2038
  %v2040 = vpop.f32.mrb[0].mxu0
  %2041 = vmatprep.mubr.f32.mxu0 0.0
  %2042 = vmatmul.mubr.f32.gmra.mrb[0].mxu0 %v1940
  %v2043 = vpop.f32.mrb[0].mxu0
  %v2044 = vadd.f32 0.0, %v2043
  %v2045 = vpop.f32.mrb[0].mxu0
  %2046 = vmatprep.mubr.f32.mxu0 0.0
  %2047 = vmatmul.mubr.f32.gmra.mrb[0].mxu0 %v1943
  %v2048 = vpop.f32.mrb[0].mxu0
  %v2049 = vadd.f32 0.0, %v2048
  %v2050 = vpop.f32.mrb[0].mxu0
  %2051 = vmatprep.mubr.f32.mxu0 0.0
  %2052 = vmatmul.mubr.f32.gmra.mrb[0].mxu0 %v1946
  %v2053 = vpop.f32.mrb[0].mxu0
  %v2054 = vadd.f32 0.0, %v2053
  %v2055 = vpop.f32.mrb[0].mxu0
  %2056 = vmatprep.mubr.f32.mxu0 0.0
  %2057 = vmatmul.mubr.f32.gmra.mrb[0].mxu0 %v1949
  %v2058 = vpop.f32.mrb[0].mxu0
  %v2059 = vadd.f32 0.0, %v2058
  %v2060 = vpop.f32.mrb[0].mxu0
  %2061 = vmatprep.mubr.f32.mxu0 0.0
  %2062 = vmatmul.mubr.f32.gmra.mrb[0].mxu0 %v1952
  %v2063 = vpop.f32.mrb[0].mxu0
  %v2064 = vadd.f32 0.0, %v2063
  %v2065 = vpop.f32.mrb[0].mxu0
  %2066 = vmatprep.mubr.f32.mxu0 0.0
  %2067 = vmatmul.mubr.f32.gmra.mrb[0].mxu0 %v1955
  %v2068 = vpop.f32.mrb[0].mxu0
  %v2069 = vadd.f32 0.0, %v2068
  %v2070 = vpop.f32.mrb[0].mxu0
  %2071 = vmatprep.mubr.f32.mxu0 0.0
  %2072 = vmatmul.mubr.f32.gmra.mrb[0].mxu0 %v1958
  %v2073 = vpop.f32.mrb[0].mxu0
  %v2074 = vadd.f32 0.0, %v2073
  %v2075 = vpop.f32.mrb[0].mxu0
  %2076 = vmatprep.mubr.f32.mxu0 0.0
  %2077 = vmatmul.mubr.f32.gmra.mrb[0].mxu0 %v1961
  %v2078 = vpop.f32.mrb[0].mxu0
  %v2079 = vadd.f32 0.0, %v2078
  %v2080 = vpop.f32.mrb[0].mxu0
  %2081 = vmatprep.mubr.f32.mxu0 0.0
  %2082 = vmatmul.mubr.f32.gmra.mrb[0].mxu0 %v1964
  %v2083 = vpop.f32.mrb[0].mxu0
  %v2084 = vadd.f32 0.0, %v2083
  %v2085 = vpop.f32.mrb[0].mxu0
  %2086 = vmatprep.mubr.f32.mxu0 0.0
  %2087 = vmatmul.mubr.f32.gmra.mrb[0].mxu0 %v1967
  %v2088 = vpop.f32.mrb[0].mxu0
  %v2089 = vadd.f32 0.0, %v2088
  %v2090 = vpop.f32.mrb[0].mxu0
  %2091 = vmatprep.mubr.f32.mxu0 0.0
  %2092 = vmatmul.mubr.f32.gmra.mrb[0].mxu0 %v1970
  %v2093 = vpop.f32.mrb[0].mxu0
  %v2094 = vadd.f32 0.0, %v2093
  %v2095 = vpop.f32.mrb[0].mxu0
  %2096 = vdwg.mxu0
  %v2098 = vsel %vm231, %v1912, 0
  %v2101 = vsel %vm231, %v1913, 0
  %v2104 = vsel %vm231, %v1914, 0
  %v2107 = vsel %vm231, %v1915, 0
  %v2110 = vsel %vm231, %v1916, 0
  %v2113 = vsel %vm231, %v1917, 0
  %v2116 = vsel %vm231, %v1918, 0
  %v2119 = vsel %vm231, %v1919, 0
  %v2122 = vsel %vm231, %v1920, 0
  %v2125 = vsel %vm231, %v1921, 0
  %v2128 = vsel %vm231, %v1922, 0
  %v2131 = vsel %vm231, %v1923, 0
  %2133 = vmatprep.subr.mxu0 0.0
  %2134 = vmatpush1.msra.mxu0 %v1909
  %2135 = vmatprep.subr.mxu0 0.0
  %2136 = vmatpush1.msra.mxu0 0.0
  %2137 = vmatprep.subr.mxu0 0.0
  %2138 = vmatpush1.msra.mxu0 0.0
  %2139 = vmatprep.subr.mxu0 0.0
  %2140 = vmatpush1.msra.mxu0 0.0
  %2141 = vmatprep.subr.mxu0 0.0
  %2142 = vmatpush1.msra.mxu0 0.0
  %2143 = vmatprep.subr.mxu0 0.0
  %2144 = vmatpush1.msra.mxu0 0.0
  %2145 = vmatprep.subr.mxu0 0.0
  %2146 = vmatpush1.msra.mxu0 0.0
  %2147 = vmatprep.subr.mxu0 0.0
  %2148 = vmatpush1.msra.mxu0 0.0
  %2149 = vmatprep.subr.mxu0 0.0
  %2150 = vmatpush1.msra.mxu0 0.0
  %2151 = vmatprep.subr.mxu0 0.0
  %2152 = vmatpush1.msra.mxu0 0.0
  %2153 = vmatprep.subr.mxu0 0.0
  %2154 = vmatpush1.msra.mxu0 0.0
  %2155 = vmatprep.subr.mxu0 0.0
  %2156 = vmatpush1.msra.mxu0 0.0
  %2157 = vmatprep.subr.mxu0 0.0
  %2158 = vmatpush1.msra.mxu0 0.0
  %2159 = vmatprep.subr.mxu0 0.0
  %2160 = vmatpush1.msra.mxu0 0.0
  %2161 = vmatprep.subr.mxu0 0.0
  %2162 = vmatpush1.msra.mxu0 0.0
  %2163 = vmatprep.subr.mxu0 0.0
  %2164 = vmatpush1.msra.mxu0 0.0
  %2165 = vmatprep.subr.mxu0 0.0
  %2166 = vmatpush1.msra.mxu0 0.0
  %2167 = vmatprep.subr.mxu0 0.0
  %2168 = vmatpush1.msra.mxu0 0.0
  %2169 = vmatprep.subr.mxu0 0.0
  %2170 = vmatpush1.msra.mxu0 0.0
  %2171 = vmatprep.subr.mxu0 0.0
  %2172 = vmatpush1.msra.mxu0 0.0
  %2173 = vmatprep.subr.mxu0 0.0
  %2174 = vmatpush1.msra.mxu0 0.0
  %2175 = vmatprep.subr.mxu0 0.0
  %2176 = vmatpush1.msra.mxu0 0.0
  %2177 = vmatprep.subr.mxu0 0.0
  %2178 = vmatpush1.msra.mxu0 0.0
  %2179 = vmatprep.subr.mxu0 0.0
  %2180 = vmatpush1.msra.mxu0 0.0
  %2181 = vmatprep.subr.mxu0 0.0
  %2182 = vmatpush1.msra.mxu0 0.0
  %2183 = vmatprep.subr.mxu0 0.0
  %2184 = vmatpush1.msra.mxu0 0.0
  %2185 = vmatprep.subr.mxu0 0.0
  %2186 = vmatpush1.msra.mxu0 0.0
  %2187 = vmatprep.subr.mxu0 0.0
  %2188 = vmatpush1.msra.mxu0 0.0
  %2189 = vmatprep.subr.mxu0 0.0
  %2190 = vmatpush1.msra.mxu0 0.0
  %2191 = vmatprep.subr.mxu0 0.0
  %2192 = vmatpush1.msra.mxu0 0.0
  %2193 = vmatprep.subr.mxu0 0.0
  %2194 = vmatpush1.msra.mxu0 0.0
  %2195 = vmatprep.subr.mxu0 0.0
  %2196 = vmatpush1.msra.mxu0 0.0
  %2197 = vmatprep.mubr.f32.mxu0 0.0
  %2198 = vmatmul.mubr.f32.gmra.mrb[0].mxu0 %v2098
  %v2199 = vpop.f32.mrb[0].mxu0
  %v2200 = vadd.f32 %v2039, %v2199
  %v2201 = vpop.f32.mrb[0].mxu0
  %2202 = vmatprep.mubr.f32.mxu0 0.0
  %2203 = vmatmul.mubr.f32.gmra.mrb[0].mxu0 %v2101
  %v2204 = vpop.f32.mrb[0].mxu0
  %v2205 = vadd.f32 %v2044, %v2204
  %v2206 = vpop.f32.mrb[0].mxu0
  %2207 = vmatprep.mubr.f32.mxu0 0.0
  %2208 = vmatmul.mubr.f32.gmra.mrb[0].mxu0 %v2104
  %v2209 = vpop.f32.mrb[0].mxu0
  %v2210 = vadd.f32 %v2049, %v2209
  %v2211 = vpop.f32.mrb[0].mxu0
  %2212 = vmatprep.mubr.f32.mxu0 0.0
  %2213 = vmatmul.mubr.f32.gmra.mrb[0].mxu0 %v2107
  %v2214 = vpop.f32.mrb[0].mxu0
  %v2215 = vadd.f32 %v2054, %v2214
  %v2216 = vpop.f32.mrb[0].mxu0
  %2217 = vmatprep.mubr.f32.mxu0 0.0
  %2218 = vmatmul.mubr.f32.gmra.mrb[0].mxu0 %v2110
  %v2219 = vpop.f32.mrb[0].mxu0
  %v2220 = vadd.f32 %v2059, %v2219
  %v2221 = vpop.f32.mrb[0].mxu0
  %2222 = vmatprep.mubr.f32.mxu0 0.0
  %2223 = vmatmul.mubr.f32.gmra.mrb[0].mxu0 %v2113
  %v2224 = vpop.f32.mrb[0].mxu0
  %v2225 = vadd.f32 %v2064, %v2224
  %v2226 = vpop.f32.mrb[0].mxu0
  %2227 = vmatprep.mubr.f32.mxu0 0.0
  %2228 = vmatmul.mubr.f32.gmra.mrb[0].mxu0 %v2116
  %v2229 = vpop.f32.mrb[0].mxu0
  %v2230 = vadd.f32 %v2069, %v2229
  %v2231 = vpop.f32.mrb[0].mxu0
  %2232 = vmatprep.mubr.f32.mxu0 0.0
  %2233 = vmatmul.mubr.f32.gmra.mrb[0].mxu0 %v2119
  %v2234 = vpop.f32.mrb[0].mxu0
  %v2235 = vadd.f32 %v2074, %v2234
  %v2236 = vpop.f32.mrb[0].mxu0
  %2237 = vmatprep.mubr.f32.mxu0 0.0
  %2238 = vmatmul.mubr.f32.gmra.mrb[0].mxu0 %v2122
  %v2239 = vpop.f32.mrb[0].mxu0
  %v2240 = vadd.f32 %v2079, %v2239
  %v2241 = vpop.f32.mrb[0].mxu0
  %2242 = vmatprep.mubr.f32.mxu0 0.0
  %2243 = vmatmul.mubr.f32.gmra.mrb[0].mxu0 %v2125
  %v2244 = vpop.f32.mrb[0].mxu0
  %v2245 = vadd.f32 %v2084, %v2244
  %v2246 = vpop.f32.mrb[0].mxu0
  %2247 = vmatprep.mubr.f32.mxu0 0.0
  %2248 = vmatmul.mubr.f32.gmra.mrb[0].mxu0 %v2128
  %v2249 = vpop.f32.mrb[0].mxu0
  %v2250 = vadd.f32 %v2089, %v2249
  %v2251 = vpop.f32.mrb[0].mxu0
  %2252 = vmatprep.mubr.f32.mxu0 0.0
  %2253 = vmatmul.mubr.f32.gmra.mrb[0].mxu0 %v2131
  %v2254 = vpop.f32.mrb[0].mxu0
  %v2255 = vadd.f32 %v2094, %v2254
  %v2256 = vpop.f32.mrb[0].mxu0
  %2257 = vdwg.mxu0
  %v2258 = vadd.f32 %v2200, %v125
  %v2259 = vadd.f32 %v2205, %v130
  %v2260 = vadd.f32 %v2210, %v135
  %v2261 = vadd.f32 %v2215, %v140
  %v2262 = vadd.f32 %v2220, %v145
  %v2263 = vadd.f32 %v2225, %v150
  %v2264 = vadd.f32 %v2230, %v155
  %v2265 = vadd.f32 %v2235, %v160
  %v2266 = vadd.f32 %v2240, %v165
  %v2267 = vadd.f32 %v2245, %v170
  %v2268 = vadd.f32 %v2250, %v175
  %v2269 = vadd.f32 %v2255, %v180
  %v2270 = vld [vmem:[%s13] sm:$0xff]
  %v2271 = vld [vmem:[%s13 + $0x8] sm:$0xff]
  %v2272 = vld [vmem:[%s13 + $0x10] sm:$0xff]
  %v2273 = vld [vmem:[%s13 + $0x18] sm:$0xff]
  %v2274 = vld [vmem:[%s13 + $0x20] sm:$0xff]
  %v2275 = vld [vmem:[%s13 + $0x28] sm:$0xff]
  %v2276 = vld [vmem:[%s13 + $0x30] sm:$0xff]
  %v2277 = vld [vmem:[%s13 + $0x38] sm:$0xff]
  %v2278 = vld [vmem:[%s13 + $0x40] sm:$0xff]
  %v2279 = vld [vmem:[%s13 + $0x48] sm:$0xff]
  %v2280 = vld [vmem:[%s13 + $0x50] sm:$0xff]
  %v2281 = vld [vmem:[%s13 + $0x58] sm:$0xff]
  %v2283 = vsel %vm1076, %v2270, 0
  %v2286 = vsel %vm1076, %v2271, 0
  %v2289 = vsel %vm1076, %v2272, 0
  %v2292 = vsel %vm1076, %v2273, 0
  %v2295 = vsel %vm1076, %v2274, 0
  %v2298 = vsel %vm1076, %v2275, 0
  %v2301 = vsel %vm1076, %v2276, 0
  %v2304 = vsel %vm1076, %v2277, 0
  %v2307 = vsel %vm1076, %v2278, 0
  %v2310 = vsel %vm1076, %v2279, 0
  %v2313 = vsel %vm1076, %v2280, 0
  %v2316 = vsel %vm1076, %v2281, 0
  %2318 = vmatprep.subr.mxu0 0.0
  %2319 = vmatpush1.msra.mxu0 %v1330
  %2320 = vmatprep.subr.mxu0 0.0
  %2321 = vmatpush1.msra.mxu0 %v1331
  %2322 = vmatprep.subr.mxu0 0.0
  %2323 = vmatpush1.msra.mxu0 %v1332
  %2324 = vmatprep.subr.mxu0 0.0
  %2325 = vmatpush1.msra.mxu0 %v1333
  %2326 = vmatprep.subr.mxu0 0.0
  %2327 = vmatpush1.msra.mxu0 0.0
  %2328 = vmatprep.subr.mxu0 0.0
  %2329 = vmatpush1.msra.mxu0 0.0
  %2330 = vmatprep.subr.mxu0 0.0
  %2331 = vmatpush1.msra.mxu0 0.0
  %2332 = vmatprep.subr.mxu0 0.0
  %2333 = vmatpush1.msra.mxu0 0.0
  %2334 = vmatprep.subr.mxu0 0.0
  %2335 = vmatpush1.msra.mxu0 0.0
  %2336 = vmatprep.subr.mxu0 0.0
  %2337 = vmatpush1.msra.mxu0 0.0
  %2338 = vmatprep.subr.mxu0 0.0
  %2339 = vmatpush1.msra.mxu0 0.0
  %2340 = vmatprep.subr.mxu0 0.0
  %2341 = vmatpush1.msra.mxu0 0.0
  %2342 = vmatprep.subr.mxu0 0.0
  %2343 = vmatpush1.msra.mxu0 0.0
  %2344 = vmatprep.subr.mxu0 0.0
  %2345 = vmatpush1.msra.mxu0 0.0
  %2346 = vmatprep.subr.mxu0 0.0
  %2347 = vmatpush1.msra.mxu0 0.0
  %2348 = vmatprep.subr.mxu0 0.0
  %2349 = vmatpush1.msra.mxu0 0.0
  %2350 = vmatprep.subr.mxu0 0.0
  %2351 = vmatpush1.msra.mxu0 0.0
  %2352 = vmatprep.subr.mxu0 0.0
  %2353 = vmatpush1.msra.mxu0 0.0
  %2354 = vmatprep.subr.mxu0 0.0
  %2355 = vmatpush1.msra.mxu0 0.0
  %2356 = vmatprep.subr.mxu0 0.0
  %2357 = vmatpush1.msra.mxu0 0.0
  %2358 = vmatprep.subr.mxu0 0.0
  %2359 = vmatpush1.msra.mxu0 0.0
  %2360 = vmatprep.subr.mxu0 0.0
  %2361 = vmatpush1.msra.mxu0 0.0
  %2362 = vmatprep.subr.mxu0 0.0
  %2363 = vmatpush1.msra.mxu0 0.0
  %2364 = vmatprep.subr.mxu0 0.0
  %2365 = vmatpush1.msra.mxu0 0.0
  %2366 = vmatprep.subr.mxu0 0.0
  %2367 = vmatpush1.msra.mxu0 0.0
  %2368 = vmatprep.subr.mxu0 0.0
  %2369 = vmatpush1.msra.mxu0 0.0
  %2370 = vmatprep.subr.mxu0 0.0
  %2371 = vmatpush1.msra.mxu0 0.0
  %2372 = vmatprep.subr.mxu0 0.0
  %2373 = vmatpush1.msra.mxu0 0.0
  %2374 = vmatprep.subr.mxu0 0.0
  %2375 = vmatpush1.msra.mxu0 0.0
  %2376 = vmatprep.subr.mxu0 0.0
  %2377 = vmatpush1.msra.mxu0 0.0
  %2378 = vmatprep.subr.mxu0 0.0
  %2379 = vmatpush1.msra.mxu0 0.0
  %2380 = vmatprep.subr.mxu0 0.0
  %2381 = vmatpush1.msra.mxu0 0.0
  %2382 = vmatprep.mubr.f32.mxu0 0.0
  %2383 = vmatmul.mubr.f32.gmra.mrb[0].mxu0 %v2283
  %v2384 = vpop.f32.mrb[0].mxu0
  %v2385 = vadd.f32 0.0, %v2384
  %v2386 = vpop.f32.mrb[0].mxu0
  %2387 = vmatprep.mubr.f32.mxu0 0.0
  %2388 = vmatmul.mubr.f32.gmra.mrb[0].mxu0 %v2286
  %v2389 = vpop.f32.mrb[0].mxu0
  %v2390 = vadd.f32 0.0, %v2389
  %v2391 = vpop.f32.mrb[0].mxu0
  %2392 = vmatprep.mubr.f32.mxu0 0.0
  %2393 = vmatmul.mubr.f32.gmra.mrb[0].mxu0 %v2289
  %v2394 = vpop.f32.mrb[0].mxu0
  %v2395 = vadd.f32 0.0, %v2394
  %v2396 = vpop.f32.mrb[0].mxu0
  %2397 = vmatprep.mubr.f32.mxu0 0.0
  %2398 = vmatmul.mubr.f32.gmra.mrb[0].mxu0 %v2292
  %v2399 = vpop.f32.mrb[0].mxu0
  %v2400 = vadd.f32 0.0, %v2399
  %v2401 = vpop.f32.mrb[0].mxu0
  %2402 = vmatprep.mubr.f32.mxu0 0.0
  %2403 = vmatmul.mubr.f32.gmra.mrb[0].mxu0 %v2295
  %v2404 = vpop.f32.mrb[0].mxu0
  %v2405 = vadd.f32 0.0, %v2404
  %v2406 = vpop.f32.mrb[0].mxu0
  %2407 = vmatprep.mubr.f32.mxu0 0.0
  %2408 = vmatmul.mubr.f32.gmra.mrb[0].mxu0 %v2298
  %v2409 = vpop.f32.mrb[0].mxu0
  %v2410 = vadd.f32 0.0, %v2409
  %v2411 = vpop.f32.mrb[0].mxu0
  %2412 = vmatprep.mubr.f32.mxu0 0.0
  %2413 = vmatmul.mubr.f32.gmra.mrb[0].mxu0 %v2301
  %v2414 = vpop.f32.mrb[0].mxu0
  %v2415 = vadd.f32 0.0, %v2414
  %v2416 = vpop.f32.mrb[0].mxu0
  %2417 = vmatprep.mubr.f32.mxu0 0.0
  %2418 = vmatmul.mubr.f32.gmra.mrb[0].mxu0 %v2304
  %v2419 = vpop.f32.mrb[0].mxu0
  %v2420 = vadd.f32 0.0, %v2419
  %v2421 = vpop.f32.mrb[0].mxu0
  %2422 = vmatprep.mubr.f32.mxu0 0.0
  %2423 = vmatmul.mubr.f32.gmra.mrb[0].mxu0 %v2307
  %v2424 = vpop.f32.mrb[0].mxu0
  %v2425 = vadd.f32 0.0, %v2424
  %v2426 = vpop.f32.mrb[0].mxu0
  %2427 = vmatprep.mubr.f32.mxu0 0.0
  %2428 = vmatmul.mubr.f32.gmra.mrb[0].mxu0 %v2310
  %v2429 = vpop.f32.mrb[0].mxu0
  %v2430 = vadd.f32 0.0, %v2429
  %v2431 = vpop.f32.mrb[0].mxu0
  %2432 = vmatprep.mubr.f32.mxu0 0.0
  %2433 = vmatmul.mubr.f32.gmra.mrb[0].mxu0 %v2313
  %v2434 = vpop.f32.mrb[0].mxu0
  %v2435 = vadd.f32 0.0, %v2434
  %v2436 = vpop.f32.mrb[0].mxu0
  %2437 = vmatprep.mubr.f32.mxu0 0.0
  %2438 = vmatmul.mubr.f32.gmra.mrb[0].mxu0 %v2316
  %v2439 = vpop.f32.mrb[0].mxu0
  %v2440 = vadd.f32 0.0, %v2439
  %v2441 = vpop.f32.mrb[0].mxu0
  %2442 = vdwg.mxu0
  %v2443 = vadd.f32 %v2258, %v2385
  %v2444 = vadd.f32 %v2259, %v2390
  %v2445 = vadd.f32 %v2260, %v2395
  %v2446 = vadd.f32 %v2261, %v2400
  %v2447 = vxor.u32 %v2443, 2147483648
  %v2448 = vxor.u32 %v2444, 2147483648
  %v2449 = vxor.u32 %v2445, 2147483648
  %v2450 = vxor.u32 %v2446, 2147483648
  %v2451 = vmul.f32 %v2447, 1.442695
  %v2452 = vpow.pop %v2451
  %v2453 = vmul.f32 %v2448, 1.442695
  %v2454 = vpow.pop %v2453
  %v2455 = vmul.f32 %v2449, 1.442695
  %v2456 = vpow.pop %v2455
  %v2457 = vmul.f32 %v2450, 1.442695
  %v2458 = vpow.pop %v2457
  %v2459 = vadd.f32 %v2452, 1.0
  %v2460 = vadd.f32 %v2454, 1.0
  %v2461 = vadd.f32 %v2456, 1.0
  %v2462 = vadd.f32 %v2458, 1.0
  %v2463 = vrcp.pop %v2459
  %v2464 = vmul.f32 1.0, %v2463
  %v2465 = vrcp.pop %v2460
  %v2466 = vmul.f32 1.0, %v2465
  %v2467 = vrcp.pop %v2461
  %v2468 = vmul.f32 1.0, %v2467
  %v2469 = vrcp.pop %v2462
  %v2470 = vmul.f32 1.0, %v2469
  %v2471 = vadd.f32 %v2262, %v2405
  %v2472 = vadd.f32 %v2263, %v2410
  %v2473 = vadd.f32 %v2264, %v2415
  %v2474 = vadd.f32 %v2265, %v2420
  %v2475 = vxor.u32 %v2471, 2147483648
  %v2476 = vxor.u32 %v2472, 2147483648
  %v2477 = vxor.u32 %v2473, 2147483648
  %v2478 = vxor.u32 %v2474, 2147483648
  %v2479 = vmul.f32 %v2475, 1.442695
  %v2480 = vpow.pop %v2479
  %v2481 = vmul.f32 %v2476, 1.442695
  %v2482 = vpow.pop %v2481
  %v2483 = vmul.f32 %v2477, 1.442695
  %v2484 = vpow.pop %v2483
  %v2485 = vmul.f32 %v2478, 1.442695
  %v2486 = vpow.pop %v2485
  %v2487 = vadd.f32 %v2480, 1.0
  %v2488 = vadd.f32 %v2482, 1.0
  %v2489 = vadd.f32 %v2484, 1.0
  %v2490 = vadd.f32 %v2486, 1.0
  %v2491 = vrcp.pop %v2487
  %v2492 = vmul.f32 1.0, %v2491
  %v2493 = vrcp.pop %v2488
  %v2494 = vmul.f32 1.0, %v2493
  %v2495 = vrcp.pop %v2489
  %v2496 = vmul.f32 1.0, %v2495
  %v2497 = vrcp.pop %v2490
  %v2498 = vmul.f32 1.0, %v2497
  %v2499 = vadd.f32 %v2425, %v189
  %v2500 = vadd.f32 %v2430, %v194
  %v2501 = vadd.f32 %v2435, %v199
  %v2502 = vadd.f32 %v2440, %v204
  %v2503 = vmul.f32 %v2464, %v2499
  %v2504 = vmul.f32 %v2466, %v2500
  %v2505 = vmul.f32 %v2468, %v2501
  %v2506 = vmul.f32 %v2470, %v2502
  %v2507 = vadd.f32 %v2266, %v2503
  %v2508 = vadd.f32 %v2267, %v2504
  %v2509 = vadd.f32 %v2268, %v2505
  %v2510 = vadd.f32 %v2269, %v2506
  %v2511 = vtanh.pop %v2507
  %v2512 = vtanh.pop %v2508
  %v2513 = vtanh.pop %v2509
  %v2514 = vtanh.pop %v2510
  %v2515 = vsub.f32 1.0, %v2492
  %v2516 = vsub.f32 1.0, %v2494
  %v2517 = vsub.f32 1.0, %v2496
  %v2518 = vsub.f32 1.0, %v2498
  %v2519 = vmul.f32 %v2515, %v2511
  %v2520 = vmul.f32 %v2516, %v2512
  %v2521 = vmul.f32 %v2517, %v2513
  %v2522 = vmul.f32 %v2518, %v2514
  %v2523 = vmul.f32 %v2492, %v1330
  %v2524 = vmul.f32 %v2494, %v1331
  %v2525 = vmul.f32 %v2496, %v1332
  %v2526 = vmul.f32 %v2498, %v1333
  %v2527 = vadd.f32 %v2519, %v2523
  %v2528 = vadd.f32 %v2520, %v2524
  %v2529 = vadd.f32 %v2521, %v2525
  %v2530 = vadd.f32 %v2522, %v2526
  %v2531 = vmax.f32 %v2527, -5.0
  %v2532 = vmax.f32 %v2528, -5.0
  %v2533 = vmax.f32 %v2529, -5.0
  %v2534 = vmax.f32 %v2530, -5.0
  %v2535 = vmin.f32 %v2531, 5.0
  %v2536 = vmin.f32 %v2532, 5.0
  %v2537 = vmin.f32 %v2533, 5.0
  %v2538 = vmin.f32 %v2534, 5.0
  %v2539 = vld [vmem:[%s16] sm:$0xff]
  %v2541 = vsel %vm1076, %v2539, 0
  %2543 = vmatprep.subr.mxu0 0.0
  %2544 = vmatpush1.msra.mxu0 %v2535
  %2545 = vmatprep.subr.mxu0 0.0
  %2546 = vmatpush1.msra.mxu0 %v2536
  %2547 = vmatprep.subr.mxu0 0.0
  %2548 = vmatpush1.msra.mxu0 %v2537
  %2549 = vmatprep.subr.mxu0 0.0
  %2550 = vmatpush1.msra.mxu0 %v2538
  %2551 = vmatprep.subr.mxu0 0.0
  %2552 = vmatpush1.msra.mxu0 0.0
  %2553 = vmatprep.subr.mxu0 0.0
  %2554 = vmatpush1.msra.mxu0 0.0
  %2555 = vmatprep.subr.mxu0 0.0
  %2556 = vmatpush1.msra.mxu0 0.0
  %2557 = vmatprep.subr.mxu0 0.0
  %2558 = vmatpush1.msra.mxu0 0.0
  %2559 = vmatprep.subr.mxu0 0.0
  %2560 = vmatpush1.msra.mxu0 0.0
  %2561 = vmatprep.subr.mxu0 0.0
  %2562 = vmatpush1.msra.mxu0 0.0
  %2563 = vmatprep.subr.mxu0 0.0
  %2564 = vmatpush1.msra.mxu0 0.0
  %2565 = vmatprep.subr.mxu0 0.0
  %2566 = vmatpush1.msra.mxu0 0.0
  %2567 = vmatprep.subr.mxu0 0.0
  %2568 = vmatpush1.msra.mxu0 0.0
  %2569 = vmatprep.subr.mxu0 0.0
  %2570 = vmatpush1.msra.mxu0 0.0
  %2571 = vmatprep.subr.mxu0 0.0
  %2572 = vmatpush1.msra.mxu0 0.0
  %2573 = vmatprep.subr.mxu0 0.0
  %2574 = vmatpush1.msra.mxu0 0.0
  %2575 = vmatprep.subr.mxu0 0.0
  %2576 = vmatpush1.msra.mxu0 0.0
  %2577 = vmatprep.subr.mxu0 0.0
  %2578 = vmatpush1.msra.mxu0 0.0
  %2579 = vmatprep.subr.mxu0 0.0
  %2580 = vmatpush1.msra.mxu0 0.0
  %2581 = vmatprep.subr.mxu0 0.0
  %2582 = vmatpush1.msra.mxu0 0.0
  %2583 = vmatprep.subr.mxu0 0.0
  %2584 = vmatpush1.msra.mxu0 0.0
  %2585 = vmatprep.subr.mxu0 0.0
  %2586 = vmatpush1.msra.mxu0 0.0
  %2587 = vmatprep.subr.mxu0 0.0
  %2588 = vmatpush1.msra.mxu0 0.0
  %2589 = vmatprep.subr.mxu0 0.0
  %2590 = vmatpush1.msra.mxu0 0.0
  %2591 = vmatprep.subr.mxu0 0.0
  %2592 = vmatpush1.msra.mxu0 0.0
  %2593 = vmatprep.subr.mxu0 0.0
  %2594 = vmatpush1.msra.mxu0 0.0
  %2595 = vmatprep.subr.mxu0 0.0
  %2596 = vmatpush1.msra.mxu0 0.0
  %2597 = vmatprep.subr.mxu0 0.0
  %2598 = vmatpush1.msra.mxu0 0.0
  %2599 = vmatprep.subr.mxu0 0.0
  %2600 = vmatpush1.msra.mxu0 0.0
  %2601 = vmatprep.subr.mxu0 0.0
  %2602 = vmatpush1.msra.mxu0 0.0
  %2603 = vmatprep.subr.mxu0 0.0
  %2604 = vmatpush1.msra.mxu0 0.0
  %2605 = vmatprep.subr.mxu0 0.0
  %2606 = vmatpush1.msra.mxu0 0.0
  %2607 = vmatprep.mubr.f32.mxu0 0.0
  %2608 = vmatmul.mubr.f32.gmra.mrb[0].mxu0 %v2541
  %v2609 = vpop.f32.mrb[0].mxu0
  %v2610 = vadd.f32 0.0, %v2609
  %v2611 = vpop.f32.mrb[0].mxu0
  %2612 = vdwg.mxu0
  %v2613 = vmul.f32 %v1909, 0.5
  %v2614 = vmul.f32 %v2613, 1.442695
  %v2615 = vpow.pop %v2614
  %v2616 = vsel %vm208, %v1909, %v2615
  %v2617 = vsel %vm208, %v1909, %v1426
  %s2618 = scalar_lea.vmem %s17, 72
  %2619 = vst.msk [vmem:[%s2618] sm:$0xff] %vm1413, %v2535
  %2620 = vst.msk [vmem:[%s2618 + $0x8] sm:$0xff] %vm1413, %v2536
  %2621 = vst.msk [vmem:[%s2618 + $0x10] sm:$0xff] %vm1413, %v2537
  %2622 = vst.msk [vmem:[%s2618 + $0x18] sm:$0xff] %vm1413, %v2538
  %2623 = vst.msk [vmem:[%s2618 + $0x20] sm:$0xff] %vm1413, %v1836
  %2624 = vst.msk [vmem:[%s2618 + $0x28] sm:$0xff] %vm1413, %v1837
  %2625 = vst.msk [vmem:[%s2618 + $0x30] sm:$0xff] %vm1413, %v2616
  %2626 = vst.msk [vmem:[%s2618 + $0x38] sm:$0xff] %vm1413, %v2617
  %2627 = vst.msk [vmem:[%s2618 + $0x40] sm:$0xff] %vm1413, %v2610
  %s2628 = scalar_lea.vmem %s0, 48
  %v2629 = vld [vmem:[%s2628] sm:$0xff]
  %v2630 = vld [vmem:[%s2628 + $0x8] sm:$0xff]
  %v2631 = vld [vmem:[%s2628 + $0x10] sm:$0xff]
  %v2632 = vld [vmem:[%s4] sm:$0xff]
  %v2633 = vld [vmem:[%s4 + $0x8] sm:$0xff]
  %v2634 = vld [vmem:[%s4 + $0x10] sm:$0xff]
  %v2635 = vld [vmem:[%s4 + $0x18] sm:$0xff]
  %v2636 = vld [vmem:[%s4 + $0x20] sm:$0xff]
  %v2637 = vld [vmem:[%s4 + $0x28] sm:$0xff]
  %v2638 = vld [vmem:[%s5] sm:$0xff]
  %v2639 = vld [vmem:[%s5 + $0x8] sm:$0xff]
  %v2640 = vld [vmem:[%s5 + $0x10] sm:$0xff]
  %v2641 = vld [vmem:[%s5 + $0x18] sm:$0xff]
  %v2642 = vld [vmem:[%s5 + $0x20] sm:$0xff]
  %v2643 = vld [vmem:[%s5 + $0x28] sm:$0xff]
  %v2645 = vsel %vm231, %v2638, 0
  %v2648 = vsel %vm231, %v2639, 0
  %v2651 = vsel %vm231, %v2640, 0
  %v2654 = vsel %vm231, %v2641, 0
  %v2657 = vsel %vm231, %v2642, 0
  %v2660 = vsel %vm231, %v2643, 0
  %2662 = vmatprep.subr.mxu0 0.0
  %2663 = vmatpush1.msra.mxu0 %v2610
  %2664 = vmatprep.subr.mxu0 0.0
  %2665 = vmatpush1.msra.mxu0 0.0
  %2666 = vmatprep.subr.mxu0 0.0
  %2667 = vmatpush1.msra.mxu0 0.0
  %2668 = vmatprep.subr.mxu0 0.0
  %2669 = vmatpush1.msra.mxu0 0.0
  %2670 = vmatprep.subr.mxu0 0.0
  %2671 = vmatpush1.msra.mxu0 0.0
  %2672 = vmatprep.subr.mxu0 0.0
  %2673 = vmatpush1.msra.mxu0 0.0
  %2674 = vmatprep.subr.mxu0 0.0
  %2675 = vmatpush1.msra.mxu0 0.0
  %2676 = vmatprep.subr.mxu0 0.0
  %2677 = vmatpush1.msra.mxu0 0.0
  %2678 = vmatprep.subr.mxu0 0.0
  %2679 = vmatpush1.msra.mxu0 0.0
  %2680 = vmatprep.subr.mxu0 0.0
  %2681 = vmatpush1.msra.mxu0 0.0
  %2682 = vmatprep.subr.mxu0 0.0
  %2683 = vmatpush1.msra.mxu0 0.0
  %2684 = vmatprep.subr.mxu0 0.0
  %2685 = vmatpush1.msra.mxu0 0.0
  %2686 = vmatprep.subr.mxu0 0.0
  %2687 = vmatpush1.msra.mxu0 0.0
  %2688 = vmatprep.subr.mxu0 0.0
  %2689 = vmatpush1.msra.mxu0 0.0
  %2690 = vmatprep.subr.mxu0 0.0
  %2691 = vmatpush1.msra.mxu0 0.0
  %2692 = vmatprep.subr.mxu0 0.0
  %2693 = vmatpush1.msra.mxu0 0.0
  %2694 = vmatprep.subr.mxu0 0.0
  %2695 = vmatpush1.msra.mxu0 0.0
  %2696 = vmatprep.subr.mxu0 0.0
  %2697 = vmatpush1.msra.mxu0 0.0
  %2698 = vmatprep.subr.mxu0 0.0
  %2699 = vmatpush1.msra.mxu0 0.0
  %2700 = vmatprep.subr.mxu0 0.0
  %2701 = vmatpush1.msra.mxu0 0.0
  %2702 = vmatprep.subr.mxu0 0.0
  %2703 = vmatpush1.msra.mxu0 0.0
  %2704 = vmatprep.subr.mxu0 0.0
  %2705 = vmatpush1.msra.mxu0 0.0
  %2706 = vmatprep.subr.mxu0 0.0
  %2707 = vmatpush1.msra.mxu0 0.0
  %2708 = vmatprep.subr.mxu0 0.0
  %2709 = vmatpush1.msra.mxu0 0.0
  %2710 = vmatprep.subr.mxu0 0.0
  %2711 = vmatpush1.msra.mxu0 0.0
  %2712 = vmatprep.subr.mxu0 0.0
  %2713 = vmatpush1.msra.mxu0 0.0
  %2714 = vmatprep.subr.mxu0 0.0
  %2715 = vmatpush1.msra.mxu0 0.0
  %2716 = vmatprep.subr.mxu0 0.0
  %2717 = vmatpush1.msra.mxu0 0.0
  %2718 = vmatprep.subr.mxu0 0.0
  %2719 = vmatpush1.msra.mxu0 0.0
  %2720 = vmatprep.subr.mxu0 0.0
  %2721 = vmatpush1.msra.mxu0 0.0
  %2722 = vmatprep.subr.mxu0 0.0
  %2723 = vmatpush1.msra.mxu0 0.0
  %2724 = vmatprep.subr.mxu0 0.0
  %2725 = vmatpush1.msra.mxu0 0.0
  %2726 = vmatprep.mubr.f32.mxu0 0.0
  %2727 = vmatmul.mubr.f32.gmra.mrb[0].mxu0 %v2645
  %v2728 = vpop.f32.mrb[0].mxu0
  %v2729 = vadd.f32 0.0, %v2728
  %v2730 = vpop.f32.mrb[0].mxu0
  %2731 = vmatprep.mubr.f32.mxu0 0.0
  %2732 = vmatmul.mubr.f32.gmra.mrb[0].mxu0 %v2648
  %v2733 = vpop.f32.mrb[0].mxu0
  %v2734 = vadd.f32 0.0, %v2733
  %v2735 = vpop.f32.mrb[0].mxu0
  %2736 = vmatprep.mubr.f32.mxu0 0.0
  %2737 = vmatmul.mubr.f32.gmra.mrb[0].mxu0 %v2651
  %v2738 = vpop.f32.mrb[0].mxu0
  %v2739 = vadd.f32 0.0, %v2738
  %v2740 = vpop.f32.mrb[0].mxu0
  %2741 = vmatprep.mubr.f32.mxu0 0.0
  %2742 = vmatmul.mubr.f32.gmra.mrb[0].mxu0 %v2654
  %v2743 = vpop.f32.mrb[0].mxu0
  %v2744 = vadd.f32 0.0, %v2743
  %v2745 = vpop.f32.mrb[0].mxu0
  %2746 = vmatprep.mubr.f32.mxu0 0.0
  %2747 = vmatmul.mubr.f32.gmra.mrb[0].mxu0 %v2657
  %v2748 = vpop.f32.mrb[0].mxu0
  %v2749 = vadd.f32 0.0, %v2748
  %v2750 = vpop.f32.mrb[0].mxu0
  %2751 = vmatprep.mubr.f32.mxu0 0.0
  %2752 = vmatmul.mubr.f32.gmra.mrb[0].mxu0 %v2660
  %v2753 = vpop.f32.mrb[0].mxu0
  %v2754 = vadd.f32 0.0, %v2753
  %v2755 = vpop.f32.mrb[0].mxu0
  %2756 = vdwg.mxu0
  %v2758 = vsel %vm345, %v2632, 0
  %v2761 = vsel %vm345, %v2633, 0
  %v2764 = vsel %vm345, %v2634, 0
  %v2767 = vsel %vm345, %v2635, 0
  %v2770 = vsel %vm345, %v2636, 0
  %v2773 = vsel %vm345, %v2637, 0
  %2775 = vmatprep.subr.mxu0 0.0
  %2776 = vmatpush1.msra.mxu0 %v2629
  %2777 = vmatprep.subr.mxu0 0.0
  %2778 = vmatpush1.msra.mxu0 %v2630
  %2779 = vmatprep.subr.mxu0 0.0
  %2780 = vmatpush1.msra.mxu0 0.0
  %2781 = vmatprep.subr.mxu0 0.0
  %2782 = vmatpush1.msra.mxu0 0.0
  %2783 = vmatprep.subr.mxu0 0.0
  %2784 = vmatpush1.msra.mxu0 0.0
  %2785 = vmatprep.subr.mxu0 0.0
  %2786 = vmatpush1.msra.mxu0 0.0
  %2787 = vmatprep.subr.mxu0 0.0
  %2788 = vmatpush1.msra.mxu0 0.0
  %2789 = vmatprep.subr.mxu0 0.0
  %2790 = vmatpush1.msra.mxu0 0.0
  %2791 = vmatprep.subr.mxu0 0.0
  %2792 = vmatpush1.msra.mxu0 0.0
  %2793 = vmatprep.subr.mxu0 0.0
  %2794 = vmatpush1.msra.mxu0 0.0
  %2795 = vmatprep.subr.mxu0 0.0
  %2796 = vmatpush1.msra.mxu0 0.0
  %2797 = vmatprep.subr.mxu0 0.0
  %2798 = vmatpush1.msra.mxu0 0.0
  %2799 = vmatprep.subr.mxu0 0.0
  %2800 = vmatpush1.msra.mxu0 0.0
  %2801 = vmatprep.subr.mxu0 0.0
  %2802 = vmatpush1.msra.mxu0 0.0
  %2803 = vmatprep.subr.mxu0 0.0
  %2804 = vmatpush1.msra.mxu0 0.0
  %2805 = vmatprep.subr.mxu0 0.0
  %2806 = vmatpush1.msra.mxu0 0.0
  %2807 = vmatprep.subr.mxu0 0.0
  %2808 = vmatpush1.msra.mxu0 0.0
  %2809 = vmatprep.subr.mxu0 0.0
  %2810 = vmatpush1.msra.mxu0 0.0
  %2811 = vmatprep.subr.mxu0 0.0
  %2812 = vmatpush1.msra.mxu0 0.0
  %2813 = vmatprep.subr.mxu0 0.0
  %2814 = vmatpush1.msra.mxu0 0.0
  %2815 = vmatprep.subr.mxu0 0.0
  %2816 = vmatpush1.msra.mxu0 0.0
  %2817 = vmatprep.subr.mxu0 0.0
  %2818 = vmatpush1.msra.mxu0 0.0
  %2819 = vmatprep.subr.mxu0 0.0
  %2820 = vmatpush1.msra.mxu0 0.0
  %2821 = vmatprep.subr.mxu0 0.0
  %2822 = vmatpush1.msra.mxu0 0.0
  %2823 = vmatprep.subr.mxu0 0.0
  %2824 = vmatpush1.msra.mxu0 0.0
  %2825 = vmatprep.subr.mxu0 0.0
  %2826 = vmatpush1.msra.mxu0 0.0
  %2827 = vmatprep.subr.mxu0 0.0
  %2828 = vmatpush1.msra.mxu0 0.0
  %2829 = vmatprep.subr.mxu0 0.0
  %2830 = vmatpush1.msra.mxu0 0.0
  %2831 = vmatprep.subr.mxu0 0.0
  %2832 = vmatpush1.msra.mxu0 0.0
  %2833 = vmatprep.subr.mxu0 0.0
  %2834 = vmatpush1.msra.mxu0 0.0
  %2835 = vmatprep.subr.mxu0 0.0
  %2836 = vmatpush1.msra.mxu0 0.0
  %2837 = vmatprep.subr.mxu0 0.0
  %2838 = vmatpush1.msra.mxu0 0.0
  %2839 = vmatprep.mubr.f32.mxu0 0.0
  %2840 = vmatmul.mubr.f32.gmra.mrb[0].mxu0 %v2758
  %v2841 = vpop.f32.mrb[0].mxu0
  %v2842 = vadd.f32 %v2729, %v2841
  %v2843 = vpop.f32.mrb[0].mxu0
  %2844 = vmatprep.mubr.f32.mxu0 0.0
  %2845 = vmatmul.mubr.f32.gmra.mrb[0].mxu0 %v2761
  %v2846 = vpop.f32.mrb[0].mxu0
  %v2847 = vadd.f32 %v2734, %v2846
  %v2848 = vpop.f32.mrb[0].mxu0
  %2849 = vmatprep.mubr.f32.mxu0 0.0
  %2850 = vmatmul.mubr.f32.gmra.mrb[0].mxu0 %v2764
  %v2851 = vpop.f32.mrb[0].mxu0
  %v2852 = vadd.f32 %v2739, %v2851
  %v2853 = vpop.f32.mrb[0].mxu0
  %2854 = vmatprep.mubr.f32.mxu0 0.0
  %2855 = vmatmul.mubr.f32.gmra.mrb[0].mxu0 %v2767
  %v2856 = vpop.f32.mrb[0].mxu0
  %v2857 = vadd.f32 %v2744, %v2856
  %v2858 = vpop.f32.mrb[0].mxu0
  %2859 = vmatprep.mubr.f32.mxu0 0.0
  %2860 = vmatmul.mubr.f32.gmra.mrb[0].mxu0 %v2770
  %v2861 = vpop.f32.mrb[0].mxu0
  %v2862 = vadd.f32 %v2749, %v2861
  %v2863 = vpop.f32.mrb[0].mxu0
  %2864 = vmatprep.mubr.f32.mxu0 0.0
  %2865 = vmatmul.mubr.f32.gmra.mrb[0].mxu0 %v2773
  %v2866 = vpop.f32.mrb[0].mxu0
  %v2867 = vadd.f32 %v2754, %v2866
  %v2868 = vpop.f32.mrb[0].mxu0
  %2869 = vdwg.mxu0
  %v2870 = vadd.f32 %v2842, %v65
  %v2871 = vadd.f32 %v2847, %v70
  %v2872 = vadd.f32 %v2852, %v75
  %v2873 = vadd.f32 %v2857, %v80
  %v2874 = vadd.f32 %v2862, %v85
  %v2875 = vadd.f32 %v2867, %v90
  %v2876 = vld [vmem:[%s6] sm:$0xff]
  %v2877 = vld [vmem:[%s6 + $0x8] sm:$0xff]
  %v2878 = vld [vmem:[%s6 + $0x10] sm:$0xff]
  %v2879 = vld [vmem:[%s6 + $0x18] sm:$0xff]
  %v2880 = vld [vmem:[%s6 + $0x20] sm:$0xff]
  %v2881 = vld [vmem:[%s6 + $0x28] sm:$0xff]
  %v2883 = vsel %vm345, %v2876, 0
  %v2886 = vsel %vm345, %v2877, 0
  %v2889 = vsel %vm345, %v2878, 0
  %v2892 = vsel %vm345, %v2879, 0
  %v2895 = vsel %vm345, %v2880, 0
  %v2898 = vsel %vm345, %v2881, 0
  %2900 = vmatprep.subr.mxu0 0.0
  %2901 = vmatpush1.msra.mxu0 %v1836
  %2902 = vmatprep.subr.mxu0 0.0
  %2903 = vmatpush1.msra.mxu0 %v1837
  %2904 = vmatprep.subr.mxu0 0.0
  %2905 = vmatpush1.msra.mxu0 0.0
  %2906 = vmatprep.subr.mxu0 0.0
  %2907 = vmatpush1.msra.mxu0 0.0
  %2908 = vmatprep.subr.mxu0 0.0
  %2909 = vmatpush1.msra.mxu0 0.0
  %2910 = vmatprep.subr.mxu0 0.0
  %2911 = vmatpush1.msra.mxu0 0.0
  %2912 = vmatprep.subr.mxu0 0.0
  %2913 = vmatpush1.msra.mxu0 0.0
  %2914 = vmatprep.subr.mxu0 0.0
  %2915 = vmatpush1.msra.mxu0 0.0
  %2916 = vmatprep.subr.mxu0 0.0
  %2917 = vmatpush1.msra.mxu0 0.0
  %2918 = vmatprep.subr.mxu0 0.0
  %2919 = vmatpush1.msra.mxu0 0.0
  %2920 = vmatprep.subr.mxu0 0.0
  %2921 = vmatpush1.msra.mxu0 0.0
  %2922 = vmatprep.subr.mxu0 0.0
  %2923 = vmatpush1.msra.mxu0 0.0
  %2924 = vmatprep.subr.mxu0 0.0
  %2925 = vmatpush1.msra.mxu0 0.0
  %2926 = vmatprep.subr.mxu0 0.0
  %2927 = vmatpush1.msra.mxu0 0.0
  %2928 = vmatprep.subr.mxu0 0.0
  %2929 = vmatpush1.msra.mxu0 0.0
  %2930 = vmatprep.subr.mxu0 0.0
  %2931 = vmatpush1.msra.mxu0 0.0
  %2932 = vmatprep.subr.mxu0 0.0
  %2933 = vmatpush1.msra.mxu0 0.0
  %2934 = vmatprep.subr.mxu0 0.0
  %2935 = vmatpush1.msra.mxu0 0.0
  %2936 = vmatprep.subr.mxu0 0.0
  %2937 = vmatpush1.msra.mxu0 0.0
  %2938 = vmatprep.subr.mxu0 0.0
  %2939 = vmatpush1.msra.mxu0 0.0
  %2940 = vmatprep.subr.mxu0 0.0
  %2941 = vmatpush1.msra.mxu0 0.0
  %2942 = vmatprep.subr.mxu0 0.0
  %2943 = vmatpush1.msra.mxu0 0.0
  %2944 = vmatprep.subr.mxu0 0.0
  %2945 = vmatpush1.msra.mxu0 0.0
  %2946 = vmatprep.subr.mxu0 0.0
  %2947 = vmatpush1.msra.mxu0 0.0
  %2948 = vmatprep.subr.mxu0 0.0
  %2949 = vmatpush1.msra.mxu0 0.0
  %2950 = vmatprep.subr.mxu0 0.0
  %2951 = vmatpush1.msra.mxu0 0.0
  %2952 = vmatprep.subr.mxu0 0.0
  %2953 = vmatpush1.msra.mxu0 0.0
  %2954 = vmatprep.subr.mxu0 0.0
  %2955 = vmatpush1.msra.mxu0 0.0
  %2956 = vmatprep.subr.mxu0 0.0
  %2957 = vmatpush1.msra.mxu0 0.0
  %2958 = vmatprep.subr.mxu0 0.0
  %2959 = vmatpush1.msra.mxu0 0.0
  %2960 = vmatprep.subr.mxu0 0.0
  %2961 = vmatpush1.msra.mxu0 0.0
  %2962 = vmatprep.subr.mxu0 0.0
  %2963 = vmatpush1.msra.mxu0 0.0
  %2964 = vmatprep.mubr.f32.mxu0 0.0
  %2965 = vmatmul.mubr.f32.gmra.mrb[0].mxu0 %v2883
  %v2966 = vpop.f32.mrb[0].mxu0
  %v2967 = vadd.f32 0.0, %v2966
  %v2968 = vpop.f32.mrb[0].mxu0
  %2969 = vmatprep.mubr.f32.mxu0 0.0
  %2970 = vmatmul.mubr.f32.gmra.mrb[0].mxu0 %v2886
  %v2971 = vpop.f32.mrb[0].mxu0
  %v2972 = vadd.f32 0.0, %v2971
  %v2973 = vpop.f32.mrb[0].mxu0
  %2974 = vmatprep.mubr.f32.mxu0 0.0
  %2975 = vmatmul.mubr.f32.gmra.mrb[0].mxu0 %v2889
  %v2976 = vpop.f32.mrb[0].mxu0
  %v2977 = vadd.f32 0.0, %v2976
  %v2978 = vpop.f32.mrb[0].mxu0
  %2979 = vmatprep.mubr.f32.mxu0 0.0
  %2980 = vmatmul.mubr.f32.gmra.mrb[0].mxu0 %v2892
  %v2981 = vpop.f32.mrb[0].mxu0
  %v2982 = vadd.f32 0.0, %v2981
  %v2983 = vpop.f32.mrb[0].mxu0
  %2984 = vmatprep.mubr.f32.mxu0 0.0
  %2985 = vmatmul.mubr.f32.gmra.mrb[0].mxu0 %v2895
  %v2986 = vpop.f32.mrb[0].mxu0
  %v2987 = vadd.f32 0.0, %v2986
  %v2988 = vpop.f32.mrb[0].mxu0
  %2989 = vmatprep.mubr.f32.mxu0 0.0
  %2990 = vmatmul.mubr.f32.gmra.mrb[0].mxu0 %v2898
  %v2991 = vpop.f32.mrb[0].mxu0
  %v2992 = vadd.f32 0.0, %v2991
  %v2993 = vpop.f32.mrb[0].mxu0
  %2994 = vdwg.mxu0
  %v2995 = vadd.f32 %v2870, %v2967
  %v2996 = vadd.f32 %v2871, %v2972
  %v2997 = vxor.u32 %v2995, 2147483648
  %v2998 = vxor.u32 %v2996, 2147483648
  %v2999 = vmul.f32 %v2997, 1.442695
  %v3000 = vpow.pop %v2999
  %v3001 = vmul.f32 %v2998, 1.442695
  %v3002 = vpow.pop %v3001
  %v3003 = vadd.f32 %v3000, 1.0
  %v3004 = vadd.f32 %v3002, 1.0
  %v3005 = vrcp.pop %v3003
  %v3006 = vmul.f32 1.0, %v3005
  %v3007 = vrcp.pop %v3004
  %v3008 = vmul.f32 1.0, %v3007
  %v3009 = vadd.f32 %v2872, %v2977
  %v3010 = vadd.f32 %v2873, %v2982
  %v3011 = vxor.u32 %v3009, 2147483648
  %v3012 = vxor.u32 %v3010, 2147483648
  %v3013 = vmul.f32 %v3011, 1.442695
  %v3014 = vpow.pop %v3013
  %v3015 = vmul.f32 %v3012, 1.442695
  %v3016 = vpow.pop %v3015
  %v3017 = vadd.f32 %v3014, 1.0
  %v3018 = vadd.f32 %v3016, 1.0
  %v3019 = vrcp.pop %v3017
  %v3020 = vmul.f32 1.0, %v3019
  %v3021 = vrcp.pop %v3018
  %v3022 = vmul.f32 1.0, %v3021
  %v3023 = vadd.f32 %v2987, %v97
  %v3024 = vadd.f32 %v2992, %v102
  %v3025 = vmul.f32 %v3006, %v3023
  %v3026 = vmul.f32 %v3008, %v3024
  %v3027 = vadd.f32 %v2874, %v3025
  %v3028 = vadd.f32 %v2875, %v3026
  %v3029 = vtanh.pop %v3027
  %v3030 = vtanh.pop %v3028
  %v3031 = vsub.f32 1.0, %v3020
  %v3032 = vsub.f32 1.0, %v3022
  %v3033 = vmul.f32 %v3031, %v3029
  %v3034 = vmul.f32 %v3032, %v3030
  %v3035 = vmul.f32 %v3020, %v1836
  %v3036 = vmul.f32 %v3022, %v1837
  %v3037 = vadd.f32 %v3033, %v3035
  %v3038 = vadd.f32 %v3034, %v3036
  %v3039 = vmax.f32 %v3037, -5.0
  %v3040 = vmax.f32 %v3038, -5.0
  %v3041 = vmin.f32 %v3039, 5.0
  %v3042 = vmin.f32 %v3040, 5.0
  %v3043 = vld [vmem:[%s9] sm:$0xff]
  %v3045 = vsel %vm345, %v3043, 0
  %3047 = vmatprep.subr.mxu0 0.0
  %3048 = vmatpush1.msra.mxu0 %v3041
  %3049 = vmatprep.subr.mxu0 0.0
  %3050 = vmatpush1.msra.mxu0 %v3042
  %3051 = vmatprep.subr.mxu0 0.0
  %3052 = vmatpush1.msra.mxu0 0.0
  %3053 = vmatprep.subr.mxu0 0.0
  %3054 = vmatpush1.msra.mxu0 0.0
  %3055 = vmatprep.subr.mxu0 0.0
  %3056 = vmatpush1.msra.mxu0 0.0
  %3057 = vmatprep.subr.mxu0 0.0
  %3058 = vmatpush1.msra.mxu0 0.0
  %3059 = vmatprep.subr.mxu0 0.0
  %3060 = vmatpush1.msra.mxu0 0.0
  %3061 = vmatprep.subr.mxu0 0.0
  %3062 = vmatpush1.msra.mxu0 0.0
  %3063 = vmatprep.subr.mxu0 0.0
  %3064 = vmatpush1.msra.mxu0 0.0
  %3065 = vmatprep.subr.mxu0 0.0
  %3066 = vmatpush1.msra.mxu0 0.0
  %3067 = vmatprep.subr.mxu0 0.0
  %3068 = vmatpush1.msra.mxu0 0.0
  %3069 = vmatprep.subr.mxu0 0.0
  %3070 = vmatpush1.msra.mxu0 0.0
  %3071 = vmatprep.subr.mxu0 0.0
  %3072 = vmatpush1.msra.mxu0 0.0
  %3073 = vmatprep.subr.mxu0 0.0
  %3074 = vmatpush1.msra.mxu0 0.0
  %3075 = vmatprep.subr.mxu0 0.0
  %3076 = vmatpush1.msra.mxu0 0.0
  %3077 = vmatprep.subr.mxu0 0.0
  %3078 = vmatpush1.msra.mxu0 0.0
  %3079 = vmatprep.subr.mxu0 0.0
  %3080 = vmatpush1.msra.mxu0 0.0
  %3081 = vmatprep.subr.mxu0 0.0
  %3082 = vmatpush1.msra.mxu0 0.0
  %3083 = vmatprep.subr.mxu0 0.0
  %3084 = vmatpush1.msra.mxu0 0.0
  %3085 = vmatprep.subr.mxu0 0.0
  %3086 = vmatpush1.msra.mxu0 0.0
  %3087 = vmatprep.subr.mxu0 0.0
  %3088 = vmatpush1.msra.mxu0 0.0
  %3089 = vmatprep.subr.mxu0 0.0
  %3090 = vmatpush1.msra.mxu0 0.0
  %3091 = vmatprep.subr.mxu0 0.0
  %3092 = vmatpush1.msra.mxu0 0.0
  %3093 = vmatprep.subr.mxu0 0.0
  %3094 = vmatpush1.msra.mxu0 0.0
  %3095 = vmatprep.subr.mxu0 0.0
  %3096 = vmatpush1.msra.mxu0 0.0
  %3097 = vmatprep.subr.mxu0 0.0
  %3098 = vmatpush1.msra.mxu0 0.0
  %3099 = vmatprep.subr.mxu0 0.0
  %3100 = vmatpush1.msra.mxu0 0.0
  %3101 = vmatprep.subr.mxu0 0.0
  %3102 = vmatpush1.msra.mxu0 0.0
  %3103 = vmatprep.subr.mxu0 0.0
  %3104 = vmatpush1.msra.mxu0 0.0
  %3105 = vmatprep.subr.mxu0 0.0
  %3106 = vmatpush1.msra.mxu0 0.0
  %3107 = vmatprep.subr.mxu0 0.0
  %3108 = vmatpush1.msra.mxu0 0.0
  %3109 = vmatprep.subr.mxu0 0.0
  %3110 = vmatpush1.msra.mxu0 0.0
  %3111 = vmatprep.mubr.f32.mxu0 0.0
  %3112 = vmatmul.mubr.f32.gmra.mrb[0].mxu0 %v3045
  %v3113 = vpop.f32.mrb[0].mxu0
  %v3114 = vadd.f32 %v108, %v3113
  %v3115 = vpop.f32.mrb[0].mxu0
  %3116 = vdwg.mxu0
  %v3117 = vld [vmem:[%s11] sm:$0xff]
  %v3118 = vld [vmem:[%s11 + $0x8] sm:$0xff]
  %v3119 = vld [vmem:[%s11 + $0x10] sm:$0xff]
  %v3120 = vld [vmem:[%s11 + $0x18] sm:$0xff]
  %v3121 = vld [vmem:[%s11 + $0x20] sm:$0xff]
  %v3122 = vld [vmem:[%s11 + $0x28] sm:$0xff]
  %v3123 = vld [vmem:[%s11 + $0x30] sm:$0xff]
  %v3124 = vld [vmem:[%s11 + $0x38] sm:$0xff]
  %v3125 = vld [vmem:[%s11 + $0x40] sm:$0xff]
  %v3126 = vld [vmem:[%s11 + $0x48] sm:$0xff]
  %v3127 = vld [vmem:[%s11 + $0x50] sm:$0xff]
  %v3128 = vld [vmem:[%s11 + $0x58] sm:$0xff]
  %v3129 = vld [vmem:[%s12] sm:$0xff]
  %v3130 = vld [vmem:[%s12 + $0x8] sm:$0xff]
  %v3131 = vld [vmem:[%s12 + $0x10] sm:$0xff]
  %v3132 = vld [vmem:[%s12 + $0x18] sm:$0xff]
  %v3133 = vld [vmem:[%s12 + $0x20] sm:$0xff]
  %v3134 = vld [vmem:[%s12 + $0x28] sm:$0xff]
  %v3135 = vld [vmem:[%s12 + $0x30] sm:$0xff]
  %v3136 = vld [vmem:[%s12 + $0x38] sm:$0xff]
  %v3137 = vld [vmem:[%s12 + $0x40] sm:$0xff]
  %v3138 = vld [vmem:[%s12 + $0x48] sm:$0xff]
  %v3139 = vld [vmem:[%s12 + $0x50] sm:$0xff]
  %v3140 = vld [vmem:[%s12 + $0x58] sm:$0xff]
  %v3142 = vsel %vm231, %v3129, 0
  %v3145 = vsel %vm231, %v3130, 0
  %v3148 = vsel %vm231, %v3131, 0
  %v3151 = vsel %vm231, %v3132, 0
  %v3154 = vsel %vm231, %v3133, 0
  %v3157 = vsel %vm231, %v3134, 0
  %v3160 = vsel %vm231, %v3135, 0
  %v3163 = vsel %vm231, %v3136, 0
  %v3166 = vsel %vm231, %v3137, 0
  %v3169 = vsel %vm231, %v3138, 0
  %v3172 = vsel %vm231, %v3139, 0
  %v3175 = vsel %vm231, %v3140, 0
  %3177 = vmatprep.subr.mxu0 0.0
  %3178 = vmatpush1.msra.mxu0 %v2631
  %3179 = vmatprep.subr.mxu0 0.0
  %3180 = vmatpush1.msra.mxu0 0.0
  %3181 = vmatprep.subr.mxu0 0.0
  %3182 = vmatpush1.msra.mxu0 0.0
  %3183 = vmatprep.subr.mxu0 0.0
  %3184 = vmatpush1.msra.mxu0 0.0
  %3185 = vmatprep.subr.mxu0 0.0
  %3186 = vmatpush1.msra.mxu0 0.0
  %3187 = vmatprep.subr.mxu0 0.0
  %3188 = vmatpush1.msra.mxu0 0.0
  %3189 = vmatprep.subr.mxu0 0.0
  %3190 = vmatpush1.msra.mxu0 0.0
  %3191 = vmatprep.subr.mxu0 0.0
  %3192 = vmatpush1.msra.mxu0 0.0
  %3193 = vmatprep.subr.mxu0 0.0
  %3194 = vmatpush1.msra.mxu0 0.0
  %3195 = vmatprep.subr.mxu0 0.0
  %3196 = vmatpush1.msra.mxu0 0.0
  %3197 = vmatprep.subr.mxu0 0.0
  %3198 = vmatpush1.msra.mxu0 0.0
  %3199 = vmatprep.subr.mxu0 0.0
  %3200 = vmatpush1.msra.mxu0 0.0
  %3201 = vmatprep.subr.mxu0 0.0
  %3202 = vmatpush1.msra.mxu0 0.0
  %3203 = vmatprep.subr.mxu0 0.0
  %3204 = vmatpush1.msra.mxu0 0.0
  %3205 = vmatprep.subr.mxu0 0.0
  %3206 = vmatpush1.msra.mxu0 0.0
  %3207 = vmatprep.subr.mxu0 0.0
  %3208 = vmatpush1.msra.mxu0 0.0
  %3209 = vmatprep.subr.mxu0 0.0
  %3210 = vmatpush1.msra.mxu0 0.0
  %3211 = vmatprep.subr.mxu0 0.0
  %3212 = vmatpush1.msra.mxu0 0.0
  %3213 = vmatprep.subr.mxu0 0.0
  %3214 = vmatpush1.msra.mxu0 0.0
  %3215 = vmatprep.subr.mxu0 0.0
  %3216 = vmatpush1.msra.mxu0 0.0
  %3217 = vmatprep.subr.mxu0 0.0
  %3218 = vmatpush1.msra.mxu0 0.0
  %3219 = vmatprep.subr.mxu0 0.0
  %3220 = vmatpush1.msra.mxu0 0.0
  %3221 = vmatprep.subr.mxu0 0.0
  %3222 = vmatpush1.msra.mxu0 0.0
  %3223 = vmatprep.subr.mxu0 0.0
  %3224 = vmatpush1.msra.mxu0 0.0
  %3225 = vmatprep.subr.mxu0 0.0
  %3226 = vmatpush1.msra.mxu0 0.0
  %3227 = vmatprep.subr.mxu0 0.0
  %3228 = vmatpush1.msra.mxu0 0.0
  %3229 = vmatprep.subr.mxu0 0.0
  %3230 = vmatpush1.msra.mxu0 0.0
  %3231 = vmatprep.subr.mxu0 0.0
  %3232 = vmatpush1.msra.mxu0 0.0
  %3233 = vmatprep.subr.mxu0 0.0
  %3234 = vmatpush1.msra.mxu0 0.0
  %3235 = vmatprep.subr.mxu0 0.0
  %3236 = vmatpush1.msra.mxu0 0.0
  %3237 = vmatprep.subr.mxu0 0.0
  %3238 = vmatpush1.msra.mxu0 0.0
  %3239 = vmatprep.subr.mxu0 0.0
  %3240 = vmatpush1.msra.mxu0 0.0
  %3241 = vmatprep.mubr.f32.mxu0 0.0
  %3242 = vmatmul.mubr.f32.gmra.mrb[0].mxu0 %v3142
  %v3243 = vpop.f32.mrb[0].mxu0
  %v3244 = vadd.f32 0.0, %v3243
  %v3245 = vpop.f32.mrb[0].mxu0
  %3246 = vmatprep.mubr.f32.mxu0 0.0
  %3247 = vmatmul.mubr.f32.gmra.mrb[0].mxu0 %v3145
  %v3248 = vpop.f32.mrb[0].mxu0
  %v3249 = vadd.f32 0.0, %v3248
  %v3250 = vpop.f32.mrb[0].mxu0
  %3251 = vmatprep.mubr.f32.mxu0 0.0
  %3252 = vmatmul.mubr.f32.gmra.mrb[0].mxu0 %v3148
  %v3253 = vpop.f32.mrb[0].mxu0
  %v3254 = vadd.f32 0.0, %v3253
  %v3255 = vpop.f32.mrb[0].mxu0
  %3256 = vmatprep.mubr.f32.mxu0 0.0
  %3257 = vmatmul.mubr.f32.gmra.mrb[0].mxu0 %v3151
  %v3258 = vpop.f32.mrb[0].mxu0
  %v3259 = vadd.f32 0.0, %v3258
  %v3260 = vpop.f32.mrb[0].mxu0
  %3261 = vmatprep.mubr.f32.mxu0 0.0
  %3262 = vmatmul.mubr.f32.gmra.mrb[0].mxu0 %v3154
  %v3263 = vpop.f32.mrb[0].mxu0
  %v3264 = vadd.f32 0.0, %v3263
  %v3265 = vpop.f32.mrb[0].mxu0
  %3266 = vmatprep.mubr.f32.mxu0 0.0
  %3267 = vmatmul.mubr.f32.gmra.mrb[0].mxu0 %v3157
  %v3268 = vpop.f32.mrb[0].mxu0
  %v3269 = vadd.f32 0.0, %v3268
  %v3270 = vpop.f32.mrb[0].mxu0
  %3271 = vmatprep.mubr.f32.mxu0 0.0
  %3272 = vmatmul.mubr.f32.gmra.mrb[0].mxu0 %v3160
  %v3273 = vpop.f32.mrb[0].mxu0
  %v3274 = vadd.f32 0.0, %v3273
  %v3275 = vpop.f32.mrb[0].mxu0
  %3276 = vmatprep.mubr.f32.mxu0 0.0
  %3277 = vmatmul.mubr.f32.gmra.mrb[0].mxu0 %v3163
  %v3278 = vpop.f32.mrb[0].mxu0
  %v3279 = vadd.f32 0.0, %v3278
  %v3280 = vpop.f32.mrb[0].mxu0
  %3281 = vmatprep.mubr.f32.mxu0 0.0
  %3282 = vmatmul.mubr.f32.gmra.mrb[0].mxu0 %v3166
  %v3283 = vpop.f32.mrb[0].mxu0
  %v3284 = vadd.f32 0.0, %v3283
  %v3285 = vpop.f32.mrb[0].mxu0
  %3286 = vmatprep.mubr.f32.mxu0 0.0
  %3287 = vmatmul.mubr.f32.gmra.mrb[0].mxu0 %v3169
  %v3288 = vpop.f32.mrb[0].mxu0
  %v3289 = vadd.f32 0.0, %v3288
  %v3290 = vpop.f32.mrb[0].mxu0
  %3291 = vmatprep.mubr.f32.mxu0 0.0
  %3292 = vmatmul.mubr.f32.gmra.mrb[0].mxu0 %v3172
  %v3293 = vpop.f32.mrb[0].mxu0
  %v3294 = vadd.f32 0.0, %v3293
  %v3295 = vpop.f32.mrb[0].mxu0
  %3296 = vmatprep.mubr.f32.mxu0 0.0
  %3297 = vmatmul.mubr.f32.gmra.mrb[0].mxu0 %v3175
  %v3298 = vpop.f32.mrb[0].mxu0
  %v3299 = vadd.f32 0.0, %v3298
  %v3300 = vpop.f32.mrb[0].mxu0
  %3301 = vdwg.mxu0
  %v3303 = vsel %vm231, %v3117, 0
  %v3306 = vsel %vm231, %v3118, 0
  %v3309 = vsel %vm231, %v3119, 0
  %v3312 = vsel %vm231, %v3120, 0
  %v3315 = vsel %vm231, %v3121, 0
  %v3318 = vsel %vm231, %v3122, 0
  %v3321 = vsel %vm231, %v3123, 0
  %v3324 = vsel %vm231, %v3124, 0
  %v3327 = vsel %vm231, %v3125, 0
  %v3330 = vsel %vm231, %v3126, 0
  %v3333 = vsel %vm231, %v3127, 0
  %v3336 = vsel %vm231, %v3128, 0
  %3338 = vmatprep.subr.mxu0 0.0
  %3339 = vmatpush1.msra.mxu0 %v3114
  %3340 = vmatprep.subr.mxu0 0.0
  %3341 = vmatpush1.msra.mxu0 0.0
  %3342 = vmatprep.subr.mxu0 0.0
  %3343 = vmatpush1.msra.mxu0 0.0
  %3344 = vmatprep.subr.mxu0 0.0
  %3345 = vmatpush1.msra.mxu0 0.0
  %3346 = vmatprep.subr.mxu0 0.0
  %3347 = vmatpush1.msra.mxu0 0.0
  %3348 = vmatprep.subr.mxu0 0.0
  %3349 = vmatpush1.msra.mxu0 0.0
  %3350 = vmatprep.subr.mxu0 0.0
  %3351 = vmatpush1.msra.mxu0 0.0
  %3352 = vmatprep.subr.mxu0 0.0
  %3353 = vmatpush1.msra.mxu0 0.0
  %3354 = vmatprep.subr.mxu0 0.0
  %3355 = vmatpush1.msra.mxu0 0.0
  %3356 = vmatprep.subr.mxu0 0.0
  %3357 = vmatpush1.msra.mxu0 0.0
  %3358 = vmatprep.subr.mxu0 0.0
  %3359 = vmatpush1.msra.mxu0 0.0
  %3360 = vmatprep.subr.mxu0 0.0
  %3361 = vmatpush1.msra.mxu0 0.0
  %3362 = vmatprep.subr.mxu0 0.0
  %3363 = vmatpush1.msra.mxu0 0.0
  %3364 = vmatprep.subr.mxu0 0.0
  %3365 = vmatpush1.msra.mxu0 0.0
  %3366 = vmatprep.subr.mxu0 0.0
  %3367 = vmatpush1.msra.mxu0 0.0
  %3368 = vmatprep.subr.mxu0 0.0
  %3369 = vmatpush1.msra.mxu0 0.0
  %3370 = vmatprep.subr.mxu0 0.0
  %3371 = vmatpush1.msra.mxu0 0.0
  %3372 = vmatprep.subr.mxu0 0.0
  %3373 = vmatpush1.msra.mxu0 0.0
  %3374 = vmatprep.subr.mxu0 0.0
  %3375 = vmatpush1.msra.mxu0 0.0
  %3376 = vmatprep.subr.mxu0 0.0
  %3377 = vmatpush1.msra.mxu0 0.0
  %3378 = vmatprep.subr.mxu0 0.0
  %3379 = vmatpush1.msra.mxu0 0.0
  %3380 = vmatprep.subr.mxu0 0.0
  %3381 = vmatpush1.msra.mxu0 0.0
  %3382 = vmatprep.subr.mxu0 0.0
  %3383 = vmatpush1.msra.mxu0 0.0
  %3384 = vmatprep.subr.mxu0 0.0
  %3385 = vmatpush1.msra.mxu0 0.0
  %3386 = vmatprep.subr.mxu0 0.0
  %3387 = vmatpush1.msra.mxu0 0.0
  %3388 = vmatprep.subr.mxu0 0.0
  %3389 = vmatpush1.msra.mxu0 0.0
  %3390 = vmatprep.subr.mxu0 0.0
  %3391 = vmatpush1.msra.mxu0 0.0
  %3392 = vmatprep.subr.mxu0 0.0
  %3393 = vmatpush1.msra.mxu0 0.0
  %3394 = vmatprep.subr.mxu0 0.0
  %3395 = vmatpush1.msra.mxu0 0.0
  %3396 = vmatprep.subr.mxu0 0.0
  %3397 = vmatpush1.msra.mxu0 0.0
  %3398 = vmatprep.subr.mxu0 0.0
  %3399 = vmatpush1.msra.mxu0 0.0
  %3400 = vmatprep.subr.mxu0 0.0
  %3401 = vmatpush1.msra.mxu0 0.0
  %3402 = vmatprep.mubr.f32.mxu0 0.0
  %3403 = vmatmul.mubr.f32.gmra.mrb[0].mxu0 %v3303
  %v3404 = vpop.f32.mrb[0].mxu0
  %v3405 = vadd.f32 %v3244, %v3404
  %v3406 = vpop.f32.mrb[0].mxu0
  %3407 = vmatprep.mubr.f32.mxu0 0.0
  %3408 = vmatmul.mubr.f32.gmra.mrb[0].mxu0 %v3306
  %v3409 = vpop.f32.mrb[0].mxu0
  %v3410 = vadd.f32 %v3249, %v3409
  %v3411 = vpop.f32.mrb[0].mxu0
  %3412 = vmatprep.mubr.f32.mxu0 0.0
  %3413 = vmatmul.mubr.f32.gmra.mrb[0].mxu0 %v3309
  %v3414 = vpop.f32.mrb[0].mxu0
  %v3415 = vadd.f32 %v3254, %v3414
  %v3416 = vpop.f32.mrb[0].mxu0
  %3417 = vmatprep.mubr.f32.mxu0 0.0
  %3418 = vmatmul.mubr.f32.gmra.mrb[0].mxu0 %v3312
  %v3419 = vpop.f32.mrb[0].mxu0
  %v3420 = vadd.f32 %v3259, %v3419
  %v3421 = vpop.f32.mrb[0].mxu0
  %3422 = vmatprep.mubr.f32.mxu0 0.0
  %3423 = vmatmul.mubr.f32.gmra.mrb[0].mxu0 %v3315
  %v3424 = vpop.f32.mrb[0].mxu0
  %v3425 = vadd.f32 %v3264, %v3424
  %v3426 = vpop.f32.mrb[0].mxu0
  %3427 = vmatprep.mubr.f32.mxu0 0.0
  %3428 = vmatmul.mubr.f32.gmra.mrb[0].mxu0 %v3318
  %v3429 = vpop.f32.mrb[0].mxu0
  %v3430 = vadd.f32 %v3269, %v3429
  %v3431 = vpop.f32.mrb[0].mxu0
  %3432 = vmatprep.mubr.f32.mxu0 0.0
  %3433 = vmatmul.mubr.f32.gmra.mrb[0].mxu0 %v3321
  %v3434 = vpop.f32.mrb[0].mxu0
  %v3435 = vadd.f32 %v3274, %v3434
  %v3436 = vpop.f32.mrb[0].mxu0
  %3437 = vmatprep.mubr.f32.mxu0 0.0
  %3438 = vmatmul.mubr.f32.gmra.mrb[0].mxu0 %v3324
  %v3439 = vpop.f32.mrb[0].mxu0
  %v3440 = vadd.f32 %v3279, %v3439
  %v3441 = vpop.f32.mrb[0].mxu0
  %3442 = vmatprep.mubr.f32.mxu0 0.0
  %3443 = vmatmul.mubr.f32.gmra.mrb[0].mxu0 %v3327
  %v3444 = vpop.f32.mrb[0].mxu0
  %v3445 = vadd.f32 %v3284, %v3444
  %v3446 = vpop.f32.mrb[0].mxu0
  %3447 = vmatprep.mubr.f32.mxu0 0.0
  %3448 = vmatmul.mubr.f32.gmra.mrb[0].mxu0 %v3330
  %v3449 = vpop.f32.mrb[0].mxu0
  %v3450 = vadd.f32 %v3289, %v3449
  %v3451 = vpop.f32.mrb[0].mxu0
  %3452 = vmatprep.mubr.f32.mxu0 0.0
  %3453 = vmatmul.mubr.f32.gmra.mrb[0].mxu0 %v3333
  %v3454 = vpop.f32.mrb[0].mxu0
  %v3455 = vadd.f32 %v3294, %v3454
  %v3456 = vpop.f32.mrb[0].mxu0
  %3457 = vmatprep.mubr.f32.mxu0 0.0
  %3458 = vmatmul.mubr.f32.gmra.mrb[0].mxu0 %v3336
  %v3459 = vpop.f32.mrb[0].mxu0
  %v3460 = vadd.f32 %v3299, %v3459
  %v3461 = vpop.f32.mrb[0].mxu0
  %3462 = vdwg.mxu0
  %v3463 = vadd.f32 %v3405, %v125
  %v3464 = vadd.f32 %v3410, %v130
  %v3465 = vadd.f32 %v3415, %v135
  %v3466 = vadd.f32 %v3420, %v140
  %v3467 = vadd.f32 %v3425, %v145
  %v3468 = vadd.f32 %v3430, %v150
  %v3469 = vadd.f32 %v3435, %v155
  %v3470 = vadd.f32 %v3440, %v160
  %v3471 = vadd.f32 %v3445, %v165
  %v3472 = vadd.f32 %v3450, %v170
  %v3473 = vadd.f32 %v3455, %v175
  %v3474 = vadd.f32 %v3460, %v180
  %v3475 = vld [vmem:[%s13] sm:$0xff]
  %v3476 = vld [vmem:[%s13 + $0x8] sm:$0xff]
  %v3477 = vld [vmem:[%s13 + $0x10] sm:$0xff]
  %v3478 = vld [vmem:[%s13 + $0x18] sm:$0xff]
  %v3479 = vld [vmem:[%s13 + $0x20] sm:$0xff]
  %v3480 = vld [vmem:[%s13 + $0x28] sm:$0xff]
  %v3481 = vld [vmem:[%s13 + $0x30] sm:$0xff]
  %v3482 = vld [vmem:[%s13 + $0x38] sm:$0xff]
  %v3483 = vld [vmem:[%s13 + $0x40] sm:$0xff]
  %v3484 = vld [vmem:[%s13 + $0x48] sm:$0xff]
  %v3485 = vld [vmem:[%s13 + $0x50] sm:$0xff]
  %v3486 = vld [vmem:[%s13 + $0x58] sm:$0xff]
  %v3488 = vsel %vm1076, %v3475, 0
  %v3491 = vsel %vm1076, %v3476, 0
  %v3494 = vsel %vm1076, %v3477, 0
  %v3497 = vsel %vm1076, %v3478, 0
  %v3500 = vsel %vm1076, %v3479, 0
  %v3503 = vsel %vm1076, %v3480, 0
  %v3506 = vsel %vm1076, %v3481, 0
  %v3509 = vsel %vm1076, %v3482, 0
  %v3512 = vsel %vm1076, %v3483, 0
  %v3515 = vsel %vm1076, %v3484, 0
  %v3518 = vsel %vm1076, %v3485, 0
  %v3521 = vsel %vm1076, %v3486, 0
  %3523 = vmatprep.subr.mxu0 0.0
  %3524 = vmatpush1.msra.mxu0 %v2535
  %3525 = vmatprep.subr.mxu0 0.0
  %3526 = vmatpush1.msra.mxu0 %v2536
  %3527 = vmatprep.subr.mxu0 0.0
  %3528 = vmatpush1.msra.mxu0 %v2537
  %3529 = vmatprep.subr.mxu0 0.0
  %3530 = vmatpush1.msra.mxu0 %v2538
  %3531 = vmatprep.subr.mxu0 0.0
  %3532 = vmatpush1.msra.mxu0 0.0
  %3533 = vmatprep.subr.mxu0 0.0
  %3534 = vmatpush1.msra.mxu0 0.0
  %3535 = vmatprep.subr.mxu0 0.0
  %3536 = vmatpush1.msra.mxu0 0.0
  %3537 = vmatprep.subr.mxu0 0.0
  %3538 = vmatpush1.msra.mxu0 0.0
  %3539 = vmatprep.subr.mxu0 0.0
  %3540 = vmatpush1.msra.mxu0 0.0
  %3541 = vmatprep.subr.mxu0 0.0
  %3542 = vmatpush1.msra.mxu0 0.0
  %3543 = vmatprep.subr.mxu0 0.0
  %3544 = vmatpush1.msra.mxu0 0.0
  %3545 = vmatprep.subr.mxu0 0.0
  %3546 = vmatpush1.msra.mxu0 0.0
  %3547 = vmatprep.subr.mxu0 0.0
  %3548 = vmatpush1.msra.mxu0 0.0
  %3549 = vmatprep.subr.mxu0 0.0
  %3550 = vmatpush1.msra.mxu0 0.0
  %3551 = vmatprep.subr.mxu0 0.0
  %3552 = vmatpush1.msra.mxu0 0.0
  %3553 = vmatprep.subr.mxu0 0.0
  %3554 = vmatpush1.msra.mxu0 0.0
  %3555 = vmatprep.subr.mxu0 0.0
  %3556 = vmatpush1.msra.mxu0 0.0
  %3557 = vmatprep.subr.mxu0 0.0
  %3558 = vmatpush1.msra.mxu0 0.0
  %3559 = vmatprep.subr.mxu0 0.0
  %3560 = vmatpush1.msra.mxu0 0.0
  %3561 = vmatprep.subr.mxu0 0.0
  %3562 = vmatpush1.msra.mxu0 0.0
  %3563 = vmatprep.subr.mxu0 0.0
  %3564 = vmatpush1.msra.mxu0 0.0
  %3565 = vmatprep.subr.mxu0 0.0
  %3566 = vmatpush1.msra.mxu0 0.0
  %3567 = vmatprep.subr.mxu0 0.0
  %3568 = vmatpush1.msra.mxu0 0.0
  %3569 = vmatprep.subr.mxu0 0.0
  %3570 = vmatpush1.msra.mxu0 0.0
  %3571 = vmatprep.subr.mxu0 0.0
  %3572 = vmatpush1.msra.mxu0 0.0
  %3573 = vmatprep.subr.mxu0 0.0
  %3574 = vmatpush1.msra.mxu0 0.0
  %3575 = vmatprep.subr.mxu0 0.0
  %3576 = vmatpush1.msra.mxu0 0.0
  %3577 = vmatprep.subr.mxu0 0.0
  %3578 = vmatpush1.msra.mxu0 0.0
  %3579 = vmatprep.subr.mxu0 0.0
  %3580 = vmatpush1.msra.mxu0 0.0
  %3581 = vmatprep.subr.mxu0 0.0
  %3582 = vmatpush1.msra.mxu0 0.0
  %3583 = vmatprep.subr.mxu0 0.0
  %3584 = vmatpush1.msra.mxu0 0.0
  %3585 = vmatprep.subr.mxu0 0.0
  %3586 = vmatpush1.msra.mxu0 0.0
  %3587 = vmatprep.mubr.f32.mxu0 0.0
  %3588 = vmatmul.mubr.f32.gmra.mrb[0].mxu0 %v3488
  %v3589 = vpop.f32.mrb[0].mxu0
  %v3590 = vadd.f32 0.0, %v3589
  %v3591 = vpop.f32.mrb[0].mxu0
  %3592 = vmatprep.mubr.f32.mxu0 0.0
  %3593 = vmatmul.mubr.f32.gmra.mrb[0].mxu0 %v3491
  %v3594 = vpop.f32.mrb[0].mxu0
  %v3595 = vadd.f32 0.0, %v3594
  %v3596 = vpop.f32.mrb[0].mxu0
  %3597 = vmatprep.mubr.f32.mxu0 0.0
  %3598 = vmatmul.mubr.f32.gmra.mrb[0].mxu0 %v3494
  %v3599 = vpop.f32.mrb[0].mxu0
  %v3600 = vadd.f32 0.0, %v3599
  %v3601 = vpop.f32.mrb[0].mxu0
  %3602 = vmatprep.mubr.f32.mxu0 0.0
  %3603 = vmatmul.mubr.f32.gmra.mrb[0].mxu0 %v3497
  %v3604 = vpop.f32.mrb[0].mxu0
  %v3605 = vadd.f32 0.0, %v3604
  %v3606 = vpop.f32.mrb[0].mxu0
  %3607 = vmatprep.mubr.f32.mxu0 0.0
  %3608 = vmatmul.mubr.f32.gmra.mrb[0].mxu0 %v3500
  %v3609 = vpop.f32.mrb[0].mxu0
  %v3610 = vadd.f32 0.0, %v3609
  %v3611 = vpop.f32.mrb[0].mxu0
  %3612 = vmatprep.mubr.f32.mxu0 0.0
  %3613 = vmatmul.mubr.f32.gmra.mrb[0].mxu0 %v3503
  %v3614 = vpop.f32.mrb[0].mxu0
  %v3615 = vadd.f32 0.0, %v3614
  %v3616 = vpop.f32.mrb[0].mxu0
  %3617 = vmatprep.mubr.f32.mxu0 0.0
  %3618 = vmatmul.mubr.f32.gmra.mrb[0].mxu0 %v3506
  %v3619 = vpop.f32.mrb[0].mxu0
  %v3620 = vadd.f32 0.0, %v3619
  %v3621 = vpop.f32.mrb[0].mxu0
  %3622 = vmatprep.mubr.f32.mxu0 0.0
  %3623 = vmatmul.mubr.f32.gmra.mrb[0].mxu0 %v3509
  %v3624 = vpop.f32.mrb[0].mxu0
  %v3625 = vadd.f32 0.0, %v3624
  %v3626 = vpop.f32.mrb[0].mxu0
  %3627 = vmatprep.mubr.f32.mxu0 0.0
  %3628 = vmatmul.mubr.f32.gmra.mrb[0].mxu0 %v3512
  %v3629 = vpop.f32.mrb[0].mxu0
  %v3630 = vadd.f32 0.0, %v3629
  %v3631 = vpop.f32.mrb[0].mxu0
  %3632 = vmatprep.mubr.f32.mxu0 0.0
  %3633 = vmatmul.mubr.f32.gmra.mrb[0].mxu0 %v3515
  %v3634 = vpop.f32.mrb[0].mxu0
  %v3635 = vadd.f32 0.0, %v3634
  %v3636 = vpop.f32.mrb[0].mxu0
  %3637 = vmatprep.mubr.f32.mxu0 0.0
  %3638 = vmatmul.mubr.f32.gmra.mrb[0].mxu0 %v3518
  %v3639 = vpop.f32.mrb[0].mxu0
  %v3640 = vadd.f32 0.0, %v3639
  %v3641 = vpop.f32.mrb[0].mxu0
  %3642 = vmatprep.mubr.f32.mxu0 0.0
  %3643 = vmatmul.mubr.f32.gmra.mrb[0].mxu0 %v3521
  %v3644 = vpop.f32.mrb[0].mxu0
  %v3645 = vadd.f32 0.0, %v3644
  %v3646 = vpop.f32.mrb[0].mxu0
  %3647 = vdwg.mxu0
  %v3648 = vadd.f32 %v3463, %v3590
  %v3649 = vadd.f32 %v3464, %v3595
  %v3650 = vadd.f32 %v3465, %v3600
  %v3651 = vadd.f32 %v3466, %v3605
  %v3652 = vxor.u32 %v3648, 2147483648
  %v3653 = vxor.u32 %v3649, 2147483648
  %v3654 = vxor.u32 %v3650, 2147483648
  %v3655 = vxor.u32 %v3651, 2147483648
  %v3656 = vmul.f32 %v3652, 1.442695
  %v3657 = vpow.pop %v3656
  %v3658 = vmul.f32 %v3653, 1.442695
  %v3659 = vpow.pop %v3658
  %v3660 = vmul.f32 %v3654, 1.442695
  %v3661 = vpow.pop %v3660
  %v3662 = vmul.f32 %v3655, 1.442695
  %v3663 = vpow.pop %v3662
  %v3664 = vadd.f32 %v3657, 1.0
  %v3665 = vadd.f32 %v3659, 1.0
  %v3666 = vadd.f32 %v3661, 1.0
  %v3667 = vadd.f32 %v3663, 1.0
  %v3668 = vrcp.pop %v3664
  %v3669 = vmul.f32 1.0, %v3668
  %v3670 = vrcp.pop %v3665
  %v3671 = vmul.f32 1.0, %v3670
  %v3672 = vrcp.pop %v3666
  %v3673 = vmul.f32 1.0, %v3672
  %v3674 = vrcp.pop %v3667
  %v3675 = vmul.f32 1.0, %v3674
  %v3676 = vadd.f32 %v3467, %v3610
  %v3677 = vadd.f32 %v3468, %v3615
  %v3678 = vadd.f32 %v3469, %v3620
  %v3679 = vadd.f32 %v3470, %v3625
  %v3680 = vxor.u32 %v3676, 2147483648
  %v3681 = vxor.u32 %v3677, 2147483648
  %v3682 = vxor.u32 %v3678, 2147483648
  %v3683 = vxor.u32 %v3679, 2147483648
  %v3684 = vmul.f32 %v3680, 1.442695
  %v3685 = vpow.pop %v3684
  %v3686 = vmul.f32 %v3681, 1.442695
  %v3687 = vpow.pop %v3686
  %v3688 = vmul.f32 %v3682, 1.442695
  %v3689 = vpow.pop %v3688
  %v3690 = vmul.f32 %v3683, 1.442695
  %v3691 = vpow.pop %v3690
  %v3692 = vadd.f32 %v3685, 1.0
  %v3693 = vadd.f32 %v3687, 1.0
  %v3694 = vadd.f32 %v3689, 1.0
  %v3695 = vadd.f32 %v3691, 1.0
  %v3696 = vrcp.pop %v3692
  %v3697 = vmul.f32 1.0, %v3696
  %v3698 = vrcp.pop %v3693
  %v3699 = vmul.f32 1.0, %v3698
  %v3700 = vrcp.pop %v3694
  %v3701 = vmul.f32 1.0, %v3700
  %v3702 = vrcp.pop %v3695
  %v3703 = vmul.f32 1.0, %v3702
  %v3704 = vadd.f32 %v3630, %v189
  %v3705 = vadd.f32 %v3635, %v194
  %v3706 = vadd.f32 %v3640, %v199
  %v3707 = vadd.f32 %v3645, %v204
  %v3708 = vmul.f32 %v3669, %v3704
  %v3709 = vmul.f32 %v3671, %v3705
  %v3710 = vmul.f32 %v3673, %v3706
  %v3711 = vmul.f32 %v3675, %v3707
  %v3712 = vadd.f32 %v3471, %v3708
  %v3713 = vadd.f32 %v3472, %v3709
  %v3714 = vadd.f32 %v3473, %v3710
  %v3715 = vadd.f32 %v3474, %v3711
  %v3716 = vtanh.pop %v3712
  %v3717 = vtanh.pop %v3713
  %v3718 = vtanh.pop %v3714
  %v3719 = vtanh.pop %v3715
  %v3720 = vsub.f32 1.0, %v3697
  %v3721 = vsub.f32 1.0, %v3699
  %v3722 = vsub.f32 1.0, %v3701
  %v3723 = vsub.f32 1.0, %v3703
  %v3724 = vmul.f32 %v3720, %v3716
  %v3725 = vmul.f32 %v3721, %v3717
  %v3726 = vmul.f32 %v3722, %v3718
  %v3727 = vmul.f32 %v3723, %v3719
  %v3728 = vmul.f32 %v3697, %v2535
  %v3729 = vmul.f32 %v3699, %v2536
  %v3730 = vmul.f32 %v3701, %v2537
  %v3731 = vmul.f32 %v3703, %v2538
  %v3732 = vadd.f32 %v3724, %v3728
  %v3733 = vadd.f32 %v3725, %v3729
  %v3734 = vadd.f32 %v3726, %v3730
  %v3735 = vadd.f32 %v3727, %v3731
  %v3736 = vmax.f32 %v3732, -5.0
  %v3737 = vmax.f32 %v3733, -5.0
  %v3738 = vmax.f32 %v3734, -5.0
  %v3739 = vmax.f32 %v3735, -5.0
  %v3740 = vmin.f32 %v3736, 5.0
  %v3741 = vmin.f32 %v3737, 5.0
  %v3742 = vmin.f32 %v3738, 5.0
  %v3743 = vmin.f32 %v3739, 5.0
  %v3744 = vld [vmem:[%s16] sm:$0xff]
  %v3746 = vsel %vm1076, %v3744, 0
  %3748 = vmatprep.subr.mxu0 0.0
  %3749 = vmatpush1.msra.mxu0 %v3740
  %3750 = vmatprep.subr.mxu0 0.0
  %3751 = vmatpush1.msra.mxu0 %v3741
  %3752 = vmatprep.subr.mxu0 0.0
  %3753 = vmatpush1.msra.mxu0 %v3742
  %3754 = vmatprep.subr.mxu0 0.0
  %3755 = vmatpush1.msra.mxu0 %v3743
  %3756 = vmatprep.subr.mxu0 0.0
  %3757 = vmatpush1.msra.mxu0 0.0
  %3758 = vmatprep.subr.mxu0 0.0
  %3759 = vmatpush1.msra.mxu0 0.0
  %3760 = vmatprep.subr.mxu0 0.0
  %3761 = vmatpush1.msra.mxu0 0.0
  %3762 = vmatprep.subr.mxu0 0.0
  %3763 = vmatpush1.msra.mxu0 0.0
  %3764 = vmatprep.subr.mxu0 0.0
  %3765 = vmatpush1.msra.mxu0 0.0
  %3766 = vmatprep.subr.mxu0 0.0
  %3767 = vmatpush1.msra.mxu0 0.0
  %3768 = vmatprep.subr.mxu0 0.0
  %3769 = vmatpush1.msra.mxu0 0.0
  %3770 = vmatprep.subr.mxu0 0.0
  %3771 = vmatpush1.msra.mxu0 0.0
  %3772 = vmatprep.subr.mxu0 0.0
  %3773 = vmatpush1.msra.mxu0 0.0
  %3774 = vmatprep.subr.mxu0 0.0
  %3775 = vmatpush1.msra.mxu0 0.0
  %3776 = vmatprep.subr.mxu0 0.0
  %3777 = vmatpush1.msra.mxu0 0.0
  %3778 = vmatprep.subr.mxu0 0.0
  %3779 = vmatpush1.msra.mxu0 0.0
  %3780 = vmatprep.subr.mxu0 0.0
  %3781 = vmatpush1.msra.mxu0 0.0
  %3782 = vmatprep.subr.mxu0 0.0
  %3783 = vmatpush1.msra.mxu0 0.0
  %3784 = vmatprep.subr.mxu0 0.0
  %3785 = vmatpush1.msra.mxu0 0.0
  %3786 = vmatprep.subr.mxu0 0.0
  %3787 = vmatpush1.msra.mxu0 0.0
  %3788 = vmatprep.subr.mxu0 0.0
  %3789 = vmatpush1.msra.mxu0 0.0
  %3790 = vmatprep.subr.mxu0 0.0
  %3791 = vmatpush1.msra.mxu0 0.0
  %3792 = vmatprep.subr.mxu0 0.0
  %3793 = vmatpush1.msra.mxu0 0.0
  %3794 = vmatprep.subr.mxu0 0.0
  %3795 = vmatpush1.msra.mxu0 0.0
  %3796 = vmatprep.subr.mxu0 0.0
  %3797 = vmatpush1.msra.mxu0 0.0
  %3798 = vmatprep.subr.mxu0 0.0
  %3799 = vmatpush1.msra.mxu0 0.0
  %3800 = vmatprep.subr.mxu0 0.0
  %3801 = vmatpush1.msra.mxu0 0.0
  %3802 = vmatprep.subr.mxu0 0.0
  %3803 = vmatpush1.msra.mxu0 0.0
  %3804 = vmatprep.subr.mxu0 0.0
  %3805 = vmatpush1.msra.mxu0 0.0
  %3806 = vmatprep.subr.mxu0 0.0
  %3807 = vmatpush1.msra.mxu0 0.0
  %3808 = vmatprep.subr.mxu0 0.0
  %3809 = vmatpush1.msra.mxu0 0.0
  %3810 = vmatprep.subr.mxu0 0.0
  %3811 = vmatpush1.msra.mxu0 0.0
  %3812 = vmatprep.mubr.f32.mxu0 0.0
  %3813 = vmatmul.mubr.f32.gmra.mrb[0].mxu0 %v3746
  %v3814 = vpop.f32.mrb[0].mxu0
  %v3815 = vadd.f32 0.0, %v3814
  %v3816 = vpop.f32.mrb[0].mxu0
  %3817 = vdwg.mxu0
  %v3818 = vmul.f32 %v3114, 0.5
  %v3819 = vmul.f32 %v3818, 1.442695
  %v3820 = vpow.pop %v3819
  %v3821 = vsel %vm208, %v3114, %v3820
  %v3822 = vsel %vm208, %v3114, %v2631
  %s3823 = scalar_lea.vmem %s17, 144
  %3824 = vst.msk [vmem:[%s3823] sm:$0xff] %vm1413, %v3740
  %3825 = vst.msk [vmem:[%s3823 + $0x8] sm:$0xff] %vm1413, %v3741
  %3826 = vst.msk [vmem:[%s3823 + $0x10] sm:$0xff] %vm1413, %v3742
  %3827 = vst.msk [vmem:[%s3823 + $0x18] sm:$0xff] %vm1413, %v3743
  %3828 = vst.msk [vmem:[%s3823 + $0x20] sm:$0xff] %vm1413, %v3041
  %3829 = vst.msk [vmem:[%s3823 + $0x28] sm:$0xff] %vm1413, %v3042
  %3830 = vst.msk [vmem:[%s3823 + $0x30] sm:$0xff] %vm1413, %v3821
  %3831 = vst.msk [vmem:[%s3823 + $0x38] sm:$0xff] %vm1413, %v3822
  %3832 = vst.msk [vmem:[%s3823 + $0x40] sm:$0xff] %vm1413, %v3815
  %s3833 = scalar_lea.vmem %s0, 72
  %v3834 = vld [vmem:[%s3833] sm:$0xff]
  %v3835 = vld [vmem:[%s3833 + $0x8] sm:$0xff]
  %v3836 = vld [vmem:[%s3833 + $0x10] sm:$0xff]
  %v3837 = vld [vmem:[%s4] sm:$0xff]
  %v3838 = vld [vmem:[%s4 + $0x8] sm:$0xff]
  %v3839 = vld [vmem:[%s4 + $0x10] sm:$0xff]
  %v3840 = vld [vmem:[%s4 + $0x18] sm:$0xff]
  %v3841 = vld [vmem:[%s4 + $0x20] sm:$0xff]
  %v3842 = vld [vmem:[%s4 + $0x28] sm:$0xff]
  %v3843 = vld [vmem:[%s5] sm:$0xff]
  %v3844 = vld [vmem:[%s5 + $0x8] sm:$0xff]
  %v3845 = vld [vmem:[%s5 + $0x10] sm:$0xff]
  %v3846 = vld [vmem:[%s5 + $0x18] sm:$0xff]
  %v3847 = vld [vmem:[%s5 + $0x20] sm:$0xff]
  %v3848 = vld [vmem:[%s5 + $0x28] sm:$0xff]
  %v3850 = vsel %vm231, %v3843, 0
  %v3853 = vsel %vm231, %v3844, 0
  %v3856 = vsel %vm231, %v3845, 0
  %v3859 = vsel %vm231, %v3846, 0
  %v3862 = vsel %vm231, %v3847, 0
  %v3865 = vsel %vm231, %v3848, 0
  %3867 = vmatprep.subr.mxu0 0.0
  %3868 = vmatpush1.msra.mxu0 %v3815
  %3869 = vmatprep.subr.mxu0 0.0
  %3870 = vmatpush1.msra.mxu0 0.0
  %3871 = vmatprep.subr.mxu0 0.0
  %3872 = vmatpush1.msra.mxu0 0.0
  %3873 = vmatprep.subr.mxu0 0.0
  %3874 = vmatpush1.msra.mxu0 0.0
  %3875 = vmatprep.subr.mxu0 0.0
  %3876 = vmatpush1.msra.mxu0 0.0
  %3877 = vmatprep.subr.mxu0 0.0
  %3878 = vmatpush1.msra.mxu0 0.0
  %3879 = vmatprep.subr.mxu0 0.0
  %3880 = vmatpush1.msra.mxu0 0.0
  %3881 = vmatprep.subr.mxu0 0.0
  %3882 = vmatpush1.msra.mxu0 0.0
  %3883 = vmatprep.subr.mxu0 0.0
  %3884 = vmatpush1.msra.mxu0 0.0
  %3885 = vmatprep.subr.mxu0 0.0
  %3886 = vmatpush1.msra.mxu0 0.0
  %3887 = vmatprep.subr.mxu0 0.0
  %3888 = vmatpush1.msra.mxu0 0.0
  %3889 = vmatprep.subr.mxu0 0.0
  %3890 = vmatpush1.msra.mxu0 0.0
  %3891 = vmatprep.subr.mxu0 0.0
  %3892 = vmatpush1.msra.mxu0 0.0
  %3893 = vmatprep.subr.mxu0 0.0
  %3894 = vmatpush1.msra.mxu0 0.0
  %3895 = vmatprep.subr.mxu0 0.0
  %3896 = vmatpush1.msra.mxu0 0.0
  %3897 = vmatprep.subr.mxu0 0.0
  %3898 = vmatpush1.msra.mxu0 0.0
  %3899 = vmatprep.subr.mxu0 0.0
  %3900 = vmatpush1.msra.mxu0 0.0
  %3901 = vmatprep.subr.mxu0 0.0
  %3902 = vmatpush1.msra.mxu0 0.0
  %3903 = vmatprep.subr.mxu0 0.0
  %3904 = vmatpush1.msra.mxu0 0.0
  %3905 = vmatprep.subr.mxu0 0.0
  %3906 = vmatpush1.msra.mxu0 0.0
  %3907 = vmatprep.subr.mxu0 0.0
  %3908 = vmatpush1.msra.mxu0 0.0
  %3909 = vmatprep.subr.mxu0 0.0
  %3910 = vmatpush1.msra.mxu0 0.0
  %3911 = vmatprep.subr.mxu0 0.0
  %3912 = vmatpush1.msra.mxu0 0.0
  %3913 = vmatprep.subr.mxu0 0.0
  %3914 = vmatpush1.msra.mxu0 0.0
  %3915 = vmatprep.subr.mxu0 0.0
  %3916 = vmatpush1.msra.mxu0 0.0
  %3917 = vmatprep.subr.mxu0 0.0
  %3918 = vmatpush1.msra.mxu0 0.0
  %3919 = vmatprep.subr.mxu0 0.0
  %3920 = vmatpush1.msra.mxu0 0.0
  %3921 = vmatprep.subr.mxu0 0.0
  %3922 = vmatpush1.msra.mxu0 0.0
  %3923 = vmatprep.subr.mxu0 0.0
  %3924 = vmatpush1.msra.mxu0 0.0
  %3925 = vmatprep.subr.mxu0 0.0
  %3926 = vmatpush1.msra.mxu0 0.0
  %3927 = vmatprep.subr.mxu0 0.0
  %3928 = vmatpush1.msra.mxu0 0.0
  %3929 = vmatprep.subr.mxu0 0.0
  %3930 = vmatpush1.msra.mxu0 0.0
  %3931 = vmatprep.mubr.f32.mxu0 0.0
  %3932 = vmatmul.mubr.f32.gmra.mrb[0].mxu0 %v3850
  %v3933 = vpop.f32.mrb[0].mxu0
  %v3934 = vadd.f32 0.0, %v3933
  %v3935 = vpop.f32.mrb[0].mxu0
  %3936 = vmatprep.mubr.f32.mxu0 0.0
  %3937 = vmatmul.mubr.f32.gmra.mrb[0].mxu0 %v3853
  %v3938 = vpop.f32.mrb[0].mxu0
  %v3939 = vadd.f32 0.0, %v3938
  %v3940 = vpop.f32.mrb[0].mxu0
  %3941 = vmatprep.mubr.f32.mxu0 0.0
  %3942 = vmatmul.mubr.f32.gmra.mrb[0].mxu0 %v3856
  %v3943 = vpop.f32.mrb[0].mxu0
  %v3944 = vadd.f32 0.0, %v3943
  %v3945 = vpop.f32.mrb[0].mxu0
  %3946 = vmatprep.mubr.f32.mxu0 0.0
  %3947 = vmatmul.mubr.f32.gmra.mrb[0].mxu0 %v3859
  %v3948 = vpop.f32.mrb[0].mxu0
  %v3949 = vadd.f32 0.0, %v3948
  %v3950 = vpop.f32.mrb[0].mxu0
  %3951 = vmatprep.mubr.f32.mxu0 0.0
  %3952 = vmatmul.mubr.f32.gmra.mrb[0].mxu0 %v3862
  %v3953 = vpop.f32.mrb[0].mxu0
  %v3954 = vadd.f32 0.0, %v3953
  %v3955 = vpop.f32.mrb[0].mxu0
  %3956 = vmatprep.mubr.f32.mxu0 0.0
  %3957 = vmatmul.mubr.f32.gmra.mrb[0].mxu0 %v3865
  %v3958 = vpop.f32.mrb[0].mxu0
  %v3959 = vadd.f32 0.0, %v3958
  %v3960 = vpop.f32.mrb[0].mxu0
  %3961 = vdwg.mxu0
  %v3963 = vsel %vm345, %v3837, 0
  %v3966 = vsel %vm345, %v3838, 0
  %v3969 = vsel %vm345, %v3839, 0
  %v3972 = vsel %vm345, %v3840, 0
  %v3975 = vsel %vm345, %v3841, 0
  %v3978 = vsel %vm345, %v3842, 0
  %3980 = vmatprep.subr.mxu0 0.0
  %3981 = vmatpush1.msra.mxu0 %v3834
  %3982 = vmatprep.subr.mxu0 0.0
  %3983 = vmatpush1.msra.mxu0 %v3835
  %3984 = vmatprep.subr.mxu0 0.0
  %3985 = vmatpush1.msra.mxu0 0.0
  %3986 = vmatprep.subr.mxu0 0.0
  %3987 = vmatpush1.msra.mxu0 0.0
  %3988 = vmatprep.subr.mxu0 0.0
  %3989 = vmatpush1.msra.mxu0 0.0
  %3990 = vmatprep.subr.mxu0 0.0
  %3991 = vmatpush1.msra.mxu0 0.0
  %3992 = vmatprep.subr.mxu0 0.0
  %3993 = vmatpush1.msra.mxu0 0.0
  %3994 = vmatprep.subr.mxu0 0.0
  %3995 = vmatpush1.msra.mxu0 0.0
  %3996 = vmatprep.subr.mxu0 0.0
  %3997 = vmatpush1.msra.mxu0 0.0
  %3998 = vmatprep.subr.mxu0 0.0
  %3999 = vmatpush1.msra.mxu0 0.0
  %4000 = vmatprep.subr.mxu0 0.0
  %4001 = vmatpush1.msra.mxu0 0.0
  %4002 = vmatprep.subr.mxu0 0.0
  %4003 = vmatpush1.msra.mxu0 0.0
  %4004 = vmatprep.subr.mxu0 0.0
  %4005 = vmatpush1.msra.mxu0 0.0
  %4006 = vmatprep.subr.mxu0 0.0
  %4007 = vmatpush1.msra.mxu0 0.0
  %4008 = vmatprep.subr.mxu0 0.0
  %4009 = vmatpush1.msra.mxu0 0.0
  %4010 = vmatprep.subr.mxu0 0.0
  %4011 = vmatpush1.msra.mxu0 0.0
  %4012 = vmatprep.subr.mxu0 0.0
  %4013 = vmatpush1.msra.mxu0 0.0
  %4014 = vmatprep.subr.mxu0 0.0
  %4015 = vmatpush1.msra.mxu0 0.0
  %4016 = vmatprep.subr.mxu0 0.0
  %4017 = vmatpush1.msra.mxu0 0.0
  %4018 = vmatprep.subr.mxu0 0.0
  %4019 = vmatpush1.msra.mxu0 0.0
  %4020 = vmatprep.subr.mxu0 0.0
  %4021 = vmatpush1.msra.mxu0 0.0
  %4022 = vmatprep.subr.mxu0 0.0
  %4023 = vmatpush1.msra.mxu0 0.0
  %4024 = vmatprep.subr.mxu0 0.0
  %4025 = vmatpush1.msra.mxu0 0.0
  %4026 = vmatprep.subr.mxu0 0.0
  %4027 = vmatpush1.msra.mxu0 0.0
  %4028 = vmatprep.subr.mxu0 0.0
  %4029 = vmatpush1.msra.mxu0 0.0
  %4030 = vmatprep.subr.mxu0 0.0
  %4031 = vmatpush1.msra.mxu0 0.0
  %4032 = vmatprep.subr.mxu0 0.0
  %4033 = vmatpush1.msra.mxu0 0.0
  %4034 = vmatprep.subr.mxu0 0.0
  %4035 = vmatpush1.msra.mxu0 0.0
  %4036 = vmatprep.subr.mxu0 0.0
  %4037 = vmatpush1.msra.mxu0 0.0
  %4038 = vmatprep.subr.mxu0 0.0
  %4039 = vmatpush1.msra.mxu0 0.0
  %4040 = vmatprep.subr.mxu0 0.0
  %4041 = vmatpush1.msra.mxu0 0.0
  %4042 = vmatprep.subr.mxu0 0.0
  %4043 = vmatpush1.msra.mxu0 0.0
  %4044 = vmatprep.mubr.f32.mxu0 0.0
  %4045 = vmatmul.mubr.f32.gmra.mrb[0].mxu0 %v3963
  %v4046 = vpop.f32.mrb[0].mxu0
  %v4047 = vadd.f32 %v3934, %v4046
  %v4048 = vpop.f32.mrb[0].mxu0
  %4049 = vmatprep.mubr.f32.mxu0 0.0
  %4050 = vmatmul.mubr.f32.gmra.mrb[0].mxu0 %v3966
  %v4051 = vpop.f32.mrb[0].mxu0
  %v4052 = vadd.f32 %v3939, %v4051
  %v4053 = vpop.f32.mrb[0].mxu0
  %4054 = vmatprep.mubr.f32.mxu0 0.0
  %4055 = vmatmul.mubr.f32.gmra.mrb[0].mxu0 %v3969
  %v4056 = vpop.f32.mrb[0].mxu0
  %v4057 = vadd.f32 %v3944, %v4056
  %v4058 = vpop.f32.mrb[0].mxu0
  %4059 = vmatprep.mubr.f32.mxu0 0.0
  %4060 = vmatmul.mubr.f32.gmra.mrb[0].mxu0 %v3972
  %v4061 = vpop.f32.mrb[0].mxu0
  %v4062 = vadd.f32 %v3949, %v4061
  %v4063 = vpop.f32.mrb[0].mxu0
  %4064 = vmatprep.mubr.f32.mxu0 0.0
  %4065 = vmatmul.mubr.f32.gmra.mrb[0].mxu0 %v3975
  %v4066 = vpop.f32.mrb[0].mxu0
  %v4067 = vadd.f32 %v3954, %v4066
  %v4068 = vpop.f32.mrb[0].mxu0
  %4069 = vmatprep.mubr.f32.mxu0 0.0
  %4070 = vmatmul.mubr.f32.gmra.mrb[0].mxu0 %v3978
  %v4071 = vpop.f32.mrb[0].mxu0
  %v4072 = vadd.f32 %v3959, %v4071
  %v4073 = vpop.f32.mrb[0].mxu0
  %4074 = vdwg.mxu0
  %v4075 = vadd.f32 %v4047, %v65
  %v4076 = vadd.f32 %v4052, %v70
  %v4077 = vadd.f32 %v4057, %v75
  %v4078 = vadd.f32 %v4062, %v80
  %v4079 = vadd.f32 %v4067, %v85
  %v4080 = vadd.f32 %v4072, %v90
  %v4081 = vld [vmem:[%s6] sm:$0xff]
  %v4082 = vld [vmem:[%s6 + $0x8] sm:$0xff]
  %v4083 = vld [vmem:[%s6 + $0x10] sm:$0xff]
  %v4084 = vld [vmem:[%s6 + $0x18] sm:$0xff]
  %v4085 = vld [vmem:[%s6 + $0x20] sm:$0xff]
  %v4086 = vld [vmem:[%s6 + $0x28] sm:$0xff]
  %v4088 = vsel %vm345, %v4081, 0
  %v4091 = vsel %vm345, %v4082, 0
  %v4094 = vsel %vm345, %v4083, 0
  %v4097 = vsel %vm345, %v4084, 0
  %v4100 = vsel %vm345, %v4085, 0
  %v4103 = vsel %vm345, %v4086, 0
  %4105 = vmatprep.subr.mxu0 0.0
  %4106 = vmatpush1.msra.mxu0 %v3041
  %4107 = vmatprep.subr.mxu0 0.0
  %4108 = vmatpush1.msra.mxu0 %v3042
  %4109 = vmatprep.subr.mxu0 0.0
  %4110 = vmatpush1.msra.mxu0 0.0
  %4111 = vmatprep.subr.mxu0 0.0
  %4112 = vmatpush1.msra.mxu0 0.0
  %4113 = vmatprep.subr.mxu0 0.0
  %4114 = vmatpush1.msra.mxu0 0.0
  %4115 = vmatprep.subr.mxu0 0.0
  %4116 = vmatpush1.msra.mxu0 0.0
  %4117 = vmatprep.subr.mxu0 0.0
  %4118 = vmatpush1.msra.mxu0 0.0
  %4119 = vmatprep.subr.mxu0 0.0
  %4120 = vmatpush1.msra.mxu0 0.0
  %4121 = vmatprep.subr.mxu0 0.0
  %4122 = vmatpush1.msra.mxu0 0.0
  %4123 = vmatprep.subr.mxu0 0.0
  %4124 = vmatpush1.msra.mxu0 0.0
  %4125 = vmatprep.subr.mxu0 0.0
  %4126 = vmatpush1.msra.mxu0 0.0
  %4127 = vmatprep.subr.mxu0 0.0
  %4128 = vmatpush1.msra.mxu0 0.0
  %4129 = vmatprep.subr.mxu0 0.0
  %4130 = vmatpush1.msra.mxu0 0.0
  %4131 = vmatprep.subr.mxu0 0.0
  %4132 = vmatpush1.msra.mxu0 0.0
  %4133 = vmatprep.subr.mxu0 0.0
  %4134 = vmatpush1.msra.mxu0 0.0
  %4135 = vmatprep.subr.mxu0 0.0
  %4136 = vmatpush1.msra.mxu0 0.0
  %4137 = vmatprep.subr.mxu0 0.0
  %4138 = vmatpush1.msra.mxu0 0.0
  %4139 = vmatprep.subr.mxu0 0.0
  %4140 = vmatpush1.msra.mxu0 0.0
  %4141 = vmatprep.subr.mxu0 0.0
  %4142 = vmatpush1.msra.mxu0 0.0
  %4143 = vmatprep.subr.mxu0 0.0
  %4144 = vmatpush1.msra.mxu0 0.0
  %4145 = vmatprep.subr.mxu0 0.0
  %4146 = vmatpush1.msra.mxu0 0.0
  %4147 = vmatprep.subr.mxu0 0.0
  %4148 = vmatpush1.msra.mxu0 0.0
  %4149 = vmatprep.subr.mxu0 0.0
  %4150 = vmatpush1.msra.mxu0 0.0
  %4151 = vmatprep.subr.mxu0 0.0
  %4152 = vmatpush1.msra.mxu0 0.0
  %4153 = vmatprep.subr.mxu0 0.0
  %4154 = vmatpush1.msra.mxu0 0.0
  %4155 = vmatprep.subr.mxu0 0.0
  %4156 = vmatpush1.msra.mxu0 0.0
  %4157 = vmatprep.subr.mxu0 0.0
  %4158 = vmatpush1.msra.mxu0 0.0
  %4159 = vmatprep.subr.mxu0 0.0
  %4160 = vmatpush1.msra.mxu0 0.0
  %4161 = vmatprep.subr.mxu0 0.0
  %4162 = vmatpush1.msra.mxu0 0.0
  %4163 = vmatprep.subr.mxu0 0.0
  %4164 = vmatpush1.msra.mxu0 0.0
  %4165 = vmatprep.subr.mxu0 0.0
  %4166 = vmatpush1.msra.mxu0 0.0
  %4167 = vmatprep.subr.mxu0 0.0
  %4168 = vmatpush1.msra.mxu0 0.0
  %4169 = vmatprep.mubr.f32.mxu0 0.0
  %4170 = vmatmul.mubr.f32.gmra.mrb[0].mxu0 %v4088
  %v4171 = vpop.f32.mrb[0].mxu0
  %v4172 = vadd.f32 0.0, %v4171
  %v4173 = vpop.f32.mrb[0].mxu0
  %4174 = vmatprep.mubr.f32.mxu0 0.0
  %4175 = vmatmul.mubr.f32.gmra.mrb[0].mxu0 %v4091
  %v4176 = vpop.f32.mrb[0].mxu0
  %v4177 = vadd.f32 0.0, %v4176
  %v4178 = vpop.f32.mrb[0].mxu0
  %4179 = vmatprep.mubr.f32.mxu0 0.0
  %4180 = vmatmul.mubr.f32.gmra.mrb[0].mxu0 %v4094
  %v4181 = vpop.f32.mrb[0].mxu0
  %v4182 = vadd.f32 0.0, %v4181
  %v4183 = vpop.f32.mrb[0].mxu0
  %4184 = vmatprep.mubr.f32.mxu0 0.0
  %4185 = vmatmul.mubr.f32.gmra.mrb[0].mxu0 %v4097
  %v4186 = vpop.f32.mrb[0].mxu0
  %v4187 = vadd.f32 0.0, %v4186
  %v4188 = vpop.f32.mrb[0].mxu0
  %4189 = vmatprep.mubr.f32.mxu0 0.0
  %4190 = vmatmul.mubr.f32.gmra.mrb[0].mxu0 %v4100
  %v4191 = vpop.f32.mrb[0].mxu0
  %v4192 = vadd.f32 0.0, %v4191
  %v4193 = vpop.f32.mrb[0].mxu0
  %4194 = vmatprep.mubr.f32.mxu0 0.0
  %4195 = vmatmul.mubr.f32.gmra.mrb[0].mxu0 %v4103
  %v4196 = vpop.f32.mrb[0].mxu0
  %v4197 = vadd.f32 0.0, %v4196
  %v4198 = vpop.f32.mrb[0].mxu0
  %4199 = vdwg.mxu0
  %v4200 = vadd.f32 %v4075, %v4172
  %v4201 = vadd.f32 %v4076, %v4177
  %v4202 = vxor.u32 %v4200, 2147483648
  %v4203 = vxor.u32 %v4201, 2147483648
  %v4204 = vmul.f32 %v4202, 1.442695
  %v4205 = vpow.pop %v4204
  %v4206 = vmul.f32 %v4203, 1.442695
  %v4207 = vpow.pop %v4206
  %v4208 = vadd.f32 %v4205, 1.0
  %v4209 = vadd.f32 %v4207, 1.0
  %v4210 = vrcp.pop %v4208
  %v4211 = vmul.f32 1.0, %v4210
  %v4212 = vrcp.pop %v4209
  %v4213 = vmul.f32 1.0, %v4212
  %v4214 = vadd.f32 %v4077, %v4182
  %v4215 = vadd.f32 %v4078, %v4187
  %v4216 = vxor.u32 %v4214, 2147483648
  %v4217 = vxor.u32 %v4215, 2147483648
  %v4218 = vmul.f32 %v4216, 1.442695
  %v4219 = vpow.pop %v4218
  %v4220 = vmul.f32 %v4217, 1.442695
  %v4221 = vpow.pop %v4220
  %v4222 = vadd.f32 %v4219, 1.0
  %v4223 = vadd.f32 %v4221, 1.0
  %v4224 = vrcp.pop %v4222
  %v4225 = vmul.f32 1.0, %v4224
  %v4226 = vrcp.pop %v4223
  %v4227 = vmul.f32 1.0, %v4226
  %v4228 = vadd.f32 %v4192, %v97
  %v4229 = vadd.f32 %v4197, %v102
  %v4230 = vmul.f32 %v4211, %v4228
  %v4231 = vmul.f32 %v4213, %v4229
  %v4232 = vadd.f32 %v4079, %v4230
  %v4233 = vadd.f32 %v4080, %v4231
  %v4234 = vtanh.pop %v4232
  %v4235 = vtanh.pop %v4233
  %v4236 = vsub.f32 1.0, %v4225
  %v4237 = vsub.f32 1.0, %v4227
  %v4238 = vmul.f32 %v4236, %v4234
  %v4239 = vmul.f32 %v4237, %v4235
  %v4240 = vmul.f32 %v4225, %v3041
  %v4241 = vmul.f32 %v4227, %v3042
  %v4242 = vadd.f32 %v4238, %v4240
  %v4243 = vadd.f32 %v4239, %v4241
  %v4244 = vmax.f32 %v4242, -5.0
  %v4245 = vmax.f32 %v4243, -5.0
  %v4246 = vmin.f32 %v4244, 5.0
  %v4247 = vmin.f32 %v4245, 5.0
  %v4248 = vld [vmem:[%s9] sm:$0xff]
  %v4250 = vsel %vm345, %v4248, 0
  %4252 = vmatprep.subr.mxu0 0.0
  %4253 = vmatpush1.msra.mxu0 %v4246
  %4254 = vmatprep.subr.mxu0 0.0
  %4255 = vmatpush1.msra.mxu0 %v4247
  %4256 = vmatprep.subr.mxu0 0.0
  %4257 = vmatpush1.msra.mxu0 0.0
  %4258 = vmatprep.subr.mxu0 0.0
  %4259 = vmatpush1.msra.mxu0 0.0
  %4260 = vmatprep.subr.mxu0 0.0
  %4261 = vmatpush1.msra.mxu0 0.0
  %4262 = vmatprep.subr.mxu0 0.0
  %4263 = vmatpush1.msra.mxu0 0.0
  %4264 = vmatprep.subr.mxu0 0.0
  %4265 = vmatpush1.msra.mxu0 0.0
  %4266 = vmatprep.subr.mxu0 0.0
  %4267 = vmatpush1.msra.mxu0 0.0
  %4268 = vmatprep.subr.mxu0 0.0
  %4269 = vmatpush1.msra.mxu0 0.0
  %4270 = vmatprep.subr.mxu0 0.0
  %4271 = vmatpush1.msra.mxu0 0.0
  %4272 = vmatprep.subr.mxu0 0.0
  %4273 = vmatpush1.msra.mxu0 0.0
  %4274 = vmatprep.subr.mxu0 0.0
  %4275 = vmatpush1.msra.mxu0 0.0
  %4276 = vmatprep.subr.mxu0 0.0
  %4277 = vmatpush1.msra.mxu0 0.0
  %4278 = vmatprep.subr.mxu0 0.0
  %4279 = vmatpush1.msra.mxu0 0.0
  %4280 = vmatprep.subr.mxu0 0.0
  %4281 = vmatpush1.msra.mxu0 0.0
  %4282 = vmatprep.subr.mxu0 0.0
  %4283 = vmatpush1.msra.mxu0 0.0
  %4284 = vmatprep.subr.mxu0 0.0
  %4285 = vmatpush1.msra.mxu0 0.0
  %4286 = vmatprep.subr.mxu0 0.0
  %4287 = vmatpush1.msra.mxu0 0.0
  %4288 = vmatprep.subr.mxu0 0.0
  %4289 = vmatpush1.msra.mxu0 0.0
  %4290 = vmatprep.subr.mxu0 0.0
  %4291 = vmatpush1.msra.mxu0 0.0
  %4292 = vmatprep.subr.mxu0 0.0
  %4293 = vmatpush1.msra.mxu0 0.0
  %4294 = vmatprep.subr.mxu0 0.0
  %4295 = vmatpush1.msra.mxu0 0.0
  %4296 = vmatprep.subr.mxu0 0.0
  %4297 = vmatpush1.msra.mxu0 0.0
  %4298 = vmatprep.subr.mxu0 0.0
  %4299 = vmatpush1.msra.mxu0 0.0
  %4300 = vmatprep.subr.mxu0 0.0
  %4301 = vmatpush1.msra.mxu0 0.0
  %4302 = vmatprep.subr.mxu0 0.0
  %4303 = vmatpush1.msra.mxu0 0.0
  %4304 = vmatprep.subr.mxu0 0.0
  %4305 = vmatpush1.msra.mxu0 0.0
  %4306 = vmatprep.subr.mxu0 0.0
  %4307 = vmatpush1.msra.mxu0 0.0
  %4308 = vmatprep.subr.mxu0 0.0
  %4309 = vmatpush1.msra.mxu0 0.0
  %4310 = vmatprep.subr.mxu0 0.0
  %4311 = vmatpush1.msra.mxu0 0.0
  %4312 = vmatprep.subr.mxu0 0.0
  %4313 = vmatpush1.msra.mxu0 0.0
  %4314 = vmatprep.subr.mxu0 0.0
  %4315 = vmatpush1.msra.mxu0 0.0
  %4316 = vmatprep.mubr.f32.mxu0 0.0
  %4317 = vmatmul.mubr.f32.gmra.mrb[0].mxu0 %v4250
  %v4318 = vpop.f32.mrb[0].mxu0
  %v4319 = vadd.f32 %v108, %v4318
  %v4320 = vpop.f32.mrb[0].mxu0
  %4321 = vdwg.mxu0
  %v4322 = vld [vmem:[%s11] sm:$0xff]
  %v4323 = vld [vmem:[%s11 + $0x8] sm:$0xff]
  %v4324 = vld [vmem:[%s11 + $0x10] sm:$0xff]
  %v4325 = vld [vmem:[%s11 + $0x18] sm:$0xff]
  %v4326 = vld [vmem:[%s11 + $0x20] sm:$0xff]
  %v4327 = vld [vmem:[%s11 + $0x28] sm:$0xff]
  %v4328 = vld [vmem:[%s11 + $0x30] sm:$0xff]
  %v4329 = vld [vmem:[%s11 + $0x38] sm:$0xff]
  %v4330 = vld [vmem:[%s11 + $0x40] sm:$0xff]
  %v4331 = vld [vmem:[%s11 + $0x48] sm:$0xff]
  %v4332 = vld [vmem:[%s11 + $0x50] sm:$0xff]
  %v4333 = vld [vmem:[%s11 + $0x58] sm:$0xff]
  %v4334 = vld [vmem:[%s12] sm:$0xff]
  %v4335 = vld [vmem:[%s12 + $0x8] sm:$0xff]
  %v4336 = vld [vmem:[%s12 + $0x10] sm:$0xff]
  %v4337 = vld [vmem:[%s12 + $0x18] sm:$0xff]
  %v4338 = vld [vmem:[%s12 + $0x20] sm:$0xff]
  %v4339 = vld [vmem:[%s12 + $0x28] sm:$0xff]
  %v4340 = vld [vmem:[%s12 + $0x30] sm:$0xff]
  %v4341 = vld [vmem:[%s12 + $0x38] sm:$0xff]
  %v4342 = vld [vmem:[%s12 + $0x40] sm:$0xff]
  %v4343 = vld [vmem:[%s12 + $0x48] sm:$0xff]
  %v4344 = vld [vmem:[%s12 + $0x50] sm:$0xff]
  %v4345 = vld [vmem:[%s12 + $0x58] sm:$0xff]
  %v4347 = vsel %vm231, %v4334, 0
  %v4350 = vsel %vm231, %v4335, 0
  %v4353 = vsel %vm231, %v4336, 0
  %v4356 = vsel %vm231, %v4337, 0
  %v4359 = vsel %vm231, %v4338, 0
  %v4362 = vsel %vm231, %v4339, 0
  %v4365 = vsel %vm231, %v4340, 0
  %v4368 = vsel %vm231, %v4341, 0
  %v4371 = vsel %vm231, %v4342, 0
  %v4374 = vsel %vm231, %v4343, 0
  %v4377 = vsel %vm231, %v4344, 0
  %v4380 = vsel %vm231, %v4345, 0
  %4382 = vmatprep.subr.mxu0 0.0
  %4383 = vmatpush1.msra.mxu0 %v3836
  %4384 = vmatprep.subr.mxu0 0.0
  %4385 = vmatpush1.msra.mxu0 0.0
  %4386 = vmatprep.subr.mxu0 0.0
  %4387 = vmatpush1.msra.mxu0 0.0
  %4388 = vmatprep.subr.mxu0 0.0
  %4389 = vmatpush1.msra.mxu0 0.0
  %4390 = vmatprep.subr.mxu0 0.0
  %4391 = vmatpush1.msra.mxu0 0.0
  %4392 = vmatprep.subr.mxu0 0.0
  %4393 = vmatpush1.msra.mxu0 0.0
  %4394 = vmatprep.subr.mxu0 0.0
  %4395 = vmatpush1.msra.mxu0 0.0
  %4396 = vmatprep.subr.mxu0 0.0
  %4397 = vmatpush1.msra.mxu0 0.0
  %4398 = vmatprep.subr.mxu0 0.0
  %4399 = vmatpush1.msra.mxu0 0.0
  %4400 = vmatprep.subr.mxu0 0.0
  %4401 = vmatpush1.msra.mxu0 0.0
  %4402 = vmatprep.subr.mxu0 0.0
  %4403 = vmatpush1.msra.mxu0 0.0
  %4404 = vmatprep.subr.mxu0 0.0
  %4405 = vmatpush1.msra.mxu0 0.0
  %4406 = vmatprep.subr.mxu0 0.0
  %4407 = vmatpush1.msra.mxu0 0.0
  %4408 = vmatprep.subr.mxu0 0.0
  %4409 = vmatpush1.msra.mxu0 0.0
  %4410 = vmatprep.subr.mxu0 0.0
  %4411 = vmatpush1.msra.mxu0 0.0
  %4412 = vmatprep.subr.mxu0 0.0
  %4413 = vmatpush1.msra.mxu0 0.0
  %4414 = vmatprep.subr.mxu0 0.0
  %4415 = vmatpush1.msra.mxu0 0.0
  %4416 = vmatprep.subr.mxu0 0.0
  %4417 = vmatpush1.msra.mxu0 0.0
  %4418 = vmatprep.subr.mxu0 0.0
  %4419 = vmatpush1.msra.mxu0 0.0
  %4420 = vmatprep.subr.mxu0 0.0
  %4421 = vmatpush1.msra.mxu0 0.0
  %4422 = vmatprep.subr.mxu0 0.0
  %4423 = vmatpush1.msra.mxu0 0.0
  %4424 = vmatprep.subr.mxu0 0.0
  %4425 = vmatpush1.msra.mxu0 0.0
  %4426 = vmatprep.subr.mxu0 0.0
  %4427 = vmatpush1.msra.mxu0 0.0
  %4428 = vmatprep.subr.mxu0 0.0
  %4429 = vmatpush1.msra.mxu0 0.0
  %4430 = vmatprep.subr.mxu0 0.0
  %4431 = vmatpush1.msra.mxu0 0.0
  %4432 = vmatprep.subr.mxu0 0.0
  %4433 = vmatpush1.msra.mxu0 0.0
  %4434 = vmatprep.subr.mxu0 0.0
  %4435 = vmatpush1.msra.mxu0 0.0
  %4436 = vmatprep.subr.mxu0 0.0
  %4437 = vmatpush1.msra.mxu0 0.0
  %4438 = vmatprep.subr.mxu0 0.0
  %4439 = vmatpush1.msra.mxu0 0.0
  %4440 = vmatprep.subr.mxu0 0.0
  %4441 = vmatpush1.msra.mxu0 0.0
  %4442 = vmatprep.subr.mxu0 0.0
  %4443 = vmatpush1.msra.mxu0 0.0
  %4444 = vmatprep.subr.mxu0 0.0
  %4445 = vmatpush1.msra.mxu0 0.0
  %4446 = vmatprep.mubr.f32.mxu0 0.0
  %4447 = vmatmul.mubr.f32.gmra.mrb[0].mxu0 %v4347
  %v4448 = vpop.f32.mrb[0].mxu0
  %v4449 = vadd.f32 0.0, %v4448
  %v4450 = vpop.f32.mrb[0].mxu0
  %4451 = vmatprep.mubr.f32.mxu0 0.0
  %4452 = vmatmul.mubr.f32.gmra.mrb[0].mxu0 %v4350
  %v4453 = vpop.f32.mrb[0].mxu0
  %v4454 = vadd.f32 0.0, %v4453
  %v4455 = vpop.f32.mrb[0].mxu0
  %4456 = vmatprep.mubr.f32.mxu0 0.0
  %4457 = vmatmul.mubr.f32.gmra.mrb[0].mxu0 %v4353
  %v4458 = vpop.f32.mrb[0].mxu0
  %v4459 = vadd.f32 0.0, %v4458
  %v4460 = vpop.f32.mrb[0].mxu0
  %4461 = vmatprep.mubr.f32.mxu0 0.0
  %4462 = vmatmul.mubr.f32.gmra.mrb[0].mxu0 %v4356
  %v4463 = vpop.f32.mrb[0].mxu0
  %v4464 = vadd.f32 0.0, %v4463
  %v4465 = vpop.f32.mrb[0].mxu0
  %4466 = vmatprep.mubr.f32.mxu0 0.0
  %4467 = vmatmul.mubr.f32.gmra.mrb[0].mxu0 %v4359
  %v4468 = vpop.f32.mrb[0].mxu0
  %v4469 = vadd.f32 0.0, %v4468
  %v4470 = vpop.f32.mrb[0].mxu0
  %4471 = vmatprep.mubr.f32.mxu0 0.0
  %4472 = vmatmul.mubr.f32.gmra.mrb[0].mxu0 %v4362
  %v4473 = vpop.f32.mrb[0].mxu0
  %v4474 = vadd.f32 0.0, %v4473
  %v4475 = vpop.f32.mrb[0].mxu0
  %4476 = vmatprep.mubr.f32.mxu0 0.0
  %4477 = vmatmul.mubr.f32.gmra.mrb[0].mxu0 %v4365
  %v4478 = vpop.f32.mrb[0].mxu0
  %v4479 = vadd.f32 0.0, %v4478
  %v4480 = vpop.f32.mrb[0].mxu0
  %4481 = vmatprep.mubr.f32.mxu0 0.0
  %4482 = vmatmul.mubr.f32.gmra.mrb[0].mxu0 %v4368
  %v4483 = vpop.f32.mrb[0].mxu0
  %v4484 = vadd.f32 0.0, %v4483
  %v4485 = vpop.f32.mrb[0].mxu0
  %4486 = vmatprep.mubr.f32.mxu0 0.0
  %4487 = vmatmul.mubr.f32.gmra.mrb[0].mxu0 %v4371
  %v4488 = vpop.f32.mrb[0].mxu0
  %v4489 = vadd.f32 0.0, %v4488
  %v4490 = vpop.f32.mrb[0].mxu0
  %4491 = vmatprep.mubr.f32.mxu0 0.0
  %4492 = vmatmul.mubr.f32.gmra.mrb[0].mxu0 %v4374
  %v4493 = vpop.f32.mrb[0].mxu0
  %v4494 = vadd.f32 0.0, %v4493
  %v4495 = vpop.f32.mrb[0].mxu0
  %4496 = vmatprep.mubr.f32.mxu0 0.0
  %4497 = vmatmul.mubr.f32.gmra.mrb[0].mxu0 %v4377
  %v4498 = vpop.f32.mrb[0].mxu0
  %v4499 = vadd.f32 0.0, %v4498
  %v4500 = vpop.f32.mrb[0].mxu0
  %4501 = vmatprep.mubr.f32.mxu0 0.0
  %4502 = vmatmul.mubr.f32.gmra.mrb[0].mxu0 %v4380
  %v4503 = vpop.f32.mrb[0].mxu0
  %v4504 = vadd.f32 0.0, %v4503
  %v4505 = vpop.f32.mrb[0].mxu0
  %4506 = vdwg.mxu0
  %v4508 = vsel %vm231, %v4322, 0
  %v4511 = vsel %vm231, %v4323, 0
  %v4514 = vsel %vm231, %v4324, 0
  %v4517 = vsel %vm231, %v4325, 0
  %v4520 = vsel %vm231, %v4326, 0
  %v4523 = vsel %vm231, %v4327, 0
  %v4526 = vsel %vm231, %v4328, 0
  %v4529 = vsel %vm231, %v4329, 0
  %v4532 = vsel %vm231, %v4330, 0
  %v4535 = vsel %vm231, %v4331, 0
  %v4538 = vsel %vm231, %v4332, 0
  %v4541 = vsel %vm231, %v4333, 0
  %4543 = vmatprep.subr.mxu0 0.0
  %4544 = vmatpush1.msra.mxu0 %v4319
  %4545 = vmatprep.subr.mxu0 0.0
  %4546 = vmatpush1.msra.mxu0 0.0
  %4547 = vmatprep.subr.mxu0 0.0
  %4548 = vmatpush1.msra.mxu0 0.0
  %4549 = vmatprep.subr.mxu0 0.0
  %4550 = vmatpush1.msra.mxu0 0.0
  %4551 = vmatprep.subr.mxu0 0.0
  %4552 = vmatpush1.msra.mxu0 0.0
  %4553 = vmatprep.subr.mxu0 0.0
  %4554 = vmatpush1.msra.mxu0 0.0
  %4555 = vmatprep.subr.mxu0 0.0
  %4556 = vmatpush1.msra.mxu0 0.0
  %4557 = vmatprep.subr.mxu0 0.0
  %4558 = vmatpush1.msra.mxu0 0.0
  %4559 = vmatprep.subr.mxu0 0.0
  %4560 = vmatpush1.msra.mxu0 0.0
  %4561 = vmatprep.subr.mxu0 0.0
  %4562 = vmatpush1.msra.mxu0 0.0
  %4563 = vmatprep.subr.mxu0 0.0
  %4564 = vmatpush1.msra.mxu0 0.0
  %4565 = vmatprep.subr.mxu0 0.0
  %4566 = vmatpush1.msra.mxu0 0.0
  %4567 = vmatprep.subr.mxu0 0.0
  %4568 = vmatpush1.msra.mxu0 0.0
  %4569 = vmatprep.subr.mxu0 0.0
  %4570 = vmatpush1.msra.mxu0 0.0
  %4571 = vmatprep.subr.mxu0 0.0
  %4572 = vmatpush1.msra.mxu0 0.0
  %4573 = vmatprep.subr.mxu0 0.0
  %4574 = vmatpush1.msra.mxu0 0.0
  %4575 = vmatprep.subr.mxu0 0.0
  %4576 = vmatpush1.msra.mxu0 0.0
  %4577 = vmatprep.subr.mxu0 0.0
  %4578 = vmatpush1.msra.mxu0 0.0
  %4579 = vmatprep.subr.mxu0 0.0
  %4580 = vmatpush1.msra.mxu0 0.0
  %4581 = vmatprep.subr.mxu0 0.0
  %4582 = vmatpush1.msra.mxu0 0.0
  %4583 = vmatprep.subr.mxu0 0.0
  %4584 = vmatpush1.msra.mxu0 0.0
  %4585 = vmatprep.subr.mxu0 0.0
  %4586 = vmatpush1.msra.mxu0 0.0
  %4587 = vmatprep.subr.mxu0 0.0
  %4588 = vmatpush1.msra.mxu0 0.0
  %4589 = vmatprep.subr.mxu0 0.0
  %4590 = vmatpush1.msra.mxu0 0.0
  %4591 = vmatprep.subr.mxu0 0.0
  %4592 = vmatpush1.msra.mxu0 0.0
  %4593 = vmatprep.subr.mxu0 0.0
  %4594 = vmatpush1.msra.mxu0 0.0
  %4595 = vmatprep.subr.mxu0 0.0
  %4596 = vmatpush1.msra.mxu0 0.0
  %4597 = vmatprep.subr.mxu0 0.0
  %4598 = vmatpush1.msra.mxu0 0.0
  %4599 = vmatprep.subr.mxu0 0.0
  %4600 = vmatpush1.msra.mxu0 0.0
  %4601 = vmatprep.subr.mxu0 0.0
  %4602 = vmatpush1.msra.mxu0 0.0
  %4603 = vmatprep.subr.mxu0 0.0
  %4604 = vmatpush1.msra.mxu0 0.0
  %4605 = vmatprep.subr.mxu0 0.0
  %4606 = vmatpush1.msra.mxu0 0.0
  %4607 = vmatprep.mubr.f32.mxu0 0.0
  %4608 = vmatmul.mubr.f32.gmra.mrb[0].mxu0 %v4508
  %v4609 = vpop.f32.mrb[0].mxu0
  %v4610 = vadd.f32 %v4449, %v4609
  %v4611 = vpop.f32.mrb[0].mxu0
  %4612 = vmatprep.mubr.f32.mxu0 0.0
  %4613 = vmatmul.mubr.f32.gmra.mrb[0].mxu0 %v4511
  %v4614 = vpop.f32.mrb[0].mxu0
  %v4615 = vadd.f32 %v4454, %v4614
  %v4616 = vpop.f32.mrb[0].mxu0
  %4617 = vmatprep.mubr.f32.mxu0 0.0
  %4618 = vmatmul.mubr.f32.gmra.mrb[0].mxu0 %v4514
  %v4619 = vpop.f32.mrb[0].mxu0
  %v4620 = vadd.f32 %v4459, %v4619
  %v4621 = vpop.f32.mrb[0].mxu0
  %4622 = vmatprep.mubr.f32.mxu0 0.0
  %4623 = vmatmul.mubr.f32.gmra.mrb[0].mxu0 %v4517
  %v4624 = vpop.f32.mrb[0].mxu0
  %v4625 = vadd.f32 %v4464, %v4624
  %v4626 = vpop.f32.mrb[0].mxu0
  %4627 = vmatprep.mubr.f32.mxu0 0.0
  %4628 = vmatmul.mubr.f32.gmra.mrb[0].mxu0 %v4520
  %v4629 = vpop.f32.mrb[0].mxu0
  %v4630 = vadd.f32 %v4469, %v4629
  %v4631 = vpop.f32.mrb[0].mxu0
  %4632 = vmatprep.mubr.f32.mxu0 0.0
  %4633 = vmatmul.mubr.f32.gmra.mrb[0].mxu0 %v4523
  %v4634 = vpop.f32.mrb[0].mxu0
  %v4635 = vadd.f32 %v4474, %v4634
  %v4636 = vpop.f32.mrb[0].mxu0
  %4637 = vmatprep.mubr.f32.mxu0 0.0
  %4638 = vmatmul.mubr.f32.gmra.mrb[0].mxu0 %v4526
  %v4639 = vpop.f32.mrb[0].mxu0
  %v4640 = vadd.f32 %v4479, %v4639
  %v4641 = vpop.f32.mrb[0].mxu0
  %4642 = vmatprep.mubr.f32.mxu0 0.0
  %4643 = vmatmul.mubr.f32.gmra.mrb[0].mxu0 %v4529
  %v4644 = vpop.f32.mrb[0].mxu0
  %v4645 = vadd.f32 %v4484, %v4644
  %v4646 = vpop.f32.mrb[0].mxu0
  %4647 = vmatprep.mubr.f32.mxu0 0.0
  %4648 = vmatmul.mubr.f32.gmra.mrb[0].mxu0 %v4532
  %v4649 = vpop.f32.mrb[0].mxu0
  %v4650 = vadd.f32 %v4489, %v4649
  %v4651 = vpop.f32.mrb[0].mxu0
  %4652 = vmatprep.mubr.f32.mxu0 0.0
  %4653 = vmatmul.mubr.f32.gmra.mrb[0].mxu0 %v4535
  %v4654 = vpop.f32.mrb[0].mxu0
  %v4655 = vadd.f32 %v4494, %v4654
  %v4656 = vpop.f32.mrb[0].mxu0
  %4657 = vmatprep.mubr.f32.mxu0 0.0
  %4658 = vmatmul.mubr.f32.gmra.mrb[0].mxu0 %v4538
  %v4659 = vpop.f32.mrb[0].mxu0
  %v4660 = vadd.f32 %v4499, %v4659
  %v4661 = vpop.f32.mrb[0].mxu0
  %4662 = vmatprep.mubr.f32.mxu0 0.0
  %4663 = vmatmul.mubr.f32.gmra.mrb[0].mxu0 %v4541
  %v4664 = vpop.f32.mrb[0].mxu0
  %v4665 = vadd.f32 %v4504, %v4664
  %v4666 = vpop.f32.mrb[0].mxu0
  %4667 = vdwg.mxu0
  %v4668 = vadd.f32 %v4610, %v125
  %v4669 = vadd.f32 %v4615, %v130
  %v4670 = vadd.f32 %v4620, %v135
  %v4671 = vadd.f32 %v4625, %v140
  %v4672 = vadd.f32 %v4630, %v145
  %v4673 = vadd.f32 %v4635, %v150
  %v4674 = vadd.f32 %v4640, %v155
  %v4675 = vadd.f32 %v4645, %v160
  %v4676 = vadd.f32 %v4650, %v165
  %v4677 = vadd.f32 %v4655, %v170
  %v4678 = vadd.f32 %v4660, %v175
  %v4679 = vadd.f32 %v4665, %v180
  %v4680 = vld [vmem:[%s13] sm:$0xff]
  %v4681 = vld [vmem:[%s13 + $0x8] sm:$0xff]
  %v4682 = vld [vmem:[%s13 + $0x10] sm:$0xff]
  %v4683 = vld [vmem:[%s13 + $0x18] sm:$0xff]
  %v4684 = vld [vmem:[%s13 + $0x20] sm:$0xff]
  %v4685 = vld [vmem:[%s13 + $0x28] sm:$0xff]
  %v4686 = vld [vmem:[%s13 + $0x30] sm:$0xff]
  %v4687 = vld [vmem:[%s13 + $0x38] sm:$0xff]
  %v4688 = vld [vmem:[%s13 + $0x40] sm:$0xff]
  %v4689 = vld [vmem:[%s13 + $0x48] sm:$0xff]
  %v4690 = vld [vmem:[%s13 + $0x50] sm:$0xff]
  %v4691 = vld [vmem:[%s13 + $0x58] sm:$0xff]
  %v4693 = vsel %vm1076, %v4680, 0
  %v4696 = vsel %vm1076, %v4681, 0
  %v4699 = vsel %vm1076, %v4682, 0
  %v4702 = vsel %vm1076, %v4683, 0
  %v4705 = vsel %vm1076, %v4684, 0
  %v4708 = vsel %vm1076, %v4685, 0
  %v4711 = vsel %vm1076, %v4686, 0
  %v4714 = vsel %vm1076, %v4687, 0
  %v4717 = vsel %vm1076, %v4688, 0
  %v4720 = vsel %vm1076, %v4689, 0
  %v4723 = vsel %vm1076, %v4690, 0
  %v4726 = vsel %vm1076, %v4691, 0
  %4728 = vmatprep.subr.mxu0 0.0
  %4729 = vmatpush1.msra.mxu0 %v3740
  %4730 = vmatprep.subr.mxu0 0.0
  %4731 = vmatpush1.msra.mxu0 %v3741
  %4732 = vmatprep.subr.mxu0 0.0
  %4733 = vmatpush1.msra.mxu0 %v3742
  %4734 = vmatprep.subr.mxu0 0.0
  %4735 = vmatpush1.msra.mxu0 %v3743
  %4736 = vmatprep.subr.mxu0 0.0
  %4737 = vmatpush1.msra.mxu0 0.0
  %4738 = vmatprep.subr.mxu0 0.0
  %4739 = vmatpush1.msra.mxu0 0.0
  %4740 = vmatprep.subr.mxu0 0.0
  %4741 = vmatpush1.msra.mxu0 0.0
  %4742 = vmatprep.subr.mxu0 0.0
  %4743 = vmatpush1.msra.mxu0 0.0
  %4744 = vmatprep.subr.mxu0 0.0
  %4745 = vmatpush1.msra.mxu0 0.0
  %4746 = vmatprep.subr.mxu0 0.0
  %4747 = vmatpush1.msra.mxu0 0.0
  %4748 = vmatprep.subr.mxu0 0.0
  %4749 = vmatpush1.msra.mxu0 0.0
  %4750 = vmatprep.subr.mxu0 0.0
  %4751 = vmatpush1.msra.mxu0 0.0
  %4752 = vmatprep.subr.mxu0 0.0
  %4753 = vmatpush1.msra.mxu0 0.0
  %4754 = vmatprep.subr.mxu0 0.0
  %4755 = vmatpush1.msra.mxu0 0.0
  %4756 = vmatprep.subr.mxu0 0.0
  %4757 = vmatpush1.msra.mxu0 0.0
  %4758 = vmatprep.subr.mxu0 0.0
  %4759 = vmatpush1.msra.mxu0 0.0
  %4760 = vmatprep.subr.mxu0 0.0
  %4761 = vmatpush1.msra.mxu0 0.0
  %4762 = vmatprep.subr.mxu0 0.0
  %4763 = vmatpush1.msra.mxu0 0.0
  %4764 = vmatprep.subr.mxu0 0.0
  %4765 = vmatpush1.msra.mxu0 0.0
  %4766 = vmatprep.subr.mxu0 0.0
  %4767 = vmatpush1.msra.mxu0 0.0
  %4768 = vmatprep.subr.mxu0 0.0
  %4769 = vmatpush1.msra.mxu0 0.0
  %4770 = vmatprep.subr.mxu0 0.0
  %4771 = vmatpush1.msra.mxu0 0.0
  %4772 = vmatprep.subr.mxu0 0.0
  %4773 = vmatpush1.msra.mxu0 0.0
  %4774 = vmatprep.subr.mxu0 0.0
  %4775 = vmatpush1.msra.mxu0 0.0
  %4776 = vmatprep.subr.mxu0 0.0
  %4777 = vmatpush1.msra.mxu0 0.0
  %4778 = vmatprep.subr.mxu0 0.0
  %4779 = vmatpush1.msra.mxu0 0.0
  %4780 = vmatprep.subr.mxu0 0.0
  %4781 = vmatpush1.msra.mxu0 0.0
  %4782 = vmatprep.subr.mxu0 0.0
  %4783 = vmatpush1.msra.mxu0 0.0
  %4784 = vmatprep.subr.mxu0 0.0
  %4785 = vmatpush1.msra.mxu0 0.0
  %4786 = vmatprep.subr.mxu0 0.0
  %4787 = vmatpush1.msra.mxu0 0.0
  %4788 = vmatprep.subr.mxu0 0.0
  %4789 = vmatpush1.msra.mxu0 0.0
  %4790 = vmatprep.subr.mxu0 0.0
  %4791 = vmatpush1.msra.mxu0 0.0
  %4792 = vmatprep.mubr.f32.mxu0 0.0
  %4793 = vmatmul.mubr.f32.gmra.mrb[0].mxu0 %v4693
  %v4794 = vpop.f32.mrb[0].mxu0
  %v4795 = vadd.f32 0.0, %v4794
  %v4796 = vpop.f32.mrb[0].mxu0
  %4797 = vmatprep.mubr.f32.mxu0 0.0
  %4798 = vmatmul.mubr.f32.gmra.mrb[0].mxu0 %v4696
  %v4799 = vpop.f32.mrb[0].mxu0
  %v4800 = vadd.f32 0.0, %v4799
  %v4801 = vpop.f32.mrb[0].mxu0
  %4802 = vmatprep.mubr.f32.mxu0 0.0
  %4803 = vmatmul.mubr.f32.gmra.mrb[0].mxu0 %v4699
  %v4804 = vpop.f32.mrb[0].mxu0
  %v4805 = vadd.f32 0.0, %v4804
  %v4806 = vpop.f32.mrb[0].mxu0
  %4807 = vmatprep.mubr.f32.mxu0 0.0
  %4808 = vmatmul.mubr.f32.gmra.mrb[0].mxu0 %v4702
  %v4809 = vpop.f32.mrb[0].mxu0
  %v4810 = vadd.f32 0.0, %v4809
  %v4811 = vpop.f32.mrb[0].mxu0
  %4812 = vmatprep.mubr.f32.mxu0 0.0
  %4813 = vmatmul.mubr.f32.gmra.mrb[0].mxu0 %v4705
  %v4814 = vpop.f32.mrb[0].mxu0
  %v4815 = vadd.f32 0.0, %v4814
  %v4816 = vpop.f32.mrb[0].mxu0
  %4817 = vmatprep.mubr.f32.mxu0 0.0
  %4818 = vmatmul.mubr.f32.gmra.mrb[0].mxu0 %v4708
  %v4819 = vpop.f32.mrb[0].mxu0
  %v4820 = vadd.f32 0.0, %v4819
  %v4821 = vpop.f32.mrb[0].mxu0
  %4822 = vmatprep.mubr.f32.mxu0 0.0
  %4823 = vmatmul.mubr.f32.gmra.mrb[0].mxu0 %v4711
  %v4824 = vpop.f32.mrb[0].mxu0
  %v4825 = vadd.f32 0.0, %v4824
  %v4826 = vpop.f32.mrb[0].mxu0
  %4827 = vmatprep.mubr.f32.mxu0 0.0
  %4828 = vmatmul.mubr.f32.gmra.mrb[0].mxu0 %v4714
  %v4829 = vpop.f32.mrb[0].mxu0
  %v4830 = vadd.f32 0.0, %v4829
  %v4831 = vpop.f32.mrb[0].mxu0
  %4832 = vmatprep.mubr.f32.mxu0 0.0
  %4833 = vmatmul.mubr.f32.gmra.mrb[0].mxu0 %v4717
  %v4834 = vpop.f32.mrb[0].mxu0
  %v4835 = vadd.f32 0.0, %v4834
  %v4836 = vpop.f32.mrb[0].mxu0
  %4837 = vmatprep.mubr.f32.mxu0 0.0
  %4838 = vmatmul.mubr.f32.gmra.mrb[0].mxu0 %v4720
  %v4839 = vpop.f32.mrb[0].mxu0
  %v4840 = vadd.f32 0.0, %v4839
  %v4841 = vpop.f32.mrb[0].mxu0
  %4842 = vmatprep.mubr.f32.mxu0 0.0
  %4843 = vmatmul.mubr.f32.gmra.mrb[0].mxu0 %v4723
  %v4844 = vpop.f32.mrb[0].mxu0
  %v4845 = vadd.f32 0.0, %v4844
  %v4846 = vpop.f32.mrb[0].mxu0
  %4847 = vmatprep.mubr.f32.mxu0 0.0
  %4848 = vmatmul.mubr.f32.gmra.mrb[0].mxu0 %v4726
  %v4849 = vpop.f32.mrb[0].mxu0
  %v4850 = vadd.f32 0.0, %v4849
  %v4851 = vpop.f32.mrb[0].mxu0
  %4852 = vdwg.mxu0
  %v4853 = vadd.f32 %v4668, %v4795
  %v4854 = vadd.f32 %v4669, %v4800
  %v4855 = vadd.f32 %v4670, %v4805
  %v4856 = vadd.f32 %v4671, %v4810
  %v4857 = vxor.u32 %v4853, 2147483648
  %v4858 = vxor.u32 %v4854, 2147483648
  %v4859 = vxor.u32 %v4855, 2147483648
  %v4860 = vxor.u32 %v4856, 2147483648
  %v4861 = vmul.f32 %v4857, 1.442695
  %v4862 = vpow.pop %v4861
  %v4863 = vmul.f32 %v4858, 1.442695
  %v4864 = vpow.pop %v4863
  %v4865 = vmul.f32 %v4859, 1.442695
  %v4866 = vpow.pop %v4865
  %v4867 = vmul.f32 %v4860, 1.442695
  %v4868 = vpow.pop %v4867
  %v4869 = vadd.f32 %v4862, 1.0
  %v4870 = vadd.f32 %v4864, 1.0
  %v4871 = vadd.f32 %v4866, 1.0
  %v4872 = vadd.f32 %v4868, 1.0
  %v4873 = vrcp.pop %v4869
  %v4874 = vmul.f32 1.0, %v4873
  %v4875 = vrcp.pop %v4870
  %v4876 = vmul.f32 1.0, %v4875
  %v4877 = vrcp.pop %v4871
  %v4878 = vmul.f32 1.0, %v4877
  %v4879 = vrcp.pop %v4872
  %v4880 = vmul.f32 1.0, %v4879
  %v4881 = vadd.f32 %v4672, %v4815
  %v4882 = vadd.f32 %v4673, %v4820
  %v4883 = vadd.f32 %v4674, %v4825
  %v4884 = vadd.f32 %v4675, %v4830
  %v4885 = vxor.u32 %v4881, 2147483648
  %v4886 = vxor.u32 %v4882, 2147483648
  %v4887 = vxor.u32 %v4883, 2147483648
  %v4888 = vxor.u32 %v4884, 2147483648
  %v4889 = vmul.f32 %v4885, 1.442695
  %v4890 = vpow.pop %v4889
  %v4891 = vmul.f32 %v4886, 1.442695
  %v4892 = vpow.pop %v4891
  %v4893 = vmul.f32 %v4887, 1.442695
  %v4894 = vpow.pop %v4893
  %v4895 = vmul.f32 %v4888, 1.442695
  %v4896 = vpow.pop %v4895
  %v4897 = vadd.f32 %v4890, 1.0
  %v4898 = vadd.f32 %v4892, 1.0
  %v4899 = vadd.f32 %v4894, 1.0
  %v4900 = vadd.f32 %v4896, 1.0
  %v4901 = vrcp.pop %v4897
  %v4902 = vmul.f32 1.0, %v4901
  %v4903 = vrcp.pop %v4898
  %v4904 = vmul.f32 1.0, %v4903
  %v4905 = vrcp.pop %v4899
  %v4906 = vmul.f32 1.0, %v4905
  %v4907 = vrcp.pop %v4900
  %v4908 = vmul.f32 1.0, %v4907
  %v4909 = vadd.f32 %v4835, %v189
  %v4910 = vadd.f32 %v4840, %v194
  %v4911 = vadd.f32 %v4845, %v199
  %v4912 = vadd.f32 %v4850, %v204
  %v4913 = vmul.f32 %v4874, %v4909
  %v4914 = vmul.f32 %v4876, %v4910
  %v4915 = vmul.f32 %v4878, %v4911
  %v4916 = vmul.f32 %v4880, %v4912
  %v4917 = vadd.f32 %v4676, %v4913
  %v4918 = vadd.f32 %v4677, %v4914
  %v4919 = vadd.f32 %v4678, %v4915
  %v4920 = vadd.f32 %v4679, %v4916
  %v4921 = vtanh.pop %v4917
  %v4922 = vtanh.pop %v4918
  %v4923 = vtanh.pop %v4919
  %v4924 = vtanh.pop %v4920
  %v4925 = vsub.f32 1.0, %v4902
  %v4926 = vsub.f32 1.0, %v4904
  %v4927 = vsub.f32 1.0, %v4906
  %v4928 = vsub.f32 1.0, %v4908
  %v4929 = vmul.f32 %v4925, %v4921
  %v4930 = vmul.f32 %v4926, %v4922
  %v4931 = vmul.f32 %v4927, %v4923
  %v4932 = vmul.f32 %v4928, %v4924
  %v4933 = vmul.f32 %v4902, %v3740
  %v4934 = vmul.f32 %v4904, %v3741
  %v4935 = vmul.f32 %v4906, %v3742
  %v4936 = vmul.f32 %v4908, %v3743
  %v4937 = vadd.f32 %v4929, %v4933
  %v4938 = vadd.f32 %v4930, %v4934
  %v4939 = vadd.f32 %v4931, %v4935
  %v4940 = vadd.f32 %v4932, %v4936
  %v4941 = vmax.f32 %v4937, -5.0
  %v4942 = vmax.f32 %v4938, -5.0
  %v4943 = vmax.f32 %v4939, -5.0
  %v4944 = vmax.f32 %v4940, -5.0
  %v4945 = vmin.f32 %v4941, 5.0
  %v4946 = vmin.f32 %v4942, 5.0
  %v4947 = vmin.f32 %v4943, 5.0
  %v4948 = vmin.f32 %v4944, 5.0
  %v4949 = vld [vmem:[%s16] sm:$0xff]
  %v4951 = vsel %vm1076, %v4949, 0
  %4953 = vmatprep.subr.mxu0 0.0
  %4954 = vmatpush1.msra.mxu0 %v4945
  %4955 = vmatprep.subr.mxu0 0.0
  %4956 = vmatpush1.msra.mxu0 %v4946
  %4957 = vmatprep.subr.mxu0 0.0
  %4958 = vmatpush1.msra.mxu0 %v4947
  %4959 = vmatprep.subr.mxu0 0.0
  %4960 = vmatpush1.msra.mxu0 %v4948
  %4961 = vmatprep.subr.mxu0 0.0
  %4962 = vmatpush1.msra.mxu0 0.0
  %4963 = vmatprep.subr.mxu0 0.0
  %4964 = vmatpush1.msra.mxu0 0.0
  %4965 = vmatprep.subr.mxu0 0.0
  %4966 = vmatpush1.msra.mxu0 0.0
  %4967 = vmatprep.subr.mxu0 0.0
  %4968 = vmatpush1.msra.mxu0 0.0
  %4969 = vmatprep.subr.mxu0 0.0
  %4970 = vmatpush1.msra.mxu0 0.0
  %4971 = vmatprep.subr.mxu0 0.0
  %4972 = vmatpush1.msra.mxu0 0.0
  %4973 = vmatprep.subr.mxu0 0.0
  %4974 = vmatpush1.msra.mxu0 0.0
  %4975 = vmatprep.subr.mxu0 0.0
  %4976 = vmatpush1.msra.mxu0 0.0
  %4977 = vmatprep.subr.mxu0 0.0
  %4978 = vmatpush1.msra.mxu0 0.0
  %4979 = vmatprep.subr.mxu0 0.0
  %4980 = vmatpush1.msra.mxu0 0.0
  %4981 = vmatprep.subr.mxu0 0.0
  %4982 = vmatpush1.msra.mxu0 0.0
  %4983 = vmatprep.subr.mxu0 0.0
  %4984 = vmatpush1.msra.mxu0 0.0
  %4985 = vmatprep.subr.mxu0 0.0
  %4986 = vmatpush1.msra.mxu0 0.0
  %4987 = vmatprep.subr.mxu0 0.0
  %4988 = vmatpush1.msra.mxu0 0.0
  %4989 = vmatprep.subr.mxu0 0.0
  %4990 = vmatpush1.msra.mxu0 0.0
  %4991 = vmatprep.subr.mxu0 0.0
  %4992 = vmatpush1.msra.mxu0 0.0
  %4993 = vmatprep.subr.mxu0 0.0
  %4994 = vmatpush1.msra.mxu0 0.0
  %4995 = vmatprep.subr.mxu0 0.0
  %4996 = vmatpush1.msra.mxu0 0.0
  %4997 = vmatprep.subr.mxu0 0.0
  %4998 = vmatpush1.msra.mxu0 0.0
  %4999 = vmatprep.subr.mxu0 0.0
  %5000 = vmatpush1.msra.mxu0 0.0
  %5001 = vmatprep.subr.mxu0 0.0
  %5002 = vmatpush1.msra.mxu0 0.0
  %5003 = vmatprep.subr.mxu0 0.0
  %5004 = vmatpush1.msra.mxu0 0.0
  %5005 = vmatprep.subr.mxu0 0.0
  %5006 = vmatpush1.msra.mxu0 0.0
  %5007 = vmatprep.subr.mxu0 0.0
  %5008 = vmatpush1.msra.mxu0 0.0
  %5009 = vmatprep.subr.mxu0 0.0
  %5010 = vmatpush1.msra.mxu0 0.0
  %5011 = vmatprep.subr.mxu0 0.0
  %5012 = vmatpush1.msra.mxu0 0.0
  %5013 = vmatprep.subr.mxu0 0.0
  %5014 = vmatpush1.msra.mxu0 0.0
  %5015 = vmatprep.subr.mxu0 0.0
  %5016 = vmatpush1.msra.mxu0 0.0
  %5017 = vmatprep.mubr.f32.mxu0 0.0
  %5018 = vmatmul.mubr.f32.gmra.mrb[0].mxu0 %v4951
  %v5019 = vpop.f32.mrb[0].mxu0
  %v5020 = vadd.f32 0.0, %v5019
  %v5021 = vpop.f32.mrb[0].mxu0
  %5022 = vdwg.mxu0
  %v5023 = vmul.f32 %v4319, 0.5
  %v5024 = vmul.f32 %v5023, 1.442695
  %v5025 = vpow.pop %v5024
  %v5026 = vsel %vm208, %v4319, %v5025
  %v5027 = vsel %vm208, %v4319, %v3836
  %s5028 = scalar_lea.vmem %s17, 216
  %5029 = vst.msk [vmem:[%s5028] sm:$0xff] %vm1413, %v4945
  %5030 = vst.msk [vmem:[%s5028 + $0x8] sm:$0xff] %vm1413, %v4946
  %5031 = vst.msk [vmem:[%s5028 + $0x10] sm:$0xff] %vm1413, %v4947
  %5032 = vst.msk [vmem:[%s5028 + $0x18] sm:$0xff] %vm1413, %v4948
  %5033 = vst.msk [vmem:[%s5028 + $0x20] sm:$0xff] %vm1413, %v4246
  %5034 = vst.msk [vmem:[%s5028 + $0x28] sm:$0xff] %vm1413, %v4247
  %5035 = vst.msk [vmem:[%s5028 + $0x30] sm:$0xff] %vm1413, %v5026
  %5036 = vst.msk [vmem:[%s5028 + $0x38] sm:$0xff] %vm1413, %v5027
  %5037 = vst.msk [vmem:[%s5028 + $0x40] sm:$0xff] %vm1413, %v5020
  %s5038 = scalar_lea.vmem %s0, 96
  %v5039 = vld [vmem:[%s5038] sm:$0xff]
  %v5040 = vld [vmem:[%s5038 + $0x8] sm:$0xff]
  %v5041 = vld [vmem:[%s5038 + $0x10] sm:$0xff]
  %v5042 = vld [vmem:[%s4] sm:$0xff]
  %v5043 = vld [vmem:[%s4 + $0x8] sm:$0xff]
  %v5044 = vld [vmem:[%s4 + $0x10] sm:$0xff]
  %v5045 = vld [vmem:[%s4 + $0x18] sm:$0xff]
  %v5046 = vld [vmem:[%s4 + $0x20] sm:$0xff]
  %v5047 = vld [vmem:[%s4 + $0x28] sm:$0xff]
  %v5048 = vld [vmem:[%s5] sm:$0xff]
  %v5049 = vld [vmem:[%s5 + $0x8] sm:$0xff]
  %v5050 = vld [vmem:[%s5 + $0x10] sm:$0xff]
  %v5051 = vld [vmem:[%s5 + $0x18] sm:$0xff]
  %v5052 = vld [vmem:[%s5 + $0x20] sm:$0xff]
  %v5053 = vld [vmem:[%s5 + $0x28] sm:$0xff]
  %v5055 = vsel %vm231, %v5048, 0
  %v5058 = vsel %vm231, %v5049, 0
  %v5061 = vsel %vm231, %v5050, 0
  %v5064 = vsel %vm231, %v5051, 0
  %v5067 = vsel %vm231, %v5052, 0
  %v5070 = vsel %vm231, %v5053, 0
  %5072 = vmatprep.subr.mxu0 0.0
  %5073 = vmatpush1.msra.mxu0 %v5020
  %5074 = vmatprep.subr.mxu0 0.0
  %5075 = vmatpush1.msra.mxu0 0.0
  %5076 = vmatprep.subr.mxu0 0.0
  %5077 = vmatpush1.msra.mxu0 0.0
  %5078 = vmatprep.subr.mxu0 0.0
  %5079 = vmatpush1.msra.mxu0 0.0
  %5080 = vmatprep.subr.mxu0 0.0
  %5081 = vmatpush1.msra.mxu0 0.0
  %5082 = vmatprep.subr.mxu0 0.0
  %5083 = vmatpush1.msra.mxu0 0.0
  %5084 = vmatprep.subr.mxu0 0.0
  %5085 = vmatpush1.msra.mxu0 0.0
  %5086 = vmatprep.subr.mxu0 0.0
  %5087 = vmatpush1.msra.mxu0 0.0
  %5088 = vmatprep.subr.mxu0 0.0
  %5089 = vmatpush1.msra.mxu0 0.0
  %5090 = vmatprep.subr.mxu0 0.0
  %5091 = vmatpush1.msra.mxu0 0.0
  %5092 = vmatprep.subr.mxu0 0.0
  %5093 = vmatpush1.msra.mxu0 0.0
  %5094 = vmatprep.subr.mxu0 0.0
  %5095 = vmatpush1.msra.mxu0 0.0
  %5096 = vmatprep.subr.mxu0 0.0
  %5097 = vmatpush1.msra.mxu0 0.0
  %5098 = vmatprep.subr.mxu0 0.0
  %5099 = vmatpush1.msra.mxu0 0.0
  %5100 = vmatprep.subr.mxu0 0.0
  %5101 = vmatpush1.msra.mxu0 0.0
  %5102 = vmatprep.subr.mxu0 0.0
  %5103 = vmatpush1.msra.mxu0 0.0
  %5104 = vmatprep.subr.mxu0 0.0
  %5105 = vmatpush1.msra.mxu0 0.0
  %5106 = vmatprep.subr.mxu0 0.0
  %5107 = vmatpush1.msra.mxu0 0.0
  %5108 = vmatprep.subr.mxu0 0.0
  %5109 = vmatpush1.msra.mxu0 0.0
  %5110 = vmatprep.subr.mxu0 0.0
  %5111 = vmatpush1.msra.mxu0 0.0
  %5112 = vmatprep.subr.mxu0 0.0
  %5113 = vmatpush1.msra.mxu0 0.0
  %5114 = vmatprep.subr.mxu0 0.0
  %5115 = vmatpush1.msra.mxu0 0.0
  %5116 = vmatprep.subr.mxu0 0.0
  %5117 = vmatpush1.msra.mxu0 0.0
  %5118 = vmatprep.subr.mxu0 0.0
  %5119 = vmatpush1.msra.mxu0 0.0
  %5120 = vmatprep.subr.mxu0 0.0
  %5121 = vmatpush1.msra.mxu0 0.0
  %5122 = vmatprep.subr.mxu0 0.0
  %5123 = vmatpush1.msra.mxu0 0.0
  %5124 = vmatprep.subr.mxu0 0.0
  %5125 = vmatpush1.msra.mxu0 0.0
  %5126 = vmatprep.subr.mxu0 0.0
  %5127 = vmatpush1.msra.mxu0 0.0
  %5128 = vmatprep.subr.mxu0 0.0
  %5129 = vmatpush1.msra.mxu0 0.0
  %5130 = vmatprep.subr.mxu0 0.0
  %5131 = vmatpush1.msra.mxu0 0.0
  %5132 = vmatprep.subr.mxu0 0.0
  %5133 = vmatpush1.msra.mxu0 0.0
  %5134 = vmatprep.subr.mxu0 0.0
  %5135 = vmatpush1.msra.mxu0 0.0
  %5136 = vmatprep.mubr.f32.mxu0 0.0
  %5137 = vmatmul.mubr.f32.gmra.mrb[0].mxu0 %v5055
  %v5138 = vpop.f32.mrb[0].mxu0
  %v5139 = vadd.f32 0.0, %v5138
  %v5140 = vpop.f32.mrb[0].mxu0
  %5141 = vmatprep.mubr.f32.mxu0 0.0
  %5142 = vmatmul.mubr.f32.gmra.mrb[0].mxu0 %v5058
  %v5143 = vpop.f32.mrb[0].mxu0
  %v5144 = vadd.f32 0.0, %v5143
  %v5145 = vpop.f32.mrb[0].mxu0
  %5146 = vmatprep.mubr.f32.mxu0 0.0
  %5147 = vmatmul.mubr.f32.gmra.mrb[0].mxu0 %v5061
  %v5148 = vpop.f32.mrb[0].mxu0
  %v5149 = vadd.f32 0.0, %v5148
  %v5150 = vpop.f32.mrb[0].mxu0
  %5151 = vmatprep.mubr.f32.mxu0 0.0
  %5152 = vmatmul.mubr.f32.gmra.mrb[0].mxu0 %v5064
  %v5153 = vpop.f32.mrb[0].mxu0
  %v5154 = vadd.f32 0.0, %v5153
  %v5155 = vpop.f32.mrb[0].mxu0
  %5156 = vmatprep.mubr.f32.mxu0 0.0
  %5157 = vmatmul.mubr.f32.gmra.mrb[0].mxu0 %v5067
  %v5158 = vpop.f32.mrb[0].mxu0
  %v5159 = vadd.f32 0.0, %v5158
  %v5160 = vpop.f32.mrb[0].mxu0
  %5161 = vmatprep.mubr.f32.mxu0 0.0
  %5162 = vmatmul.mubr.f32.gmra.mrb[0].mxu0 %v5070
  %v5163 = vpop.f32.mrb[0].mxu0
  %v5164 = vadd.f32 0.0, %v5163
  %v5165 = vpop.f32.mrb[0].mxu0
  %5166 = vdwg.mxu0
  %v5168 = vsel %vm345, %v5042, 0
  %v5171 = vsel %vm345, %v5043, 0
  %v5174 = vsel %vm345, %v5044, 0
  %v5177 = vsel %vm345, %v5045, 0
  %v5180 = vsel %vm345, %v5046, 0
  %v5183 = vsel %vm345, %v5047, 0
  %5185 = vmatprep.subr.mxu0 0.0
  %5186 = vmatpush1.msra.mxu0 %v5039
  %5187 = vmatprep.subr.mxu0 0.0
  %5188 = vmatpush1.msra.mxu0 %v5040
  %5189 = vmatprep.subr.mxu0 0.0
  %5190 = vmatpush1.msra.mxu0 0.0
  %5191 = vmatprep.subr.mxu0 0.0
  %5192 = vmatpush1.msra.mxu0 0.0
  %5193 = vmatprep.subr.mxu0 0.0
  %5194 = vmatpush1.msra.mxu0 0.0
  %5195 = vmatprep.subr.mxu0 0.0
  %5196 = vmatpush1.msra.mxu0 0.0
  %5197 = vmatprep.subr.mxu0 0.0
  %5198 = vmatpush1.msra.mxu0 0.0
  %5199 = vmatprep.subr.mxu0 0.0
  %5200 = vmatpush1.msra.mxu0 0.0
  %5201 = vmatprep.subr.mxu0 0.0
  %5202 = vmatpush1.msra.mxu0 0.0
  %5203 = vmatprep.subr.mxu0 0.0
  %5204 = vmatpush1.msra.mxu0 0.0
  %5205 = vmatprep.subr.mxu0 0.0
  %5206 = vmatpush1.msra.mxu0 0.0
  %5207 = vmatprep.subr.mxu0 0.0
  %5208 = vmatpush1.msra.mxu0 0.0
  %5209 = vmatprep.subr.mxu0 0.0
  %5210 = vmatpush1.msra.mxu0 0.0
  %5211 = vmatprep.subr.mxu0 0.0
  %5212 = vmatpush1.msra.mxu0 0.0
  %5213 = vmatprep.subr.mxu0 0.0
  %5214 = vmatpush1.msra.mxu0 0.0
  %5215 = vmatprep.subr.mxu0 0.0
  %5216 = vmatpush1.msra.mxu0 0.0
  %5217 = vmatprep.subr.mxu0 0.0
  %5218 = vmatpush1.msra.mxu0 0.0
  %5219 = vmatprep.subr.mxu0 0.0
  %5220 = vmatpush1.msra.mxu0 0.0
  %5221 = vmatprep.subr.mxu0 0.0
  %5222 = vmatpush1.msra.mxu0 0.0
  %5223 = vmatprep.subr.mxu0 0.0
  %5224 = vmatpush1.msra.mxu0 0.0
  %5225 = vmatprep.subr.mxu0 0.0
  %5226 = vmatpush1.msra.mxu0 0.0
  %5227 = vmatprep.subr.mxu0 0.0
  %5228 = vmatpush1.msra.mxu0 0.0
  %5229 = vmatprep.subr.mxu0 0.0
  %5230 = vmatpush1.msra.mxu0 0.0
  %5231 = vmatprep.subr.mxu0 0.0
  %5232 = vmatpush1.msra.mxu0 0.0
  %5233 = vmatprep.subr.mxu0 0.0
  %5234 = vmatpush1.msra.mxu0 0.0
  %5235 = vmatprep.subr.mxu0 0.0
  %5236 = vmatpush1.msra.mxu0 0.0
  %5237 = vmatprep.subr.mxu0 0.0
  %5238 = vmatpush1.msra.mxu0 0.0
  %5239 = vmatprep.subr.mxu0 0.0
  %5240 = vmatpush1.msra.mxu0 0.0
  %5241 = vmatprep.subr.mxu0 0.0
  %5242 = vmatpush1.msra.mxu0 0.0
  %5243 = vmatprep.subr.mxu0 0.0
  %5244 = vmatpush1.msra.mxu0 0.0
  %5245 = vmatprep.subr.mxu0 0.0
  %5246 = vmatpush1.msra.mxu0 0.0
  %5247 = vmatprep.subr.mxu0 0.0
  %5248 = vmatpush1.msra.mxu0 0.0
  %5249 = vmatprep.mubr.f32.mxu0 0.0
  %5250 = vmatmul.mubr.f32.gmra.mrb[0].mxu0 %v5168
  %v5251 = vpop.f32.mrb[0].mxu0
  %v5252 = vadd.f32 %v5139, %v5251
  %v5253 = vpop.f32.mrb[0].mxu0
  %5254 = vmatprep.mubr.f32.mxu0 0.0
  %5255 = vmatmul.mubr.f32.gmra.mrb[0].mxu0 %v5171
  %v5256 = vpop.f32.mrb[0].mxu0
  %v5257 = vadd.f32 %v5144, %v5256
  %v5258 = vpop.f32.mrb[0].mxu0
  %5259 = vmatprep.mubr.f32.mxu0 0.0
  %5260 = vmatmul.mubr.f32.gmra.mrb[0].mxu0 %v5174
  %v5261 = vpop.f32.mrb[0].mxu0
  %v5262 = vadd.f32 %v5149, %v5261
  %v5263 = vpop.f32.mrb[0].mxu0
  %5264 = vmatprep.mubr.f32.mxu0 0.0
  %5265 = vmatmul.mubr.f32.gmra.mrb[0].mxu0 %v5177
  %v5266 = vpop.f32.mrb[0].mxu0
  %v5267 = vadd.f32 %v5154, %v5266
  %v5268 = vpop.f32.mrb[0].mxu0
  %5269 = vmatprep.mubr.f32.mxu0 0.0
  %5270 = vmatmul.mubr.f32.gmra.mrb[0].mxu0 %v5180
  %v5271 = vpop.f32.mrb[0].mxu0
  %v5272 = vadd.f32 %v5159, %v5271
  %v5273 = vpop.f32.mrb[0].mxu0
  %5274 = vmatprep.mubr.f32.mxu0 0.0
  %5275 = vmatmul.mubr.f32.gmra.mrb[0].mxu0 %v5183
  %v5276 = vpop.f32.mrb[0].mxu0
  %v5277 = vadd.f32 %v5164, %v5276
  %v5278 = vpop.f32.mrb[0].mxu0
  %5279 = vdwg.mxu0
  %v5280 = vadd.f32 %v5252, %v65
  %v5281 = vadd.f32 %v5257, %v70
  %v5282 = vadd.f32 %v5262, %v75
  %v5283 = vadd.f32 %v5267, %v80
  %v5284 = vadd.f32 %v5272, %v85
  %v5285 = vadd.f32 %v5277, %v90
  %v5286 = vld [vmem:[%s6] sm:$0xff]
  %v5287 = vld [vmem:[%s6 + $0x8] sm:$0xff]
  %v5288 = vld [vmem:[%s6 + $0x10] sm:$0xff]
  %v5289 = vld [vmem:[%s6 + $0x18] sm:$0xff]
  %v5290 = vld [vmem:[%s6 + $0x20] sm:$0xff]
  %v5291 = vld [vmem:[%s6 + $0x28] sm:$0xff]
  %v5293 = vsel %vm345, %v5286, 0
  %v5296 = vsel %vm345, %v5287, 0
  %v5299 = vsel %vm345, %v5288, 0
  %v5302 = vsel %vm345, %v5289, 0
  %v5305 = vsel %vm345, %v5290, 0
  %v5308 = vsel %vm345, %v5291, 0
  %5310 = vmatprep.subr.mxu0 0.0
  %5311 = vmatpush1.msra.mxu0 %v4246
  %5312 = vmatprep.subr.mxu0 0.0
  %5313 = vmatpush1.msra.mxu0 %v4247
  %5314 = vmatprep.subr.mxu0 0.0
  %5315 = vmatpush1.msra.mxu0 0.0
  %5316 = vmatprep.subr.mxu0 0.0
  %5317 = vmatpush1.msra.mxu0 0.0
  %5318 = vmatprep.subr.mxu0 0.0
  %5319 = vmatpush1.msra.mxu0 0.0
  %5320 = vmatprep.subr.mxu0 0.0
  %5321 = vmatpush1.msra.mxu0 0.0
  %5322 = vmatprep.subr.mxu0 0.0
  %5323 = vmatpush1.msra.mxu0 0.0
  %5324 = vmatprep.subr.mxu0 0.0
  %5325 = vmatpush1.msra.mxu0 0.0
  %5326 = vmatprep.subr.mxu0 0.0
  %5327 = vmatpush1.msra.mxu0 0.0
  %5328 = vmatprep.subr.mxu0 0.0
  %5329 = vmatpush1.msra.mxu0 0.0
  %5330 = vmatprep.subr.mxu0 0.0
  %5331 = vmatpush1.msra.mxu0 0.0
  %5332 = vmatprep.subr.mxu0 0.0
  %5333 = vmatpush1.msra.mxu0 0.0
  %5334 = vmatprep.subr.mxu0 0.0
  %5335 = vmatpush1.msra.mxu0 0.0
  %5336 = vmatprep.subr.mxu0 0.0
  %5337 = vmatpush1.msra.mxu0 0.0
  %5338 = vmatprep.subr.mxu0 0.0
  %5339 = vmatpush1.msra.mxu0 0.0
  %5340 = vmatprep.subr.mxu0 0.0
  %5341 = vmatpush1.msra.mxu0 0.0
  %5342 = vmatprep.subr.mxu0 0.0
  %5343 = vmatpush1.msra.mxu0 0.0
  %5344 = vmatprep.subr.mxu0 0.0
  %5345 = vmatpush1.msra.mxu0 0.0
  %5346 = vmatprep.subr.mxu0 0.0
  %5347 = vmatpush1.msra.mxu0 0.0
  %5348 = vmatprep.subr.mxu0 0.0
  %5349 = vmatpush1.msra.mxu0 0.0
  %5350 = vmatprep.subr.mxu0 0.0
  %5351 = vmatpush1.msra.mxu0 0.0
  %5352 = vmatprep.subr.mxu0 0.0
  %5353 = vmatpush1.msra.mxu0 0.0
  %5354 = vmatprep.subr.mxu0 0.0
  %5355 = vmatpush1.msra.mxu0 0.0
  %5356 = vmatprep.subr.mxu0 0.0
  %5357 = vmatpush1.msra.mxu0 0.0
  %5358 = vmatprep.subr.mxu0 0.0
  %5359 = vmatpush1.msra.mxu0 0.0
  %5360 = vmatprep.subr.mxu0 0.0
  %5361 = vmatpush1.msra.mxu0 0.0
  %5362 = vmatprep.subr.mxu0 0.0
  %5363 = vmatpush1.msra.mxu0 0.0
  %5364 = vmatprep.subr.mxu0 0.0
  %5365 = vmatpush1.msra.mxu0 0.0
  %5366 = vmatprep.subr.mxu0 0.0
  %5367 = vmatpush1.msra.mxu0 0.0
  %5368 = vmatprep.subr.mxu0 0.0
  %5369 = vmatpush1.msra.mxu0 0.0
  %5370 = vmatprep.subr.mxu0 0.0
  %5371 = vmatpush1.msra.mxu0 0.0
  %5372 = vmatprep.subr.mxu0 0.0
  %5373 = vmatpush1.msra.mxu0 0.0
  %5374 = vmatprep.mubr.f32.mxu0 0.0
  %5375 = vmatmul.mubr.f32.gmra.mrb[0].mxu0 %v5293
  %v5376 = vpop.f32.mrb[0].mxu0
  %v5377 = vadd.f32 0.0, %v5376
  %v5378 = vpop.f32.mrb[0].mxu0
  %5379 = vmatprep.mubr.f32.mxu0 0.0
  %5380 = vmatmul.mubr.f32.gmra.mrb[0].mxu0 %v5296
  %v5381 = vpop.f32.mrb[0].mxu0
  %v5382 = vadd.f32 0.0, %v5381
  %v5383 = vpop.f32.mrb[0].mxu0
  %5384 = vmatprep.mubr.f32.mxu0 0.0
  %5385 = vmatmul.mubr.f32.gmra.mrb[0].mxu0 %v5299
  %v5386 = vpop.f32.mrb[0].mxu0
  %v5387 = vadd.f32 0.0, %v5386
  %v5388 = vpop.f32.mrb[0].mxu0
  %5389 = vmatprep.mubr.f32.mxu0 0.0
  %5390 = vmatmul.mubr.f32.gmra.mrb[0].mxu0 %v5302
  %v5391 = vpop.f32.mrb[0].mxu0
  %v5392 = vadd.f32 0.0, %v5391
  %v5393 = vpop.f32.mrb[0].mxu0
  %5394 = vmatprep.mubr.f32.mxu0 0.0
  %5395 = vmatmul.mubr.f32.gmra.mrb[0].mxu0 %v5305
  %v5396 = vpop.f32.mrb[0].mxu0
  %v5397 = vadd.f32 0.0, %v5396
  %v5398 = vpop.f32.mrb[0].mxu0
  %5399 = vmatprep.mubr.f32.mxu0 0.0
  %5400 = vmatmul.mubr.f32.gmra.mrb[0].mxu0 %v5308
  %v5401 = vpop.f32.mrb[0].mxu0
  %v5402 = vadd.f32 0.0, %v5401
  %v5403 = vpop.f32.mrb[0].mxu0
  %5404 = vdwg.mxu0
  %v5405 = vadd.f32 %v5280, %v5377
  %v5406 = vadd.f32 %v5281, %v5382
  %v5407 = vxor.u32 %v5405, 2147483648
  %v5408 = vxor.u32 %v5406, 2147483648
  %v5409 = vmul.f32 %v5407, 1.442695
  %v5410 = vpow.pop %v5409
  %v5411 = vmul.f32 %v5408, 1.442695
  %v5412 = vpow.pop %v5411
  %v5413 = vadd.f32 %v5410, 1.0
  %v5414 = vadd.f32 %v5412, 1.0
  %v5415 = vrcp.pop %v5413
  %v5416 = vmul.f32 1.0, %v5415
  %v5417 = vrcp.pop %v5414
  %v5418 = vmul.f32 1.0, %v5417
  %v5419 = vadd.f32 %v5282, %v5387
  %v5420 = vadd.f32 %v5283, %v5392
  %v5421 = vxor.u32 %v5419, 2147483648
  %v5422 = vxor.u32 %v5420, 2147483648
  %v5423 = vmul.f32 %v5421, 1.442695
  %v5424 = vpow.pop %v5423
  %v5425 = vmul.f32 %v5422, 1.442695
  %v5426 = vpow.pop %v5425
  %v5427 = vadd.f32 %v5424, 1.0
  %v5428 = vadd.f32 %v5426, 1.0
  %v5429 = vrcp.pop %v5427
  %v5430 = vmul.f32 1.0, %v5429
  %v5431 = vrcp.pop %v5428
  %v5432 = vmul.f32 1.0, %v5431
  %v5433 = vadd.f32 %v5397, %v97
  %v5434 = vadd.f32 %v5402, %v102
  %v5435 = vmul.f32 %v5416, %v5433
  %v5436 = vmul.f32 %v5418, %v5434
  %v5437 = vadd.f32 %v5284, %v5435
  %v5438 = vadd.f32 %v5285, %v5436
  %v5439 = vtanh.pop %v5437
  %v5440 = vtanh.pop %v5438
  %v5441 = vsub.f32 1.0, %v5430
  %v5442 = vsub.f32 1.0, %v5432
  %v5443 = vmul.f32 %v5441, %v5439
  %v5444 = vmul.f32 %v5442, %v5440
  %v5445 = vmul.f32 %v5430, %v4246
  %v5446 = vmul.f32 %v5432, %v4247
  %v5447 = vadd.f32 %v5443, %v5445
  %v5448 = vadd.f32 %v5444, %v5446
  %v5449 = vmax.f32 %v5447, -5.0
  %v5450 = vmax.f32 %v5448, -5.0
  %v5451 = vmin.f32 %v5449, 5.0
  %v5452 = vmin.f32 %v5450, 5.0
  %v5453 = vld [vmem:[%s9] sm:$0xff]
  %v5455 = vsel %vm345, %v5453, 0
  %5457 = vmatprep.subr.mxu0 0.0
  %5458 = vmatpush1.msra.mxu0 %v5451
  %5459 = vmatprep.subr.mxu0 0.0
  %5460 = vmatpush1.msra.mxu0 %v5452
  %5461 = vmatprep.subr.mxu0 0.0
  %5462 = vmatpush1.msra.mxu0 0.0
  %5463 = vmatprep.subr.mxu0 0.0
  %5464 = vmatpush1.msra.mxu0 0.0
  %5465 = vmatprep.subr.mxu0 0.0
  %5466 = vmatpush1.msra.mxu0 0.0
  %5467 = vmatprep.subr.mxu0 0.0
  %5468 = vmatpush1.msra.mxu0 0.0
  %5469 = vmatprep.subr.mxu0 0.0
  %5470 = vmatpush1.msra.mxu0 0.0
  %5471 = vmatprep.subr.mxu0 0.0
  %5472 = vmatpush1.msra.mxu0 0.0
  %5473 = vmatprep.subr.mxu0 0.0
  %5474 = vmatpush1.msra.mxu0 0.0
  %5475 = vmatprep.subr.mxu0 0.0
  %5476 = vmatpush1.msra.mxu0 0.0
  %5477 = vmatprep.subr.mxu0 0.0
  %5478 = vmatpush1.msra.mxu0 0.0
  %5479 = vmatprep.subr.mxu0 0.0
  %5480 = vmatpush1.msra.mxu0 0.0
  %5481 = vmatprep.subr.mxu0 0.0
  %5482 = vmatpush1.msra.mxu0 0.0
  %5483 = vmatprep.subr.mxu0 0.0
  %5484 = vmatpush1.msra.mxu0 0.0
  %5485 = vmatprep.subr.mxu0 0.0
  %5486 = vmatpush1.msra.mxu0 0.0
  %5487 = vmatprep.subr.mxu0 0.0
  %5488 = vmatpush1.msra.mxu0 0.0
  %5489 = vmatprep.subr.mxu0 0.0
  %5490 = vmatpush1.msra.mxu0 0.0
  %5491 = vmatprep.subr.mxu0 0.0
  %5492 = vmatpush1.msra.mxu0 0.0
  %5493 = vmatprep.subr.mxu0 0.0
  %5494 = vmatpush1.msra.mxu0 0.0
  %5495 = vmatprep.subr.mxu0 0.0
  %5496 = vmatpush1.msra.mxu0 0.0
  %5497 = vmatprep.subr.mxu0 0.0
  %5498 = vmatpush1.msra.mxu0 0.0
  %5499 = vmatprep.subr.mxu0 0.0
  %5500 = vmatpush1.msra.mxu0 0.0
  %5501 = vmatprep.subr.mxu0 0.0
  %5502 = vmatpush1.msra.mxu0 0.0
  %5503 = vmatprep.subr.mxu0 0.0
  %5504 = vmatpush1.msra.mxu0 0.0
  %5505 = vmatprep.subr.mxu0 0.0
  %5506 = vmatpush1.msra.mxu0 0.0
  %5507 = vmatprep.subr.mxu0 0.0
  %5508 = vmatpush1.msra.mxu0 0.0
  %5509 = vmatprep.subr.mxu0 0.0
  %5510 = vmatpush1.msra.mxu0 0.0
  %5511 = vmatprep.subr.mxu0 0.0
  %5512 = vmatpush1.msra.mxu0 0.0
  %5513 = vmatprep.subr.mxu0 0.0
  %5514 = vmatpush1.msra.mxu0 0.0
  %5515 = vmatprep.subr.mxu0 0.0
  %5516 = vmatpush1.msra.mxu0 0.0
  %5517 = vmatprep.subr.mxu0 0.0
  %5518 = vmatpush1.msra.mxu0 0.0
  %5519 = vmatprep.subr.mxu0 0.0
  %5520 = vmatpush1.msra.mxu0 0.0
  %5521 = vmatprep.mubr.f32.mxu0 0.0
  %5522 = vmatmul.mubr.f32.gmra.mrb[0].mxu0 %v5455
  %v5523 = vpop.f32.mrb[0].mxu0
  %v5524 = vadd.f32 %v108, %v5523
  %v5525 = vpop.f32.mrb[0].mxu0
  %5526 = vdwg.mxu0
  %v5527 = vld [vmem:[%s11] sm:$0xff]
  %v5528 = vld [vmem:[%s11 + $0x8] sm:$0xff]
  %v5529 = vld [vmem:[%s11 + $0x10] sm:$0xff]
  %v5530 = vld [vmem:[%s11 + $0x18] sm:$0xff]
  %v5531 = vld [vmem:[%s11 + $0x20] sm:$0xff]
  %v5532 = vld [vmem:[%s11 + $0x28] sm:$0xff]
  %v5533 = vld [vmem:[%s11 + $0x30] sm:$0xff]
  %v5534 = vld [vmem:[%s11 + $0x38] sm:$0xff]
  %v5535 = vld [vmem:[%s11 + $0x40] sm:$0xff]
  %v5536 = vld [vmem:[%s11 + $0x48] sm:$0xff]
  %v5537 = vld [vmem:[%s11 + $0x50] sm:$0xff]
  %v5538 = vld [vmem:[%s11 + $0x58] sm:$0xff]
  %v5539 = vld [vmem:[%s12] sm:$0xff]
  %v5540 = vld [vmem:[%s12 + $0x8] sm:$0xff]
  %v5541 = vld [vmem:[%s12 + $0x10] sm:$0xff]
  %v5542 = vld [vmem:[%s12 + $0x18] sm:$0xff]
  %v5543 = vld [vmem:[%s12 + $0x20] sm:$0xff]
  %v5544 = vld [vmem:[%s12 + $0x28] sm:$0xff]
  %v5545 = vld [vmem:[%s12 + $0x30] sm:$0xff]
  %v5546 = vld [vmem:[%s12 + $0x38] sm:$0xff]
  %v5547 = vld [vmem:[%s12 + $0x40] sm:$0xff]
  %v5548 = vld [vmem:[%s12 + $0x48] sm:$0xff]
  %v5549 = vld [vmem:[%s12 + $0x50] sm:$0xff]
  %v5550 = vld [vmem:[%s12 + $0x58] sm:$0xff]
  %v5552 = vsel %vm231, %v5539, 0
  %v5555 = vsel %vm231, %v5540, 0
  %v5558 = vsel %vm231, %v5541, 0
  %v5561 = vsel %vm231, %v5542, 0
  %v5564 = vsel %vm231, %v5543, 0
  %v5567 = vsel %vm231, %v5544, 0
  %v5570 = vsel %vm231, %v5545, 0
  %v5573 = vsel %vm231, %v5546, 0
  %v5576 = vsel %vm231, %v5547, 0
  %v5579 = vsel %vm231, %v5548, 0
  %v5582 = vsel %vm231, %v5549, 0
  %v5585 = vsel %vm231, %v5550, 0
  %5587 = vmatprep.subr.mxu0 0.0
  %5588 = vmatpush1.msra.mxu0 %v5041
  %5589 = vmatprep.subr.mxu0 0.0
  %5590 = vmatpush1.msra.mxu0 0.0
  %5591 = vmatprep.subr.mxu0 0.0
  %5592 = vmatpush1.msra.mxu0 0.0
  %5593 = vmatprep.subr.mxu0 0.0
  %5594 = vmatpush1.msra.mxu0 0.0
  %5595 = vmatprep.subr.mxu0 0.0
  %5596 = vmatpush1.msra.mxu0 0.0
  %5597 = vmatprep.subr.mxu0 0.0
  %5598 = vmatpush1.msra.mxu0 0.0
  %5599 = vmatprep.subr.mxu0 0.0
  %5600 = vmatpush1.msra.mxu0 0.0
  %5601 = vmatprep.subr.mxu0 0.0
  %5602 = vmatpush1.msra.mxu0 0.0
  %5603 = vmatprep.subr.mxu0 0.0
  %5604 = vmatpush1.msra.mxu0 0.0
  %5605 = vmatprep.subr.mxu0 0.0
  %5606 = vmatpush1.msra.mxu0 0.0
  %5607 = vmatprep.subr.mxu0 0.0
  %5608 = vmatpush1.msra.mxu0 0.0
  %5609 = vmatprep.subr.mxu0 0.0
  %5610 = vmatpush1.msra.mxu0 0.0
  %5611 = vmatprep.subr.mxu0 0.0
  %5612 = vmatpush1.msra.mxu0 0.0
  %5613 = vmatprep.subr.mxu0 0.0
  %5614 = vmatpush1.msra.mxu0 0.0
  %5615 = vmatprep.subr.mxu0 0.0
  %5616 = vmatpush1.msra.mxu0 0.0
  %5617 = vmatprep.subr.mxu0 0.0
  %5618 = vmatpush1.msra.mxu0 0.0
  %5619 = vmatprep.subr.mxu0 0.0
  %5620 = vmatpush1.msra.mxu0 0.0
  %5621 = vmatprep.subr.mxu0 0.0
  %5622 = vmatpush1.msra.mxu0 0.0
  %5623 = vmatprep.subr.mxu0 0.0
  %5624 = vmatpush1.msra.mxu0 0.0
  %5625 = vmatprep.subr.mxu0 0.0
  %5626 = vmatpush1.msra.mxu0 0.0
  %5627 = vmatprep.subr.mxu0 0.0
  %5628 = vmatpush1.msra.mxu0 0.0
  %5629 = vmatprep.subr.mxu0 0.0
  %5630 = vmatpush1.msra.mxu0 0.0
  %5631 = vmatprep.subr.mxu0 0.0
  %5632 = vmatpush1.msra.mxu0 0.0
  %5633 = vmatprep.subr.mxu0 0.0
  %5634 = vmatpush1.msra.mxu0 0.0
  %5635 = vmatprep.subr.mxu0 0.0
  %5636 = vmatpush1.msra.mxu0 0.0
  %5637 = vmatprep.subr.mxu0 0.0
  %5638 = vmatpush1.msra.mxu0 0.0
  %5639 = vmatprep.subr.mxu0 0.0
  %5640 = vmatpush1.msra.mxu0 0.0
  %5641 = vmatprep.subr.mxu0 0.0
  %5642 = vmatpush1.msra.mxu0 0.0
  %5643 = vmatprep.subr.mxu0 0.0
  %5644 = vmatpush1.msra.mxu0 0.0
  %5645 = vmatprep.subr.mxu0 0.0
  %5646 = vmatpush1.msra.mxu0 0.0
  %5647 = vmatprep.subr.mxu0 0.0
  %5648 = vmatpush1.msra.mxu0 0.0
  %5649 = vmatprep.subr.mxu0 0.0
  %5650 = vmatpush1.msra.mxu0 0.0
  %5651 = vmatprep.mubr.f32.mxu0 0.0
  %5652 = vmatmul.mubr.f32.gmra.mrb[0].mxu0 %v5552
  %v5653 = vpop.f32.mrb[0].mxu0
  %v5654 = vadd.f32 0.0, %v5653
  %v5655 = vpop.f32.mrb[0].mxu0
  %5656 = vmatprep.mubr.f32.mxu0 0.0
  %5657 = vmatmul.mubr.f32.gmra.mrb[0].mxu0 %v5555
  %v5658 = vpop.f32.mrb[0].mxu0
  %v5659 = vadd.f32 0.0, %v5658
  %v5660 = vpop.f32.mrb[0].mxu0
  %5661 = vmatprep.mubr.f32.mxu0 0.0
  %5662 = vmatmul.mubr.f32.gmra.mrb[0].mxu0 %v5558
  %v5663 = vpop.f32.mrb[0].mxu0
  %v5664 = vadd.f32 0.0, %v5663
  %v5665 = vpop.f32.mrb[0].mxu0
  %5666 = vmatprep.mubr.f32.mxu0 0.0
  %5667 = vmatmul.mubr.f32.gmra.mrb[0].mxu0 %v5561
  %v5668 = vpop.f32.mrb[0].mxu0
  %v5669 = vadd.f32 0.0, %v5668
  %v5670 = vpop.f32.mrb[0].mxu0
  %5671 = vmatprep.mubr.f32.mxu0 0.0
  %5672 = vmatmul.mubr.f32.gmra.mrb[0].mxu0 %v5564
  %v5673 = vpop.f32.mrb[0].mxu0
  %v5674 = vadd.f32 0.0, %v5673
  %v5675 = vpop.f32.mrb[0].mxu0
  %5676 = vmatprep.mubr.f32.mxu0 0.0
  %5677 = vmatmul.mubr.f32.gmra.mrb[0].mxu0 %v5567
  %v5678 = vpop.f32.mrb[0].mxu0
  %v5679 = vadd.f32 0.0, %v5678
  %v5680 = vpop.f32.mrb[0].mxu0
  %5681 = vmatprep.mubr.f32.mxu0 0.0
  %5682 = vmatmul.mubr.f32.gmra.mrb[0].mxu0 %v5570
  %v5683 = vpop.f32.mrb[0].mxu0
  %v5684 = vadd.f32 0.0, %v5683
  %v5685 = vpop.f32.mrb[0].mxu0
  %5686 = vmatprep.mubr.f32.mxu0 0.0
  %5687 = vmatmul.mubr.f32.gmra.mrb[0].mxu0 %v5573
  %v5688 = vpop.f32.mrb[0].mxu0
  %v5689 = vadd.f32 0.0, %v5688
  %v5690 = vpop.f32.mrb[0].mxu0
  %5691 = vmatprep.mubr.f32.mxu0 0.0
  %5692 = vmatmul.mubr.f32.gmra.mrb[0].mxu0 %v5576
  %v5693 = vpop.f32.mrb[0].mxu0
  %v5694 = vadd.f32 0.0, %v5693
  %v5695 = vpop.f32.mrb[0].mxu0
  %5696 = vmatprep.mubr.f32.mxu0 0.0
  %5697 = vmatmul.mubr.f32.gmra.mrb[0].mxu0 %v5579
  %v5698 = vpop.f32.mrb[0].mxu0
  %v5699 = vadd.f32 0.0, %v5698
  %v5700 = vpop.f32.mrb[0].mxu0
  %5701 = vmatprep.mubr.f32.mxu0 0.0
  %5702 = vmatmul.mubr.f32.gmra.mrb[0].mxu0 %v5582
  %v5703 = vpop.f32.mrb[0].mxu0
  %v5704 = vadd.f32 0.0, %v5703
  %v5705 = vpop.f32.mrb[0].mxu0
  %5706 = vmatprep.mubr.f32.mxu0 0.0
  %5707 = vmatmul.mubr.f32.gmra.mrb[0].mxu0 %v5585
  %v5708 = vpop.f32.mrb[0].mxu0
  %v5709 = vadd.f32 0.0, %v5708
  %v5710 = vpop.f32.mrb[0].mxu0
  %5711 = vdwg.mxu0
  %v5713 = vsel %vm231, %v5527, 0
  %v5716 = vsel %vm231, %v5528, 0
  %v5719 = vsel %vm231, %v5529, 0
  %v5722 = vsel %vm231, %v5530, 0
  %v5725 = vsel %vm231, %v5531, 0
  %v5728 = vsel %vm231, %v5532, 0
  %v5731 = vsel %vm231, %v5533, 0
  %v5734 = vsel %vm231, %v5534, 0
  %v5737 = vsel %vm231, %v5535, 0
  %v5740 = vsel %vm231, %v5536, 0
  %v5743 = vsel %vm231, %v5537, 0
  %v5746 = vsel %vm231, %v5538, 0
  %5748 = vmatprep.subr.mxu0 0.0
  %5749 = vmatpush1.msra.mxu0 %v5524
  %5750 = vmatprep.subr.mxu0 0.0
  %5751 = vmatpush1.msra.mxu0 0.0
  %5752 = vmatprep.subr.mxu0 0.0
  %5753 = vmatpush1.msra.mxu0 0.0
  %5754 = vmatprep.subr.mxu0 0.0
  %5755 = vmatpush1.msra.mxu0 0.0
  %5756 = vmatprep.subr.mxu0 0.0
  %5757 = vmatpush1.msra.mxu0 0.0
  %5758 = vmatprep.subr.mxu0 0.0
  %5759 = vmatpush1.msra.mxu0 0.0
  %5760 = vmatprep.subr.mxu0 0.0
  %5761 = vmatpush1.msra.mxu0 0.0
  %5762 = vmatprep.subr.mxu0 0.0
  %5763 = vmatpush1.msra.mxu0 0.0
  %5764 = vmatprep.subr.mxu0 0.0
  %5765 = vmatpush1.msra.mxu0 0.0
  %5766 = vmatprep.subr.mxu0 0.0
  %5767 = vmatpush1.msra.mxu0 0.0
  %5768 = vmatprep.subr.mxu0 0.0
  %5769 = vmatpush1.msra.mxu0 0.0
  %5770 = vmatprep.subr.mxu0 0.0
  %5771 = vmatpush1.msra.mxu0 0.0
  %5772 = vmatprep.subr.mxu0 0.0
  %5773 = vmatpush1.msra.mxu0 0.0
  %5774 = vmatprep.subr.mxu0 0.0
  %5775 = vmatpush1.msra.mxu0 0.0
  %5776 = vmatprep.subr.mxu0 0.0
  %5777 = vmatpush1.msra.mxu0 0.0
  %5778 = vmatprep.subr.mxu0 0.0
  %5779 = vmatpush1.msra.mxu0 0.0
  %5780 = vmatprep.subr.mxu0 0.0
  %5781 = vmatpush1.msra.mxu0 0.0
  %5782 = vmatprep.subr.mxu0 0.0
  %5783 = vmatpush1.msra.mxu0 0.0
  %5784 = vmatprep.subr.mxu0 0.0
  %5785 = vmatpush1.msra.mxu0 0.0
  %5786 = vmatprep.subr.mxu0 0.0
  %5787 = vmatpush1.msra.mxu0 0.0
  %5788 = vmatprep.subr.mxu0 0.0
  %5789 = vmatpush1.msra.mxu0 0.0
  %5790 = vmatprep.subr.mxu0 0.0
  %5791 = vmatpush1.msra.mxu0 0.0
  %5792 = vmatprep.subr.mxu0 0.0
  %5793 = vmatpush1.msra.mxu0 0.0
  %5794 = vmatprep.subr.mxu0 0.0
  %5795 = vmatpush1.msra.mxu0 0.0
  %5796 = vmatprep.subr.mxu0 0.0
  %5797 = vmatpush1.msra.mxu0 0.0
  %5798 = vmatprep.subr.mxu0 0.0
  %5799 = vmatpush1.msra.mxu0 0.0
  %5800 = vmatprep.subr.mxu0 0.0
  %5801 = vmatpush1.msra.mxu0 0.0
  %5802 = vmatprep.subr.mxu0 0.0
  %5803 = vmatpush1.msra.mxu0 0.0
  %5804 = vmatprep.subr.mxu0 0.0
  %5805 = vmatpush1.msra.mxu0 0.0
  %5806 = vmatprep.subr.mxu0 0.0
  %5807 = vmatpush1.msra.mxu0 0.0
  %5808 = vmatprep.subr.mxu0 0.0
  %5809 = vmatpush1.msra.mxu0 0.0
  %5810 = vmatprep.subr.mxu0 0.0
  %5811 = vmatpush1.msra.mxu0 0.0
  %5812 = vmatprep.mubr.f32.mxu0 0.0
  %5813 = vmatmul.mubr.f32.gmra.mrb[0].mxu0 %v5713
  %v5814 = vpop.f32.mrb[0].mxu0
  %v5815 = vadd.f32 %v5654, %v5814
  %v5816 = vpop.f32.mrb[0].mxu0
  %5817 = vmatprep.mubr.f32.mxu0 0.0
  %5818 = vmatmul.mubr.f32.gmra.mrb[0].mxu0 %v5716
  %v5819 = vpop.f32.mrb[0].mxu0
  %v5820 = vadd.f32 %v5659, %v5819
  %v5821 = vpop.f32.mrb[0].mxu0
  %5822 = vmatprep.mubr.f32.mxu0 0.0
  %5823 = vmatmul.mubr.f32.gmra.mrb[0].mxu0 %v5719
  %v5824 = vpop.f32.mrb[0].mxu0
  %v5825 = vadd.f32 %v5664, %v5824
  %v5826 = vpop.f32.mrb[0].mxu0
  %5827 = vmatprep.mubr.f32.mxu0 0.0
  %5828 = vmatmul.mubr.f32.gmra.mrb[0].mxu0 %v5722
  %v5829 = vpop.f32.mrb[0].mxu0
  %v5830 = vadd.f32 %v5669, %v5829
  %v5831 = vpop.f32.mrb[0].mxu0
  %5832 = vmatprep.mubr.f32.mxu0 0.0
  %5833 = vmatmul.mubr.f32.gmra.mrb[0].mxu0 %v5725
  %v5834 = vpop.f32.mrb[0].mxu0
  %v5835 = vadd.f32 %v5674, %v5834
  %v5836 = vpop.f32.mrb[0].mxu0
  %5837 = vmatprep.mubr.f32.mxu0 0.0
  %5838 = vmatmul.mubr.f32.gmra.mrb[0].mxu0 %v5728
  %v5839 = vpop.f32.mrb[0].mxu0
  %v5840 = vadd.f32 %v5679, %v5839
  %v5841 = vpop.f32.mrb[0].mxu0
  %5842 = vmatprep.mubr.f32.mxu0 0.0
  %5843 = vmatmul.mubr.f32.gmra.mrb[0].mxu0 %v5731
  %v5844 = vpop.f32.mrb[0].mxu0
  %v5845 = vadd.f32 %v5684, %v5844
  %v5846 = vpop.f32.mrb[0].mxu0
  %5847 = vmatprep.mubr.f32.mxu0 0.0
  %5848 = vmatmul.mubr.f32.gmra.mrb[0].mxu0 %v5734
  %v5849 = vpop.f32.mrb[0].mxu0
  %v5850 = vadd.f32 %v5689, %v5849
  %v5851 = vpop.f32.mrb[0].mxu0
  %5852 = vmatprep.mubr.f32.mxu0 0.0
  %5853 = vmatmul.mubr.f32.gmra.mrb[0].mxu0 %v5737
  %v5854 = vpop.f32.mrb[0].mxu0
  %v5855 = vadd.f32 %v5694, %v5854
  %v5856 = vpop.f32.mrb[0].mxu0
  %5857 = vmatprep.mubr.f32.mxu0 0.0
  %5858 = vmatmul.mubr.f32.gmra.mrb[0].mxu0 %v5740
  %v5859 = vpop.f32.mrb[0].mxu0
  %v5860 = vadd.f32 %v5699, %v5859
  %v5861 = vpop.f32.mrb[0].mxu0
  %5862 = vmatprep.mubr.f32.mxu0 0.0
  %5863 = vmatmul.mubr.f32.gmra.mrb[0].mxu0 %v5743
  %v5864 = vpop.f32.mrb[0].mxu0
  %v5865 = vadd.f32 %v5704, %v5864
  %v5866 = vpop.f32.mrb[0].mxu0
  %5867 = vmatprep.mubr.f32.mxu0 0.0
  %5868 = vmatmul.mubr.f32.gmra.mrb[0].mxu0 %v5746
  %v5869 = vpop.f32.mrb[0].mxu0
  %v5870 = vadd.f32 %v5709, %v5869
  %v5871 = vpop.f32.mrb[0].mxu0
  %5872 = vdwg.mxu0
  %v5873 = vadd.f32 %v5815, %v125
  %v5874 = vadd.f32 %v5820, %v130
  %v5875 = vadd.f32 %v5825, %v135
  %v5876 = vadd.f32 %v5830, %v140
  %v5877 = vadd.f32 %v5835, %v145
  %v5878 = vadd.f32 %v5840, %v150
  %v5879 = vadd.f32 %v5845, %v155
  %v5880 = vadd.f32 %v5850, %v160
  %v5881 = vadd.f32 %v5855, %v165
  %v5882 = vadd.f32 %v5860, %v170
  %v5883 = vadd.f32 %v5865, %v175
  %v5884 = vadd.f32 %v5870, %v180
  %v5885 = vld [vmem:[%s13] sm:$0xff]
  %v5886 = vld [vmem:[%s13 + $0x8] sm:$0xff]
  %v5887 = vld [vmem:[%s13 + $0x10] sm:$0xff]
  %v5888 = vld [vmem:[%s13 + $0x18] sm:$0xff]
  %v5889 = vld [vmem:[%s13 + $0x20] sm:$0xff]
  %v5890 = vld [vmem:[%s13 + $0x28] sm:$0xff]
  %v5891 = vld [vmem:[%s13 + $0x30] sm:$0xff]
  %v5892 = vld [vmem:[%s13 + $0x38] sm:$0xff]
  %v5893 = vld [vmem:[%s13 + $0x40] sm:$0xff]
  %v5894 = vld [vmem:[%s13 + $0x48] sm:$0xff]
  %v5895 = vld [vmem:[%s13 + $0x50] sm:$0xff]
  %v5896 = vld [vmem:[%s13 + $0x58] sm:$0xff]
  %v5898 = vsel %vm1076, %v5885, 0
  %v5901 = vsel %vm1076, %v5886, 0
  %v5904 = vsel %vm1076, %v5887, 0
  %v5907 = vsel %vm1076, %v5888, 0
  %v5910 = vsel %vm1076, %v5889, 0
  %v5913 = vsel %vm1076, %v5890, 0
  %v5916 = vsel %vm1076, %v5891, 0
  %v5919 = vsel %vm1076, %v5892, 0
  %v5922 = vsel %vm1076, %v5893, 0
  %v5925 = vsel %vm1076, %v5894, 0
  %v5928 = vsel %vm1076, %v5895, 0
  %v5931 = vsel %vm1076, %v5896, 0
  %5933 = vmatprep.subr.mxu0 0.0
  %5934 = vmatpush1.msra.mxu0 %v4945
  %5935 = vmatprep.subr.mxu0 0.0
  %5936 = vmatpush1.msra.mxu0 %v4946
  %5937 = vmatprep.subr.mxu0 0.0
  %5938 = vmatpush1.msra.mxu0 %v4947
  %5939 = vmatprep.subr.mxu0 0.0
  %5940 = vmatpush1.msra.mxu0 %v4948
  %5941 = vmatprep.subr.mxu0 0.0
  %5942 = vmatpush1.msra.mxu0 0.0
  %5943 = vmatprep.subr.mxu0 0.0
  %5944 = vmatpush1.msra.mxu0 0.0
  %5945 = vmatprep.subr.mxu0 0.0
  %5946 = vmatpush1.msra.mxu0 0.0
  %5947 = vmatprep.subr.mxu0 0.0
  %5948 = vmatpush1.msra.mxu0 0.0
  %5949 = vmatprep.subr.mxu0 0.0
  %5950 = vmatpush1.msra.mxu0 0.0
  %5951 = vmatprep.subr.mxu0 0.0
  %5952 = vmatpush1.msra.mxu0 0.0
  %5953 = vmatprep.subr.mxu0 0.0
  %5954 = vmatpush1.msra.mxu0 0.0
  %5955 = vmatprep.subr.mxu0 0.0
  %5956 = vmatpush1.msra.mxu0 0.0
  %5957 = vmatprep.subr.mxu0 0.0
  %5958 = vmatpush1.msra.mxu0 0.0
  %5959 = vmatprep.subr.mxu0 0.0
  %5960 = vmatpush1.msra.mxu0 0.0
  %5961 = vmatprep.subr.mxu0 0.0
  %5962 = vmatpush1.msra.mxu0 0.0
  %5963 = vmatprep.subr.mxu0 0.0
  %5964 = vmatpush1.msra.mxu0 0.0
  %5965 = vmatprep.subr.mxu0 0.0
  %5966 = vmatpush1.msra.mxu0 0.0
  %5967 = vmatprep.subr.mxu0 0.0
  %5968 = vmatpush1.msra.mxu0 0.0
  %5969 = vmatprep.subr.mxu0 0.0
  %5970 = vmatpush1.msra.mxu0 0.0
  %5971 = vmatprep.subr.mxu0 0.0
  %5972 = vmatpush1.msra.mxu0 0.0
  %5973 = vmatprep.subr.mxu0 0.0
  %5974 = vmatpush1.msra.mxu0 0.0
  %5975 = vmatprep.subr.mxu0 0.0
  %5976 = vmatpush1.msra.mxu0 0.0
  %5977 = vmatprep.subr.mxu0 0.0
  %5978 = vmatpush1.msra.mxu0 0.0
  %5979 = vmatprep.subr.mxu0 0.0
  %5980 = vmatpush1.msra.mxu0 0.0
  %5981 = vmatprep.subr.mxu0 0.0
  %5982 = vmatpush1.msra.mxu0 0.0
  %5983 = vmatprep.subr.mxu0 0.0
  %5984 = vmatpush1.msra.mxu0 0.0
  %5985 = vmatprep.subr.mxu0 0.0
  %5986 = vmatpush1.msra.mxu0 0.0
  %5987 = vmatprep.subr.mxu0 0.0
  %5988 = vmatpush1.msra.mxu0 0.0
  %5989 = vmatprep.subr.mxu0 0.0
  %5990 = vmatpush1.msra.mxu0 0.0
  %5991 = vmatprep.subr.mxu0 0.0
  %5992 = vmatpush1.msra.mxu0 0.0
  %5993 = vmatprep.subr.mxu0 0.0
  %5994 = vmatpush1.msra.mxu0 0.0
  %5995 = vmatprep.subr.mxu0 0.0
  %5996 = vmatpush1.msra.mxu0 0.0
  %5997 = vmatprep.mubr.f32.mxu0 0.0
  %5998 = vmatmul.mubr.f32.gmra.mrb[0].mxu0 %v5898
  %v5999 = vpop.f32.mrb[0].mxu0
  %v6000 = vadd.f32 0.0, %v5999
  %v6001 = vpop.f32.mrb[0].mxu0
  %6002 = vmatprep.mubr.f32.mxu0 0.0
  %6003 = vmatmul.mubr.f32.gmra.mrb[0].mxu0 %v5901
  %v6004 = vpop.f32.mrb[0].mxu0
  %v6005 = vadd.f32 0.0, %v6004
  %v6006 = vpop.f32.mrb[0].mxu0
  %6007 = vmatprep.mubr.f32.mxu0 0.0
  %6008 = vmatmul.mubr.f32.gmra.mrb[0].mxu0 %v5904
  %v6009 = vpop.f32.mrb[0].mxu0
  %v6010 = vadd.f32 0.0, %v6009
  %v6011 = vpop.f32.mrb[0].mxu0
  %6012 = vmatprep.mubr.f32.mxu0 0.0
  %6013 = vmatmul.mubr.f32.gmra.mrb[0].mxu0 %v5907
  %v6014 = vpop.f32.mrb[0].mxu0
  %v6015 = vadd.f32 0.0, %v6014
  %v6016 = vpop.f32.mrb[0].mxu0
  %6017 = vmatprep.mubr.f32.mxu0 0.0
  %6018 = vmatmul.mubr.f32.gmra.mrb[0].mxu0 %v5910
  %v6019 = vpop.f32.mrb[0].mxu0
  %v6020 = vadd.f32 0.0, %v6019
  %v6021 = vpop.f32.mrb[0].mxu0
  %6022 = vmatprep.mubr.f32.mxu0 0.0
  %6023 = vmatmul.mubr.f32.gmra.mrb[0].mxu0 %v5913
  %v6024 = vpop.f32.mrb[0].mxu0
  %v6025 = vadd.f32 0.0, %v6024
  %v6026 = vpop.f32.mrb[0].mxu0
  %6027 = vmatprep.mubr.f32.mxu0 0.0
  %6028 = vmatmul.mubr.f32.gmra.mrb[0].mxu0 %v5916
  %v6029 = vpop.f32.mrb[0].mxu0
  %v6030 = vadd.f32 0.0, %v6029
  %v6031 = vpop.f32.mrb[0].mxu0
  %6032 = vmatprep.mubr.f32.mxu0 0.0
  %6033 = vmatmul.mubr.f32.gmra.mrb[0].mxu0 %v5919
  %v6034 = vpop.f32.mrb[0].mxu0
  %v6035 = vadd.f32 0.0, %v6034
  %v6036 = vpop.f32.mrb[0].mxu0
  %6037 = vmatprep.mubr.f32.mxu0 0.0
  %6038 = vmatmul.mubr.f32.gmra.mrb[0].mxu0 %v5922
  %v6039 = vpop.f32.mrb[0].mxu0
  %v6040 = vadd.f32 0.0, %v6039
  %v6041 = vpop.f32.mrb[0].mxu0
  %6042 = vmatprep.mubr.f32.mxu0 0.0
  %6043 = vmatmul.mubr.f32.gmra.mrb[0].mxu0 %v5925
  %v6044 = vpop.f32.mrb[0].mxu0
  %v6045 = vadd.f32 0.0, %v6044
  %v6046 = vpop.f32.mrb[0].mxu0
  %6047 = vmatprep.mubr.f32.mxu0 0.0
  %6048 = vmatmul.mubr.f32.gmra.mrb[0].mxu0 %v5928
  %v6049 = vpop.f32.mrb[0].mxu0
  %v6050 = vadd.f32 0.0, %v6049
  %v6051 = vpop.f32.mrb[0].mxu0
  %6052 = vmatprep.mubr.f32.mxu0 0.0
  %6053 = vmatmul.mubr.f32.gmra.mrb[0].mxu0 %v5931
  %v6054 = vpop.f32.mrb[0].mxu0
  %v6055 = vadd.f32 0.0, %v6054
  %v6056 = vpop.f32.mrb[0].mxu0
  %6057 = vdwg.mxu0
  %v6058 = vadd.f32 %v5873, %v6000
  %v6059 = vadd.f32 %v5874, %v6005
  %v6060 = vadd.f32 %v5875, %v6010
  %v6061 = vadd.f32 %v5876, %v6015
  %v6062 = vxor.u32 %v6058, 2147483648
  %v6063 = vxor.u32 %v6059, 2147483648
  %v6064 = vxor.u32 %v6060, 2147483648
  %v6065 = vxor.u32 %v6061, 2147483648
  %v6066 = vmul.f32 %v6062, 1.442695
  %v6067 = vpow.pop %v6066
  %v6068 = vmul.f32 %v6063, 1.442695
  %v6069 = vpow.pop %v6068
  %v6070 = vmul.f32 %v6064, 1.442695
  %v6071 = vpow.pop %v6070
  %v6072 = vmul.f32 %v6065, 1.442695
  %v6073 = vpow.pop %v6072
  %v6074 = vadd.f32 %v6067, 1.0
  %v6075 = vadd.f32 %v6069, 1.0
  %v6076 = vadd.f32 %v6071, 1.0
  %v6077 = vadd.f32 %v6073, 1.0
  %v6078 = vrcp.pop %v6074
  %v6079 = vmul.f32 1.0, %v6078
  %v6080 = vrcp.pop %v6075
  %v6081 = vmul.f32 1.0, %v6080
  %v6082 = vrcp.pop %v6076
  %v6083 = vmul.f32 1.0, %v6082
  %v6084 = vrcp.pop %v6077
  %v6085 = vmul.f32 1.0, %v6084
  %v6086 = vadd.f32 %v5877, %v6020
  %v6087 = vadd.f32 %v5878, %v6025
  %v6088 = vadd.f32 %v5879, %v6030
  %v6089 = vadd.f32 %v5880, %v6035
  %v6090 = vxor.u32 %v6086, 2147483648
  %v6091 = vxor.u32 %v6087, 2147483648
  %v6092 = vxor.u32 %v6088, 2147483648
  %v6093 = vxor.u32 %v6089, 2147483648
  %v6094 = vmul.f32 %v6090, 1.442695
  %v6095 = vpow.pop %v6094
  %v6096 = vmul.f32 %v6091, 1.442695
  %v6097 = vpow.pop %v6096
  %v6098 = vmul.f32 %v6092, 1.442695
  %v6099 = vpow.pop %v6098
  %v6100 = vmul.f32 %v6093, 1.442695
  %v6101 = vpow.pop %v6100
  %v6102 = vadd.f32 %v6095, 1.0
  %v6103 = vadd.f32 %v6097, 1.0
  %v6104 = vadd.f32 %v6099, 1.0
  %v6105 = vadd.f32 %v6101, 1.0
  %v6106 = vrcp.pop %v6102
  %v6107 = vmul.f32 1.0, %v6106
  %v6108 = vrcp.pop %v6103
  %v6109 = vmul.f32 1.0, %v6108
  %v6110 = vrcp.pop %v6104
  %v6111 = vmul.f32 1.0, %v6110
  %v6112 = vrcp.pop %v6105
  %v6113 = vmul.f32 1.0, %v6112
  %v6114 = vadd.f32 %v6040, %v189
  %v6115 = vadd.f32 %v6045, %v194
  %v6116 = vadd.f32 %v6050, %v199
  %v6117 = vadd.f32 %v6055, %v204
  %v6118 = vmul.f32 %v6079, %v6114
  %v6119 = vmul.f32 %v6081, %v6115
  %v6120 = vmul.f32 %v6083, %v6116
  %v6121 = vmul.f32 %v6085, %v6117
  %v6122 = vadd.f32 %v5881, %v6118
  %v6123 = vadd.f32 %v5882, %v6119
  %v6124 = vadd.f32 %v5883, %v6120
  %v6125 = vadd.f32 %v5884, %v6121
  %v6126 = vtanh.pop %v6122
  %v6127 = vtanh.pop %v6123
  %v6128 = vtanh.pop %v6124
  %v6129 = vtanh.pop %v6125
  %v6130 = vsub.f32 1.0, %v6107
  %v6131 = vsub.f32 1.0, %v6109
  %v6132 = vsub.f32 1.0, %v6111
  %v6133 = vsub.f32 1.0, %v6113
  %v6134 = vmul.f32 %v6130, %v6126
  %v6135 = vmul.f32 %v6131, %v6127
  %v6136 = vmul.f32 %v6132, %v6128
  %v6137 = vmul.f32 %v6133, %v6129
  %v6138 = vmul.f32 %v6107, %v4945
  %v6139 = vmul.f32 %v6109, %v4946
  %v6140 = vmul.f32 %v6111, %v4947
  %v6141 = vmul.f32 %v6113, %v4948
  %v6142 = vadd.f32 %v6134, %v6138
  %v6143 = vadd.f32 %v6135, %v6139
  %v6144 = vadd.f32 %v6136, %v6140
  %v6145 = vadd.f32 %v6137, %v6141
  %v6146 = vmax.f32 %v6142, -5.0
  %v6147 = vmax.f32 %v6143, -5.0
  %v6148 = vmax.f32 %v6144, -5.0
  %v6149 = vmax.f32 %v6145, -5.0
  %v6150 = vmin.f32 %v6146, 5.0
  %v6151 = vmin.f32 %v6147, 5.0
  %v6152 = vmin.f32 %v6148, 5.0
  %v6153 = vmin.f32 %v6149, 5.0
  %v6154 = vld [vmem:[%s16] sm:$0xff]
  %v6156 = vsel %vm1076, %v6154, 0
  %6158 = vmatprep.subr.mxu0 0.0
  %6159 = vmatpush1.msra.mxu0 %v6150
  %6160 = vmatprep.subr.mxu0 0.0
  %6161 = vmatpush1.msra.mxu0 %v6151
  %6162 = vmatprep.subr.mxu0 0.0
  %6163 = vmatpush1.msra.mxu0 %v6152
  %6164 = vmatprep.subr.mxu0 0.0
  %6165 = vmatpush1.msra.mxu0 %v6153
  %6166 = vmatprep.subr.mxu0 0.0
  %6167 = vmatpush1.msra.mxu0 0.0
  %6168 = vmatprep.subr.mxu0 0.0
  %6169 = vmatpush1.msra.mxu0 0.0
  %6170 = vmatprep.subr.mxu0 0.0
  %6171 = vmatpush1.msra.mxu0 0.0
  %6172 = vmatprep.subr.mxu0 0.0
  %6173 = vmatpush1.msra.mxu0 0.0
  %6174 = vmatprep.subr.mxu0 0.0
  %6175 = vmatpush1.msra.mxu0 0.0
  %6176 = vmatprep.subr.mxu0 0.0
  %6177 = vmatpush1.msra.mxu0 0.0
  %6178 = vmatprep.subr.mxu0 0.0
  %6179 = vmatpush1.msra.mxu0 0.0
  %6180 = vmatprep.subr.mxu0 0.0
  %6181 = vmatpush1.msra.mxu0 0.0
  %6182 = vmatprep.subr.mxu0 0.0
  %6183 = vmatpush1.msra.mxu0 0.0
  %6184 = vmatprep.subr.mxu0 0.0
  %6185 = vmatpush1.msra.mxu0 0.0
  %6186 = vmatprep.subr.mxu0 0.0
  %6187 = vmatpush1.msra.mxu0 0.0
  %6188 = vmatprep.subr.mxu0 0.0
  %6189 = vmatpush1.msra.mxu0 0.0
  %6190 = vmatprep.subr.mxu0 0.0
  %6191 = vmatpush1.msra.mxu0 0.0
  %6192 = vmatprep.subr.mxu0 0.0
  %6193 = vmatpush1.msra.mxu0 0.0
  %6194 = vmatprep.subr.mxu0 0.0
  %6195 = vmatpush1.msra.mxu0 0.0
  %6196 = vmatprep.subr.mxu0 0.0
  %6197 = vmatpush1.msra.mxu0 0.0
  %6198 = vmatprep.subr.mxu0 0.0
  %6199 = vmatpush1.msra.mxu0 0.0
  %6200 = vmatprep.subr.mxu0 0.0
  %6201 = vmatpush1.msra.mxu0 0.0
  %6202 = vmatprep.subr.mxu0 0.0
  %6203 = vmatpush1.msra.mxu0 0.0
  %6204 = vmatprep.subr.mxu0 0.0
  %6205 = vmatpush1.msra.mxu0 0.0
  %6206 = vmatprep.subr.mxu0 0.0
  %6207 = vmatpush1.msra.mxu0 0.0
  %6208 = vmatprep.subr.mxu0 0.0
  %6209 = vmatpush1.msra.mxu0 0.0
  %6210 = vmatprep.subr.mxu0 0.0
  %6211 = vmatpush1.msra.mxu0 0.0
  %6212 = vmatprep.subr.mxu0 0.0
  %6213 = vmatpush1.msra.mxu0 0.0
  %6214 = vmatprep.subr.mxu0 0.0
  %6215 = vmatpush1.msra.mxu0 0.0
  %6216 = vmatprep.subr.mxu0 0.0
  %6217 = vmatpush1.msra.mxu0 0.0
  %6218 = vmatprep.subr.mxu0 0.0
  %6219 = vmatpush1.msra.mxu0 0.0
  %6220 = vmatprep.subr.mxu0 0.0
  %6221 = vmatpush1.msra.mxu0 0.0
  %6222 = vmatprep.mubr.f32.mxu0 0.0
  %6223 = vmatmul.mubr.f32.gmra.mrb[0].mxu0 %v6156
  %v6224 = vpop.f32.mrb[0].mxu0
  %v6225 = vadd.f32 0.0, %v6224
  %v6226 = vpop.f32.mrb[0].mxu0
  %6227 = vdwg.mxu0
  %v6228 = vmul.f32 %v5524, 0.5
  %v6229 = vmul.f32 %v6228, 1.442695
  %v6230 = vpow.pop %v6229
  %v6231 = vsel %vm208, %v5524, %v6230
  %v6232 = vsel %vm208, %v5524, %v5041
  %s6233 = scalar_lea.vmem %s17, 288
  %6234 = vst.msk [vmem:[%s6233] sm:$0xff] %vm1413, %v6150
  %6235 = vst.msk [vmem:[%s6233 + $0x8] sm:$0xff] %vm1413, %v6151
  %6236 = vst.msk [vmem:[%s6233 + $0x10] sm:$0xff] %vm1413, %v6152
  %6237 = vst.msk [vmem:[%s6233 + $0x18] sm:$0xff] %vm1413, %v6153
  %6238 = vst.msk [vmem:[%s6233 + $0x20] sm:$0xff] %vm1413, %v5451
  %6239 = vst.msk [vmem:[%s6233 + $0x28] sm:$0xff] %vm1413, %v5452
  %6240 = vst.msk [vmem:[%s6233 + $0x30] sm:$0xff] %vm1413, %v6231
  %6241 = vst.msk [vmem:[%s6233 + $0x38] sm:$0xff] %vm1413, %v6232
  %6242 = vst.msk [vmem:[%s6233 + $0x40] sm:$0xff] %vm1413, %v6225
  %s6243 = scalar_lea.vmem %s0, 120
  %v6244 = vld [vmem:[%s6243] sm:$0xff]
  %v6245 = vld [vmem:[%s6243 + $0x8] sm:$0xff]
  %v6246 = vld [vmem:[%s6243 + $0x10] sm:$0xff]
  %v6247 = vld [vmem:[%s4] sm:$0xff]
  %v6248 = vld [vmem:[%s4 + $0x8] sm:$0xff]
  %v6249 = vld [vmem:[%s4 + $0x10] sm:$0xff]
  %v6250 = vld [vmem:[%s4 + $0x18] sm:$0xff]
  %v6251 = vld [vmem:[%s4 + $0x20] sm:$0xff]
  %v6252 = vld [vmem:[%s4 + $0x28] sm:$0xff]
  %v6253 = vld [vmem:[%s5] sm:$0xff]
  %v6254 = vld [vmem:[%s5 + $0x8] sm:$0xff]
  %v6255 = vld [vmem:[%s5 + $0x10] sm:$0xff]
  %v6256 = vld [vmem:[%s5 + $0x18] sm:$0xff]
  %v6257 = vld [vmem:[%s5 + $0x20] sm:$0xff]
  %v6258 = vld [vmem:[%s5 + $0x28] sm:$0xff]
  %v6260 = vsel %vm231, %v6253, 0
  %v6263 = vsel %vm231, %v6254, 0
  %v6266 = vsel %vm231, %v6255, 0
  %v6269 = vsel %vm231, %v6256, 0
  %v6272 = vsel %vm231, %v6257, 0
  %v6275 = vsel %vm231, %v6258, 0
  %6277 = vmatprep.subr.mxu0 0.0
  %6278 = vmatpush1.msra.mxu0 %v6225
  %6279 = vmatprep.subr.mxu0 0.0
  %6280 = vmatpush1.msra.mxu0 0.0
  %6281 = vmatprep.subr.mxu0 0.0
  %6282 = vmatpush1.msra.mxu0 0.0
  %6283 = vmatprep.subr.mxu0 0.0
  %6284 = vmatpush1.msra.mxu0 0.0
  %6285 = vmatprep.subr.mxu0 0.0
  %6286 = vmatpush1.msra.mxu0 0.0
  %6287 = vmatprep.subr.mxu0 0.0
  %6288 = vmatpush1.msra.mxu0 0.0
  %6289 = vmatprep.subr.mxu0 0.0
  %6290 = vmatpush1.msra.mxu0 0.0
  %6291 = vmatprep.subr.mxu0 0.0
  %6292 = vmatpush1.msra.mxu0 0.0
  %6293 = vmatprep.subr.mxu0 0.0
  %6294 = vmatpush1.msra.mxu0 0.0
  %6295 = vmatprep.subr.mxu0 0.0
  %6296 = vmatpush1.msra.mxu0 0.0
  %6297 = vmatprep.subr.mxu0 0.0
  %6298 = vmatpush1.msra.mxu0 0.0
  %6299 = vmatprep.subr.mxu0 0.0
  %6300 = vmatpush1.msra.mxu0 0.0
  %6301 = vmatprep.subr.mxu0 0.0
  %6302 = vmatpush1.msra.mxu0 0.0
  %6303 = vmatprep.subr.mxu0 0.0
  %6304 = vmatpush1.msra.mxu0 0.0
  %6305 = vmatprep.subr.mxu0 0.0
  %6306 = vmatpush1.msra.mxu0 0.0
  %6307 = vmatprep.subr.mxu0 0.0
  %6308 = vmatpush1.msra.mxu0 0.0
  %6309 = vmatprep.subr.mxu0 0.0
  %6310 = vmatpush1.msra.mxu0 0.0
  %6311 = vmatprep.subr.mxu0 0.0
  %6312 = vmatpush1.msra.mxu0 0.0
  %6313 = vmatprep.subr.mxu0 0.0
  %6314 = vmatpush1.msra.mxu0 0.0
  %6315 = vmatprep.subr.mxu0 0.0
  %6316 = vmatpush1.msra.mxu0 0.0
  %6317 = vmatprep.subr.mxu0 0.0
  %6318 = vmatpush1.msra.mxu0 0.0
  %6319 = vmatprep.subr.mxu0 0.0
  %6320 = vmatpush1.msra.mxu0 0.0
  %6321 = vmatprep.subr.mxu0 0.0
  %6322 = vmatpush1.msra.mxu0 0.0
  %6323 = vmatprep.subr.mxu0 0.0
  %6324 = vmatpush1.msra.mxu0 0.0
  %6325 = vmatprep.subr.mxu0 0.0
  %6326 = vmatpush1.msra.mxu0 0.0
  %6327 = vmatprep.subr.mxu0 0.0
  %6328 = vmatpush1.msra.mxu0 0.0
  %6329 = vmatprep.subr.mxu0 0.0
  %6330 = vmatpush1.msra.mxu0 0.0
  %6331 = vmatprep.subr.mxu0 0.0
  %6332 = vmatpush1.msra.mxu0 0.0
  %6333 = vmatprep.subr.mxu0 0.0
  %6334 = vmatpush1.msra.mxu0 0.0
  %6335 = vmatprep.subr.mxu0 0.0
  %6336 = vmatpush1.msra.mxu0 0.0
  %6337 = vmatprep.subr.mxu0 0.0
  %6338 = vmatpush1.msra.mxu0 0.0
  %6339 = vmatprep.subr.mxu0 0.0
  %6340 = vmatpush1.msra.mxu0 0.0
  %6341 = vmatprep.mubr.f32.mxu0 0.0
  %6342 = vmatmul.mubr.f32.gmra.mrb[0].mxu0 %v6260
  %v6343 = vpop.f32.mrb[0].mxu0
  %v6344 = vadd.f32 0.0, %v6343
  %v6345 = vpop.f32.mrb[0].mxu0
  %6346 = vmatprep.mubr.f32.mxu0 0.0
  %6347 = vmatmul.mubr.f32.gmra.mrb[0].mxu0 %v6263
  %v6348 = vpop.f32.mrb[0].mxu0
  %v6349 = vadd.f32 0.0, %v6348
  %v6350 = vpop.f32.mrb[0].mxu0
  %6351 = vmatprep.mubr.f32.mxu0 0.0
  %6352 = vmatmul.mubr.f32.gmra.mrb[0].mxu0 %v6266
  %v6353 = vpop.f32.mrb[0].mxu0
  %v6354 = vadd.f32 0.0, %v6353
  %v6355 = vpop.f32.mrb[0].mxu0
  %6356 = vmatprep.mubr.f32.mxu0 0.0
  %6357 = vmatmul.mubr.f32.gmra.mrb[0].mxu0 %v6269
  %v6358 = vpop.f32.mrb[0].mxu0
  %v6359 = vadd.f32 0.0, %v6358
  %v6360 = vpop.f32.mrb[0].mxu0
  %6361 = vmatprep.mubr.f32.mxu0 0.0
  %6362 = vmatmul.mubr.f32.gmra.mrb[0].mxu0 %v6272
  %v6363 = vpop.f32.mrb[0].mxu0
  %v6364 = vadd.f32 0.0, %v6363
  %v6365 = vpop.f32.mrb[0].mxu0
  %6366 = vmatprep.mubr.f32.mxu0 0.0
  %6367 = vmatmul.mubr.f32.gmra.mrb[0].mxu0 %v6275
  %v6368 = vpop.f32.mrb[0].mxu0
  %v6369 = vadd.f32 0.0, %v6368
  %v6370 = vpop.f32.mrb[0].mxu0
  %6371 = vdwg.mxu0
  %v6373 = vsel %vm345, %v6247, 0
  %v6376 = vsel %vm345, %v6248, 0
  %v6379 = vsel %vm345, %v6249, 0
  %v6382 = vsel %vm345, %v6250, 0
  %v6385 = vsel %vm345, %v6251, 0
  %v6388 = vsel %vm345, %v6252, 0
  %6390 = vmatprep.subr.mxu0 0.0
  %6391 = vmatpush1.msra.mxu0 %v6244
  %6392 = vmatprep.subr.mxu0 0.0
  %6393 = vmatpush1.msra.mxu0 %v6245
  %6394 = vmatprep.subr.mxu0 0.0
  %6395 = vmatpush1.msra.mxu0 0.0
  %6396 = vmatprep.subr.mxu0 0.0
  %6397 = vmatpush1.msra.mxu0 0.0
  %6398 = vmatprep.subr.mxu0 0.0
  %6399 = vmatpush1.msra.mxu0 0.0
  %6400 = vmatprep.subr.mxu0 0.0
  %6401 = vmatpush1.msra.mxu0 0.0
  %6402 = vmatprep.subr.mxu0 0.0
  %6403 = vmatpush1.msra.mxu0 0.0
  %6404 = vmatprep.subr.mxu0 0.0
  %6405 = vmatpush1.msra.mxu0 0.0
  %6406 = vmatprep.subr.mxu0 0.0
  %6407 = vmatpush1.msra.mxu0 0.0
  %6408 = vmatprep.subr.mxu0 0.0
  %6409 = vmatpush1.msra.mxu0 0.0
  %6410 = vmatprep.subr.mxu0 0.0
  %6411 = vmatpush1.msra.mxu0 0.0
  %6412 = vmatprep.subr.mxu0 0.0
  %6413 = vmatpush1.msra.mxu0 0.0
  %6414 = vmatprep.subr.mxu0 0.0
  %6415 = vmatpush1.msra.mxu0 0.0
  %6416 = vmatprep.subr.mxu0 0.0
  %6417 = vmatpush1.msra.mxu0 0.0
  %6418 = vmatprep.subr.mxu0 0.0
  %6419 = vmatpush1.msra.mxu0 0.0
  %6420 = vmatprep.subr.mxu0 0.0
  %6421 = vmatpush1.msra.mxu0 0.0
  %6422 = vmatprep.subr.mxu0 0.0
  %6423 = vmatpush1.msra.mxu0 0.0
  %6424 = vmatprep.subr.mxu0 0.0
  %6425 = vmatpush1.msra.mxu0 0.0
  %6426 = vmatprep.subr.mxu0 0.0
  %6427 = vmatpush1.msra.mxu0 0.0
  %6428 = vmatprep.subr.mxu0 0.0
  %6429 = vmatpush1.msra.mxu0 0.0
  %6430 = vmatprep.subr.mxu0 0.0
  %6431 = vmatpush1.msra.mxu0 0.0
  %6432 = vmatprep.subr.mxu0 0.0
  %6433 = vmatpush1.msra.mxu0 0.0
  %6434 = vmatprep.subr.mxu0 0.0
  %6435 = vmatpush1.msra.mxu0 0.0
  %6436 = vmatprep.subr.mxu0 0.0
  %6437 = vmatpush1.msra.mxu0 0.0
  %6438 = vmatprep.subr.mxu0 0.0
  %6439 = vmatpush1.msra.mxu0 0.0
  %6440 = vmatprep.subr.mxu0 0.0
  %6441 = vmatpush1.msra.mxu0 0.0
  %6442 = vmatprep.subr.mxu0 0.0
  %6443 = vmatpush1.msra.mxu0 0.0
  %6444 = vmatprep.subr.mxu0 0.0
  %6445 = vmatpush1.msra.mxu0 0.0
  %6446 = vmatprep.subr.mxu0 0.0
  %6447 = vmatpush1.msra.mxu0 0.0
  %6448 = vmatprep.subr.mxu0 0.0
  %6449 = vmatpush1.msra.mxu0 0.0
  %6450 = vmatprep.subr.mxu0 0.0
  %6451 = vmatpush1.msra.mxu0 0.0
  %6452 = vmatprep.subr.mxu0 0.0
  %6453 = vmatpush1.msra.mxu0 0.0
  %6454 = vmatprep.mubr.f32.mxu0 0.0
  %6455 = vmatmul.mubr.f32.gmra.mrb[0].mxu0 %v6373
  %v6456 = vpop.f32.mrb[0].mxu0
  %v6457 = vadd.f32 %v6344, %v6456
  %v6458 = vpop.f32.mrb[0].mxu0
  %6459 = vmatprep.mubr.f32.mxu0 0.0
  %6460 = vmatmul.mubr.f32.gmra.mrb[0].mxu0 %v6376
  %v6461 = vpop.f32.mrb[0].mxu0
  %v6462 = vadd.f32 %v6349, %v6461
  %v6463 = vpop.f32.mrb[0].mxu0
  %6464 = vmatprep.mubr.f32.mxu0 0.0
  %6465 = vmatmul.mubr.f32.gmra.mrb[0].mxu0 %v6379
  %v6466 = vpop.f32.mrb[0].mxu0
  %v6467 = vadd.f32 %v6354, %v6466
  %v6468 = vpop.f32.mrb[0].mxu0
  %6469 = vmatprep.mubr.f32.mxu0 0.0
  %6470 = vmatmul.mubr.f32.gmra.mrb[0].mxu0 %v6382
  %v6471 = vpop.f32.mrb[0].mxu0
  %v6472 = vadd.f32 %v6359, %v6471
  %v6473 = vpop.f32.mrb[0].mxu0
  %6474 = vmatprep.mubr.f32.mxu0 0.0
  %6475 = vmatmul.mubr.f32.gmra.mrb[0].mxu0 %v6385
  %v6476 = vpop.f32.mrb[0].mxu0
  %v6477 = vadd.f32 %v6364, %v6476
  %v6478 = vpop.f32.mrb[0].mxu0
  %6479 = vmatprep.mubr.f32.mxu0 0.0
  %6480 = vmatmul.mubr.f32.gmra.mrb[0].mxu0 %v6388
  %v6481 = vpop.f32.mrb[0].mxu0
  %v6482 = vadd.f32 %v6369, %v6481
  %v6483 = vpop.f32.mrb[0].mxu0
  %6484 = vdwg.mxu0
  %v6485 = vadd.f32 %v6457, %v65
  %v6486 = vadd.f32 %v6462, %v70
  %v6487 = vadd.f32 %v6467, %v75
  %v6488 = vadd.f32 %v6472, %v80
  %v6489 = vadd.f32 %v6477, %v85
  %v6490 = vadd.f32 %v6482, %v90
  %v6491 = vld [vmem:[%s6] sm:$0xff]
  %v6492 = vld [vmem:[%s6 + $0x8] sm:$0xff]
  %v6493 = vld [vmem:[%s6 + $0x10] sm:$0xff]
  %v6494 = vld [vmem:[%s6 + $0x18] sm:$0xff]
  %v6495 = vld [vmem:[%s6 + $0x20] sm:$0xff]
  %v6496 = vld [vmem:[%s6 + $0x28] sm:$0xff]
  %v6498 = vsel %vm345, %v6491, 0
  %v6501 = vsel %vm345, %v6492, 0
  %v6504 = vsel %vm345, %v6493, 0
  %v6507 = vsel %vm345, %v6494, 0
  %v6510 = vsel %vm345, %v6495, 0
  %v6513 = vsel %vm345, %v6496, 0
  %6515 = vmatprep.subr.mxu0 0.0
  %6516 = vmatpush1.msra.mxu0 %v5451
  %6517 = vmatprep.subr.mxu0 0.0
  %6518 = vmatpush1.msra.mxu0 %v5452
  %6519 = vmatprep.subr.mxu0 0.0
  %6520 = vmatpush1.msra.mxu0 0.0
  %6521 = vmatprep.subr.mxu0 0.0
  %6522 = vmatpush1.msra.mxu0 0.0
  %6523 = vmatprep.subr.mxu0 0.0
  %6524 = vmatpush1.msra.mxu0 0.0
  %6525 = vmatprep.subr.mxu0 0.0
  %6526 = vmatpush1.msra.mxu0 0.0
  %6527 = vmatprep.subr.mxu0 0.0
  %6528 = vmatpush1.msra.mxu0 0.0
  %6529 = vmatprep.subr.mxu0 0.0
  %6530 = vmatpush1.msra.mxu0 0.0
  %6531 = vmatprep.subr.mxu0 0.0
  %6532 = vmatpush1.msra.mxu0 0.0
  %6533 = vmatprep.subr.mxu0 0.0
  %6534 = vmatpush1.msra.mxu0 0.0
  %6535 = vmatprep.subr.mxu0 0.0
  %6536 = vmatpush1.msra.mxu0 0.0
  %6537 = vmatprep.subr.mxu0 0.0
  %6538 = vmatpush1.msra.mxu0 0.0
  %6539 = vmatprep.subr.mxu0 0.0
  %6540 = vmatpush1.msra.mxu0 0.0
  %6541 = vmatprep.subr.mxu0 0.0
  %6542 = vmatpush1.msra.mxu0 0.0
  %6543 = vmatprep.subr.mxu0 0.0
  %6544 = vmatpush1.msra.mxu0 0.0
  %6545 = vmatprep.subr.mxu0 0.0
  %6546 = vmatpush1.msra.mxu0 0.0
  %6547 = vmatprep.subr.mxu0 0.0
  %6548 = vmatpush1.msra.mxu0 0.0
  %6549 = vmatprep.subr.mxu0 0.0
  %6550 = vmatpush1.msra.mxu0 0.0
  %6551 = vmatprep.subr.mxu0 0.0
  %6552 = vmatpush1.msra.mxu0 0.0
  %6553 = vmatprep.subr.mxu0 0.0
  %6554 = vmatpush1.msra.mxu0 0.0
  %6555 = vmatprep.subr.mxu0 0.0
  %6556 = vmatpush1.msra.mxu0 0.0
  %6557 = vmatprep.subr.mxu0 0.0
  %6558 = vmatpush1.msra.mxu0 0.0
  %6559 = vmatprep.subr.mxu0 0.0
  %6560 = vmatpush1.msra.mxu0 0.0
  %6561 = vmatprep.subr.mxu0 0.0
  %6562 = vmatpush1.msra.mxu0 0.0
  %6563 = vmatprep.subr.mxu0 0.0
  %6564 = vmatpush1.msra.mxu0 0.0
  %6565 = vmatprep.subr.mxu0 0.0
  %6566 = vmatpush1.msra.mxu0 0.0
  %6567 = vmatprep.subr.mxu0 0.0
  %6568 = vmatpush1.msra.mxu0 0.0
  %6569 = vmatprep.subr.mxu0 0.0
  %6570 = vmatpush1.msra.mxu0 0.0
  %6571 = vmatprep.subr.mxu0 0.0
  %6572 = vmatpush1.msra.mxu0 0.0
  %6573 = vmatprep.subr.mxu0 0.0
  %6574 = vmatpush1.msra.mxu0 0.0
  %6575 = vmatprep.subr.mxu0 0.0
  %6576 = vmatpush1.msra.mxu0 0.0
  %6577 = vmatprep.subr.mxu0 0.0
  %6578 = vmatpush1.msra.mxu0 0.0
  %6579 = vmatprep.mubr.f32.mxu0 0.0
  %6580 = vmatmul.mubr.f32.gmra.mrb[0].mxu0 %v6498
  %v6581 = vpop.f32.mrb[0].mxu0
  %v6582 = vadd.f32 0.0, %v6581
  %v6583 = vpop.f32.mrb[0].mxu0
  %6584 = vmatprep.mubr.f32.mxu0 0.0
  %6585 = vmatmul.mubr.f32.gmra.mrb[0].mxu0 %v6501
  %v6586 = vpop.f32.mrb[0].mxu0
  %v6587 = vadd.f32 0.0, %v6586
  %v6588 = vpop.f32.mrb[0].mxu0
  %6589 = vmatprep.mubr.f32.mxu0 0.0
  %6590 = vmatmul.mubr.f32.gmra.mrb[0].mxu0 %v6504
  %v6591 = vpop.f32.mrb[0].mxu0
  %v6592 = vadd.f32 0.0, %v6591
  %v6593 = vpop.f32.mrb[0].mxu0
  %6594 = vmatprep.mubr.f32.mxu0 0.0
  %6595 = vmatmul.mubr.f32.gmra.mrb[0].mxu0 %v6507
  %v6596 = vpop.f32.mrb[0].mxu0
  %v6597 = vadd.f32 0.0, %v6596
  %v6598 = vpop.f32.mrb[0].mxu0
  %6599 = vmatprep.mubr.f32.mxu0 0.0
  %6600 = vmatmul.mubr.f32.gmra.mrb[0].mxu0 %v6510
  %v6601 = vpop.f32.mrb[0].mxu0
  %v6602 = vadd.f32 0.0, %v6601
  %v6603 = vpop.f32.mrb[0].mxu0
  %6604 = vmatprep.mubr.f32.mxu0 0.0
  %6605 = vmatmul.mubr.f32.gmra.mrb[0].mxu0 %v6513
  %v6606 = vpop.f32.mrb[0].mxu0
  %v6607 = vadd.f32 0.0, %v6606
  %v6608 = vpop.f32.mrb[0].mxu0
  %6609 = vdwg.mxu0
  %v6610 = vadd.f32 %v6485, %v6582
  %v6611 = vadd.f32 %v6486, %v6587
  %v6612 = vxor.u32 %v6610, 2147483648
  %v6613 = vxor.u32 %v6611, 2147483648
  %v6614 = vmul.f32 %v6612, 1.442695
  %v6615 = vpow.pop %v6614
  %v6616 = vmul.f32 %v6613, 1.442695
  %v6617 = vpow.pop %v6616
  %v6618 = vadd.f32 %v6615, 1.0
  %v6619 = vadd.f32 %v6617, 1.0
  %v6620 = vrcp.pop %v6618
  %v6621 = vmul.f32 1.0, %v6620
  %v6622 = vrcp.pop %v6619
  %v6623 = vmul.f32 1.0, %v6622
  %v6624 = vadd.f32 %v6487, %v6592
  %v6625 = vadd.f32 %v6488, %v6597
  %v6626 = vxor.u32 %v6624, 2147483648
  %v6627 = vxor.u32 %v6625, 2147483648
  %v6628 = vmul.f32 %v6626, 1.442695
  %v6629 = vpow.pop %v6628
  %v6630 = vmul.f32 %v6627, 1.442695
  %v6631 = vpow.pop %v6630
  %v6632 = vadd.f32 %v6629, 1.0
  %v6633 = vadd.f32 %v6631, 1.0
  %v6634 = vrcp.pop %v6632
  %v6635 = vmul.f32 1.0, %v6634
  %v6636 = vrcp.pop %v6633
  %v6637 = vmul.f32 1.0, %v6636
  %v6638 = vadd.f32 %v6602, %v97
  %v6639 = vadd.f32 %v6607, %v102
  %v6640 = vmul.f32 %v6621, %v6638
  %v6641 = vmul.f32 %v6623, %v6639
  %v6642 = vadd.f32 %v6489, %v6640
  %v6643 = vadd.f32 %v6490, %v6641
  %v6644 = vtanh.pop %v6642
  %v6645 = vtanh.pop %v6643
  %v6646 = vsub.f32 1.0, %v6635
  %v6647 = vsub.f32 1.0, %v6637
  %v6648 = vmul.f32 %v6646, %v6644
  %v6649 = vmul.f32 %v6647, %v6645
  %v6650 = vmul.f32 %v6635, %v5451
  %v6651 = vmul.f32 %v6637, %v5452
  %v6652 = vadd.f32 %v6648, %v6650
  %v6653 = vadd.f32 %v6649, %v6651
  %v6654 = vmax.f32 %v6652, -5.0
  %v6655 = vmax.f32 %v6653, -5.0
  %v6656 = vmin.f32 %v6654, 5.0
  %v6657 = vmin.f32 %v6655, 5.0
  %v6658 = vld [vmem:[%s9] sm:$0xff]
  %v6660 = vsel %vm345, %v6658, 0
  %6662 = vmatprep.subr.mxu0 0.0
  %6663 = vmatpush1.msra.mxu0 %v6656
  %6664 = vmatprep.subr.mxu0 0.0
  %6665 = vmatpush1.msra.mxu0 %v6657
  %6666 = vmatprep.subr.mxu0 0.0
  %6667 = vmatpush1.msra.mxu0 0.0
  %6668 = vmatprep.subr.mxu0 0.0
  %6669 = vmatpush1.msra.mxu0 0.0
  %6670 = vmatprep.subr.mxu0 0.0
  %6671 = vmatpush1.msra.mxu0 0.0
  %6672 = vmatprep.subr.mxu0 0.0
  %6673 = vmatpush1.msra.mxu0 0.0
  %6674 = vmatprep.subr.mxu0 0.0
  %6675 = vmatpush1.msra.mxu0 0.0
  %6676 = vmatprep.subr.mxu0 0.0
  %6677 = vmatpush1.msra.mxu0 0.0
  %6678 = vmatprep.subr.mxu0 0.0
  %6679 = vmatpush1.msra.mxu0 0.0
  %6680 = vmatprep.subr.mxu0 0.0
  %6681 = vmatpush1.msra.mxu0 0.0
  %6682 = vmatprep.subr.mxu0 0.0
  %6683 = vmatpush1.msra.mxu0 0.0
  %6684 = vmatprep.subr.mxu0 0.0
  %6685 = vmatpush1.msra.mxu0 0.0
  %6686 = vmatprep.subr.mxu0 0.0
  %6687 = vmatpush1.msra.mxu0 0.0
  %6688 = vmatprep.subr.mxu0 0.0
  %6689 = vmatpush1.msra.mxu0 0.0
  %6690 = vmatprep.subr.mxu0 0.0
  %6691 = vmatpush1.msra.mxu0 0.0
  %6692 = vmatprep.subr.mxu0 0.0
  %6693 = vmatpush1.msra.mxu0 0.0
  %6694 = vmatprep.subr.mxu0 0.0
  %6695 = vmatpush1.msra.mxu0 0.0
  %6696 = vmatprep.subr.mxu0 0.0
  %6697 = vmatpush1.msra.mxu0 0.0
  %6698 = vmatprep.subr.mxu0 0.0
  %6699 = vmatpush1.msra.mxu0 0.0
  %6700 = vmatprep.subr.mxu0 0.0
  %6701 = vmatpush1.msra.mxu0 0.0
  %6702 = vmatprep.subr.mxu0 0.0
  %6703 = vmatpush1.msra.mxu0 0.0
  %6704 = vmatprep.subr.mxu0 0.0
  %6705 = vmatpush1.msra.mxu0 0.0
  %6706 = vmatprep.subr.mxu0 0.0
  %6707 = vmatpush1.msra.mxu0 0.0
  %6708 = vmatprep.subr.mxu0 0.0
  %6709 = vmatpush1.msra.mxu0 0.0
  %6710 = vmatprep.subr.mxu0 0.0
  %6711 = vmatpush1.msra.mxu0 0.0
  %6712 = vmatprep.subr.mxu0 0.0
  %6713 = vmatpush1.msra.mxu0 0.0
  %6714 = vmatprep.subr.mxu0 0.0
  %6715 = vmatpush1.msra.mxu0 0.0
  %6716 = vmatprep.subr.mxu0 0.0
  %6717 = vmatpush1.msra.mxu0 0.0
  %6718 = vmatprep.subr.mxu0 0.0
  %6719 = vmatpush1.msra.mxu0 0.0
  %6720 = vmatprep.subr.mxu0 0.0
  %6721 = vmatpush1.msra.mxu0 0.0
  %6722 = vmatprep.subr.mxu0 0.0
  %6723 = vmatpush1.msra.mxu0 0.0
  %6724 = vmatprep.subr.mxu0 0.0
  %6725 = vmatpush1.msra.mxu0 0.0
  %6726 = vmatprep.mubr.f32.mxu0 0.0
  %6727 = vmatmul.mubr.f32.gmra.mrb[0].mxu0 %v6660
  %v6728 = vpop.f32.mrb[0].mxu0
  %v6729 = vadd.f32 %v108, %v6728
  %v6730 = vpop.f32.mrb[0].mxu0
  %6731 = vdwg.mxu0
  %v6732 = vld [vmem:[%s11] sm:$0xff]
  %v6733 = vld [vmem:[%s11 + $0x8] sm:$0xff]
  %v6734 = vld [vmem:[%s11 + $0x10] sm:$0xff]
  %v6735 = vld [vmem:[%s11 + $0x18] sm:$0xff]
  %v6736 = vld [vmem:[%s11 + $0x20] sm:$0xff]
  %v6737 = vld [vmem:[%s11 + $0x28] sm:$0xff]
  %v6738 = vld [vmem:[%s11 + $0x30] sm:$0xff]
  %v6739 = vld [vmem:[%s11 + $0x38] sm:$0xff]
  %v6740 = vld [vmem:[%s11 + $0x40] sm:$0xff]
  %v6741 = vld [vmem:[%s11 + $0x48] sm:$0xff]
  %v6742 = vld [vmem:[%s11 + $0x50] sm:$0xff]
  %v6743 = vld [vmem:[%s11 + $0x58] sm:$0xff]
  %v6744 = vld [vmem:[%s12] sm:$0xff]
  %v6745 = vld [vmem:[%s12 + $0x8] sm:$0xff]
  %v6746 = vld [vmem:[%s12 + $0x10] sm:$0xff]
  %v6747 = vld [vmem:[%s12 + $0x18] sm:$0xff]
  %v6748 = vld [vmem:[%s12 + $0x20] sm:$0xff]
  %v6749 = vld [vmem:[%s12 + $0x28] sm:$0xff]
  %v6750 = vld [vmem:[%s12 + $0x30] sm:$0xff]
  %v6751 = vld [vmem:[%s12 + $0x38] sm:$0xff]
  %v6752 = vld [vmem:[%s12 + $0x40] sm:$0xff]
  %v6753 = vld [vmem:[%s12 + $0x48] sm:$0xff]
  %v6754 = vld [vmem:[%s12 + $0x50] sm:$0xff]
  %v6755 = vld [vmem:[%s12 + $0x58] sm:$0xff]
  %v6757 = vsel %vm231, %v6744, 0
  %v6760 = vsel %vm231, %v6745, 0
  %v6763 = vsel %vm231, %v6746, 0
  %v6766 = vsel %vm231, %v6747, 0
  %v6769 = vsel %vm231, %v6748, 0
  %v6772 = vsel %vm231, %v6749, 0
  %v6775 = vsel %vm231, %v6750, 0
  %v6778 = vsel %vm231, %v6751, 0
  %v6781 = vsel %vm231, %v6752, 0
  %v6784 = vsel %vm231, %v6753, 0
  %v6787 = vsel %vm231, %v6754, 0
  %v6790 = vsel %vm231, %v6755, 0
  %6792 = vmatprep.subr.mxu0 0.0
  %6793 = vmatpush1.msra.mxu0 %v6246
  %6794 = vmatprep.subr.mxu0 0.0
  %6795 = vmatpush1.msra.mxu0 0.0
  %6796 = vmatprep.subr.mxu0 0.0
  %6797 = vmatpush1.msra.mxu0 0.0
  %6798 = vmatprep.subr.mxu0 0.0
  %6799 = vmatpush1.msra.mxu0 0.0
  %6800 = vmatprep.subr.mxu0 0.0
  %6801 = vmatpush1.msra.mxu0 0.0
  %6802 = vmatprep.subr.mxu0 0.0
  %6803 = vmatpush1.msra.mxu0 0.0
  %6804 = vmatprep.subr.mxu0 0.0
  %6805 = vmatpush1.msra.mxu0 0.0
  %6806 = vmatprep.subr.mxu0 0.0
  %6807 = vmatpush1.msra.mxu0 0.0
  %6808 = vmatprep.subr.mxu0 0.0
  %6809 = vmatpush1.msra.mxu0 0.0
  %6810 = vmatprep.subr.mxu0 0.0
  %6811 = vmatpush1.msra.mxu0 0.0
  %6812 = vmatprep.subr.mxu0 0.0
  %6813 = vmatpush1.msra.mxu0 0.0
  %6814 = vmatprep.subr.mxu0 0.0
  %6815 = vmatpush1.msra.mxu0 0.0
  %6816 = vmatprep.subr.mxu0 0.0
  %6817 = vmatpush1.msra.mxu0 0.0
  %6818 = vmatprep.subr.mxu0 0.0
  %6819 = vmatpush1.msra.mxu0 0.0
  %6820 = vmatprep.subr.mxu0 0.0
  %6821 = vmatpush1.msra.mxu0 0.0
  %6822 = vmatprep.subr.mxu0 0.0
  %6823 = vmatpush1.msra.mxu0 0.0
  %6824 = vmatprep.subr.mxu0 0.0
  %6825 = vmatpush1.msra.mxu0 0.0
  %6826 = vmatprep.subr.mxu0 0.0
  %6827 = vmatpush1.msra.mxu0 0.0
  %6828 = vmatprep.subr.mxu0 0.0
  %6829 = vmatpush1.msra.mxu0 0.0
  %6830 = vmatprep.subr.mxu0 0.0
  %6831 = vmatpush1.msra.mxu0 0.0
  %6832 = vmatprep.subr.mxu0 0.0
  %6833 = vmatpush1.msra.mxu0 0.0
  %6834 = vmatprep.subr.mxu0 0.0
  %6835 = vmatpush1.msra.mxu0 0.0
  %6836 = vmatprep.subr.mxu0 0.0
  %6837 = vmatpush1.msra.mxu0 0.0
  %6838 = vmatprep.subr.mxu0 0.0
  %6839 = vmatpush1.msra.mxu0 0.0
  %6840 = vmatprep.subr.mxu0 0.0
  %6841 = vmatpush1.msra.mxu0 0.0
  %6842 = vmatprep.subr.mxu0 0.0
  %6843 = vmatpush1.msra.mxu0 0.0
  %6844 = vmatprep.subr.mxu0 0.0
  %6845 = vmatpush1.msra.mxu0 0.0
  %6846 = vmatprep.subr.mxu0 0.0
  %6847 = vmatpush1.msra.mxu0 0.0
  %6848 = vmatprep.subr.mxu0 0.0
  %6849 = vmatpush1.msra.mxu0 0.0
  %6850 = vmatprep.subr.mxu0 0.0
  %6851 = vmatpush1.msra.mxu0 0.0
  %6852 = vmatprep.subr.mxu0 0.0
  %6853 = vmatpush1.msra.mxu0 0.0
  %6854 = vmatprep.subr.mxu0 0.0
  %6855 = vmatpush1.msra.mxu0 0.0
  %6856 = vmatprep.mubr.f32.mxu0 0.0
  %6857 = vmatmul.mubr.f32.gmra.mrb[0].mxu0 %v6757
  %v6858 = vpop.f32.mrb[0].mxu0
  %v6859 = vadd.f32 0.0, %v6858
  %v6860 = vpop.f32.mrb[0].mxu0
  %6861 = vmatprep.mubr.f32.mxu0 0.0
  %6862 = vmatmul.mubr.f32.gmra.mrb[0].mxu0 %v6760
  %v6863 = vpop.f32.mrb[0].mxu0
  %v6864 = vadd.f32 0.0, %v6863
  %v6865 = vpop.f32.mrb[0].mxu0
  %6866 = vmatprep.mubr.f32.mxu0 0.0
  %6867 = vmatmul.mubr.f32.gmra.mrb[0].mxu0 %v6763
  %v6868 = vpop.f32.mrb[0].mxu0
  %v6869 = vadd.f32 0.0, %v6868
  %v6870 = vpop.f32.mrb[0].mxu0
  %6871 = vmatprep.mubr.f32.mxu0 0.0
  %6872 = vmatmul.mubr.f32.gmra.mrb[0].mxu0 %v6766
  %v6873 = vpop.f32.mrb[0].mxu0
  %v6874 = vadd.f32 0.0, %v6873
  %v6875 = vpop.f32.mrb[0].mxu0
  %6876 = vmatprep.mubr.f32.mxu0 0.0
  %6877 = vmatmul.mubr.f32.gmra.mrb[0].mxu0 %v6769
  %v6878 = vpop.f32.mrb[0].mxu0
  %v6879 = vadd.f32 0.0, %v6878
  %v6880 = vpop.f32.mrb[0].mxu0
  %6881 = vmatprep.mubr.f32.mxu0 0.0
  %6882 = vmatmul.mubr.f32.gmra.mrb[0].mxu0 %v6772
  %v6883 = vpop.f32.mrb[0].mxu0
  %v6884 = vadd.f32 0.0, %v6883
  %v6885 = vpop.f32.mrb[0].mxu0
  %6886 = vmatprep.mubr.f32.mxu0 0.0
  %6887 = vmatmul.mubr.f32.gmra.mrb[0].mxu0 %v6775
  %v6888 = vpop.f32.mrb[0].mxu0
  %v6889 = vadd.f32 0.0, %v6888
  %v6890 = vpop.f32.mrb[0].mxu0
  %6891 = vmatprep.mubr.f32.mxu0 0.0
  %6892 = vmatmul.mubr.f32.gmra.mrb[0].mxu0 %v6778
  %v6893 = vpop.f32.mrb[0].mxu0
  %v6894 = vadd.f32 0.0, %v6893
  %v6895 = vpop.f32.mrb[0].mxu0
  %6896 = vmatprep.mubr.f32.mxu0 0.0
  %6897 = vmatmul.mubr.f32.gmra.mrb[0].mxu0 %v6781
  %v6898 = vpop.f32.mrb[0].mxu0
  %v6899 = vadd.f32 0.0, %v6898
  %v6900 = vpop.f32.mrb[0].mxu0
  %6901 = vmatprep.mubr.f32.mxu0 0.0
  %6902 = vmatmul.mubr.f32.gmra.mrb[0].mxu0 %v6784
  %v6903 = vpop.f32.mrb[0].mxu0
  %v6904 = vadd.f32 0.0, %v6903
  %v6905 = vpop.f32.mrb[0].mxu0
  %6906 = vmatprep.mubr.f32.mxu0 0.0
  %6907 = vmatmul.mubr.f32.gmra.mrb[0].mxu0 %v6787
  %v6908 = vpop.f32.mrb[0].mxu0
  %v6909 = vadd.f32 0.0, %v6908
  %v6910 = vpop.f32.mrb[0].mxu0
  %6911 = vmatprep.mubr.f32.mxu0 0.0
  %6912 = vmatmul.mubr.f32.gmra.mrb[0].mxu0 %v6790
  %v6913 = vpop.f32.mrb[0].mxu0
  %v6914 = vadd.f32 0.0, %v6913
  %v6915 = vpop.f32.mrb[0].mxu0
  %6916 = vdwg.mxu0
  %v6918 = vsel %vm231, %v6732, 0
  %v6921 = vsel %vm231, %v6733, 0
  %v6924 = vsel %vm231, %v6734, 0
  %v6927 = vsel %vm231, %v6735, 0
  %v6930 = vsel %vm231, %v6736, 0
  %v6933 = vsel %vm231, %v6737, 0
  %v6936 = vsel %vm231, %v6738, 0
  %v6939 = vsel %vm231, %v6739, 0
  %v6942 = vsel %vm231, %v6740, 0
  %v6945 = vsel %vm231, %v6741, 0
  %v6948 = vsel %vm231, %v6742, 0
  %v6951 = vsel %vm231, %v6743, 0
  %6953 = vmatprep.subr.mxu0 0.0
  %6954 = vmatpush1.msra.mxu0 %v6729
  %6955 = vmatprep.subr.mxu0 0.0
  %6956 = vmatpush1.msra.mxu0 0.0
  %6957 = vmatprep.subr.mxu0 0.0
  %6958 = vmatpush1.msra.mxu0 0.0
  %6959 = vmatprep.subr.mxu0 0.0
  %6960 = vmatpush1.msra.mxu0 0.0
  %6961 = vmatprep.subr.mxu0 0.0
  %6962 = vmatpush1.msra.mxu0 0.0
  %6963 = vmatprep.subr.mxu0 0.0
  %6964 = vmatpush1.msra.mxu0 0.0
  %6965 = vmatprep.subr.mxu0 0.0
  %6966 = vmatpush1.msra.mxu0 0.0
  %6967 = vmatprep.subr.mxu0 0.0
  %6968 = vmatpush1.msra.mxu0 0.0
  %6969 = vmatprep.subr.mxu0 0.0
  %6970 = vmatpush1.msra.mxu0 0.0
  %6971 = vmatprep.subr.mxu0 0.0
  %6972 = vmatpush1.msra.mxu0 0.0
  %6973 = vmatprep.subr.mxu0 0.0
  %6974 = vmatpush1.msra.mxu0 0.0
  %6975 = vmatprep.subr.mxu0 0.0
  %6976 = vmatpush1.msra.mxu0 0.0
  %6977 = vmatprep.subr.mxu0 0.0
  %6978 = vmatpush1.msra.mxu0 0.0
  %6979 = vmatprep.subr.mxu0 0.0
  %6980 = vmatpush1.msra.mxu0 0.0
  %6981 = vmatprep.subr.mxu0 0.0
  %6982 = vmatpush1.msra.mxu0 0.0
  %6983 = vmatprep.subr.mxu0 0.0
  %6984 = vmatpush1.msra.mxu0 0.0
  %6985 = vmatprep.subr.mxu0 0.0
  %6986 = vmatpush1.msra.mxu0 0.0
  %6987 = vmatprep.subr.mxu0 0.0
  %6988 = vmatpush1.msra.mxu0 0.0
  %6989 = vmatprep.subr.mxu0 0.0
  %6990 = vmatpush1.msra.mxu0 0.0
  %6991 = vmatprep.subr.mxu0 0.0
  %6992 = vmatpush1.msra.mxu0 0.0
  %6993 = vmatprep.subr.mxu0 0.0
  %6994 = vmatpush1.msra.mxu0 0.0
  %6995 = vmatprep.subr.mxu0 0.0
  %6996 = vmatpush1.msra.mxu0 0.0
  %6997 = vmatprep.subr.mxu0 0.0
  %6998 = vmatpush1.msra.mxu0 0.0
  %6999 = vmatprep.subr.mxu0 0.0
  %7000 = vmatpush1.msra.mxu0 0.0
  %7001 = vmatprep.subr.mxu0 0.0
  %7002 = vmatpush1.msra.mxu0 0.0
  %7003 = vmatprep.subr.mxu0 0.0
  %7004 = vmatpush1.msra.mxu0 0.0
  %7005 = vmatprep.subr.mxu0 0.0
  %7006 = vmatpush1.msra.mxu0 0.0
  %7007 = vmatprep.subr.mxu0 0.0
  %7008 = vmatpush1.msra.mxu0 0.0
  %7009 = vmatprep.subr.mxu0 0.0
  %7010 = vmatpush1.msra.mxu0 0.0
  %7011 = vmatprep.subr.mxu0 0.0
  %7012 = vmatpush1.msra.mxu0 0.0
  %7013 = vmatprep.subr.mxu0 0.0
  %7014 = vmatpush1.msra.mxu0 0.0
  %7015 = vmatprep.subr.mxu0 0.0
  %7016 = vmatpush1.msra.mxu0 0.0
  %7017 = vmatprep.mubr.f32.mxu0 0.0
  %7018 = vmatmul.mubr.f32.gmra.mrb[0].mxu0 %v6918
  %v7019 = vpop.f32.mrb[0].mxu0
  %v7020 = vadd.f32 %v6859, %v7019
  %v7021 = vpop.f32.mrb[0].mxu0
  %7022 = vmatprep.mubr.f32.mxu0 0.0
  %7023 = vmatmul.mubr.f32.gmra.mrb[0].mxu0 %v6921
  %v7024 = vpop.f32.mrb[0].mxu0
  %v7025 = vadd.f32 %v6864, %v7024
  %v7026 = vpop.f32.mrb[0].mxu0
  %7027 = vmatprep.mubr.f32.mxu0 0.0
  %7028 = vmatmul.mubr.f32.gmra.mrb[0].mxu0 %v6924
  %v7029 = vpop.f32.mrb[0].mxu0
  %v7030 = vadd.f32 %v6869, %v7029
  %v7031 = vpop.f32.mrb[0].mxu0
  %7032 = vmatprep.mubr.f32.mxu0 0.0
  %7033 = vmatmul.mubr.f32.gmra.mrb[0].mxu0 %v6927
  %v7034 = vpop.f32.mrb[0].mxu0
  %v7035 = vadd.f32 %v6874, %v7034
  %v7036 = vpop.f32.mrb[0].mxu0
  %7037 = vmatprep.mubr.f32.mxu0 0.0
  %7038 = vmatmul.mubr.f32.gmra.mrb[0].mxu0 %v6930
  %v7039 = vpop.f32.mrb[0].mxu0
  %v7040 = vadd.f32 %v6879, %v7039
  %v7041 = vpop.f32.mrb[0].mxu0
  %7042 = vmatprep.mubr.f32.mxu0 0.0
  %7043 = vmatmul.mubr.f32.gmra.mrb[0].mxu0 %v6933
  %v7044 = vpop.f32.mrb[0].mxu0
  %v7045 = vadd.f32 %v6884, %v7044
  %v7046 = vpop.f32.mrb[0].mxu0
  %7047 = vmatprep.mubr.f32.mxu0 0.0
  %7048 = vmatmul.mubr.f32.gmra.mrb[0].mxu0 %v6936
  %v7049 = vpop.f32.mrb[0].mxu0
  %v7050 = vadd.f32 %v6889, %v7049
  %v7051 = vpop.f32.mrb[0].mxu0
  %7052 = vmatprep.mubr.f32.mxu0 0.0
  %7053 = vmatmul.mubr.f32.gmra.mrb[0].mxu0 %v6939
  %v7054 = vpop.f32.mrb[0].mxu0
  %v7055 = vadd.f32 %v6894, %v7054
  %v7056 = vpop.f32.mrb[0].mxu0
  %7057 = vmatprep.mubr.f32.mxu0 0.0
  %7058 = vmatmul.mubr.f32.gmra.mrb[0].mxu0 %v6942
  %v7059 = vpop.f32.mrb[0].mxu0
  %v7060 = vadd.f32 %v6899, %v7059
  %v7061 = vpop.f32.mrb[0].mxu0
  %7062 = vmatprep.mubr.f32.mxu0 0.0
  %7063 = vmatmul.mubr.f32.gmra.mrb[0].mxu0 %v6945
  %v7064 = vpop.f32.mrb[0].mxu0
  %v7065 = vadd.f32 %v6904, %v7064
  %v7066 = vpop.f32.mrb[0].mxu0
  %7067 = vmatprep.mubr.f32.mxu0 0.0
  %7068 = vmatmul.mubr.f32.gmra.mrb[0].mxu0 %v6948
  %v7069 = vpop.f32.mrb[0].mxu0
  %v7070 = vadd.f32 %v6909, %v7069
  %v7071 = vpop.f32.mrb[0].mxu0
  %7072 = vmatprep.mubr.f32.mxu0 0.0
  %7073 = vmatmul.mubr.f32.gmra.mrb[0].mxu0 %v6951
  %v7074 = vpop.f32.mrb[0].mxu0
  %v7075 = vadd.f32 %v6914, %v7074
  %v7076 = vpop.f32.mrb[0].mxu0
  %7077 = vdwg.mxu0
  %v7078 = vadd.f32 %v7020, %v125
  %v7079 = vadd.f32 %v7025, %v130
  %v7080 = vadd.f32 %v7030, %v135
  %v7081 = vadd.f32 %v7035, %v140
  %v7082 = vadd.f32 %v7040, %v145
  %v7083 = vadd.f32 %v7045, %v150
  %v7084 = vadd.f32 %v7050, %v155
  %v7085 = vadd.f32 %v7055, %v160
  %v7086 = vadd.f32 %v7060, %v165
  %v7087 = vadd.f32 %v7065, %v170
  %v7088 = vadd.f32 %v7070, %v175
  %v7089 = vadd.f32 %v7075, %v180
  %v7090 = vld [vmem:[%s13] sm:$0xff]
  %v7091 = vld [vmem:[%s13 + $0x8] sm:$0xff]
  %v7092 = vld [vmem:[%s13 + $0x10] sm:$0xff]
  %v7093 = vld [vmem:[%s13 + $0x18] sm:$0xff]
  %v7094 = vld [vmem:[%s13 + $0x20] sm:$0xff]
  %v7095 = vld [vmem:[%s13 + $0x28] sm:$0xff]
  %v7096 = vld [vmem:[%s13 + $0x30] sm:$0xff]
  %v7097 = vld [vmem:[%s13 + $0x38] sm:$0xff]
  %v7098 = vld [vmem:[%s13 + $0x40] sm:$0xff]
  %v7099 = vld [vmem:[%s13 + $0x48] sm:$0xff]
  %v7100 = vld [vmem:[%s13 + $0x50] sm:$0xff]
  %v7101 = vld [vmem:[%s13 + $0x58] sm:$0xff]
  %v7103 = vsel %vm1076, %v7090, 0
  %v7106 = vsel %vm1076, %v7091, 0
  %v7109 = vsel %vm1076, %v7092, 0
  %v7112 = vsel %vm1076, %v7093, 0
  %v7115 = vsel %vm1076, %v7094, 0
  %v7118 = vsel %vm1076, %v7095, 0
  %v7121 = vsel %vm1076, %v7096, 0
  %v7124 = vsel %vm1076, %v7097, 0
  %v7127 = vsel %vm1076, %v7098, 0
  %v7130 = vsel %vm1076, %v7099, 0
  %v7133 = vsel %vm1076, %v7100, 0
  %v7136 = vsel %vm1076, %v7101, 0
  %7138 = vmatprep.subr.mxu0 0.0
  %7139 = vmatpush1.msra.mxu0 %v6150
  %7140 = vmatprep.subr.mxu0 0.0
  %7141 = vmatpush1.msra.mxu0 %v6151
  %7142 = vmatprep.subr.mxu0 0.0
  %7143 = vmatpush1.msra.mxu0 %v6152
  %7144 = vmatprep.subr.mxu0 0.0
  %7145 = vmatpush1.msra.mxu0 %v6153
  %7146 = vmatprep.subr.mxu0 0.0
  %7147 = vmatpush1.msra.mxu0 0.0
  %7148 = vmatprep.subr.mxu0 0.0
  %7149 = vmatpush1.msra.mxu0 0.0
  %7150 = vmatprep.subr.mxu0 0.0
  %7151 = vmatpush1.msra.mxu0 0.0
  %7152 = vmatprep.subr.mxu0 0.0
  %7153 = vmatpush1.msra.mxu0 0.0
  %7154 = vmatprep.subr.mxu0 0.0
  %7155 = vmatpush1.msra.mxu0 0.0
  %7156 = vmatprep.subr.mxu0 0.0
  %7157 = vmatpush1.msra.mxu0 0.0
  %7158 = vmatprep.subr.mxu0 0.0
  %7159 = vmatpush1.msra.mxu0 0.0
  %7160 = vmatprep.subr.mxu0 0.0
  %7161 = vmatpush1.msra.mxu0 0.0
  %7162 = vmatprep.subr.mxu0 0.0
  %7163 = vmatpush1.msra.mxu0 0.0
  %7164 = vmatprep.subr.mxu0 0.0
  %7165 = vmatpush1.msra.mxu0 0.0
  %7166 = vmatprep.subr.mxu0 0.0
  %7167 = vmatpush1.msra.mxu0 0.0
  %7168 = vmatprep.subr.mxu0 0.0
  %7169 = vmatpush1.msra.mxu0 0.0
  %7170 = vmatprep.subr.mxu0 0.0
  %7171 = vmatpush1.msra.mxu0 0.0
  %7172 = vmatprep.subr.mxu0 0.0
  %7173 = vmatpush1.msra.mxu0 0.0
  %7174 = vmatprep.subr.mxu0 0.0
  %7175 = vmatpush1.msra.mxu0 0.0
  %7176 = vmatprep.subr.mxu0 0.0
  %7177 = vmatpush1.msra.mxu0 0.0
  %7178 = vmatprep.subr.mxu0 0.0
  %7179 = vmatpush1.msra.mxu0 0.0
  %7180 = vmatprep.subr.mxu0 0.0
  %7181 = vmatpush1.msra.mxu0 0.0
  %7182 = vmatprep.subr.mxu0 0.0
  %7183 = vmatpush1.msra.mxu0 0.0
  %7184 = vmatprep.subr.mxu0 0.0
  %7185 = vmatpush1.msra.mxu0 0.0
  %7186 = vmatprep.subr.mxu0 0.0
  %7187 = vmatpush1.msra.mxu0 0.0
  %7188 = vmatprep.subr.mxu0 0.0
  %7189 = vmatpush1.msra.mxu0 0.0
  %7190 = vmatprep.subr.mxu0 0.0
  %7191 = vmatpush1.msra.mxu0 0.0
  %7192 = vmatprep.subr.mxu0 0.0
  %7193 = vmatpush1.msra.mxu0 0.0
  %7194 = vmatprep.subr.mxu0 0.0
  %7195 = vmatpush1.msra.mxu0 0.0
  %7196 = vmatprep.subr.mxu0 0.0
  %7197 = vmatpush1.msra.mxu0 0.0
  %7198 = vmatprep.subr.mxu0 0.0
  %7199 = vmatpush1.msra.mxu0 0.0
  %7200 = vmatprep.subr.mxu0 0.0
  %7201 = vmatpush1.msra.mxu0 0.0
  %7202 = vmatprep.mubr.f32.mxu0 0.0
  %7203 = vmatmul.mubr.f32.gmra.mrb[0].mxu0 %v7103
  %v7204 = vpop.f32.mrb[0].mxu0
  %v7205 = vadd.f32 0.0, %v7204
  %v7206 = vpop.f32.mrb[0].mxu0
  %7207 = vmatprep.mubr.f32.mxu0 0.0
  %7208 = vmatmul.mubr.f32.gmra.mrb[0].mxu0 %v7106
  %v7209 = vpop.f32.mrb[0].mxu0
  %v7210 = vadd.f32 0.0, %v7209
  %v7211 = vpop.f32.mrb[0].mxu0
  %7212 = vmatprep.mubr.f32.mxu0 0.0
  %7213 = vmatmul.mubr.f32.gmra.mrb[0].mxu0 %v7109
  %v7214 = vpop.f32.mrb[0].mxu0
  %v7215 = vadd.f32 0.0, %v7214
  %v7216 = vpop.f32.mrb[0].mxu0
  %7217 = vmatprep.mubr.f32.mxu0 0.0
  %7218 = vmatmul.mubr.f32.gmra.mrb[0].mxu0 %v7112
  %v7219 = vpop.f32.mrb[0].mxu0
  %v7220 = vadd.f32 0.0, %v7219
  %v7221 = vpop.f32.mrb[0].mxu0
  %7222 = vmatprep.mubr.f32.mxu0 0.0
  %7223 = vmatmul.mubr.f32.gmra.mrb[0].mxu0 %v7115
  %v7224 = vpop.f32.mrb[0].mxu0
  %v7225 = vadd.f32 0.0, %v7224
  %v7226 = vpop.f32.mrb[0].mxu0
  %7227 = vmatprep.mubr.f32.mxu0 0.0
  %7228 = vmatmul.mubr.f32.gmra.mrb[0].mxu0 %v7118
  %v7229 = vpop.f32.mrb[0].mxu0
  %v7230 = vadd.f32 0.0, %v7229
  %v7231 = vpop.f32.mrb[0].mxu0
  %7232 = vmatprep.mubr.f32.mxu0 0.0
  %7233 = vmatmul.mubr.f32.gmra.mrb[0].mxu0 %v7121
  %v7234 = vpop.f32.mrb[0].mxu0
  %v7235 = vadd.f32 0.0, %v7234
  %v7236 = vpop.f32.mrb[0].mxu0
  %7237 = vmatprep.mubr.f32.mxu0 0.0
  %7238 = vmatmul.mubr.f32.gmra.mrb[0].mxu0 %v7124
  %v7239 = vpop.f32.mrb[0].mxu0
  %v7240 = vadd.f32 0.0, %v7239
  %v7241 = vpop.f32.mrb[0].mxu0
  %7242 = vmatprep.mubr.f32.mxu0 0.0
  %7243 = vmatmul.mubr.f32.gmra.mrb[0].mxu0 %v7127
  %v7244 = vpop.f32.mrb[0].mxu0
  %v7245 = vadd.f32 0.0, %v7244
  %v7246 = vpop.f32.mrb[0].mxu0
  %7247 = vmatprep.mubr.f32.mxu0 0.0
  %7248 = vmatmul.mubr.f32.gmra.mrb[0].mxu0 %v7130
  %v7249 = vpop.f32.mrb[0].mxu0
  %v7250 = vadd.f32 0.0, %v7249
  %v7251 = vpop.f32.mrb[0].mxu0
  %7252 = vmatprep.mubr.f32.mxu0 0.0
  %7253 = vmatmul.mubr.f32.gmra.mrb[0].mxu0 %v7133
  %v7254 = vpop.f32.mrb[0].mxu0
  %v7255 = vadd.f32 0.0, %v7254
  %v7256 = vpop.f32.mrb[0].mxu0
  %7257 = vmatprep.mubr.f32.mxu0 0.0
  %7258 = vmatmul.mubr.f32.gmra.mrb[0].mxu0 %v7136
  %v7259 = vpop.f32.mrb[0].mxu0
  %v7260 = vadd.f32 0.0, %v7259
  %v7261 = vpop.f32.mrb[0].mxu0
  %7262 = vdwg.mxu0
  %v7263 = vadd.f32 %v7078, %v7205
  %v7264 = vadd.f32 %v7079, %v7210
  %v7265 = vadd.f32 %v7080, %v7215
  %v7266 = vadd.f32 %v7081, %v7220
  %v7267 = vxor.u32 %v7263, 2147483648
  %v7268 = vxor.u32 %v7264, 2147483648
  %v7269 = vxor.u32 %v7265, 2147483648
  %v7270 = vxor.u32 %v7266, 2147483648
  %v7271 = vmul.f32 %v7267, 1.442695
  %v7272 = vpow.pop %v7271
  %v7273 = vmul.f32 %v7268, 1.442695
  %v7274 = vpow.pop %v7273
  %v7275 = vmul.f32 %v7269, 1.442695
  %v7276 = vpow.pop %v7275
  %v7277 = vmul.f32 %v7270, 1.442695
  %v7278 = vpow.pop %v7277
  %v7279 = vadd.f32 %v7272, 1.0
  %v7280 = vadd.f32 %v7274, 1.0
  %v7281 = vadd.f32 %v7276, 1.0
  %v7282 = vadd.f32 %v7278, 1.0
  %v7283 = vrcp.pop %v7279
  %v7284 = vmul.f32 1.0, %v7283
  %v7285 = vrcp.pop %v7280
  %v7286 = vmul.f32 1.0, %v7285
  %v7287 = vrcp.pop %v7281
  %v7288 = vmul.f32 1.0, %v7287
  %v7289 = vrcp.pop %v7282
  %v7290 = vmul.f32 1.0, %v7289
  %v7291 = vadd.f32 %v7082, %v7225
  %v7292 = vadd.f32 %v7083, %v7230
  %v7293 = vadd.f32 %v7084, %v7235
  %v7294 = vadd.f32 %v7085, %v7240
  %v7295 = vxor.u32 %v7291, 2147483648
  %v7296 = vxor.u32 %v7292, 2147483648
  %v7297 = vxor.u32 %v7293, 2147483648
  %v7298 = vxor.u32 %v7294, 2147483648
  %v7299 = vmul.f32 %v7295, 1.442695
  %v7300 = vpow.pop %v7299
  %v7301 = vmul.f32 %v7296, 1.442695
  %v7302 = vpow.pop %v7301
  %v7303 = vmul.f32 %v7297, 1.442695
  %v7304 = vpow.pop %v7303
  %v7305 = vmul.f32 %v7298, 1.442695
  %v7306 = vpow.pop %v7305
  %v7307 = vadd.f32 %v7300, 1.0
  %v7308 = vadd.f32 %v7302, 1.0
  %v7309 = vadd.f32 %v7304, 1.0
  %v7310 = vadd.f32 %v7306, 1.0
  %v7311 = vrcp.pop %v7307
  %v7312 = vmul.f32 1.0, %v7311
  %v7313 = vrcp.pop %v7308
  %v7314 = vmul.f32 1.0, %v7313
  %v7315 = vrcp.pop %v7309
  %v7316 = vmul.f32 1.0, %v7315
  %v7317 = vrcp.pop %v7310
  %v7318 = vmul.f32 1.0, %v7317
  %v7319 = vadd.f32 %v7245, %v189
  %v7320 = vadd.f32 %v7250, %v194
  %v7321 = vadd.f32 %v7255, %v199
  %v7322 = vadd.f32 %v7260, %v204
  %v7323 = vmul.f32 %v7284, %v7319
  %v7324 = vmul.f32 %v7286, %v7320
  %v7325 = vmul.f32 %v7288, %v7321
  %v7326 = vmul.f32 %v7290, %v7322
  %v7327 = vadd.f32 %v7086, %v7323
  %v7328 = vadd.f32 %v7087, %v7324
  %v7329 = vadd.f32 %v7088, %v7325
  %v7330 = vadd.f32 %v7089, %v7326
  %v7331 = vtanh.pop %v7327
  %v7332 = vtanh.pop %v7328
  %v7333 = vtanh.pop %v7329
  %v7334 = vtanh.pop %v7330
  %v7335 = vsub.f32 1.0, %v7312
  %v7336 = vsub.f32 1.0, %v7314
  %v7337 = vsub.f32 1.0, %v7316
  %v7338 = vsub.f32 1.0, %v7318
  %v7339 = vmul.f32 %v7335, %v7331
  %v7340 = vmul.f32 %v7336, %v7332
  %v7341 = vmul.f32 %v7337, %v7333
  %v7342 = vmul.f32 %v7338, %v7334
  %v7343 = vmul.f32 %v7312, %v6150
  %v7344 = vmul.f32 %v7314, %v6151
  %v7345 = vmul.f32 %v7316, %v6152
  %v7346 = vmul.f32 %v7318, %v6153
  %v7347 = vadd.f32 %v7339, %v7343
  %v7348 = vadd.f32 %v7340, %v7344
  %v7349 = vadd.f32 %v7341, %v7345
  %v7350 = vadd.f32 %v7342, %v7346
  %v7351 = vmax.f32 %v7347, -5.0
  %v7352 = vmax.f32 %v7348, -5.0
  %v7353 = vmax.f32 %v7349, -5.0
  %v7354 = vmax.f32 %v7350, -5.0
  %v7355 = vmin.f32 %v7351, 5.0
  %v7356 = vmin.f32 %v7352, 5.0
  %v7357 = vmin.f32 %v7353, 5.0
  %v7358 = vmin.f32 %v7354, 5.0
  %v7359 = vld [vmem:[%s16] sm:$0xff]
  %v7361 = vsel %vm1076, %v7359, 0
  %7363 = vmatprep.subr.mxu0 0.0
  %7364 = vmatpush1.msra.mxu0 %v7355
  %7365 = vmatprep.subr.mxu0 0.0
  %7366 = vmatpush1.msra.mxu0 %v7356
  %7367 = vmatprep.subr.mxu0 0.0
  %7368 = vmatpush1.msra.mxu0 %v7357
  %7369 = vmatprep.subr.mxu0 0.0
  %7370 = vmatpush1.msra.mxu0 %v7358
  %7371 = vmatprep.subr.mxu0 0.0
  %7372 = vmatpush1.msra.mxu0 0.0
  %7373 = vmatprep.subr.mxu0 0.0
  %7374 = vmatpush1.msra.mxu0 0.0
  %7375 = vmatprep.subr.mxu0 0.0
  %7376 = vmatpush1.msra.mxu0 0.0
  %7377 = vmatprep.subr.mxu0 0.0
  %7378 = vmatpush1.msra.mxu0 0.0
  %7379 = vmatprep.subr.mxu0 0.0
  %7380 = vmatpush1.msra.mxu0 0.0
  %7381 = vmatprep.subr.mxu0 0.0
  %7382 = vmatpush1.msra.mxu0 0.0
  %7383 = vmatprep.subr.mxu0 0.0
  %7384 = vmatpush1.msra.mxu0 0.0
  %7385 = vmatprep.subr.mxu0 0.0
  %7386 = vmatpush1.msra.mxu0 0.0
  %7387 = vmatprep.subr.mxu0 0.0
  %7388 = vmatpush1.msra.mxu0 0.0
  %7389 = vmatprep.subr.mxu0 0.0
  %7390 = vmatpush1.msra.mxu0 0.0
  %7391 = vmatprep.subr.mxu0 0.0
  %7392 = vmatpush1.msra.mxu0 0.0
  %7393 = vmatprep.subr.mxu0 0.0
  %7394 = vmatpush1.msra.mxu0 0.0
  %7395 = vmatprep.subr.mxu0 0.0
  %7396 = vmatpush1.msra.mxu0 0.0
  %7397 = vmatprep.subr.mxu0 0.0
  %7398 = vmatpush1.msra.mxu0 0.0
  %7399 = vmatprep.subr.mxu0 0.0
  %7400 = vmatpush1.msra.mxu0 0.0
  %7401 = vmatprep.subr.mxu0 0.0
  %7402 = vmatpush1.msra.mxu0 0.0
  %7403 = vmatprep.subr.mxu0 0.0
  %7404 = vmatpush1.msra.mxu0 0.0
  %7405 = vmatprep.subr.mxu0 0.0
  %7406 = vmatpush1.msra.mxu0 0.0
  %7407 = vmatprep.subr.mxu0 0.0
  %7408 = vmatpush1.msra.mxu0 0.0
  %7409 = vmatprep.subr.mxu0 0.0
  %7410 = vmatpush1.msra.mxu0 0.0
  %7411 = vmatprep.subr.mxu0 0.0
  %7412 = vmatpush1.msra.mxu0 0.0
  %7413 = vmatprep.subr.mxu0 0.0
  %7414 = vmatpush1.msra.mxu0 0.0
  %7415 = vmatprep.subr.mxu0 0.0
  %7416 = vmatpush1.msra.mxu0 0.0
  %7417 = vmatprep.subr.mxu0 0.0
  %7418 = vmatpush1.msra.mxu0 0.0
  %7419 = vmatprep.subr.mxu0 0.0
  %7420 = vmatpush1.msra.mxu0 0.0
  %7421 = vmatprep.subr.mxu0 0.0
  %7422 = vmatpush1.msra.mxu0 0.0
  %7423 = vmatprep.subr.mxu0 0.0
  %7424 = vmatpush1.msra.mxu0 0.0
  %7425 = vmatprep.subr.mxu0 0.0
  %7426 = vmatpush1.msra.mxu0 0.0
  %7427 = vmatprep.mubr.f32.mxu0 0.0
  %7428 = vmatmul.mubr.f32.gmra.mrb[0].mxu0 %v7361
  %v7429 = vpop.f32.mrb[0].mxu0
  %v7430 = vadd.f32 0.0, %v7429
  %v7431 = vpop.f32.mrb[0].mxu0
  %7432 = vdwg.mxu0
  %v7433 = vmul.f32 %v6729, 0.5
  %v7434 = vmul.f32 %v7433, 1.442695
  %v7435 = vpow.pop %v7434
  %v7436 = vsel %vm208, %v6729, %v7435
  %v7437 = vsel %vm208, %v6729, %v6246
  %s7438 = scalar_lea.vmem %s17, 360
  %7439 = vst.msk [vmem:[%s7438] sm:$0xff] %vm1413, %v7355
  %7440 = vst.msk [vmem:[%s7438 + $0x8] sm:$0xff] %vm1413, %v7356
  %7441 = vst.msk [vmem:[%s7438 + $0x10] sm:$0xff] %vm1413, %v7357
  %7442 = vst.msk [vmem:[%s7438 + $0x18] sm:$0xff] %vm1413, %v7358
  %7443 = vst.msk [vmem:[%s7438 + $0x20] sm:$0xff] %vm1413, %v6656
  %7444 = vst.msk [vmem:[%s7438 + $0x28] sm:$0xff] %vm1413, %v6657
  %7445 = vst.msk [vmem:[%s7438 + $0x30] sm:$0xff] %vm1413, %v7436
  %7446 = vst.msk [vmem:[%s7438 + $0x38] sm:$0xff] %vm1413, %v7437
  %7447 = vst.msk [vmem:[%s7438 + $0x40] sm:$0xff] %vm1413, %v7430
  // Predicated region
  $region70: #{tpu_custom_call.1} parent=0 // pred_check
    _
  $region71: #{tpu_custom_call.1} parent=0 // pred_check_branch
    %7449 = sbr.rel (0) target = $region73
  $region72: #{tpu_custom_call.1} parent=0 // pred_region
    _
  $region73: #{tpu_custom_call.1} parent=0 // pred_fallthru
    _
  // Predicated region
  $region74: #{tpu_custom_call.1} parent=0 // pred_check
    _
  $region75: #{tpu_custom_call.1} parent=0 // pred_check_branch
    %7451 = sbr.rel (0) target = $region77
  $region76: #{tpu_custom_call.1} parent=0 // pred_region
    _
  $region77: #{tpu_custom_call.1} parent=0 // pred_fallthru
    _

</llo_original>
